<compile_context>
chip_gen: v5e
topology: v5e:2x2
jax: 0.10.0
libtpu: 0.0.40
codegen_flags: <defaults>
</compile_context>

<pallas_src>
import numpy as np
import jax
import jax.numpy as jnp
from jax.experimental import pallas as pl
from jax.experimental.pallas import tpu as pltpu


# ----------------------------------------------------------------------------
# Host-side geometry: fold pad / 3x3 shifts / stride-2 / nearest-2x upsample
# into constant 0/1 matrices acting on the flattened (H*W) spatial index.
# ----------------------------------------------------------------------------
def _shift_matrix(h, w, dy, dx):
    """P[flat(i,j), flat(i+dy,j+dx)] = 1 when in bounds (zero padding)."""
    p = np.zeros((h * w, h * w), np.float32)
    for i in range(h):
        for j in range(w):
            ii, jj = i + dy, j + dx
            if 0 <= ii < h and 0 <= jj < w:
                p[i * w + j, ii * w + jj] = 1.0
    return p


def _downsample_matrix(h, w):
    """Select even rows/cols (stride-2): shape (h/2*w/2, h*w)."""
    ho, wo = h // 2, w // 2
    s = np.zeros((ho * wo, h * w), np.float32)
    for i in range(ho):
        for j in range(wo):
            s[i * wo + j, (2 * i) * w + 2 * j] = 1.0
    return s


def _upsample_matrix(h, w):
    """Nearest-neighbour 2x upsample: shape (2h*2w, h*w)."""
    ho, wo = 2 * h, 2 * w
    u = np.zeros((ho * wo, h * w), np.float32)
    for i in range(ho):
        for j in range(wo):
            u[i * wo + j, (i // 2) * w + (j // 2)] = 1.0
    return u


def _conv_taps(h, w, *, stride=1, pre_up=False):
    """Stacked (9, M_out, M_in) geometry for a 3x3 / pad=1 conv at resolution
    (h, w), optionally preceded by a nearest-2x upsample (input is h/2 x w/2)
    and/or followed by stride-2 subsampling."""
    post = _downsample_matrix(h, w) if stride == 2 else None
    pre = _upsample_matrix(h // 2, w // 2) if pre_up else None
    taps = []
    for ky in range(3):
        for kx in range(3):
            a = _shift_matrix(h, w, ky - 1, kx - 1)
            if post is not None:
                a = post @ a
            if pre is not None:
                a = a @ pre
            taps.append(a)
    return jnp.asarray(np.stack(taps, axis=0))


def build_geometry(spatial=16):
    s = spatial
    return {
        "A1": _conv_taps(s, s, stride=2),              # (9,  64, 256)
        "A2": _conv_taps(s // 2, s // 2, stride=2),    # (9,  16,  64)
        "A3": _conv_taps(s // 2, s // 2, pre_up=True),  # (9,  64,  16)
        "A4": _conv_taps(s, s, pre_up=True),           # (9, 256,  64)
    }


# ----------------------------------------------------------------------------
# Parameters (the instantiated encoder/decoder weights)
# ----------------------------------------------------------------------------
def init_params(key, c_in=4, c_mid=16, c_lat=32):
    ks = jax.random.split(key, 8)

    def w(k, kh, kw, ci, co):
        fan_in = kh * kw * ci
        return (jax.random.normal(k, (kh, kw, ci, co), jnp.float32)
                * (1.0 / jnp.sqrt(fan_in)))

    return {
        "enc1_w": w(ks[0], 3, 3, c_in, c_mid),
        "enc1_b": 0.01 * jax.random.normal(ks[1], (c_mid,), jnp.float32),
        "enc2_w": w(ks[2], 3, 3, c_mid, c_lat),
        "enc2_b": 0.01 * jax.random.normal(ks[3], (c_lat,), jnp.float32),
        "dec1_w": w(ks[4], 3, 3, c_lat, c_mid),
        "dec1_b": 0.01 * jax.random.normal(ks[5], (c_mid,), jnp.float32),
        "dec2_w": w(ks[6], 3, 3, c_mid, c_in),
        "dec2_b": 0.01 * jax.random.normal(ks[7], (c_in,), jnp.float32),
    }


# ----------------------------------------------------------------------------
# Fused Pallas kernel: whole autoencoder forward for one image per grid step.
# All intermediates live in VMEM; each conv = sum_t (A[t] @ h) @ W[t] + b.
# ----------------------------------------------------------------------------
def _autoencoder_kernel(x_ref,
                        a1_ref, w1_ref, b1_ref,
                        a2_ref, w2_ref, b2_ref,
                        a3_ref, w3_ref, b3_ref,
                        a4_ref, w4_ref, b4_ref,
                        o_ref):
    def conv_layer(h, a_ref, w_ref, b_ref, act):
        m_out = a_ref.shape[1]
        c_out = w_ref.shape[2]
        acc = jnp.zeros((m_out, c_out), jnp.float32) + b_ref[...]
        for t in range(9):                      # static unroll: 9 taps
            g = jnp.dot(a_ref[t], h, preferred_element_type=jnp.float32)
            acc = acc + jnp.dot(g, w_ref[t], preferred_element_type=jnp.float32)
        if act == "silu":
            return acc * jax.nn.sigmoid(acc)
        if act == "sigmoid":
            return jax.nn.sigmoid(acc)
        return acc

    h = x_ref[0]                                           # (256, 4)
    h = conv_layer(h, a1_ref, w1_ref, b1_ref, "silu")      # (64, 16)  8x8x16
    h = conv_layer(h, a2_ref, w2_ref, b2_ref, "silu")      # (16, 32)  4x4x32
    h = conv_layer(h, a3_ref, w3_ref, b3_ref, "silu")      # (64, 16)  8x8x16
    h = conv_layer(h, a4_ref, w4_ref, b4_ref, "sigmoid")   # (256, 4)  16x16x4
    o_ref[0] = h.astype(o_ref.dtype)


def _const_spec(shape):
    rank = len(shape)
    if rank == 2:
        index_map = lambda b: (0, 0)
    else:
        index_map = lambda b: (0, 0, 0)
    return pl.BlockSpec(shape, index_map)


# ----------------------------------------------------------------------------
# Forward pass: reconstruction = decoder(encoder(x))
# ----------------------------------------------------------------------------
@jax.jit
def efficientnet_autoencoder(x_nchw, params, geom):
    n, c_in, hh, ww = x_nchw.shape
    hw = hh * ww
    # NCHW -> flattened NHWC rows (h*W + w, c); channels on the lane axis.
    x = jnp.transpose(x_nchw, (0, 2, 3, 1)).astype(jnp.float32).reshape(n, hw, c_in)

    def taps(name):
        kh, kw, ci, co = params[name].shape
        return params[name].reshape(kh * kw, ci, co).astype(jnp.float32)

    def bias(name):
        return params[name].reshape(1, -1).astype(jnp.float32)

    w1, b1 = taps("enc1_w"), bias("enc1_b")
    w2, b2 = taps("enc2_w"), bias("enc2_b")
    w3, b3 = taps("dec1_w"), bias("dec1_b")
    w4, b4 = taps("dec2_w"), bias("dec2_b")
    a1, a2, a3, a4 = geom["A1"], geom["A2"], geom["A3"], geom["A4"]

    operands = (x, a1, w1, b1, a2, w2, b2, a3, w3, b3, a4, w4, b4)
    in_specs = [pl.BlockSpec((1, hw, c_in), lambda b: (b, 0, 0))]
    for op in operands[1:]:
        in_specs.append(_const_spec(op.shape))   # staged once, reused per step

    c_out = w4.shape[-1]
    out_flat = pl.pallas_call(
        _autoencoder_kernel,
        out_shape=jax.ShapeDtypeStruct((n, hw, c_out), jnp.float32),
        grid_spec=pltpu.PrefetchScalarGridSpec(
            num_scalar_prefetch=0,
            grid=(n,),
            in_specs=in_specs,
            out_specs=pl.BlockSpec((1, hw, c_out), lambda b: (b, 0, 0)),
        ),
        compiler_params=pltpu.CompilerParams(
            dimension_semantics=("parallel",)),
    )(*operands)

    out = out_flat.reshape(n, hh, ww, c_out)
    return jnp.transpose(out, (0, 3, 1, 2))                # back to NCHW


# ----------------------------------------------------------------------------
# Pure-JAX reference (for a correctness sanity check)
# ----------------------------------------------------------------------------
def _ref_forward(x_nchw, params):
    x = jnp.transpose(x_nchw, (0, 2, 3, 1)).astype(jnp.float32)

    def conv(h, w, b, stride):
        out = jax.lax.conv_general_dilated(
            h, w, window_strides=(stride, stride), padding=((1, 1), (1, 1)),
            dimension_numbers=("NHWC", "HWIO", "NHWC"))
        return out + b

    h = jax.nn.silu(conv(x, params["enc1_w"], params["enc1_b"], 2))
    h = jax.nn.silu(conv(h, params["enc2_w"], params["enc2_b"], 2))
    h = jnp.repeat(jnp.repeat(h, 2, axis=1), 2, axis=2)
    h = jax.nn.silu(conv(h, params["dec1_w"], params["dec1_b"], 1))
    h = jnp.repeat(jnp.repeat(h, 2, axis=1), 2, axis=2)
    h = jax.nn.sigmoid(conv(h, params["dec2_w"], params["dec2_b"], 1))
    return jnp.transpose(h, (0, 3, 1, 2))


if __name__ == "__main__":
    key = jax.random.PRNGKey(0)
    k_x, k_p = jax.random.split(key)

    x = jax.random.normal(k_x, (2, 4, 16, 16), jnp.float32)   # NCHW
    params = init_params(k_p, c_in=4, c_mid=16, c_lat=32)
    geom = build_geometry(spatial=16)

    recon = efficientnet_autoencoder(x, params, geom)
    recon = jax.block_until_ready(recon)

    assert recon.shape == x.shape, recon.shape
    assert bool(jnp.all(jnp.isfinite(recon)))

    ref = jax.block_until_ready(_ref_forward(x, params))
    max_err = float(jnp.max(jnp.abs(recon - ref)))
    assert max_err < 3e-4, f"max abs err vs reference: {max_err}"

    print("KERNEL_OK")
</pallas_src>

<mosaic_0001>
module attributes {stable_mosaic.version = 11 : i64} {
  func.func @_autoencoder_kernel(%arg0: i32, %arg1: memref<1x256x4xf32, #tpu.memory_space<vmem>>, %arg2: memref<9x64x256xf32, #tpu.memory_space<vmem>>, %arg3: memref<9x4x16xf32, #tpu.memory_space<vmem>>, %arg4: memref<1x16xf32, #tpu.memory_space<vmem>>, %arg5: memref<9x16x64xf32, #tpu.memory_space<vmem>>, %arg6: memref<9x16x32xf32, #tpu.memory_space<vmem>>, %arg7: memref<1x32xf32, #tpu.memory_space<vmem>>, %arg8: memref<9x64x16xf32, #tpu.memory_space<vmem>>, %arg9: memref<9x32x16xf32, #tpu.memory_space<vmem>>, %arg10: memref<1x16xf32, #tpu.memory_space<vmem>>, %arg11: memref<9x256x64xf32, #tpu.memory_space<vmem>>, %arg12: memref<9x16x4xf32, #tpu.memory_space<vmem>>, %arg13: memref<1x4xf32, #tpu.memory_space<vmem>>, %arg14: memref<1x256x4xf32, #tpu.memory_space<vmem>>) attributes {dimension_semantics = [#tpu.dimension_semantics<parallel>], iteration_bounds = array<i64: 2>, scalar_prefetch = 0 : i64, scratch_operands = 0 : i64, tpu.core_type = #tpu.core_type<tc>, window_params = [{transform_indices = @transform_0, window_bounds = array<i64: 1, 256, 4>}, {pipeline_mode = #tpu.pipeline_mode<synchronous>, transform_indices = @transform_1, window_bounds = array<i64: 9, 64, 256>}, {pipeline_mode = #tpu.pipeline_mode<synchronous>, transform_indices = @transform_2, window_bounds = array<i64: 9, 4, 16>}, {pipeline_mode = #tpu.pipeline_mode<synchronous>, transform_indices = @transform_3, window_bounds = array<i64: 1, 16>}, {pipeline_mode = #tpu.pipeline_mode<synchronous>, transform_indices = @transform_4, window_bounds = array<i64: 9, 16, 64>}, {pipeline_mode = #tpu.pipeline_mode<synchronous>, transform_indices = @transform_5, window_bounds = array<i64: 9, 16, 32>}, {pipeline_mode = #tpu.pipeline_mode<synchronous>, transform_indices = @transform_6, window_bounds = array<i64: 1, 32>}, {pipeline_mode = #tpu.pipeline_mode<synchronous>, transform_indices = @transform_7, window_bounds = array<i64: 9, 64, 16>}, {pipeline_mode = #tpu.pipeline_mode<synchronous>, transform_indices = @transform_8, window_bounds = array<i64: 9, 32, 16>}, {pipeline_mode = #tpu.pipeline_mode<synchronous>, transform_indices = @transform_9, window_bounds = array<i64: 1, 16>}, {pipeline_mode = #tpu.pipeline_mode<synchronous>, transform_indices = @transform_10, window_bounds = array<i64: 9, 256, 64>}, {pipeline_mode = #tpu.pipeline_mode<synchronous>, transform_indices = @transform_11, window_bounds = array<i64: 9, 16, 4>}, {pipeline_mode = #tpu.pipeline_mode<synchronous>, transform_indices = @transform_12, window_bounds = array<i64: 1, 4>}, {transform_indices = @transform_13, window_bounds = array<i64: 1, 256, 4>}]} {
    %c0 = arith.constant 0 : index
    %c0_0 = arith.constant 0 : index
    %c0_1 = arith.constant 0 : index
    %0 = vector.load %arg1[%c0, %c0_0, %c0_1] : memref<1x256x4xf32, #tpu.memory_space<vmem>>, vector<1x256x4xf32>
    %1 = vector.shape_cast %0 : vector<1x256x4xf32> to vector<256x4xf32>
    %cst = arith.constant 0.000000e+00 : f32
    %2 = vector.broadcast %cst : f32 to vector<64x16xf32>
    %c0_2 = arith.constant 0 : index
    %c0_3 = arith.constant 0 : index
    %3 = vector.load %arg4[%c0_2, %c0_3] : memref<1x16xf32, #tpu.memory_space<vmem>>, vector<1x16xf32>
    %4 = vector.broadcast %3 : vector<1x16xf32> to vector<64x16xf32>
    %5 = arith.addf %2, %4 : vector<64x16xf32>
    %c0_4 = arith.constant 0 : index
    %c0_5 = arith.constant 0 : index
    %c0_6 = arith.constant 0 : index
    %6 = vector.load %arg2[%c0_4, %c0_5, %c0_6] : memref<9x64x256xf32, #tpu.memory_space<vmem>>, vector<1x64x256xf32>
    %7 = vector.shape_cast %6 : vector<1x64x256xf32> to vector<64x256xf32>
    %cst_7 = arith.constant dense<0.000000e+00> : vector<64x4xf32>
    %8 = tpu.matmul %7, %1, %cst_7 {dimension_numbers = #tpu.dot_dimension_numbers<[1], [0], [0], [1], [0, 0, 1, 1], [], []>} : vector<64x256xf32>, vector<256x4xf32>, vector<64x4xf32> -> vector<64x4xf32>
    %c0_8 = arith.constant 0 : index
    %c0_9 = arith.constant 0 : index
    %c0_10 = arith.constant 0 : index
    %9 = vector.load %arg3[%c0_8, %c0_9, %c0_10] : memref<9x4x16xf32, #tpu.memory_space<vmem>>, vector<1x4x16xf32>
    %10 = vector.shape_cast %9 : vector<1x4x16xf32> to vector<4x16xf32>
    %cst_11 = arith.constant dense<0.000000e+00> : vector<64x16xf32>
    %11 = tpu.matmul %8, %10, %cst_11 {dimension_numbers = #tpu.dot_dimension_numbers<[1], [0], [0], [1], [0, 0, 1, 1], [], []>} : vector<64x4xf32>, vector<4x16xf32>, vector<64x16xf32> -> vector<64x16xf32>
    %12 = arith.addf %5, %11 : vector<64x16xf32>
    %c1 = arith.constant 1 : index
    %c0_12 = arith.constant 0 : index
    %c0_13 = arith.constant 0 : index
    %13 = vector.load %arg2[%c1, %c0_12, %c0_13] : memref<9x64x256xf32, #tpu.memory_space<vmem>>, vector<1x64x256xf32>
    %14 = vector.shape_cast %13 : vector<1x64x256xf32> to vector<64x256xf32>
    %cst_14 = arith.constant dense<0.000000e+00> : vector<64x4xf32>
    %15 = tpu.matmul %14, %1, %cst_14 {dimension_numbers = #tpu.dot_dimension_numbers<[1], [0], [0], [1], [0, 0, 1, 1], [], []>} : vector<64x256xf32>, vector<256x4xf32>, vector<64x4xf32> -> vector<64x4xf32>
    %c1_15 = arith.constant 1 : index
    %c0_16 = arith.constant 0 : index
    %c0_17 = arith.constant 0 : index
    %16 = vector.load %arg3[%c1_15, %c0_16, %c0_17] : memref<9x4x16xf32, #tpu.memory_space<vmem>>, vector<1x4x16xf32>
    %17 = vector.shape_cast %16 : vector<1x4x16xf32> to vector<4x16xf32>
    %cst_18 = arith.constant dense<0.000000e+00> : vector<64x16xf32>
    %18 = tpu.matmul %15, %17, %cst_18 {dimension_numbers = #tpu.dot_dimension_numbers<[1], [0], [0], [1], [0, 0, 1, 1], [], []>} : vector<64x4xf32>, vector<4x16xf32>, vector<64x16xf32> -> vector<64x16xf32>
    %19 = arith.addf %12, %18 : vector<64x16xf32>
    %c2 = arith.constant 2 : index
    %c0_19 = arith.constant 0 : index
    %c0_20 = arith.constant 0 : index
    %20 = vector.load %arg2[%c2, %c0_19, %c0_20] : memref<9x64x256xf32, #tpu.memory_space<vmem>>, vector<1x64x256xf32>
    %21 = vector.shape_cast %20 : vector<1x64x256xf32> to vector<64x256xf32>
    %cst_21 = arith.constant dense<0.000000e+00> : vector<64x4xf32>
    %22 = tpu.matmul %21, %1, %cst_21 {dimension_numbers = #tpu.dot_dimension_numbers<[1], [0], [0], [1], [0, 0, 1, 1], [], []>} : vector<64x256xf32>, vector<256x4xf32>, vector<64x4xf32> -> vector<64x4xf32>
    %c2_22 = arith.constant 2 : index
    %c0_23 = arith.constant 0 : index
    %c0_24 = arith.constant 0 : index
    %23 = vector.load %arg3[%c2_22, %c0_23, %c0_24] : memref<9x4x16xf32, #tpu.memory_space<vmem>>, vector<1x4x16xf32>
    %24 = vector.shape_cast %23 : vector<1x4x16xf32> to vector<4x16xf32>
    %cst_25 = arith.constant dense<0.000000e+00> : vector<64x16xf32>
    %25 = tpu.matmul %22, %24, %cst_25 {dimension_numbers = #tpu.dot_dimension_numbers<[1], [0], [0], [1], [0, 0, 1, 1], [], []>} : vector<64x4xf32>, vector<4x16xf32>, vector<64x16xf32> -> vector<64x16xf32>
    %26 = arith.addf %19, %25 : vector<64x16xf32>
    %c3 = arith.constant 3 : index
    %c0_26 = arith.constant 0 : index
    %c0_27 = arith.constant 0 : index
    %27 = vector.load %arg2[%c3, %c0_26, %c0_27] : memref<9x64x256xf32, #tpu.memory_space<vmem>>, vector<1x64x256xf32>
    %28 = vector.shape_cast %27 : vector<1x64x256xf32> to vector<64x256xf32>
    %cst_28 = arith.constant dense<0.000000e+00> : vector<64x4xf32>
    %29 = tpu.matmul %28, %1, %cst_28 {dimension_numbers = #tpu.dot_dimension_numbers<[1], [0], [0], [1], [0, 0, 1, 1], [], []>} : vector<64x256xf32>, vector<256x4xf32>, vector<64x4xf32> -> vector<64x4xf32>
    %c3_29 = arith.constant 3 : index
    %c0_30 = arith.constant 0 : index
    %c0_31 = arith.constant 0 : index
    %30 = vector.load %arg3[%c3_29, %c0_30, %c0_31] : memref<9x4x16xf32, #tpu.memory_space<vmem>>, vector<1x4x16xf32>
    %31 = vector.shape_cast %30 : vector<1x4x16xf32> to vector<4x16xf32>
    %cst_32 = arith.constant dense<0.000000e+00> : vector<64x16xf32>
    %32 = tpu.matmul %29, %31, %cst_32 {dimension_numbers = #tpu.dot_dimension_numbers<[1], [0], [0], [1], [0, 0, 1, 1], [], []>} : vector<64x4xf32>, vector<4x16xf32>, vector<64x16xf32> -> vector<64x16xf32>
    %33 = arith.addf %26, %32 : vector<64x16xf32>
    %c4 = arith.constant 4 : index
    %c0_33 = arith.constant 0 : index
    %c0_34 = arith.constant 0 : index
    %34 = vector.load %arg2[%c4, %c0_33, %c0_34] : memref<9x64x256xf32, #tpu.memory_space<vmem>>, vector<1x64x256xf32>
    %35 = vector.shape_cast %34 : vector<1x64x256xf32> to vector<64x256xf32>
    %cst_35 = arith.constant dense<0.000000e+00> : vector<64x4xf32>
    %36 = tpu.matmul %35, %1, %cst_35 {dimension_numbers = #tpu.dot_dimension_numbers<[1], [0], [0], [1], [0, 0, 1, 1], [], []>} : vector<64x256xf32>, vector<256x4xf32>, vector<64x4xf32> -> vector<64x4xf32>
    %c4_36 = arith.constant 4 : index
    %c0_37 = arith.constant 0 : index
    %c0_38 = arith.constant 0 : index
    %37 = vector.load %arg3[%c4_36, %c0_37, %c0_38] : memref<9x4x16xf32, #tpu.memory_space<vmem>>, vector<1x4x16xf32>
    %38 = vector.shape_cast %37 : vector<1x4x16xf32> to vector<4x16xf32>
    %cst_39 = arith.constant dense<0.000000e+00> : vector<64x16xf32>
    %39 = tpu.matmul %36, %38, %cst_39 {dimension_numbers = #tpu.dot_dimension_numbers<[1], [0], [0], [1], [0, 0, 1, 1], [], []>} : vector<64x4xf32>, vector<4x16xf32>, vector<64x16xf32> -> vector<64x16xf32>
    %40 = arith.addf %33, %39 : vector<64x16xf32>
    %c5 = arith.constant 5 : index
    %c0_40 = arith.constant 0 : index
    %c0_41 = arith.constant 0 : index
    %41 = vector.load %arg2[%c5, %c0_40, %c0_41] : memref<9x64x256xf32, #tpu.memory_space<vmem>>, vector<1x64x256xf32>
    %42 = vector.shape_cast %41 : vector<1x64x256xf32> to vector<64x256xf32>
    %cst_42 = arith.constant dense<0.000000e+00> : vector<64x4xf32>
    %43 = tpu.matmul %42, %1, %cst_42 {dimension_numbers = #tpu.dot_dimension_numbers<[1], [0], [0], [1], [0, 0, 1, 1], [], []>} : vector<64x256xf32>, vector<256x4xf32>, vector<64x4xf32> -> vector<64x4xf32>
    %c5_43 = arith.constant 5 : index
    %c0_44 = arith.constant 0 : index
    %c0_45 = arith.constant 0 : index
    %44 = vector.load %arg3[%c5_43, %c0_44, %c0_45] : memref<9x4x16xf32, #tpu.memory_space<vmem>>, vector<1x4x16xf32>
    %45 = vector.shape_cast %44 : vector<1x4x16xf32> to vector<4x16xf32>
    %cst_46 = arith.constant dense<0.000000e+00> : vector<64x16xf32>
    %46 = tpu.matmul %43, %45, %cst_46 {dimension_numbers = #tpu.dot_dimension_numbers<[1], [0], [0], [1], [0, 0, 1, 1], [], []>} : vector<64x4xf32>, vector<4x16xf32>, vector<64x16xf32> -> vector<64x16xf32>
    %47 = arith.addf %40, %46 : vector<64x16xf32>
    %c6 = arith.constant 6 : index
    %c0_47 = arith.constant 0 : index
    %c0_48 = arith.constant 0 : index
    %48 = vector.load %arg2[%c6, %c0_47, %c0_48] : memref<9x64x256xf32, #tpu.memory_space<vmem>>, vector<1x64x256xf32>
    %49 = vector.shape_cast %48 : vector<1x64x256xf32> to vector<64x256xf32>
    %cst_49 = arith.constant dense<0.000000e+00> : vector<64x4xf32>
    %50 = tpu.matmul %49, %1, %cst_49 {dimension_numbers = #tpu.dot_dimension_numbers<[1], [0], [0], [1], [0, 0, 1, 1], [], []>} : vector<64x256xf32>, vector<256x4xf32>, vector<64x4xf32> -> vector<64x4xf32>
    %c6_50 = arith.constant 6 : index
    %c0_51 = arith.constant 0 : index
    %c0_52 = arith.constant 0 : index
    %51 = vector.load %arg3[%c6_50, %c0_51, %c0_52] : memref<9x4x16xf32, #tpu.memory_space<vmem>>, vector<1x4x16xf32>
    %52 = vector.shape_cast %51 : vector<1x4x16xf32> to vector<4x16xf32>
    %cst_53 = arith.constant dense<0.000000e+00> : vector<64x16xf32>
    %53 = tpu.matmul %50, %52, %cst_53 {dimension_numbers = #tpu.dot_dimension_numbers<[1], [0], [0], [1], [0, 0, 1, 1], [], []>} : vector<64x4xf32>, vector<4x16xf32>, vector<64x16xf32> -> vector<64x16xf32>
    %54 = arith.addf %47, %53 : vector<64x16xf32>
    %c7 = arith.constant 7 : index
    %c0_54 = arith.constant 0 : index
    %c0_55 = arith.constant 0 : index
    %55 = vector.load %arg2[%c7, %c0_54, %c0_55] : memref<9x64x256xf32, #tpu.memory_space<vmem>>, vector<1x64x256xf32>
    %56 = vector.shape_cast %55 : vector<1x64x256xf32> to vector<64x256xf32>
    %cst_56 = arith.constant dense<0.000000e+00> : vector<64x4xf32>
    %57 = tpu.matmul %56, %1, %cst_56 {dimension_numbers = #tpu.dot_dimension_numbers<[1], [0], [0], [1], [0, 0, 1, 1], [], []>} : vector<64x256xf32>, vector<256x4xf32>, vector<64x4xf32> -> vector<64x4xf32>
    %c7_57 = arith.constant 7 : index
    %c0_58 = arith.constant 0 : index
    %c0_59 = arith.constant 0 : index
    %58 = vector.load %arg3[%c7_57, %c0_58, %c0_59] : memref<9x4x16xf32, #tpu.memory_space<vmem>>, vector<1x4x16xf32>
    %59 = vector.shape_cast %58 : vector<1x4x16xf32> to vector<4x16xf32>
    %cst_60 = arith.constant dense<0.000000e+00> : vector<64x16xf32>
    %60 = tpu.matmul %57, %59, %cst_60 {dimension_numbers = #tpu.dot_dimension_numbers<[1], [0], [0], [1], [0, 0, 1, 1], [], []>} : vector<64x4xf32>, vector<4x16xf32>, vector<64x16xf32> -> vector<64x16xf32>
    %61 = arith.addf %54, %60 : vector<64x16xf32>
    %c8 = arith.constant 8 : index
    %c0_61 = arith.constant 0 : index
    %c0_62 = arith.constant 0 : index
    %62 = vector.load %arg2[%c8, %c0_61, %c0_62] : memref<9x64x256xf32, #tpu.memory_space<vmem>>, vector<1x64x256xf32>
    %63 = vector.shape_cast %62 : vector<1x64x256xf32> to vector<64x256xf32>
    %cst_63 = arith.constant dense<0.000000e+00> : vector<64x4xf32>
    %64 = tpu.matmul %63, %1, %cst_63 {dimension_numbers = #tpu.dot_dimension_numbers<[1], [0], [0], [1], [0, 0, 1, 1], [], []>} : vector<64x256xf32>, vector<256x4xf32>, vector<64x4xf32> -> vector<64x4xf32>
    %c8_64 = arith.constant 8 : index
    %c0_65 = arith.constant 0 : index
    %c0_66 = arith.constant 0 : index
    %65 = vector.load %arg3[%c8_64, %c0_65, %c0_66] : memref<9x4x16xf32, #tpu.memory_space<vmem>>, vector<1x4x16xf32>
    %66 = vector.shape_cast %65 : vector<1x4x16xf32> to vector<4x16xf32>
    %cst_67 = arith.constant dense<0.000000e+00> : vector<64x16xf32>
    %67 = tpu.matmul %64, %66, %cst_67 {dimension_numbers = #tpu.dot_dimension_numbers<[1], [0], [0], [1], [0, 0, 1, 1], [], []>} : vector<64x4xf32>, vector<4x16xf32>, vector<64x16xf32> -> vector<64x16xf32>
    %68 = arith.addf %61, %67 : vector<64x16xf32>
    %69 = arith.negf %68 : vector<64x16xf32>
    %70 = math.exp %69 : vector<64x16xf32>
    %cst_68 = arith.constant 1.000000e+00 : f32
    %71 = vector.broadcast %cst_68 : f32 to vector<64x16xf32>
    %72 = arith.addf %71, %70 : vector<64x16xf32>
    %73 = arith.divf %71, %72 : vector<64x16xf32>
    %74 = arith.mulf %68, %73 : vector<64x16xf32>
    %cst_69 = arith.constant 0.000000e+00 : f32
    %75 = vector.broadcast %cst_69 : f32 to vector<16x32xf32>
    %c0_70 = arith.constant 0 : index
    %c0_71 = arith.constant 0 : index
    %76 = vector.load %arg7[%c0_70, %c0_71] : memref<1x32xf32, #tpu.memory_space<vmem>>, vector<1x32xf32>
    %77 = vector.broadcast %76 : vector<1x32xf32> to vector<16x32xf32>
    %78 = arith.addf %75, %77 : vector<16x32xf32>
    %c0_72 = arith.constant 0 : index
    %c0_73 = arith.constant 0 : index
    %c0_74 = arith.constant 0 : index
    %79 = vector.load %arg5[%c0_72, %c0_73, %c0_74] : memref<9x16x64xf32, #tpu.memory_space<vmem>>, vector<1x16x64xf32>
    %80 = vector.shape_cast %79 : vector<1x16x64xf32> to vector<16x64xf32>
    %cst_75 = arith.constant dense<0.000000e+00> : vector<16x16xf32>
    %81 = tpu.matmul %80, %74, %cst_75 {dimension_numbers = #tpu.dot_dimension_numbers<[1], [0], [0], [1], [0, 0, 1, 1], [], []>} : vector<16x64xf32>, vector<64x16xf32>, vector<16x16xf32> -> vector<16x16xf32>
    %c0_76 = arith.constant 0 : index
    %c0_77 = arith.constant 0 : index
    %c0_78 = arith.constant 0 : index
    %82 = vector.load %arg6[%c0_76, %c0_77, %c0_78] : memref<9x16x32xf32, #tpu.memory_space<vmem>>, vector<1x16x32xf32>
    %83 = vector.shape_cast %82 : vector<1x16x32xf32> to vector<16x32xf32>
    %cst_79 = arith.constant dense<0.000000e+00> : vector<16x32xf32>
    %84 = tpu.matmul %81, %83, %cst_79 {dimension_numbers = #tpu.dot_dimension_numbers<[1], [0], [0], [1], [0, 0, 1, 1], [], []>} : vector<16x16xf32>, vector<16x32xf32>, vector<16x32xf32> -> vector<16x32xf32>
    %85 = arith.addf %78, %84 : vector<16x32xf32>
    %c1_80 = arith.constant 1 : index
    %c0_81 = arith.constant 0 : index
    %c0_82 = arith.constant 0 : index
    %86 = vector.load %arg5[%c1_80, %c0_81, %c0_82] : memref<9x16x64xf32, #tpu.memory_space<vmem>>, vector<1x16x64xf32>
    %87 = vector.shape_cast %86 : vector<1x16x64xf32> to vector<16x64xf32>
    %cst_83 = arith.constant dense<0.000000e+00> : vector<16x16xf32>
    %88 = tpu.matmul %87, %74, %cst_83 {dimension_numbers = #tpu.dot_dimension_numbers<[1], [0], [0], [1], [0, 0, 1, 1], [], []>} : vector<16x64xf32>, vector<64x16xf32>, vector<16x16xf32> -> vector<16x16xf32>
    %c1_84 = arith.constant 1 : index
    %c0_85 = arith.constant 0 : index
    %c0_86 = arith.constant 0 : index
    %89 = vector.load %arg6[%c1_84, %c0_85, %c0_86] : memref<9x16x32xf32, #tpu.memory_space<vmem>>, vector<1x16x32xf32>
    %90 = vector.shape_cast %89 : vector<1x16x32xf32> to vector<16x32xf32>
    %cst_87 = arith.constant dense<0.000000e+00> : vector<16x32xf32>
    %91 = tpu.matmul %88, %90, %cst_87 {dimension_numbers = #tpu.dot_dimension_numbers<[1], [0], [0], [1], [0, 0, 1, 1], [], []>} : vector<16x16xf32>, vector<16x32xf32>, vector<16x32xf32> -> vector<16x32xf32>
    %92 = arith.addf %85, %91 : vector<16x32xf32>
    %c2_88 = arith.constant 2 : index
    %c0_89 = arith.constant 0 : index
    %c0_90 = arith.constant 0 : index
    %93 = vector.load %arg5[%c2_88, %c0_89, %c0_90] : memref<9x16x64xf32, #tpu.memory_space<vmem>>, vector<1x16x64xf32>
    %94 = vector.shape_cast %93 : vector<1x16x64xf32> to vector<16x64xf32>
    %cst_91 = arith.constant dense<0.000000e+00> : vector<16x16xf32>
    %95 = tpu.matmul %94, %74, %cst_91 {dimension_numbers = #tpu.dot_dimension_numbers<[1], [0], [0], [1], [0, 0, 1, 1], [], []>} : vector<16x64xf32>, vector<64x16xf32>, vector<16x16xf32> -> vector<16x16xf32>
    %c2_92 = arith.constant 2 : index
    %c0_93 = arith.constant 0 : index
    %c0_94 = arith.constant 0 : index
    %96 = vector.load %arg6[%c2_92, %c0_93, %c0_94] : memref<9x16x32xf32, #tpu.memory_space<vmem>>, vector<1x16x32xf32>
    %97 = vector.shape_cast %96 : vector<1x16x32xf32> to vector<16x32xf32>
    %cst_95 = arith.constant dense<0.000000e+00> : vector<16x32xf32>
    %98 = tpu.matmul %95, %97, %cst_95 {dimension_numbers = #tpu.dot_dimension_numbers<[1], [0], [0], [1], [0, 0, 1, 1], [], []>} : vector<16x16xf32>, vector<16x32xf32>, vector<16x32xf32> -> vector<16x32xf32>
    %99 = arith.addf %92, %98 : vector<16x32xf32>
    %c3_96 = arith.constant 3 : index
    %c0_97 = arith.constant 0 : index
    %c0_98 = arith.constant 0 : index
    %100 = vector.load %arg5[%c3_96, %c0_97, %c0_98] : memref<9x16x64xf32, #tpu.memory_space<vmem>>, vector<1x16x64xf32>
    %101 = vector.shape_cast %100 : vector<1x16x64xf32> to vector<16x64xf32>
    %cst_99 = arith.constant dense<0.000000e+00> : vector<16x16xf32>
    %102 = tpu.matmul %101, %74, %cst_99 {dimension_numbers = #tpu.dot_dimension_numbers<[1], [0], [0], [1], [0, 0, 1, 1], [], []>} : vector<16x64xf32>, vector<64x16xf32>, vector<16x16xf32> -> vector<16x16xf32>
    %c3_100 = arith.constant 3 : index
    %c0_101 = arith.constant 0 : index
    %c0_102 = arith.constant 0 : index
    %103 = vector.load %arg6[%c3_100, %c0_101, %c0_102] : memref<9x16x32xf32, #tpu.memory_space<vmem>>, vector<1x16x32xf32>
    %104 = vector.shape_cast %103 : vector<1x16x32xf32> to vector<16x32xf32>
    %cst_103 = arith.constant dense<0.000000e+00> : vector<16x32xf32>
    %105 = tpu.matmul %102, %104, %cst_103 {dimension_numbers = #tpu.dot_dimension_numbers<[1], [0], [0], [1], [0, 0, 1, 1], [], []>} : vector<16x16xf32>, vector<16x32xf32>, vector<16x32xf32> -> vector<16x32xf32>
    %106 = arith.addf %99, %105 : vector<16x32xf32>
    %c4_104 = arith.constant 4 : index
    %c0_105 = arith.constant 0 : index
    %c0_106 = arith.constant 0 : index
    %107 = vector.load %arg5[%c4_104, %c0_105, %c0_106] : memref<9x16x64xf32, #tpu.memory_space<vmem>>, vector<1x16x64xf32>
    %108 = vector.shape_cast %107 : vector<1x16x64xf32> to vector<16x64xf32>
    %cst_107 = arith.constant dense<0.000000e+00> : vector<16x16xf32>
    %109 = tpu.matmul %108, %74, %cst_107 {dimension_numbers = #tpu.dot_dimension_numbers<[1], [0], [0], [1], [0, 0, 1, 1], [], []>} : vector<16x64xf32>, vector<64x16xf32>, vector<16x16xf32> -> vector<16x16xf32>
    %c4_108 = arith.constant 4 : index
    %c0_109 = arith.constant 0 : index
    %c0_110 = arith.constant 0 : index
    %110 = vector.load %arg6[%c4_108, %c0_109, %c0_110] : memref<9x16x32xf32, #tpu.memory_space<vmem>>, vector<1x16x32xf32>
    %111 = vector.shape_cast %110 : vector<1x16x32xf32> to vector<16x32xf32>
    %cst_111 = arith.constant dense<0.000000e+00> : vector<16x32xf32>
    %112 = tpu.matmul %109, %111, %cst_111 {dimension_numbers = #tpu.dot_dimension_numbers<[1], [0], [0], [1], [0, 0, 1, 1], [], []>} : vector<16x16xf32>, vector<16x32xf32>, vector<16x32xf32> -> vector<16x32xf32>
    %113 = arith.addf %106, %112 : vector<16x32xf32>
    %c5_112 = arith.constant 5 : index
    %c0_113 = arith.constant 0 : index
    %c0_114 = arith.constant 0 : index
    %114 = vector.load %arg5[%c5_112, %c0_113, %c0_114] : memref<9x16x64xf32, #tpu.memory_space<vmem>>, vector<1x16x64xf32>
    %115 = vector.shape_cast %114 : vector<1x16x64xf32> to vector<16x64xf32>
    %cst_115 = arith.constant dense<0.000000e+00> : vector<16x16xf32>
    %116 = tpu.matmul %115, %74, %cst_115 {dimension_numbers = #tpu.dot_dimension_numbers<[1], [0], [0], [1], [0, 0, 1, 1], [], []>} : vector<16x64xf32>, vector<64x16xf32>, vector<16x16xf32> -> vector<16x16xf32>
    %c5_116 = arith.constant 5 : index
    %c0_117 = arith.constant 0 : index
    %c0_118 = arith.constant 0 : index
    %117 = vector.load %arg6[%c5_116, %c0_117, %c0_118] : memref<9x16x32xf32, #tpu.memory_space<vmem>>, vector<1x16x32xf32>
    %118 = vector.shape_cast %117 : vector<1x16x32xf32> to vector<16x32xf32>
    %cst_119 = arith.constant dense<0.000000e+00> : vector<16x32xf32>
    %119 = tpu.matmul %116, %118, %cst_119 {dimension_numbers = #tpu.dot_dimension_numbers<[1], [0], [0], [1], [0, 0, 1, 1], [], []>} : vector<16x16xf32>, vector<16x32xf32>, vector<16x32xf32> -> vector<16x32xf32>
    %120 = arith.addf %113, %119 : vector<16x32xf32>
    %c6_120 = arith.constant 6 : index
    %c0_121 = arith.constant 0 : index
    %c0_122 = arith.constant 0 : index
    %121 = vector.load %arg5[%c6_120, %c0_121, %c0_122] : memref<9x16x64xf32, #tpu.memory_space<vmem>>, vector<1x16x64xf32>
    %122 = vector.shape_cast %121 : vector<1x16x64xf32> to vector<16x64xf32>
    %cst_123 = arith.constant dense<0.000000e+00> : vector<16x16xf32>
    %123 = tpu.matmul %122, %74, %cst_123 {dimension_numbers = #tpu.dot_dimension_numbers<[1], [0], [0], [1], [0, 0, 1, 1], [], []>} : vector<16x64xf32>, vector<64x16xf32>, vector<16x16xf32> -> vector<16x16xf32>
    %c6_124 = arith.constant 6 : index
    %c0_125 = arith.constant 0 : index
    %c0_126 = arith.constant 0 : index
    %124 = vector.load %arg6[%c6_124, %c0_125, %c0_126] : memref<9x16x32xf32, #tpu.memory_space<vmem>>, vector<1x16x32xf32>
    %125 = vector.shape_cast %124 : vector<1x16x32xf32> to vector<16x32xf32>
    %cst_127 = arith.constant dense<0.000000e+00> : vector<16x32xf32>
    %126 = tpu.matmul %123, %125, %cst_127 {dimension_numbers = #tpu.dot_dimension_numbers<[1], [0], [0], [1], [0, 0, 1, 1], [], []>} : vector<16x16xf32>, vector<16x32xf32>, vector<16x32xf32> -> vector<16x32xf32>
    %127 = arith.addf %120, %126 : vector<16x32xf32>
    %c7_128 = arith.constant 7 : index
    %c0_129 = arith.constant 0 : index
    %c0_130 = arith.constant 0 : index
    %128 = vector.load %arg5[%c7_128, %c0_129, %c0_130] : memref<9x16x64xf32, #tpu.memory_space<vmem>>, vector<1x16x64xf32>
    %129 = vector.shape_cast %128 : vector<1x16x64xf32> to vector<16x64xf32>
    %cst_131 = arith.constant dense<0.000000e+00> : vector<16x16xf32>
    %130 = tpu.matmul %129, %74, %cst_131 {dimension_numbers = #tpu.dot_dimension_numbers<[1], [0], [0], [1], [0, 0, 1, 1], [], []>} : vector<16x64xf32>, vector<64x16xf32>, vector<16x16xf32> -> vector<16x16xf32>
    %c7_132 = arith.constant 7 : index
    %c0_133 = arith.constant 0 : index
    %c0_134 = arith.constant 0 : index
    %131 = vector.load %arg6[%c7_132, %c0_133, %c0_134] : memref<9x16x32xf32, #tpu.memory_space<vmem>>, vector<1x16x32xf32>
    %132 = vector.shape_cast %131 : vector<1x16x32xf32> to vector<16x32xf32>
    %cst_135 = arith.constant dense<0.000000e+00> : vector<16x32xf32>
    %133 = tpu.matmul %130, %132, %cst_135 {dimension_numbers = #tpu.dot_dimension_numbers<[1], [0], [0], [1], [0, 0, 1, 1], [], []>} : vector<16x16xf32>, vector<16x32xf32>, vector<16x32xf32> -> vector<16x32xf32>
    %134 = arith.addf %127, %133 : vector<16x32xf32>
    %c8_136 = arith.constant 8 : index
    %c0_137 = arith.constant 0 : index
    %c0_138 = arith.constant 0 : index
    %135 = vector.load %arg5[%c8_136, %c0_137, %c0_138] : memref<9x16x64xf32, #tpu.memory_space<vmem>>, vector<1x16x64xf32>
    %136 = vector.shape_cast %135 : vector<1x16x64xf32> to vector<16x64xf32>
    %cst_139 = arith.constant dense<0.000000e+00> : vector<16x16xf32>
    %137 = tpu.matmul %136, %74, %cst_139 {dimension_numbers = #tpu.dot_dimension_numbers<[1], [0], [0], [1], [0, 0, 1, 1], [], []>} : vector<16x64xf32>, vector<64x16xf32>, vector<16x16xf32> -> vector<16x16xf32>
    %c8_140 = arith.constant 8 : index
    %c0_141 = arith.constant 0 : index
    %c0_142 = arith.constant 0 : index
    %138 = vector.load %arg6[%c8_140, %c0_141, %c0_142] : memref<9x16x32xf32, #tpu.memory_space<vmem>>, vector<1x16x32xf32>
    %139 = vector.shape_cast %138 : vector<1x16x32xf32> to vector<16x32xf32>
    %cst_143 = arith.constant dense<0.000000e+00> : vector<16x32xf32>
    %140 = tpu.matmul %137, %139, %cst_143 {dimension_numbers = #tpu.dot_dimension_numbers<[1], [0], [0], [1], [0, 0, 1, 1], [], []>} : vector<16x16xf32>, vector<16x32xf32>, vector<16x32xf32> -> vector<16x32xf32>
    %141 = arith.addf %134, %140 : vector<16x32xf32>
    %142 = arith.negf %141 : vector<16x32xf32>
    %143 = math.exp %142 : vector<16x32xf32>
    %cst_144 = arith.constant 1.000000e+00 : f32
    %144 = vector.broadcast %cst_144 : f32 to vector<16x32xf32>
    %145 = arith.addf %144, %143 : vector<16x32xf32>
    %146 = arith.divf %144, %145 : vector<16x32xf32>
    %147 = arith.mulf %141, %146 : vector<16x32xf32>
    %cst_145 = arith.constant 0.000000e+00 : f32
    %148 = vector.broadcast %cst_145 : f32 to vector<64x16xf32>
    %c0_146 = arith.constant 0 : index
    %c0_147 = arith.constant 0 : index
    %149 = vector.load %arg10[%c0_146, %c0_147] : memref<1x16xf32, #tpu.memory_space<vmem>>, vector<1x16xf32>
    %150 = vector.broadcast %149 : vector<1x16xf32> to vector<64x16xf32>
    %151 = arith.addf %148, %150 : vector<64x16xf32>
    %c0_148 = arith.constant 0 : index
    %c0_149 = arith.constant 0 : index
    %c0_150 = arith.constant 0 : index
    %152 = vector.load %arg8[%c0_148, %c0_149, %c0_150] : memref<9x64x16xf32, #tpu.memory_space<vmem>>, vector<1x64x16xf32>
    %153 = vector.shape_cast %152 : vector<1x64x16xf32> to vector<64x16xf32>
    %cst_151 = arith.constant dense<0.000000e+00> : vector<64x32xf32>
    %154 = tpu.matmul %153, %147, %cst_151 {dimension_numbers = #tpu.dot_dimension_numbers<[1], [0], [0], [1], [0, 0, 1, 1], [], []>} : vector<64x16xf32>, vector<16x32xf32>, vector<64x32xf32> -> vector<64x32xf32>
    %c0_152 = arith.constant 0 : index
    %c0_153 = arith.constant 0 : index
    %c0_154 = arith.constant 0 : index
    %155 = vector.load %arg9[%c0_152, %c0_153, %c0_154] : memref<9x32x16xf32, #tpu.memory_space<vmem>>, vector<1x32x16xf32>
    %156 = vector.shape_cast %155 : vector<1x32x16xf32> to vector<32x16xf32>
    %cst_155 = arith.constant dense<0.000000e+00> : vector<64x16xf32>
    %157 = tpu.matmul %154, %156, %cst_155 {dimension_numbers = #tpu.dot_dimension_numbers<[1], [0], [0], [1], [0, 0, 1, 1], [], []>} : vector<64x32xf32>, vector<32x16xf32>, vector<64x16xf32> -> vector<64x16xf32>
    %158 = arith.addf %151, %157 : vector<64x16xf32>
    %c1_156 = arith.constant 1 : index
    %c0_157 = arith.constant 0 : index
    %c0_158 = arith.constant 0 : index
    %159 = vector.load %arg8[%c1_156, %c0_157, %c0_158] : memref<9x64x16xf32, #tpu.memory_space<vmem>>, vector<1x64x16xf32>
    %160 = vector.shape_cast %159 : vector<1x64x16xf32> to vector<64x16xf32>
    %cst_159 = arith.constant dense<0.000000e+00> : vector<64x32xf32>
    %161 = tpu.matmul %160, %147, %cst_159 {dimension_numbers = #tpu.dot_dimension_numbers<[1], [0], [0], [1], [0, 0, 1, 1], [], []>} : vector<64x16xf32>, vector<16x32xf32>, vector<64x32xf32> -> vector<64x32xf32>
    %c1_160 = arith.constant 1 : index
    %c0_161 = arith.constant 0 : index
    %c0_162 = arith.constant 0 : index
    %162 = vector.load %arg9[%c1_160, %c0_161, %c0_162] : memref<9x32x16xf32, #tpu.memory_space<vmem>>, vector<1x32x16xf32>
    %163 = vector.shape_cast %162 : vector<1x32x16xf32> to vector<32x16xf32>
    %cst_163 = arith.constant dense<0.000000e+00> : vector<64x16xf32>
    %164 = tpu.matmul %161, %163, %cst_163 {dimension_numbers = #tpu.dot_dimension_numbers<[1], [0], [0], [1], [0, 0, 1, 1], [], []>} : vector<64x32xf32>, vector<32x16xf32>, vector<64x16xf32> -> vector<64x16xf32>
    %165 = arith.addf %158, %164 : vector<64x16xf32>
    %c2_164 = arith.constant 2 : index
    %c0_165 = arith.constant 0 : index
    %c0_166 = arith.constant 0 : index
    %166 = vector.load %arg8[%c2_164, %c0_165, %c0_166] : memref<9x64x16xf32, #tpu.memory_space<vmem>>, vector<1x64x16xf32>
    %167 = vector.shape_cast %166 : vector<1x64x16xf32> to vector<64x16xf32>
    %cst_167 = arith.constant dense<0.000000e+00> : vector<64x32xf32>
    %168 = tpu.matmul %167, %147, %cst_167 {dimension_numbers = #tpu.dot_dimension_numbers<[1], [0], [0], [1], [0, 0, 1, 1], [], []>} : vector<64x16xf32>, vector<16x32xf32>, vector<64x32xf32> -> vector<64x32xf32>
    %c2_168 = arith.constant 2 : index
    %c0_169 = arith.constant 0 : index
    %c0_170 = arith.constant 0 : index
    %169 = vector.load %arg9[%c2_168, %c0_169, %c0_170] : memref<9x32x16xf32, #tpu.memory_space<vmem>>, vector<1x32x16xf32>
    %170 = vector.shape_cast %169 : vector<1x32x16xf32> to vector<32x16xf32>
    %cst_171 = arith.constant dense<0.000000e+00> : vector<64x16xf32>
    %171 = tpu.matmul %168, %170, %cst_171 {dimension_numbers = #tpu.dot_dimension_numbers<[1], [0], [0], [1], [0, 0, 1, 1], [], []>} : vector<64x32xf32>, vector<32x16xf32>, vector<64x16xf32> -> vector<64x16xf32>
    %172 = arith.addf %165, %171 : vector<64x16xf32>
    %c3_172 = arith.constant 3 : index
    %c0_173 = arith.constant 0 : index
    %c0_174 = arith.constant 0 : index
    %173 = vector.load %arg8[%c3_172, %c0_173, %c0_174] : memref<9x64x16xf32, #tpu.memory_space<vmem>>, vector<1x64x16xf32>
    %174 = vector.shape_cast %173 : vector<1x64x16xf32> to vector<64x16xf32>
    %cst_175 = arith.constant dense<0.000000e+00> : vector<64x32xf32>
    %175 = tpu.matmul %174, %147, %cst_175 {dimension_numbers = #tpu.dot_dimension_numbers<[1], [0], [0], [1], [0, 0, 1, 1], [], []>} : vector<64x16xf32>, vector<16x32xf32>, vector<64x32xf32> -> vector<64x32xf32>
    %c3_176 = arith.constant 3 : index
    %c0_177 = arith.constant 0 : index
    %c0_178 = arith.constant 0 : index
    %176 = vector.load %arg9[%c3_176, %c0_177, %c0_178] : memref<9x32x16xf32, #tpu.memory_space<vmem>>, vector<1x32x16xf32>
    %177 = vector.shape_cast %176 : vector<1x32x16xf32> to vector<32x16xf32>
    %cst_179 = arith.constant dense<0.000000e+00> : vector<64x16xf32>
    %178 = tpu.matmul %175, %177, %cst_179 {dimension_numbers = #tpu.dot_dimension_numbers<[1], [0], [0], [1], [0, 0, 1, 1], [], []>} : vector<64x32xf32>, vector<32x16xf32>, vector<64x16xf32> -> vector<64x16xf32>
    %179 = arith.addf %172, %178 : vector<64x16xf32>
    %c4_180 = arith.constant 4 : index
    %c0_181 = arith.constant 0 : index
    %c0_182 = arith.constant 0 : index
    %180 = vector.load %arg8[%c4_180, %c0_181, %c0_182] : memref<9x64x16xf32, #tpu.memory_space<vmem>>, vector<1x64x16xf32>
    %181 = vector.shape_cast %180 : vector<1x64x16xf32> to vector<64x16xf32>
    %cst_183 = arith.constant dense<0.000000e+00> : vector<64x32xf32>
    %182 = tpu.matmul %181, %147, %cst_183 {dimension_numbers = #tpu.dot_dimension_numbers<[1], [0], [0], [1], [0, 0, 1, 1], [], []>} : vector<64x16xf32>, vector<16x32xf32>, vector<64x32xf32> -> vector<64x32xf32>
    %c4_184 = arith.constant 4 : index
    %c0_185 = arith.constant 0 : index
    %c0_186 = arith.constant 0 : index
    %183 = vector.load %arg9[%c4_184, %c0_185, %c0_186] : memref<9x32x16xf32, #tpu.memory_space<vmem>>, vector<1x32x16xf32>
    %184 = vector.shape_cast %183 : vector<1x32x16xf32> to vector<32x16xf32>
    %cst_187 = arith.constant dense<0.000000e+00> : vector<64x16xf32>
    %185 = tpu.matmul %182, %184, %cst_187 {dimension_numbers = #tpu.dot_dimension_numbers<[1], [0], [0], [1], [0, 0, 1, 1], [], []>} : vector<64x32xf32>, vector<32x16xf32>, vector<64x16xf32> -> vector<64x16xf32>
    %186 = arith.addf %179, %185 : vector<64x16xf32>
    %c5_188 = arith.constant 5 : index
    %c0_189 = arith.constant 0 : index
    %c0_190 = arith.constant 0 : index
    %187 = vector.load %arg8[%c5_188, %c0_189, %c0_190] : memref<9x64x16xf32, #tpu.memory_space<vmem>>, vector<1x64x16xf32>
    %188 = vector.shape_cast %187 : vector<1x64x16xf32> to vector<64x16xf32>
    %cst_191 = arith.constant dense<0.000000e+00> : vector<64x32xf32>
    %189 = tpu.matmul %188, %147, %cst_191 {dimension_numbers = #tpu.dot_dimension_numbers<[1], [0], [0], [1], [0, 0, 1, 1], [], []>} : vector<64x16xf32>, vector<16x32xf32>, vector<64x32xf32> -> vector<64x32xf32>
    %c5_192 = arith.constant 5 : index
    %c0_193 = arith.constant 0 : index
    %c0_194 = arith.constant 0 : index
    %190 = vector.load %arg9[%c5_192, %c0_193, %c0_194] : memref<9x32x16xf32, #tpu.memory_space<vmem>>, vector<1x32x16xf32>
    %191 = vector.shape_cast %190 : vector<1x32x16xf32> to vector<32x16xf32>
    %cst_195 = arith.constant dense<0.000000e+00> : vector<64x16xf32>
    %192 = tpu.matmul %189, %191, %cst_195 {dimension_numbers = #tpu.dot_dimension_numbers<[1], [0], [0], [1], [0, 0, 1, 1], [], []>} : vector<64x32xf32>, vector<32x16xf32>, vector<64x16xf32> -> vector<64x16xf32>
    %193 = arith.addf %186, %192 : vector<64x16xf32>
    %c6_196 = arith.constant 6 : index
    %c0_197 = arith.constant 0 : index
    %c0_198 = arith.constant 0 : index
    %194 = vector.load %arg8[%c6_196, %c0_197, %c0_198] : memref<9x64x16xf32, #tpu.memory_space<vmem>>, vector<1x64x16xf32>
    %195 = vector.shape_cast %194 : vector<1x64x16xf32> to vector<64x16xf32>
    %cst_199 = arith.constant dense<0.000000e+00> : vector<64x32xf32>
    %196 = tpu.matmul %195, %147, %cst_199 {dimension_numbers = #tpu.dot_dimension_numbers<[1], [0], [0], [1], [0, 0, 1, 1], [], []>} : vector<64x16xf32>, vector<16x32xf32>, vector<64x32xf32> -> vector<64x32xf32>
    %c6_200 = arith.constant 6 : index
    %c0_201 = arith.constant 0 : index
    %c0_202 = arith.constant 0 : index
    %197 = vector.load %arg9[%c6_200, %c0_201, %c0_202] : memref<9x32x16xf32, #tpu.memory_space<vmem>>, vector<1x32x16xf32>
    %198 = vector.shape_cast %197 : vector<1x32x16xf32> to vector<32x16xf32>
    %cst_203 = arith.constant dense<0.000000e+00> : vector<64x16xf32>
    %199 = tpu.matmul %196, %198, %cst_203 {dimension_numbers = #tpu.dot_dimension_numbers<[1], [0], [0], [1], [0, 0, 1, 1], [], []>} : vector<64x32xf32>, vector<32x16xf32>, vector<64x16xf32> -> vector<64x16xf32>
    %200 = arith.addf %193, %199 : vector<64x16xf32>
    %c7_204 = arith.constant 7 : index
    %c0_205 = arith.constant 0 : index
    %c0_206 = arith.constant 0 : index
    %201 = vector.load %arg8[%c7_204, %c0_205, %c0_206] : memref<9x64x16xf32, #tpu.memory_space<vmem>>, vector<1x64x16xf32>
    %202 = vector.shape_cast %201 : vector<1x64x16xf32> to vector<64x16xf32>
    %cst_207 = arith.constant dense<0.000000e+00> : vector<64x32xf32>
    %203 = tpu.matmul %202, %147, %cst_207 {dimension_numbers = #tpu.dot_dimension_numbers<[1], [0], [0], [1], [0, 0, 1, 1], [], []>} : vector<64x16xf32>, vector<16x32xf32>, vector<64x32xf32> -> vector<64x32xf32>
    %c7_208 = arith.constant 7 : index
    %c0_209 = arith.constant 0 : index
    %c0_210 = arith.constant 0 : index
    %204 = vector.load %arg9[%c7_208, %c0_209, %c0_210] : memref<9x32x16xf32, #tpu.memory_space<vmem>>, vector<1x32x16xf32>
    %205 = vector.shape_cast %204 : vector<1x32x16xf32> to vector<32x16xf32>
    %cst_211 = arith.constant dense<0.000000e+00> : vector<64x16xf32>
    %206 = tpu.matmul %203, %205, %cst_211 {dimension_numbers = #tpu.dot_dimension_numbers<[1], [0], [0], [1], [0, 0, 1, 1], [], []>} : vector<64x32xf32>, vector<32x16xf32>, vector<64x16xf32> -> vector<64x16xf32>
    %207 = arith.addf %200, %206 : vector<64x16xf32>
    %c8_212 = arith.constant 8 : index
    %c0_213 = arith.constant 0 : index
    %c0_214 = arith.constant 0 : index
    %208 = vector.load %arg8[%c8_212, %c0_213, %c0_214] : memref<9x64x16xf32, #tpu.memory_space<vmem>>, vector<1x64x16xf32>
    %209 = vector.shape_cast %208 : vector<1x64x16xf32> to vector<64x16xf32>
    %cst_215 = arith.constant dense<0.000000e+00> : vector<64x32xf32>
    %210 = tpu.matmul %209, %147, %cst_215 {dimension_numbers = #tpu.dot_dimension_numbers<[1], [0], [0], [1], [0, 0, 1, 1], [], []>} : vector<64x16xf32>, vector<16x32xf32>, vector<64x32xf32> -> vector<64x32xf32>
    %c8_216 = arith.constant 8 : index
    %c0_217 = arith.constant 0 : index
    %c0_218 = arith.constant 0 : index
    %211 = vector.load %arg9[%c8_216, %c0_217, %c0_218] : memref<9x32x16xf32, #tpu.memory_space<vmem>>, vector<1x32x16xf32>
    %212 = vector.shape_cast %211 : vector<1x32x16xf32> to vector<32x16xf32>
    %cst_219 = arith.constant dense<0.000000e+00> : vector<64x16xf32>
    %213 = tpu.matmul %210, %212, %cst_219 {dimension_numbers = #tpu.dot_dimension_numbers<[1], [0], [0], [1], [0, 0, 1, 1], [], []>} : vector<64x32xf32>, vector<32x16xf32>, vector<64x16xf32> -> vector<64x16xf32>
    %214 = arith.addf %207, %213 : vector<64x16xf32>
    %215 = arith.negf %214 : vector<64x16xf32>
    %216 = math.exp %215 : vector<64x16xf32>
    %cst_220 = arith.constant 1.000000e+00 : f32
    %217 = vector.broadcast %cst_220 : f32 to vector<64x16xf32>
    %218 = arith.addf %217, %216 : vector<64x16xf32>
    %219 = arith.divf %217, %218 : vector<64x16xf32>
    %220 = arith.mulf %214, %219 : vector<64x16xf32>
    %cst_221 = arith.constant 0.000000e+00 : f32
    %221 = vector.broadcast %cst_221 : f32 to vector<256x4xf32>
    %c0_222 = arith.constant 0 : index
    %c0_223 = arith.constant 0 : index
    %222 = vector.load %arg13[%c0_222, %c0_223] : memref<1x4xf32, #tpu.memory_space<vmem>>, vector<1x4xf32>
    %223 = vector.broadcast %222 : vector<1x4xf32> to vector<256x4xf32>
    %224 = arith.addf %221, %223 : vector<256x4xf32>
    %c0_224 = arith.constant 0 : index
    %c0_225 = arith.constant 0 : index
    %c0_226 = arith.constant 0 : index
    %225 = vector.load %arg11[%c0_224, %c0_225, %c0_226] : memref<9x256x64xf32, #tpu.memory_space<vmem>>, vector<1x256x64xf32>
    %226 = vector.shape_cast %225 : vector<1x256x64xf32> to vector<256x64xf32>
    %cst_227 = arith.constant dense<0.000000e+00> : vector<256x16xf32>
    %227 = tpu.matmul %226, %220, %cst_227 {dimension_numbers = #tpu.dot_dimension_numbers<[1], [0], [0], [1], [0, 0, 1, 1], [], []>} : vector<256x64xf32>, vector<64x16xf32>, vector<256x16xf32> -> vector<256x16xf32>
    %c0_228 = arith.constant 0 : index
    %c0_229 = arith.constant 0 : index
    %c0_230 = arith.constant 0 : index
    %228 = vector.load %arg12[%c0_228, %c0_229, %c0_230] : memref<9x16x4xf32, #tpu.memory_space<vmem>>, vector<1x16x4xf32>
    %229 = vector.shape_cast %228 : vector<1x16x4xf32> to vector<16x4xf32>
    %cst_231 = arith.constant dense<0.000000e+00> : vector<256x4xf32>
    %230 = tpu.matmul %227, %229, %cst_231 {dimension_numbers = #tpu.dot_dimension_numbers<[1], [0], [0], [1], [0, 0, 1, 1], [], []>} : vector<256x16xf32>, vector<16x4xf32>, vector<256x4xf32> -> vector<256x4xf32>
    %231 = arith.addf %224, %230 : vector<256x4xf32>
    %c1_232 = arith.constant 1 : index
    %c0_233 = arith.constant 0 : index
    %c0_234 = arith.constant 0 : index
    %232 = vector.load %arg11[%c1_232, %c0_233, %c0_234] : memref<9x256x64xf32, #tpu.memory_space<vmem>>, vector<1x256x64xf32>
    %233 = vector.shape_cast %232 : vector<1x256x64xf32> to vector<256x64xf32>
    %cst_235 = arith.constant dense<0.000000e+00> : vector<256x16xf32>
    %234 = tpu.matmul %233, %220, %cst_235 {dimension_numbers = #tpu.dot_dimension_numbers<[1], [0], [0], [1], [0, 0, 1, 1], [], []>} : vector<256x64xf32>, vector<64x16xf32>, vector<256x16xf32> -> vector<256x16xf32>
    %c1_236 = arith.constant 1 : index
    %c0_237 = arith.constant 0 : index
    %c0_238 = arith.constant 0 : index
    %235 = vector.load %arg12[%c1_236, %c0_237, %c0_238] : memref<9x16x4xf32, #tpu.memory_space<vmem>>, vector<1x16x4xf32>
    %236 = vector.shape_cast %235 : vector<1x16x4xf32> to vector<16x4xf32>
    %cst_239 = arith.constant dense<0.000000e+00> : vector<256x4xf32>
    %237 = tpu.matmul %234, %236, %cst_239 {dimension_numbers = #tpu.dot_dimension_numbers<[1], [0], [0], [1], [0, 0, 1, 1], [], []>} : vector<256x16xf32>, vector<16x4xf32>, vector<256x4xf32> -> vector<256x4xf32>
    %238 = arith.addf %231, %237 : vector<256x4xf32>
    %c2_240 = arith.constant 2 : index
    %c0_241 = arith.constant 0 : index
    %c0_242 = arith.constant 0 : index
    %239 = vector.load %arg11[%c2_240, %c0_241, %c0_242] : memref<9x256x64xf32, #tpu.memory_space<vmem>>, vector<1x256x64xf32>
    %240 = vector.shape_cast %239 : vector<1x256x64xf32> to vector<256x64xf32>
    %cst_243 = arith.constant dense<0.000000e+00> : vector<256x16xf32>
    %241 = tpu.matmul %240, %220, %cst_243 {dimension_numbers = #tpu.dot_dimension_numbers<[1], [0], [0], [1], [0, 0, 1, 1], [], []>} : vector<256x64xf32>, vector<64x16xf32>, vector<256x16xf32> -> vector<256x16xf32>
    %c2_244 = arith.constant 2 : index
    %c0_245 = arith.constant 0 : index
    %c0_246 = arith.constant 0 : index
    %242 = vector.load %arg12[%c2_244, %c0_245, %c0_246] : memref<9x16x4xf32, #tpu.memory_space<vmem>>, vector<1x16x4xf32>
    %243 = vector.shape_cast %242 : vector<1x16x4xf32> to vector<16x4xf32>
    %cst_247 = arith.constant dense<0.000000e+00> : vector<256x4xf32>
    %244 = tpu.matmul %241, %243, %cst_247 {dimension_numbers = #tpu.dot_dimension_numbers<[1], [0], [0], [1], [0, 0, 1, 1], [], []>} : vector<256x16xf32>, vector<16x4xf32>, vector<256x4xf32> -> vector<256x4xf32>
    %245 = arith.addf %238, %244 : vector<256x4xf32>
    %c3_248 = arith.constant 3 : index
    %c0_249 = arith.constant 0 : index
    %c0_250 = arith.constant 0 : index
    %246 = vector.load %arg11[%c3_248, %c0_249, %c0_250] : memref<9x256x64xf32, #tpu.memory_space<vmem>>, vector<1x256x64xf32>
    %247 = vector.shape_cast %246 : vector<1x256x64xf32> to vector<256x64xf32>
    %cst_251 = arith.constant dense<0.000000e+00> : vector<256x16xf32>
    %248 = tpu.matmul %247, %220, %cst_251 {dimension_numbers = #tpu.dot_dimension_numbers<[1], [0], [0], [1], [0, 0, 1, 1], [], []>} : vector<256x64xf32>, vector<64x16xf32>, vector<256x16xf32> -> vector<256x16xf32>
    %c3_252 = arith.constant 3 : index
    %c0_253 = arith.constant 0 : index
    %c0_254 = arith.constant 0 : index
    %249 = vector.load %arg12[%c3_252, %c0_253, %c0_254] : memref<9x16x4xf32, #tpu.memory_space<vmem>>, vector<1x16x4xf32>
    %250 = vector.shape_cast %249 : vector<1x16x4xf32> to vector<16x4xf32>
    %cst_255 = arith.constant dense<0.000000e+00> : vector<256x4xf32>
    %251 = tpu.matmul %248, %250, %cst_255 {dimension_numbers = #tpu.dot_dimension_numbers<[1], [0], [0], [1], [0, 0, 1, 1], [], []>} : vector<256x16xf32>, vector<16x4xf32>, vector<256x4xf32> -> vector<256x4xf32>
    %252 = arith.addf %245, %251 : vector<256x4xf32>
    %c4_256 = arith.constant 4 : index
    %c0_257 = arith.constant 0 : index
    %c0_258 = arith.constant 0 : index
    %253 = vector.load %arg11[%c4_256, %c0_257, %c0_258] : memref<9x256x64xf32, #tpu.memory_space<vmem>>, vector<1x256x64xf32>
    %254 = vector.shape_cast %253 : vector<1x256x64xf32> to vector<256x64xf32>
    %cst_259 = arith.constant dense<0.000000e+00> : vector<256x16xf32>
    %255 = tpu.matmul %254, %220, %cst_259 {dimension_numbers = #tpu.dot_dimension_numbers<[1], [0], [0], [1], [0, 0, 1, 1], [], []>} : vector<256x64xf32>, vector<64x16xf32>, vector<256x16xf32> -> vector<256x16xf32>
    %c4_260 = arith.constant 4 : index
    %c0_261 = arith.constant 0 : index
    %c0_262 = arith.constant 0 : index
    %256 = vector.load %arg12[%c4_260, %c0_261, %c0_262] : memref<9x16x4xf32, #tpu.memory_space<vmem>>, vector<1x16x4xf32>
    %257 = vector.shape_cast %256 : vector<1x16x4xf32> to vector<16x4xf32>
    %cst_263 = arith.constant dense<0.000000e+00> : vector<256x4xf32>
    %258 = tpu.matmul %255, %257, %cst_263 {dimension_numbers = #tpu.dot_dimension_numbers<[1], [0], [0], [1], [0, 0, 1, 1], [], []>} : vector<256x16xf32>, vector<16x4xf32>, vector<256x4xf32> -> vector<256x4xf32>
    %259 = arith.addf %252, %258 : vector<256x4xf32>
    %c5_264 = arith.constant 5 : index
    %c0_265 = arith.constant 0 : index
    %c0_266 = arith.constant 0 : index
    %260 = vector.load %arg11[%c5_264, %c0_265, %c0_266] : memref<9x256x64xf32, #tpu.memory_space<vmem>>, vector<1x256x64xf32>
    %261 = vector.shape_cast %260 : vector<1x256x64xf32> to vector<256x64xf32>
    %cst_267 = arith.constant dense<0.000000e+00> : vector<256x16xf32>
    %262 = tpu.matmul %261, %220, %cst_267 {dimension_numbers = #tpu.dot_dimension_numbers<[1], [0], [0], [1], [0, 0, 1, 1], [], []>} : vector<256x64xf32>, vector<64x16xf32>, vector<256x16xf32> -> vector<256x16xf32>
    %c5_268 = arith.constant 5 : index
    %c0_269 = arith.constant 0 : index
    %c0_270 = arith.constant 0 : index
    %263 = vector.load %arg12[%c5_268, %c0_269, %c0_270] : memref<9x16x4xf32, #tpu.memory_space<vmem>>, vector<1x16x4xf32>
    %264 = vector.shape_cast %263 : vector<1x16x4xf32> to vector<16x4xf32>
    %cst_271 = arith.constant dense<0.000000e+00> : vector<256x4xf32>
    %265 = tpu.matmul %262, %264, %cst_271 {dimension_numbers = #tpu.dot_dimension_numbers<[1], [0], [0], [1], [0, 0, 1, 1], [], []>} : vector<256x16xf32>, vector<16x4xf32>, vector<256x4xf32> -> vector<256x4xf32>
    %266 = arith.addf %259, %265 : vector<256x4xf32>
    %c6_272 = arith.constant 6 : index
    %c0_273 = arith.constant 0 : index
    %c0_274 = arith.constant 0 : index
    %267 = vector.load %arg11[%c6_272, %c0_273, %c0_274] : memref<9x256x64xf32, #tpu.memory_space<vmem>>, vector<1x256x64xf32>
    %268 = vector.shape_cast %267 : vector<1x256x64xf32> to vector<256x64xf32>
    %cst_275 = arith.constant dense<0.000000e+00> : vector<256x16xf32>
    %269 = tpu.matmul %268, %220, %cst_275 {dimension_numbers = #tpu.dot_dimension_numbers<[1], [0], [0], [1], [0, 0, 1, 1], [], []>} : vector<256x64xf32>, vector<64x16xf32>, vector<256x16xf32> -> vector<256x16xf32>
    %c6_276 = arith.constant 6 : index
    %c0_277 = arith.constant 0 : index
    %c0_278 = arith.constant 0 : index
    %270 = vector.load %arg12[%c6_276, %c0_277, %c0_278] : memref<9x16x4xf32, #tpu.memory_space<vmem>>, vector<1x16x4xf32>
    %271 = vector.shape_cast %270 : vector<1x16x4xf32> to vector<16x4xf32>
    %cst_279 = arith.constant dense<0.000000e+00> : vector<256x4xf32>
    %272 = tpu.matmul %269, %271, %cst_279 {dimension_numbers = #tpu.dot_dimension_numbers<[1], [0], [0], [1], [0, 0, 1, 1], [], []>} : vector<256x16xf32>, vector<16x4xf32>, vector<256x4xf32> -> vector<256x4xf32>
    %273 = arith.addf %266, %272 : vector<256x4xf32>
    %c7_280 = arith.constant 7 : index
    %c0_281 = arith.constant 0 : index
    %c0_282 = arith.constant 0 : index
    %274 = vector.load %arg11[%c7_280, %c0_281, %c0_282] : memref<9x256x64xf32, #tpu.memory_space<vmem>>, vector<1x256x64xf32>
    %275 = vector.shape_cast %274 : vector<1x256x64xf32> to vector<256x64xf32>
    %cst_283 = arith.constant dense<0.000000e+00> : vector<256x16xf32>
    %276 = tpu.matmul %275, %220, %cst_283 {dimension_numbers = #tpu.dot_dimension_numbers<[1], [0], [0], [1], [0, 0, 1, 1], [], []>} : vector<256x64xf32>, vector<64x16xf32>, vector<256x16xf32> -> vector<256x16xf32>
    %c7_284 = arith.constant 7 : index
    %c0_285 = arith.constant 0 : index
    %c0_286 = arith.constant 0 : index
    %277 = vector.load %arg12[%c7_284, %c0_285, %c0_286] : memref<9x16x4xf32, #tpu.memory_space<vmem>>, vector<1x16x4xf32>
    %278 = vector.shape_cast %277 : vector<1x16x4xf32> to vector<16x4xf32>
    %cst_287 = arith.constant dense<0.000000e+00> : vector<256x4xf32>
    %279 = tpu.matmul %276, %278, %cst_287 {dimension_numbers = #tpu.dot_dimension_numbers<[1], [0], [0], [1], [0, 0, 1, 1], [], []>} : vector<256x16xf32>, vector<16x4xf32>, vector<256x4xf32> -> vector<256x4xf32>
    %280 = arith.addf %273, %279 : vector<256x4xf32>
    %c8_288 = arith.constant 8 : index
    %c0_289 = arith.constant 0 : index
    %c0_290 = arith.constant 0 : index
    %281 = vector.load %arg11[%c8_288, %c0_289, %c0_290] : memref<9x256x64xf32, #tpu.memory_space<vmem>>, vector<1x256x64xf32>
    %282 = vector.shape_cast %281 : vector<1x256x64xf32> to vector<256x64xf32>
    %cst_291 = arith.constant dense<0.000000e+00> : vector<256x16xf32>
    %283 = tpu.matmul %282, %220, %cst_291 {dimension_numbers = #tpu.dot_dimension_numbers<[1], [0], [0], [1], [0, 0, 1, 1], [], []>} : vector<256x64xf32>, vector<64x16xf32>, vector<256x16xf32> -> vector<256x16xf32>
    %c8_292 = arith.constant 8 : index
    %c0_293 = arith.constant 0 : index
    %c0_294 = arith.constant 0 : index
    %284 = vector.load %arg12[%c8_292, %c0_293, %c0_294] : memref<9x16x4xf32, #tpu.memory_space<vmem>>, vector<1x16x4xf32>
    %285 = vector.shape_cast %284 : vector<1x16x4xf32> to vector<16x4xf32>
    %cst_295 = arith.constant dense<0.000000e+00> : vector<256x4xf32>
    %286 = tpu.matmul %283, %285, %cst_295 {dimension_numbers = #tpu.dot_dimension_numbers<[1], [0], [0], [1], [0, 0, 1, 1], [], []>} : vector<256x16xf32>, vector<16x4xf32>, vector<256x4xf32> -> vector<256x4xf32>
    %287 = arith.addf %280, %286 : vector<256x4xf32>
    %288 = arith.negf %287 : vector<256x4xf32>
    %289 = math.exp %288 : vector<256x4xf32>
    %cst_296 = arith.constant 1.000000e+00 : f32
    %290 = vector.broadcast %cst_296 : f32 to vector<256x4xf32>
    %291 = arith.addf %290, %289 : vector<256x4xf32>
    %292 = arith.divf %290, %291 : vector<256x4xf32>
    %c0_297 = arith.constant 0 : index
    %c0_298 = arith.constant 0 : index
    %c0_299 = arith.constant 0 : index
    %293 = vector.load %arg14[%c0_297, %c0_298, %c0_299] : memref<1x256x4xf32, #tpu.memory_space<vmem>>, vector<1x256x4xf32>
    %294 = vector.shape_cast %293 : vector<1x256x4xf32> to vector<256x4xf32>
    %295 = vector.shape_cast %292 : vector<256x4xf32> to vector<1x256x4xf32>
    tpu.vector_store %arg14[%c0_297, %c0_298, %c0_299], %295 {strides = array<i32>} : memref<1x256x4xf32, #tpu.memory_space<vmem>>, vector<1x256x4xf32>,
    return
  }
  func.func @transform_0(%arg0: i32) -> (i32, i32, i32) {
    %c0_i32 = arith.constant 0 : i32
    %c0_i32_0 = arith.constant 0 : i32
    %c0_i32_1 = arith.constant 0 : i32
    return %arg0, %c0_i32, %c0_i32_0 : i32, i32, i32
  }
  func.func @transform_1(%arg0: i32) -> (i32, i32, i32) {
    %c0_i32 = arith.constant 0 : i32
    %c0_i32_0 = arith.constant 0 : i32
    %c0_i32_1 = arith.constant 0 : i32
    %c0_i32_2 = arith.constant 0 : i32
    return %c0_i32, %c0_i32_0, %c0_i32_1 : i32, i32, i32
  }
  func.func @transform_2(%arg0: i32) -> (i32, i32, i32) {
    %c0_i32 = arith.constant 0 : i32
    %c0_i32_0 = arith.constant 0 : i32
    %c0_i32_1 = arith.constant 0 : i32
    %c0_i32_2 = arith.constant 0 : i32
    return %c0_i32, %c0_i32_0, %c0_i32_1 : i32, i32, i32
  }
  func.func @transform_3(%arg0: i32) -> (i32, i32) {
    %c0_i32 = arith.constant 0 : i32
    %c0_i32_0 = arith.constant 0 : i32
    %c0_i32_1 = arith.constant 0 : i32
    return %c0_i32, %c0_i32_0 : i32, i32
  }
  func.func @transform_4(%arg0: i32) -> (i32, i32, i32) {
    %c0_i32 = arith.constant 0 : i32
    %c0_i32_0 = arith.constant 0 : i32
    %c0_i32_1 = arith.constant 0 : i32
    %c0_i32_2 = arith.constant 0 : i32
    return %c0_i32, %c0_i32_0, %c0_i32_1 : i32, i32, i32
  }
  func.func @transform_5(%arg0: i32) -> (i32, i32, i32) {
    %c0_i32 = arith.constant 0 : i32
    %c0_i32_0 = arith.constant 0 : i32
    %c0_i32_1 = arith.constant 0 : i32
    %c0_i32_2 = arith.constant 0 : i32
    return %c0_i32, %c0_i32_0, %c0_i32_1 : i32, i32, i32
  }
  func.func @transform_6(%arg0: i32) -> (i32, i32) {
    %c0_i32 = arith.constant 0 : i32
    %c0_i32_0 = arith.constant 0 : i32
    %c0_i32_1 = arith.constant 0 : i32
    return %c0_i32, %c0_i32_0 : i32, i32
  }
  func.func @transform_7(%arg0: i32) -> (i32, i32, i32) {
    %c0_i32 = arith.constant 0 : i32
    %c0_i32_0 = arith.constant 0 : i32
    %c0_i32_1 = arith.constant 0 : i32
    %c0_i32_2 = arith.constant 0 : i32
    return %c0_i32, %c0_i32_0, %c0_i32_1 : i32, i32, i32
  }
  func.func @transform_8(%arg0: i32) -> (i32, i32, i32) {
    %c0_i32 = arith.constant 0 : i32
    %c0_i32_0 = arith.constant 0 : i32
    %c0_i32_1 = arith.constant 0 : i32
    %c0_i32_2 = arith.constant 0 : i32
    return %c0_i32, %c0_i32_0, %c0_i32_1 : i32, i32, i32
  }
  func.func @transform_9(%arg0: i32) -> (i32, i32) {
    %c0_i32 = arith.constant 0 : i32
    %c0_i32_0 = arith.constant 0 : i32
    %c0_i32_1 = arith.constant 0 : i32
    return %c0_i32, %c0_i32_0 : i32, i32
  }
  func.func @transform_10(%arg0: i32) -> (i32, i32, i32) {
    %c0_i32 = arith.constant 0 : i32
    %c0_i32_0 = arith.constant 0 : i32
    %c0_i32_1 = arith.constant 0 : i32
    %c0_i32_2 = arith.constant 0 : i32
    return %c0_i32, %c0_i32_0, %c0_i32_1 : i32, i32, i32
  }
  func.func @transform_11(%arg0: i32) -> (i32, i32, i32) {
    %c0_i32 = arith.constant 0 : i32
    %c0_i32_0 = arith.constant 0 : i32
    %c0_i32_1 = arith.constant 0 : i32
    %c0_i32_2 = arith.constant 0 : i32
    return %c0_i32, %c0_i32_0, %c0_i32_1 : i32, i32, i32
  }
  func.func @transform_12(%arg0: i32) -> (i32, i32) {
    %c0_i32 = arith.constant 0 : i32
    %c0_i32_0 = arith.constant 0 : i32
    %c0_i32_1 = arith.constant 0 : i32
    return %c0_i32, %c0_i32_0 : i32, i32
  }
  func.func @transform_13(%arg0: i32) -> (i32, i32, i32) {
    %c0_i32 = arith.constant 0 : i32
    %c0_i32_0 = arith.constant 0 : i32
    %c0_i32_1 = arith.constant 0 : i32
    return %arg0, %c0_i32, %c0_i32_0 : i32, i32, i32
  }
}

</mosaic_0001>

<llo_original>
// kernel: efficientnet_autoencoder.1
$region0: #{efficientnet_autoencoder.1}
  #allocation0 [shape = 'u32[]', space=smem, size = 0x4, offset = 0x4, fixed_abs, tag = 'smem constant byte address 0x4 - core index']
  #allocation1 [shape = 'u32[72,128]{1,0:T(1,128)}', space=vmem, size = 0x9000, scoped, tag = 'internal scratch']
  %s0 = inlined_call_operand.vmem [shape: f32[2,256,4], index: 0, kind: input, shape index: {}]
  %s1 = inlined_call_operand.vmem [shape: f32[9,64,256], index: 1, kind: input, shape index: {}]
  %s2 = inlined_call_operand.vmem [shape: f32[9,4,16], index: 2, kind: input, shape index: {}]
  %s3 = inlined_call_operand.vmem [shape: f32[1,16], index: 3, kind: input, shape index: {}]
  %s4 = inlined_call_operand.vmem [shape: f32[9,16,64], index: 4, kind: input, shape index: {}]
  %s5 = inlined_call_operand.vmem [shape: f32[9,16,32], index: 5, kind: input, shape index: {}]
  %s6 = inlined_call_operand.vmem [shape: f32[1,32], index: 6, kind: input, shape index: {}]
  %s7 = inlined_call_operand.vmem [shape: f32[9,64,16], index: 7, kind: input, shape index: {}]
  %s8 = inlined_call_operand.vmem [shape: f32[9,32,16], index: 8, kind: input, shape index: {}]
  %s9 = inlined_call_operand.vmem [shape: f32[1,16], index: 9, kind: input, shape index: {}]
  %s10 = inlined_call_operand.vmem [shape: f32[9,256,64], index: 10, kind: input, shape index: {}]
  %s11 = inlined_call_operand.vmem [shape: f32[9,16,4], index: 11, kind: input, shape index: {}]
  %s12 = inlined_call_operand.vmem [shape: f32[1,4], index: 12, kind: input, shape index: {}]
  %s13 = inlined_call_operand.vmem [shape: f32[2,256,4], index: 13, kind: output, shape index: {}]
  %s14 = sld [smem:[#allocation0]]
  $region85: #{efficientnet_autoencoder.1} parent=0
    _
  %s16 = ssub.s32 1, %s14
  %s17 = scalar_select 0, %s16, %s14
  loop: start=0, step=1, limit=4
  $region2: #{efficientnet_autoencoder.1} parent=0 // loop_pre_header
    _
  $region3: #{efficientnet_autoencoder.1} parent=0 // loop_header
    %s19 = sphi 0, %s23
    %p20 = scmp.ge.s32.totalorder %s19, 4
    %s29 = sphi 0, %s31
    %s32 = sphi 0, %s29
    %s33 = sphi 0, %s32
    %s49 = sphi 0, %s33
    %s53 = sphi 0, %s53
    %s55 = sphi 0, %s53
    %s56 = sphi 0, %s55
    %s70 = sphi 0, %s56
    %s74 = sphi 0, %s74
    %s76 = sphi 0, %s74
    %s77 = sphi 0, %s76
    %s91 = sphi 0, %s77
    %s95 = sphi 0, %s95
    %s97 = sphi 0, %s95
    %s98 = sphi 0, %s97
    %s112 = sphi 0, %s98
    %s116 = sphi 0, %s116
    %s118 = sphi 0, %s116
    %s119 = sphi 0, %s118
    %s133 = sphi 0, %s119
    %s137 = sphi 0, %s137
    %s139 = sphi 0, %s137
    %s140 = sphi 0, %s139
    %s154 = sphi 0, %s140
    %s158 = sphi 0, %s158
    %s160 = sphi 0, %s158
    %s161 = sphi 0, %s160
    %s175 = sphi 0, %s161
    %s179 = sphi 0, %s179
    %s181 = sphi 0, %s179
    %s182 = sphi 0, %s181
    %s196 = sphi 0, %s182
    %s200 = sphi 0, %s200
    %s202 = sphi 0, %s200
    %s203 = sphi 0, %s202
    %s217 = sphi 0, %s203
    %s221 = sphi 0, %s221
    %s223 = sphi 0, %s221
    %s224 = sphi 0, %s223
    %s238 = sphi 0, %s224
    %s242 = sphi 0, %s242
    %s244 = sphi 0, %s242
    %s245 = sphi 0, %s244
    %s259 = sphi 0, %s245
    %s263 = sphi 0, %s263
    %s265 = sphi 0, %s263
    %s266 = sphi 0, %s265
    %s280 = sphi 0, %s266
    %s284 = sphi 0, %s284
    %s286 = sphi 0, %s284
    %s287 = sphi 0, %s286
    %s301 = sphi 0, %s287
    %s307 = sphi 0, %s309
    %s310 = sphi 0, %s307
    %s311 = sphi 0, %s310
    %s327 = sphi 0, %s311
  $region4: #{efficientnet_autoencoder.1} parent=0 // loop_header_branch
    %22 = sbr.rel (%p20) target = $region8
  $region5: #{efficientnet_autoencoder.1} parent=0 // loop_body
    %s24 = ssub.s32 %s19, 1
    %s25 = ssub.s32 %s19, 2
    %s26 = sadd.s32 %s19, 1
    %s27 = ssub.s32 %s19, %s26
    %p28 = scmp.eq.s32.totalorder %s27, 0
    %s30 = sadd.s32 %s29, 1
    %s31 = scalar_select %p28, %s29, %s30
    %p34 = pneg %p28
    %p35 = scmp.eq.s32.totalorder %s19, 1
    %p36 = por %p34, %p35
    %p37 = scmp.ne.s32.totalorder %s29, %s32
    %p38 = scmp.eq.s32.totalorder %s19, 0
    %p39 = por %p37, %p38
    %p40 = scmp.ne.s32.totalorder %s29, %s32
    %p41 = scmp.eq.s32.totalorder %s24, 1
    %p42 = por %p40, %p41
    %p43 = scmp.ne.s32.totalorder %s32, %s33
    %p44 = scmp.eq.s32.totalorder %s24, 0
    %p45 = por %p43, %p44
    %p46 = scmp.ne.s32.totalorder %s32, %s33
    %p47 = scmp.eq.s32.totalorder %s25, 1
    %p48 = por %p46, %p47
    %p50 = scmp.ne.s32.totalorder %s33, %s49
    %p51 = scmp.eq.s32.totalorder %s25, 0
    %p52 = por %p50, %p51
    %s54 = sadd.s32 %s53, 1
    %p57 = scmp.eq.s32.totalorder %s19, 1
    %p58 = scmp.ne.s32.totalorder %s53, %s55
    %p59 = scmp.eq.s32.totalorder %s19, 0
    %p60 = por %p58, %p59
    %p61 = scmp.ne.s32.totalorder %s53, %s55
    %p62 = scmp.eq.s32.totalorder %s24, 1
    %p63 = por %p61, %p62
    %p64 = scmp.ne.s32.totalorder %s55, %s56
    %p65 = scmp.eq.s32.totalorder %s24, 0
    %p66 = por %p64, %p65
    %p67 = scmp.ne.s32.totalorder %s55, %s56
    %p68 = scmp.eq.s32.totalorder %s25, 1
    %p69 = por %p67, %p68
    %p71 = scmp.ne.s32.totalorder %s56, %s70
    %p72 = scmp.eq.s32.totalorder %s25, 0
    %p73 = por %p71, %p72
    %s75 = sadd.s32 %s74, 1
    %p78 = scmp.eq.s32.totalorder %s19, 1
    %p79 = scmp.ne.s32.totalorder %s74, %s76
    %p80 = scmp.eq.s32.totalorder %s19, 0
    %p81 = por %p79, %p80
    %p82 = scmp.ne.s32.totalorder %s74, %s76
    %p83 = scmp.eq.s32.totalorder %s24, 1
    %p84 = por %p82, %p83
    %p85 = scmp.ne.s32.totalorder %s76, %s77
    %p86 = scmp.eq.s32.totalorder %s24, 0
    %p87 = por %p85, %p86
    %p88 = scmp.ne.s32.totalorder %s76, %s77
    %p89 = scmp.eq.s32.totalorder %s25, 1
    %p90 = por %p88, %p89
    %p92 = scmp.ne.s32.totalorder %s77, %s91
    %p93 = scmp.eq.s32.totalorder %s25, 0
    %p94 = por %p92, %p93
    %s96 = sadd.s32 %s95, 1
    %p99 = scmp.eq.s32.totalorder %s19, 1
    %p100 = scmp.ne.s32.totalorder %s95, %s97
    %p101 = scmp.eq.s32.totalorder %s19, 0
    %p102 = por %p100, %p101
    %p103 = scmp.ne.s32.totalorder %s95, %s97
    %p104 = scmp.eq.s32.totalorder %s24, 1
    %p105 = por %p103, %p104
    %p106 = scmp.ne.s32.totalorder %s97, %s98
    %p107 = scmp.eq.s32.totalorder %s24, 0
    %p108 = por %p106, %p107
    %p109 = scmp.ne.s32.totalorder %s97, %s98
    %p110 = scmp.eq.s32.totalorder %s25, 1
    %p111 = por %p109, %p110
    %p113 = scmp.ne.s32.totalorder %s98, %s112
    %p114 = scmp.eq.s32.totalorder %s25, 0
    %p115 = por %p113, %p114
    %s117 = sadd.s32 %s116, 1
    %p120 = scmp.eq.s32.totalorder %s19, 1
    %p121 = scmp.ne.s32.totalorder %s116, %s118
    %p122 = scmp.eq.s32.totalorder %s19, 0
    %p123 = por %p121, %p122
    %p124 = scmp.ne.s32.totalorder %s116, %s118
    %p125 = scmp.eq.s32.totalorder %s24, 1
    %p126 = por %p124, %p125
    %p127 = scmp.ne.s32.totalorder %s118, %s119
    %p128 = scmp.eq.s32.totalorder %s24, 0
    %p129 = por %p127, %p128
    %p130 = scmp.ne.s32.totalorder %s118, %s119
    %p131 = scmp.eq.s32.totalorder %s25, 1
    %p132 = por %p130, %p131
    %p134 = scmp.ne.s32.totalorder %s119, %s133
    %p135 = scmp.eq.s32.totalorder %s25, 0
    %p136 = por %p134, %p135
    %s138 = sadd.s32 %s137, 1
    %p141 = scmp.eq.s32.totalorder %s19, 1
    %p142 = scmp.ne.s32.totalorder %s137, %s139
    %p143 = scmp.eq.s32.totalorder %s19, 0
    %p144 = por %p142, %p143
    %p145 = scmp.ne.s32.totalorder %s137, %s139
    %p146 = scmp.eq.s32.totalorder %s24, 1
    %p147 = por %p145, %p146
    %p148 = scmp.ne.s32.totalorder %s139, %s140
    %p149 = scmp.eq.s32.totalorder %s24, 0
    %p150 = por %p148, %p149
    %p151 = scmp.ne.s32.totalorder %s139, %s140
    %p152 = scmp.eq.s32.totalorder %s25, 1
    %p153 = por %p151, %p152
    %p155 = scmp.ne.s32.totalorder %s140, %s154
    %p156 = scmp.eq.s32.totalorder %s25, 0
    %p157 = por %p155, %p156
    %s159 = sadd.s32 %s158, 1
    %p162 = scmp.eq.s32.totalorder %s19, 1
    %p163 = scmp.ne.s32.totalorder %s158, %s160
    %p164 = scmp.eq.s32.totalorder %s19, 0
    %p165 = por %p163, %p164
    %p166 = scmp.ne.s32.totalorder %s158, %s160
    %p167 = scmp.eq.s32.totalorder %s24, 1
    %p168 = por %p166, %p167
    %p169 = scmp.ne.s32.totalorder %s160, %s161
    %p170 = scmp.eq.s32.totalorder %s24, 0
    %p171 = por %p169, %p170
    %p172 = scmp.ne.s32.totalorder %s160, %s161
    %p173 = scmp.eq.s32.totalorder %s25, 1
    %p174 = por %p172, %p173
    %p176 = scmp.ne.s32.totalorder %s161, %s175
    %p177 = scmp.eq.s32.totalorder %s25, 0
    %p178 = por %p176, %p177
    %s180 = sadd.s32 %s179, 1
    %p183 = scmp.eq.s32.totalorder %s19, 1
    %p184 = scmp.ne.s32.totalorder %s179, %s181
    %p185 = scmp.eq.s32.totalorder %s19, 0
    %p186 = por %p184, %p185
    %p187 = scmp.ne.s32.totalorder %s179, %s181
    %p188 = scmp.eq.s32.totalorder %s24, 1
    %p189 = por %p187, %p188
    %p190 = scmp.ne.s32.totalorder %s181, %s182
    %p191 = scmp.eq.s32.totalorder %s24, 0
    %p192 = por %p190, %p191
    %p193 = scmp.ne.s32.totalorder %s181, %s182
    %p194 = scmp.eq.s32.totalorder %s25, 1
    %p195 = por %p193, %p194
    %p197 = scmp.ne.s32.totalorder %s182, %s196
    %p198 = scmp.eq.s32.totalorder %s25, 0
    %p199 = por %p197, %p198
    %s201 = sadd.s32 %s200, 1
    %p204 = scmp.eq.s32.totalorder %s19, 1
    %p205 = scmp.ne.s32.totalorder %s200, %s202
    %p206 = scmp.eq.s32.totalorder %s19, 0
    %p207 = por %p205, %p206
    %p208 = scmp.ne.s32.totalorder %s200, %s202
    %p209 = scmp.eq.s32.totalorder %s24, 1
    %p210 = por %p208, %p209
    %p211 = scmp.ne.s32.totalorder %s202, %s203
    %p212 = scmp.eq.s32.totalorder %s24, 0
    %p213 = por %p211, %p212
    %p214 = scmp.ne.s32.totalorder %s202, %s203
    %p215 = scmp.eq.s32.totalorder %s25, 1
    %p216 = por %p214, %p215
    %p218 = scmp.ne.s32.totalorder %s203, %s217
    %p219 = scmp.eq.s32.totalorder %s25, 0
    %p220 = por %p218, %p219
    %s222 = sadd.s32 %s221, 1
    %p225 = scmp.eq.s32.totalorder %s19, 1
    %p226 = scmp.ne.s32.totalorder %s221, %s223
    %p227 = scmp.eq.s32.totalorder %s19, 0
    %p228 = por %p226, %p227
    %p229 = scmp.ne.s32.totalorder %s221, %s223
    %p230 = scmp.eq.s32.totalorder %s24, 1
    %p231 = por %p229, %p230
    %p232 = scmp.ne.s32.totalorder %s223, %s224
    %p233 = scmp.eq.s32.totalorder %s24, 0
    %p234 = por %p232, %p233
    %p235 = scmp.ne.s32.totalorder %s223, %s224
    %p236 = scmp.eq.s32.totalorder %s25, 1
    %p237 = por %p235, %p236
    %p239 = scmp.ne.s32.totalorder %s224, %s238
    %p240 = scmp.eq.s32.totalorder %s25, 0
    %p241 = por %p239, %p240
    %s243 = sadd.s32 %s242, 1
    %p246 = scmp.eq.s32.totalorder %s19, 1
    %p247 = scmp.ne.s32.totalorder %s242, %s244
    %p248 = scmp.eq.s32.totalorder %s19, 0
    %p249 = por %p247, %p248
    %p250 = scmp.ne.s32.totalorder %s242, %s244
    %p251 = scmp.eq.s32.totalorder %s24, 1
    %p252 = por %p250, %p251
    %p253 = scmp.ne.s32.totalorder %s244, %s245
    %p254 = scmp.eq.s32.totalorder %s24, 0
    %p255 = por %p253, %p254
    %p256 = scmp.ne.s32.totalorder %s244, %s245
    %p257 = scmp.eq.s32.totalorder %s25, 1
    %p258 = por %p256, %p257
    %p260 = scmp.ne.s32.totalorder %s245, %s259
    %p261 = scmp.eq.s32.totalorder %s25, 0
    %p262 = por %p260, %p261
    %s264 = sadd.s32 %s263, 1
    %p267 = scmp.eq.s32.totalorder %s19, 1
    %p268 = scmp.ne.s32.totalorder %s263, %s265
    %p269 = scmp.eq.s32.totalorder %s19, 0
    %p270 = por %p268, %p269
    %p271 = scmp.ne.s32.totalorder %s263, %s265
    %p272 = scmp.eq.s32.totalorder %s24, 1
    %p273 = por %p271, %p272
    %p274 = scmp.ne.s32.totalorder %s265, %s266
    %p275 = scmp.eq.s32.totalorder %s24, 0
    %p276 = por %p274, %p275
    %p277 = scmp.ne.s32.totalorder %s265, %s266
    %p278 = scmp.eq.s32.totalorder %s25, 1
    %p279 = por %p277, %p278
    %p281 = scmp.ne.s32.totalorder %s266, %s280
    %p282 = scmp.eq.s32.totalorder %s25, 0
    %p283 = por %p281, %p282
    %s285 = sadd.s32 %s284, 1
    %p288 = scmp.eq.s32.totalorder %s19, 1
    %p289 = scmp.ne.s32.totalorder %s284, %s286
    %p290 = scmp.eq.s32.totalorder %s19, 0
    %p291 = por %p289, %p290
    %p292 = scmp.ne.s32.totalorder %s284, %s286
    %p293 = scmp.eq.s32.totalorder %s24, 1
    %p294 = por %p292, %p293
    %p295 = scmp.ne.s32.totalorder %s286, %s287
    %p296 = scmp.eq.s32.totalorder %s24, 0
    %p297 = por %p295, %p296
    %p298 = scmp.ne.s32.totalorder %s286, %s287
    %p299 = scmp.eq.s32.totalorder %s25, 1
    %p300 = por %p298, %p299
    %p302 = scmp.ne.s32.totalorder %s287, %s301
    %p303 = scmp.eq.s32.totalorder %s25, 0
    %p304 = por %p302, %p303
    %s305 = ssub.s32 %s19, %s26
    %p306 = scmp.eq.s32.totalorder %s305, 0
    %s308 = sadd.s32 %s307, 1
    %s309 = scalar_select %p306, %s307, %s308
    %p312 = pneg %p306
    %p313 = scmp.eq.s32.totalorder %s19, 1
    %p314 = por %p312, %p313
    %p315 = scmp.ne.s32.totalorder %s307, %s310
    %p316 = scmp.eq.s32.totalorder %s19, 0
    %p317 = por %p315, %p316
    %p318 = scmp.ne.s32.totalorder %s307, %s310
    %p319 = scmp.eq.s32.totalorder %s24, 1
    %p320 = por %p318, %p319
    %p321 = scmp.ne.s32.totalorder %s310, %s311
    %p322 = scmp.eq.s32.totalorder %s24, 0
    %p323 = por %p321, %p322
    %p324 = scmp.ne.s32.totalorder %s310, %s311
    %p325 = scmp.eq.s32.totalorder %s25, 1
    %p326 = por %p324, %p325
    %p328 = scmp.ne.s32.totalorder %s311, %s327
    %p329 = scmp.eq.s32.totalorder %s25, 0
    %p330 = por %p328, %p329
    %p331 = scmp.le.s32.totalorder 1, %s19
    %p332 = scmp.lt.s32.totalorder %s19, 3
    %p333 = pnand %p331, %p332
    %p334 = pneg %p333
    // Predicated region
    $region9: #{efficientnet_autoencoder.1} parent=5 // pred_check
      _
    $region10: #{efficientnet_autoencoder.1} parent=5 // pred_check_branch
      %336 = sbr.rel (%p333) target = $region12
    $region11: #{efficientnet_autoencoder.1} parent=5 // pred_region
      %s337 = ssub.s32 %s19, 1
      // Predicated region
      $region13: #{efficientnet_autoencoder.1} parent=11 // pred_check
        %p338 = pneg %p66
      $region14: #{efficientnet_autoencoder.1} parent=11 // pred_check_branch
        %340 = sbr.rel (%p338) target = $region16
      $region15: #{efficientnet_autoencoder.1} parent=11 // pred_region
        _
      $region16: #{efficientnet_autoencoder.1} parent=11 // pred_fallthru
        _
      // Predicated region
      $region17: #{efficientnet_autoencoder.1} parent=11 // pred_check
        %p341 = pneg %p87
      $region18: #{efficientnet_autoencoder.1} parent=11 // pred_check_branch
        %343 = sbr.rel (%p341) target = $region20
      $region19: #{efficientnet_autoencoder.1} parent=11 // pred_region
        _
      $region20: #{efficientnet_autoencoder.1} parent=11 // pred_fallthru
        _
      // Predicated region
      $region21: #{efficientnet_autoencoder.1} parent=11 // pred_check
        %p344 = pneg %p108
      $region22: #{efficientnet_autoencoder.1} parent=11 // pred_check_branch
        %346 = sbr.rel (%p344) target = $region24
      $region23: #{efficientnet_autoencoder.1} parent=11 // pred_region
        _
      $region24: #{efficientnet_autoencoder.1} parent=11 // pred_fallthru
        _
      // Predicated region
      $region25: #{efficientnet_autoencoder.1} parent=11 // pred_check
        %p347 = pneg %p129
      $region26: #{efficientnet_autoencoder.1} parent=11 // pred_check_branch
        %349 = sbr.rel (%p347) target = $region28
      $region27: #{efficientnet_autoencoder.1} parent=11 // pred_region
        _
      $region28: #{efficientnet_autoencoder.1} parent=11 // pred_fallthru
        _
      // Predicated region
      $region29: #{efficientnet_autoencoder.1} parent=11 // pred_check
        %p350 = pneg %p150
      $region30: #{efficientnet_autoencoder.1} parent=11 // pred_check_branch
        %352 = sbr.rel (%p350) target = $region32
      $region31: #{efficientnet_autoencoder.1} parent=11 // pred_region
        _
      $region32: #{efficientnet_autoencoder.1} parent=11 // pred_fallthru
        _
      // Predicated region
      $region33: #{efficientnet_autoencoder.1} parent=11 // pred_check
        %p353 = pneg %p171
      $region34: #{efficientnet_autoencoder.1} parent=11 // pred_check_branch
        %355 = sbr.rel (%p353) target = $region36
      $region35: #{efficientnet_autoencoder.1} parent=11 // pred_region
        _
      $region36: #{efficientnet_autoencoder.1} parent=11 // pred_fallthru
        _
      // Predicated region
      $region37: #{efficientnet_autoencoder.1} parent=11 // pred_check
        %p356 = pneg %p192
      $region38: #{efficientnet_autoencoder.1} parent=11 // pred_check_branch
        %358 = sbr.rel (%p356) target = $region40
      $region39: #{efficientnet_autoencoder.1} parent=11 // pred_region
        _
      $region40: #{efficientnet_autoencoder.1} parent=11 // pred_fallthru
        _
      // Predicated region
      $region41: #{efficientnet_autoencoder.1} parent=11 // pred_check
        %p359 = pneg %p213
      $region42: #{efficientnet_autoencoder.1} parent=11 // pred_check_branch
        %361 = sbr.rel (%p359) target = $region44
      $region43: #{efficientnet_autoencoder.1} parent=11 // pred_region
        _
      $region44: #{efficientnet_autoencoder.1} parent=11 // pred_fallthru
        _
      // Predicated region
      $region45: #{efficientnet_autoencoder.1} parent=11 // pred_check
        %p362 = pneg %p234
      $region46: #{efficientnet_autoencoder.1} parent=11 // pred_check_branch
        %364 = sbr.rel (%p362) target = $region48
      $region47: #{efficientnet_autoencoder.1} parent=11 // pred_region
        _
      $region48: #{efficientnet_autoencoder.1} parent=11 // pred_fallthru
        _
      // Predicated region
      $region49: #{efficientnet_autoencoder.1} parent=11 // pred_check
        %p365 = pneg %p255
      $region50: #{efficientnet_autoencoder.1} parent=11 // pred_check_branch
        %367 = sbr.rel (%p365) target = $region52
      $region51: #{efficientnet_autoencoder.1} parent=11 // pred_region
        _
      $region52: #{efficientnet_autoencoder.1} parent=11 // pred_fallthru
        _
      // Predicated region
      $region53: #{efficientnet_autoencoder.1} parent=11 // pred_check
        %p368 = pneg %p276
      $region54: #{efficientnet_autoencoder.1} parent=11 // pred_check_branch
        %370 = sbr.rel (%p368) target = $region56
      $region55: #{efficientnet_autoencoder.1} parent=11 // pred_region
        _
      $region56: #{efficientnet_autoencoder.1} parent=11 // pred_fallthru
        _
      // Predicated region
      $region57: #{efficientnet_autoencoder.1} parent=11 // pred_check
        %p371 = pneg %p297
      $region58: #{efficientnet_autoencoder.1} parent=11 // pred_check_branch
        %373 = sbr.rel (%p371) target = $region60
      $region59: #{efficientnet_autoencoder.1} parent=11 // pred_region
        _
      $region60: #{efficientnet_autoencoder.1} parent=11 // pred_fallthru
        _
    $region12: #{efficientnet_autoencoder.1} parent=5 // pred_fallthru
      _
    %p374 = scmp.lt.s32.totalorder %s19, 2
    // Predicated region
    $region61: #{efficientnet_autoencoder.1} parent=5 // pred_check
      %p375 = pneg %p374
    $region62: #{efficientnet_autoencoder.1} parent=5 // pred_check_branch
      %377 = sbr.rel (%p375) target = $region64
    $region63: #{efficientnet_autoencoder.1} parent=5 // pred_region
      // Predicated region
      $region65: #{efficientnet_autoencoder.1} parent=63 // pred_check
        %p378 = pneg %p39
      $region66: #{efficientnet_autoencoder.1} parent=63 // pred_check_branch
        %380 = sbr.rel (%p378) target = $region68
      $region67: #{efficientnet_autoencoder.1} parent=63 // pred_region
        %p381 = scmp.lt.s32.totalorder %s19, 1
        %s382 = scalar_select %p381, %s19, 1
        %s383 = smul.addr %s382, 32
        %s384 = smul.addr %s383, 8
        %s385 = scalar_lea.vmem %s0, %s384
      $region68: #{efficientnet_autoencoder.1} parent=63 // pred_fallthru
        _
    $region64: #{efficientnet_autoencoder.1} parent=5 // pred_fallthru
      _
    %p386 = scmp.le.s32.totalorder 1, %s19
    %p387 = scmp.lt.s32.totalorder %s19, 3
    %p388 = pnand %p386, %p387
    %p389 = pneg %p388
    // Predicated region
    $region69: #{efficientnet_autoencoder.1} parent=5 // pred_check
      _
    $region70: #{efficientnet_autoencoder.1} parent=5 // pred_check_branch
      %391 = sbr.rel (%p388) target = $region72
    $region71: #{efficientnet_autoencoder.1} parent=5 // pred_region
      %s392 = ssub.s32 %s19, 1
      %p393 = scmp.lt.s32.totalorder %s24, 1
      %s394 = scalar_select %p393, %s24, 1
      %s395 = smul.addr %s394, 32
      %s396 = smul.addr %s395, 8
      %s397 = scalar_lea.vmem %s0, %s396
      %p398 = pneg %p45
      %p399 = pneg %p42
      %p400 = pneg %p66
      %p401 = pneg %p63
      %p402 = pneg %p87
      %p403 = pneg %p84
      %p404 = pneg %p108
      %p405 = pneg %p105
      %p406 = pneg %p129
      %p407 = pneg %p126
      %p408 = pneg %p150
      %p409 = pneg %p147
      %p410 = pneg %p171
      %p411 = pneg %p168
      %p412 = pneg %p192
      %p413 = pneg %p189
      %p414 = pneg %p213
      %p415 = pneg %p210
      %p416 = pneg %p234
      %p417 = pneg %p231
      %p418 = pneg %p255
      %p419 = pneg %p252
      %p420 = pneg %p276
      %p421 = pneg %p273
      %p422 = pneg %p297
      %p423 = pneg %p294
      %p424 = pneg %p323
      %p425 = pneg %p320
      %p426 = scmp.lt.s32.totalorder %s24, 1
      %s427 = scalar_select %p426, %s24, 1
      %s428 = smul.addr %s427, 32
      %s429 = smul.addr %s428, 8
      %s430 = scalar_lea.vmem %s13, %s429
      %p431 = scmp.lt.s32.totalorder %s24, 1
      %s432 = scalar_select %p431, %s24, 1
      %s433 = smul.addr %s432, 32
      %s434 = smul.addr %s433, 8
      %s435 = scalar_lea.vmem %s0, %s434
      %p436 = scmp.lt.s32.totalorder %s24, 1
      %s437 = scalar_select %p436, %s24, 1
      %s438 = smul.addr %s437, 32
      %s439 = smul.addr %s438, 8
      %s440 = scalar_lea.vmem %s13, %s439
      %v441 = vld [vmem:[%s435] sm:$0xff]
      %v442 = vld [vmem:[%s435 + $0x8] sm:$0xff]
      %v443 = vld [vmem:[%s435 + $0x10] sm:$0xff]
      %v444 = vld [vmem:[%s435 + $0x18] sm:$0xff]
      %v445 = vld [vmem:[%s435 + $0x20] sm:$0xff]
      %v446 = vld [vmem:[%s435 + $0x28] sm:$0xff]
      %v447 = vld [vmem:[%s435 + $0x30] sm:$0xff]
      %v448 = vld [vmem:[%s435 + $0x38] sm:$0xff]
      %v449 = vld [vmem:[%s435 + $0x40] sm:$0xff]
      %v450 = vld [vmem:[%s435 + $0x48] sm:$0xff]
      %v451 = vld [vmem:[%s435 + $0x50] sm:$0xff]
      %v452 = vld [vmem:[%s435 + $0x58] sm:$0xff]
      %v453 = vld [vmem:[%s435 + $0x60] sm:$0xff]
      %v454 = vld [vmem:[%s435 + $0x68] sm:$0xff]
      %v455 = vld [vmem:[%s435 + $0x70] sm:$0xff]
      %v456 = vld [vmem:[%s435 + $0x78] sm:$0xff]
      %v457 = vld [vmem:[%s435 + $0x80] sm:$0xff]
      %v458 = vld [vmem:[%s435 + $0x88] sm:$0xff]
      %v459 = vld [vmem:[%s435 + $0x90] sm:$0xff]
      %v460 = vld [vmem:[%s435 + $0x98] sm:$0xff]
      %v461 = vld [vmem:[%s435 + $0xa0] sm:$0xff]
      %v462 = vld [vmem:[%s435 + $0xa8] sm:$0xff]
      %v463 = vld [vmem:[%s435 + $0xb0] sm:$0xff]
      %v464 = vld [vmem:[%s435 + $0xb8] sm:$0xff]
      %v465 = vld [vmem:[%s435 + $0xc0] sm:$0xff]
      %v466 = vld [vmem:[%s435 + $0xc8] sm:$0xff]
      %v467 = vld [vmem:[%s435 + $0xd0] sm:$0xff]
      %v468 = vld [vmem:[%s435 + $0xd8] sm:$0xff]
      %v469 = vld [vmem:[%s435 + $0xe0] sm:$0xff]
      %v470 = vld [vmem:[%s435 + $0xe8] sm:$0xff]
      %v471 = vld [vmem:[%s435 + $0xf0] sm:$0xff]
      %v472 = vld [vmem:[%s435 + $0xf8] sm:$0xff]
      %v473 = vld [vmem:[%s3] sm:$0x1]
      %v475 = vperm.slane %v473, 0
      %v477 = vadd.f32 %v475, 0.0
      %v478 = vld [vmem:[%s1] sm:$0xff]
      %v479 = vld [vmem:[%s1 + $0x8] sm:$0xff]
      %v480 = vld [vmem:[%s1 + $0x10] sm:$0xff]
      %v481 = vld [vmem:[%s1 + $0x18] sm:$0xff]
      %v482 = vld [vmem:[%s1 + $0x20] sm:$0xff]
      %v483 = vld [vmem:[%s1 + $0x28] sm:$0xff]
      %v484 = vld [vmem:[%s1 + $0x30] sm:$0xff]
      %v485 = vld [vmem:[%s1 + $0x38] sm:$0xff]
      %v486 = vld [vmem:[%s1 + $0x40] sm:$0xff]
      %v487 = vld [vmem:[%s1 + $0x48] sm:$0xff]
      %v488 = vld [vmem:[%s1 + $0x50] sm:$0xff]
      %v489 = vld [vmem:[%s1 + $0x58] sm:$0xff]
      %v490 = vld [vmem:[%s1 + $0x60] sm:$0xff]
      %v491 = vld [vmem:[%s1 + $0x68] sm:$0xff]
      %v492 = vld [vmem:[%s1 + $0x70] sm:$0xff]
      %v493 = vld [vmem:[%s1 + $0x78] sm:$0xff]
      %494 = vmatpush.msra.mxu0 %v456
      %495 = vmatpush.msra.mxu0 %v455
      %496 = vmatpush.msra.mxu0 %v454
      %497 = vmatpush.msra.mxu0 %v453
      %498 = vmatpush.msra.mxu0 %v452
      %499 = vmatpush.msra.mxu0 %v451
      %500 = vmatpush.msra.mxu0 %v450
      %501 = vmatpush.msra.mxu0 %v449
      %502 = vmatpush.msra.mxu0 %v448
      %503 = vmatpush.msra.mxu0 %v447
      %504 = vmatpush.msra.mxu0 %v446
      %505 = vmatpush.msra.mxu0 %v445
      %506 = vmatpush.msra.mxu0 %v444
      %507 = vmatpush.msra.mxu0 %v443
      %508 = vmatpush.msra.mxu0 %v442
      %509 = vmatpush.msra.mxu0 %v441
      %510 = vmatmul.f32.gmra.mxu0 %v478
      %v511 = vpop.f32.mrf.mxu0
      %v512 = vadd.f32 0.0, %v511
      %513 = vmatmul.f32.gmra.mxu0 %v480
      %v514 = vpop.f32.mrf.mxu0
      %v515 = vadd.f32 0.0, %v514
      %516 = vmatmul.f32.gmra.mxu0 %v482
      %v517 = vpop.f32.mrf.mxu0
      %v518 = vadd.f32 0.0, %v517
      %519 = vmatmul.f32.gmra.mxu0 %v484
      %v520 = vpop.f32.mrf.mxu0
      %v521 = vadd.f32 0.0, %v520
      %522 = vmatmul.f32.gmra.mxu0 %v486
      %v523 = vpop.f32.mrf.mxu0
      %v524 = vadd.f32 0.0, %v523
      %525 = vmatmul.f32.gmra.mxu0 %v488
      %v526 = vpop.f32.mrf.mxu0
      %v527 = vadd.f32 0.0, %v526
      %528 = vmatmul.f32.gmra.mxu0 %v490
      %v529 = vpop.f32.mrf.mxu0
      %v530 = vadd.f32 0.0, %v529
      %531 = vmatmul.f32.gmra.mxu0 %v492
      %v532 = vpop.f32.mrf.mxu0
      %v533 = vadd.f32 0.0, %v532
      %534 = vdwg.mxu0
      %535 = vmatpush.msra.mxu0 %v472
      %536 = vmatpush.msra.mxu0 %v471
      %537 = vmatpush.msra.mxu0 %v470
      %538 = vmatpush.msra.mxu0 %v469
      %539 = vmatpush.msra.mxu0 %v468
      %540 = vmatpush.msra.mxu0 %v467
      %541 = vmatpush.msra.mxu0 %v466
      %542 = vmatpush.msra.mxu0 %v465
      %543 = vmatpush.msra.mxu0 %v464
      %544 = vmatpush.msra.mxu0 %v463
      %545 = vmatpush.msra.mxu0 %v462
      %546 = vmatpush.msra.mxu0 %v461
      %547 = vmatpush.msra.mxu0 %v460
      %548 = vmatpush.msra.mxu0 %v459
      %549 = vmatpush.msra.mxu0 %v458
      %550 = vmatpush.msra.mxu0 %v457
      %551 = vmatmul.f32.gmra.mxu0 %v479
      %v552 = vpop.f32.mrf.mxu0
      %v553 = vadd.f32 %v512, %v552
      %554 = vmatmul.f32.gmra.mxu0 %v481
      %v555 = vpop.f32.mrf.mxu0
      %v556 = vadd.f32 %v515, %v555
      %557 = vmatmul.f32.gmra.mxu0 %v483
      %v558 = vpop.f32.mrf.mxu0
      %v559 = vadd.f32 %v518, %v558
      %560 = vmatmul.f32.gmra.mxu0 %v485
      %v561 = vpop.f32.mrf.mxu0
      %v562 = vadd.f32 %v521, %v561
      %563 = vmatmul.f32.gmra.mxu0 %v487
      %v564 = vpop.f32.mrf.mxu0
      %v565 = vadd.f32 %v524, %v564
      %566 = vmatmul.f32.gmra.mxu0 %v489
      %v567 = vpop.f32.mrf.mxu0
      %v568 = vadd.f32 %v527, %v567
      %569 = vmatmul.f32.gmra.mxu0 %v491
      %v570 = vpop.f32.mrf.mxu0
      %v571 = vadd.f32 %v530, %v570
      %572 = vmatmul.f32.gmra.mxu0 %v493
      %v573 = vpop.f32.mrf.mxu0
      %v574 = vadd.f32 %v533, %v573
      %575 = vdwg.mxu0
      %v576 = vld [vmem:[%s2] sm:$0xf]
      %vm577 = vcmask 31744
      %v579 = vsel %vm577, %v553, 0
      %v582 = vsel %vm577, %v556, 0
      %v585 = vsel %vm577, %v559, 0
      %v588 = vsel %vm577, %v562, 0
      %v591 = vsel %vm577, %v565, 0
      %v594 = vsel %vm577, %v568, 0
      %v597 = vsel %vm577, %v571, 0
      %v600 = vsel %vm577, %v574, 0
      %vm602 = vcmask 1043456
      %v604 = vsel %vm602, %v576, 0
      %606 = vmatpush.msra.mxu0 0.0
      %607 = vmatpush.msra.mxu0 0.0
      %608 = vmatpush.msra.mxu0 0.0
      %609 = vmatpush.msra.mxu0 0.0
      %610 = vmatpush.msra.mxu0 0.0
      %611 = vmatpush.msra.mxu0 0.0
      %612 = vmatpush.msra.mxu0 0.0
      %613 = vmatpush.msra.mxu0 0.0
      %614 = vmatpush.msra.mxu0 0.0
      %615 = vmatpush.msra.mxu0 0.0
      %616 = vmatpush.msra.mxu0 0.0
      %617 = vmatpush.msra.mxu0 0.0
      %618 = vmatpush.msra.mxu0 0.0
      %619 = vmatpush.msra.mxu0 0.0
      %620 = vmatpush.msra.mxu0 0.0
      %621 = vmatpush.msra.mxu0 %v604
      %622 = vmatmul.f32.gmra.mxu0 %v579
      %v623 = vpop.f32.mrf.mxu0
      %v624 = vadd.f32 0.0, %v623
      %625 = vmatmul.f32.gmra.mxu0 %v582
      %v626 = vpop.f32.mrf.mxu0
      %v627 = vadd.f32 0.0, %v626
      %628 = vmatmul.f32.gmra.mxu0 %v585
      %v629 = vpop.f32.mrf.mxu0
      %v630 = vadd.f32 0.0, %v629
      %631 = vmatmul.f32.gmra.mxu0 %v588
      %v632 = vpop.f32.mrf.mxu0
      %v633 = vadd.f32 0.0, %v632
      %634 = vmatmul.f32.gmra.mxu0 %v591
      %v635 = vpop.f32.mrf.mxu0
      %v636 = vadd.f32 0.0, %v635
      %637 = vmatmul.f32.gmra.mxu0 %v594
      %v638 = vpop.f32.mrf.mxu0
      %v639 = vadd.f32 0.0, %v638
      %640 = vmatmul.f32.gmra.mxu0 %v597
      %v641 = vpop.f32.mrf.mxu0
      %v642 = vadd.f32 0.0, %v641
      %643 = vmatmul.f32.gmra.mxu0 %v600
      %v644 = vpop.f32.mrf.mxu0
      %v645 = vadd.f32 0.0, %v644
      %646 = vdwg.mxu0
      %v647 = vadd.f32 %v477, %v624
      %v648 = vadd.f32 %v477, %v627
      %v649 = vadd.f32 %v477, %v630
      %v650 = vadd.f32 %v477, %v633
      %v651 = vadd.f32 %v477, %v636
      %v652 = vadd.f32 %v477, %v639
      %v653 = vadd.f32 %v477, %v642
      %v654 = vadd.f32 %v477, %v645
      %s655 = scalar_lea.vmem %s1, 128
      %v656 = vld [vmem:[%s655] sm:$0xff]
      %v657 = vld [vmem:[%s655 + $0x8] sm:$0xff]
      %v658 = vld [vmem:[%s655 + $0x10] sm:$0xff]
      %v659 = vld [vmem:[%s655 + $0x18] sm:$0xff]
      %v660 = vld [vmem:[%s655 + $0x20] sm:$0xff]
      %v661 = vld [vmem:[%s655 + $0x28] sm:$0xff]
      %v662 = vld [vmem:[%s655 + $0x30] sm:$0xff]
      %v663 = vld [vmem:[%s655 + $0x38] sm:$0xff]
      %v664 = vld [vmem:[%s655 + $0x40] sm:$0xff]
      %v665 = vld [vmem:[%s655 + $0x48] sm:$0xff]
      %v666 = vld [vmem:[%s655 + $0x50] sm:$0xff]
      %v667 = vld [vmem:[%s655 + $0x58] sm:$0xff]
      %v668 = vld [vmem:[%s655 + $0x60] sm:$0xff]
      %v669 = vld [vmem:[%s655 + $0x68] sm:$0xff]
      %v670 = vld [vmem:[%s655 + $0x70] sm:$0xff]
      %v671 = vld [vmem:[%s655 + $0x78] sm:$0xff]
      %672 = vmatpush.msra.mxu0 %v456
      %673 = vmatpush.msra.mxu0 %v455
      %674 = vmatpush.msra.mxu0 %v454
      %675 = vmatpush.msra.mxu0 %v453
      %676 = vmatpush.msra.mxu0 %v452
      %677 = vmatpush.msra.mxu0 %v451
      %678 = vmatpush.msra.mxu0 %v450
      %679 = vmatpush.msra.mxu0 %v449
      %680 = vmatpush.msra.mxu0 %v448
      %681 = vmatpush.msra.mxu0 %v447
      %682 = vmatpush.msra.mxu0 %v446
      %683 = vmatpush.msra.mxu0 %v445
      %684 = vmatpush.msra.mxu0 %v444
      %685 = vmatpush.msra.mxu0 %v443
      %686 = vmatpush.msra.mxu0 %v442
      %687 = vmatpush.msra.mxu0 %v441
      %688 = vmatmul.f32.gmra.mxu0 %v656
      %v689 = vpop.f32.mrf.mxu0
      %v690 = vadd.f32 0.0, %v689
      %691 = vmatmul.f32.gmra.mxu0 %v658
      %v692 = vpop.f32.mrf.mxu0
      %v693 = vadd.f32 0.0, %v692
      %694 = vmatmul.f32.gmra.mxu0 %v660
      %v695 = vpop.f32.mrf.mxu0
      %v696 = vadd.f32 0.0, %v695
      %697 = vmatmul.f32.gmra.mxu0 %v662
      %v698 = vpop.f32.mrf.mxu0
      %v699 = vadd.f32 0.0, %v698
      %700 = vmatmul.f32.gmra.mxu0 %v664
      %v701 = vpop.f32.mrf.mxu0
      %v702 = vadd.f32 0.0, %v701
      %703 = vmatmul.f32.gmra.mxu0 %v666
      %v704 = vpop.f32.mrf.mxu0
      %v705 = vadd.f32 0.0, %v704
      %706 = vmatmul.f32.gmra.mxu0 %v668
      %v707 = vpop.f32.mrf.mxu0
      %v708 = vadd.f32 0.0, %v707
      %709 = vmatmul.f32.gmra.mxu0 %v670
      %v710 = vpop.f32.mrf.mxu0
      %v711 = vadd.f32 0.0, %v710
      %712 = vdwg.mxu0
      %713 = vmatpush.msra.mxu0 %v472
      %714 = vmatpush.msra.mxu0 %v471
      %715 = vmatpush.msra.mxu0 %v470
      %716 = vmatpush.msra.mxu0 %v469
      %717 = vmatpush.msra.mxu0 %v468
      %718 = vmatpush.msra.mxu0 %v467
      %719 = vmatpush.msra.mxu0 %v466
      %720 = vmatpush.msra.mxu0 %v465
      %721 = vmatpush.msra.mxu0 %v464
      %722 = vmatpush.msra.mxu0 %v463
      %723 = vmatpush.msra.mxu0 %v462
      %724 = vmatpush.msra.mxu0 %v461
      %725 = vmatpush.msra.mxu0 %v460
      %726 = vmatpush.msra.mxu0 %v459
      %727 = vmatpush.msra.mxu0 %v458
      %728 = vmatpush.msra.mxu0 %v457
      %729 = vmatmul.f32.gmra.mxu0 %v657
      %v730 = vpop.f32.mrf.mxu0
      %v731 = vadd.f32 %v690, %v730
      %732 = vmatmul.f32.gmra.mxu0 %v659
      %v733 = vpop.f32.mrf.mxu0
      %v734 = vadd.f32 %v693, %v733
      %735 = vmatmul.f32.gmra.mxu0 %v661
      %v736 = vpop.f32.mrf.mxu0
      %v737 = vadd.f32 %v696, %v736
      %738 = vmatmul.f32.gmra.mxu0 %v663
      %v739 = vpop.f32.mrf.mxu0
      %v740 = vadd.f32 %v699, %v739
      %741 = vmatmul.f32.gmra.mxu0 %v665
      %v742 = vpop.f32.mrf.mxu0
      %v743 = vadd.f32 %v702, %v742
      %744 = vmatmul.f32.gmra.mxu0 %v667
      %v745 = vpop.f32.mrf.mxu0
      %v746 = vadd.f32 %v705, %v745
      %747 = vmatmul.f32.gmra.mxu0 %v669
      %v748 = vpop.f32.mrf.mxu0
      %v749 = vadd.f32 %v708, %v748
      %750 = vmatmul.f32.gmra.mxu0 %v671
      %v751 = vpop.f32.mrf.mxu0
      %v752 = vadd.f32 %v711, %v751
      %753 = vdwg.mxu0
      %s754 = scalar_lea.vmem %s2, 4
      %v755 = vld [vmem:[%s754] sm:$0xf]
      %v757 = vsel %vm577, %v731, 0
      %v760 = vsel %vm577, %v734, 0
      %v763 = vsel %vm577, %v737, 0
      %v766 = vsel %vm577, %v740, 0
      %v769 = vsel %vm577, %v743, 0
      %v772 = vsel %vm577, %v746, 0
      %v775 = vsel %vm577, %v749, 0
      %v778 = vsel %vm577, %v752, 0
      %v781 = vsel %vm602, %v755, 0
      %783 = vmatpush.msra.mxu0 0.0
      %784 = vmatpush.msra.mxu0 0.0
      %785 = vmatpush.msra.mxu0 0.0
      %786 = vmatpush.msra.mxu0 0.0
      %787 = vmatpush.msra.mxu0 0.0
      %788 = vmatpush.msra.mxu0 0.0
      %789 = vmatpush.msra.mxu0 0.0
      %790 = vmatpush.msra.mxu0 0.0
      %791 = vmatpush.msra.mxu0 0.0
      %792 = vmatpush.msra.mxu0 0.0
      %793 = vmatpush.msra.mxu0 0.0
      %794 = vmatpush.msra.mxu0 0.0
      %795 = vmatpush.msra.mxu0 0.0
      %796 = vmatpush.msra.mxu0 0.0
      %797 = vmatpush.msra.mxu0 0.0
      %798 = vmatpush.msra.mxu0 %v781
      %799 = vmatmul.f32.gmra.mxu0 %v757
      %v800 = vpop.f32.mrf.mxu0
      %v801 = vadd.f32 0.0, %v800
      %802 = vmatmul.f32.gmra.mxu0 %v760
      %v803 = vpop.f32.mrf.mxu0
      %v804 = vadd.f32 0.0, %v803
      %805 = vmatmul.f32.gmra.mxu0 %v763
      %v806 = vpop.f32.mrf.mxu0
      %v807 = vadd.f32 0.0, %v806
      %808 = vmatmul.f32.gmra.mxu0 %v766
      %v809 = vpop.f32.mrf.mxu0
      %v810 = vadd.f32 0.0, %v809
      %811 = vmatmul.f32.gmra.mxu0 %v769
      %v812 = vpop.f32.mrf.mxu0
      %v813 = vadd.f32 0.0, %v812
      %814 = vmatmul.f32.gmra.mxu0 %v772
      %v815 = vpop.f32.mrf.mxu0
      %v816 = vadd.f32 0.0, %v815
      %817 = vmatmul.f32.gmra.mxu0 %v775
      %v818 = vpop.f32.mrf.mxu0
      %v819 = vadd.f32 0.0, %v818
      %820 = vmatmul.f32.gmra.mxu0 %v778
      %v821 = vpop.f32.mrf.mxu0
      %v822 = vadd.f32 0.0, %v821
      %823 = vdwg.mxu0
      %v824 = vadd.f32 %v647, %v801
      %v825 = vadd.f32 %v648, %v804
      %v826 = vadd.f32 %v649, %v807
      %v827 = vadd.f32 %v650, %v810
      %v828 = vadd.f32 %v651, %v813
      %v829 = vadd.f32 %v652, %v816
      %v830 = vadd.f32 %v653, %v819
      %v831 = vadd.f32 %v654, %v822
      %s832 = scalar_lea.vmem %s1, 256
      %v833 = vld [vmem:[%s832] sm:$0xff]
      %v834 = vld [vmem:[%s832 + $0x8] sm:$0xff]
      %v835 = vld [vmem:[%s832 + $0x10] sm:$0xff]
      %v836 = vld [vmem:[%s832 + $0x18] sm:$0xff]
      %v837 = vld [vmem:[%s832 + $0x20] sm:$0xff]
      %v838 = vld [vmem:[%s832 + $0x28] sm:$0xff]
      %v839 = vld [vmem:[%s832 + $0x30] sm:$0xff]
      %v840 = vld [vmem:[%s832 + $0x38] sm:$0xff]
      %v841 = vld [vmem:[%s832 + $0x40] sm:$0xff]
      %v842 = vld [vmem:[%s832 + $0x48] sm:$0xff]
      %v843 = vld [vmem:[%s832 + $0x50] sm:$0xff]
      %v844 = vld [vmem:[%s832 + $0x58] sm:$0xff]
      %v845 = vld [vmem:[%s832 + $0x60] sm:$0xff]
      %v846 = vld [vmem:[%s832 + $0x68] sm:$0xff]
      %v847 = vld [vmem:[%s832 + $0x70] sm:$0xff]
      %v848 = vld [vmem:[%s832 + $0x78] sm:$0xff]
      %849 = vmatpush.msra.mxu0 %v456
      %850 = vmatpush.msra.mxu0 %v455
      %851 = vmatpush.msra.mxu0 %v454
      %852 = vmatpush.msra.mxu0 %v453
      %853 = vmatpush.msra.mxu0 %v452
      %854 = vmatpush.msra.mxu0 %v451
      %855 = vmatpush.msra.mxu0 %v450
      %856 = vmatpush.msra.mxu0 %v449
      %857 = vmatpush.msra.mxu0 %v448
      %858 = vmatpush.msra.mxu0 %v447
      %859 = vmatpush.msra.mxu0 %v446
      %860 = vmatpush.msra.mxu0 %v445
      %861 = vmatpush.msra.mxu0 %v444
      %862 = vmatpush.msra.mxu0 %v443
      %863 = vmatpush.msra.mxu0 %v442
      %864 = vmatpush.msra.mxu0 %v441
      %865 = vmatmul.f32.gmra.mxu0 %v833
      %v866 = vpop.f32.mrf.mxu0
      %v867 = vadd.f32 0.0, %v866
      %868 = vmatmul.f32.gmra.mxu0 %v835
      %v869 = vpop.f32.mrf.mxu0
      %v870 = vadd.f32 0.0, %v869
      %871 = vmatmul.f32.gmra.mxu0 %v837
      %v872 = vpop.f32.mrf.mxu0
      %v873 = vadd.f32 0.0, %v872
      %874 = vmatmul.f32.gmra.mxu0 %v839
      %v875 = vpop.f32.mrf.mxu0
      %v876 = vadd.f32 0.0, %v875
      %877 = vmatmul.f32.gmra.mxu0 %v841
      %v878 = vpop.f32.mrf.mxu0
      %v879 = vadd.f32 0.0, %v878
      %880 = vmatmul.f32.gmra.mxu0 %v843
      %v881 = vpop.f32.mrf.mxu0
      %v882 = vadd.f32 0.0, %v881
      %883 = vmatmul.f32.gmra.mxu0 %v845
      %v884 = vpop.f32.mrf.mxu0
      %v885 = vadd.f32 0.0, %v884
      %886 = vmatmul.f32.gmra.mxu0 %v847
      %v887 = vpop.f32.mrf.mxu0
      %v888 = vadd.f32 0.0, %v887
      %889 = vdwg.mxu0
      %890 = vmatpush.msra.mxu0 %v472
      %891 = vmatpush.msra.mxu0 %v471
      %892 = vmatpush.msra.mxu0 %v470
      %893 = vmatpush.msra.mxu0 %v469
      %894 = vmatpush.msra.mxu0 %v468
      %895 = vmatpush.msra.mxu0 %v467
      %896 = vmatpush.msra.mxu0 %v466
      %897 = vmatpush.msra.mxu0 %v465
      %898 = vmatpush.msra.mxu0 %v464
      %899 = vmatpush.msra.mxu0 %v463
      %900 = vmatpush.msra.mxu0 %v462
      %901 = vmatpush.msra.mxu0 %v461
      %902 = vmatpush.msra.mxu0 %v460
      %903 = vmatpush.msra.mxu0 %v459
      %904 = vmatpush.msra.mxu0 %v458
      %905 = vmatpush.msra.mxu0 %v457
      %906 = vmatmul.f32.gmra.mxu0 %v834
      %v907 = vpop.f32.mrf.mxu0
      %v908 = vadd.f32 %v867, %v907
      %909 = vmatmul.f32.gmra.mxu0 %v836
      %v910 = vpop.f32.mrf.mxu0
      %v911 = vadd.f32 %v870, %v910
      %912 = vmatmul.f32.gmra.mxu0 %v838
      %v913 = vpop.f32.mrf.mxu0
      %v914 = vadd.f32 %v873, %v913
      %915 = vmatmul.f32.gmra.mxu0 %v840
      %v916 = vpop.f32.mrf.mxu0
      %v917 = vadd.f32 %v876, %v916
      %918 = vmatmul.f32.gmra.mxu0 %v842
      %v919 = vpop.f32.mrf.mxu0
      %v920 = vadd.f32 %v879, %v919
      %921 = vmatmul.f32.gmra.mxu0 %v844
      %v922 = vpop.f32.mrf.mxu0
      %v923 = vadd.f32 %v882, %v922
      %924 = vmatmul.f32.gmra.mxu0 %v846
      %v925 = vpop.f32.mrf.mxu0
      %v926 = vadd.f32 %v885, %v925
      %927 = vmatmul.f32.gmra.mxu0 %v848
      %v928 = vpop.f32.mrf.mxu0
      %v929 = vadd.f32 %v888, %v928
      %930 = vdwg.mxu0
      %s931 = scalar_lea.vmem %s2, 8
      %v932 = vld [vmem:[%s931] sm:$0xf]
      %v934 = vsel %vm577, %v908, 0
      %v937 = vsel %vm577, %v911, 0
      %v940 = vsel %vm577, %v914, 0
      %v943 = vsel %vm577, %v917, 0
      %v946 = vsel %vm577, %v920, 0
      %v949 = vsel %vm577, %v923, 0
      %v952 = vsel %vm577, %v926, 0
      %v955 = vsel %vm577, %v929, 0
      %v958 = vsel %vm602, %v932, 0
      %960 = vmatpush.msra.mxu0 0.0
      %961 = vmatpush.msra.mxu0 0.0
      %962 = vmatpush.msra.mxu0 0.0
      %963 = vmatpush.msra.mxu0 0.0
      %964 = vmatpush.msra.mxu0 0.0
      %965 = vmatpush.msra.mxu0 0.0
      %966 = vmatpush.msra.mxu0 0.0
      %967 = vmatpush.msra.mxu0 0.0
      %968 = vmatpush.msra.mxu0 0.0
      %969 = vmatpush.msra.mxu0 0.0
      %970 = vmatpush.msra.mxu0 0.0
      %971 = vmatpush.msra.mxu0 0.0
      %972 = vmatpush.msra.mxu0 0.0
      %973 = vmatpush.msra.mxu0 0.0
      %974 = vmatpush.msra.mxu0 0.0
      %975 = vmatpush.msra.mxu0 %v958
      %976 = vmatmul.f32.gmra.mxu0 %v934
      %v977 = vpop.f32.mrf.mxu0
      %v978 = vadd.f32 0.0, %v977
      %979 = vmatmul.f32.gmra.mxu0 %v937
      %v980 = vpop.f32.mrf.mxu0
      %v981 = vadd.f32 0.0, %v980
      %982 = vmatmul.f32.gmra.mxu0 %v940
      %v983 = vpop.f32.mrf.mxu0
      %v984 = vadd.f32 0.0, %v983
      %985 = vmatmul.f32.gmra.mxu0 %v943
      %v986 = vpop.f32.mrf.mxu0
      %v987 = vadd.f32 0.0, %v986
      %988 = vmatmul.f32.gmra.mxu0 %v946
      %v989 = vpop.f32.mrf.mxu0
      %v990 = vadd.f32 0.0, %v989
      %991 = vmatmul.f32.gmra.mxu0 %v949
      %v992 = vpop.f32.mrf.mxu0
      %v993 = vadd.f32 0.0, %v992
      %994 = vmatmul.f32.gmra.mxu0 %v952
      %v995 = vpop.f32.mrf.mxu0
      %v996 = vadd.f32 0.0, %v995
      %997 = vmatmul.f32.gmra.mxu0 %v955
      %v998 = vpop.f32.mrf.mxu0
      %v999 = vadd.f32 0.0, %v998
      %1000 = vdwg.mxu0
      %v1001 = vadd.f32 %v824, %v978
      %v1002 = vadd.f32 %v825, %v981
      %v1003 = vadd.f32 %v826, %v984
      %v1004 = vadd.f32 %v827, %v987
      %v1005 = vadd.f32 %v828, %v990
      %v1006 = vadd.f32 %v829, %v993
      %v1007 = vadd.f32 %v830, %v996
      %v1008 = vadd.f32 %v831, %v999
      %s1009 = scalar_lea.vmem %s1, 384
      %v1010 = vld [vmem:[%s1009] sm:$0xff]
      %v1011 = vld [vmem:[%s1009 + $0x8] sm:$0xff]
      %v1012 = vld [vmem:[%s1009 + $0x10] sm:$0xff]
      %v1013 = vld [vmem:[%s1009 + $0x18] sm:$0xff]
      %v1014 = vld [vmem:[%s1009 + $0x20] sm:$0xff]
      %v1015 = vld [vmem:[%s1009 + $0x28] sm:$0xff]
      %v1016 = vld [vmem:[%s1009 + $0x30] sm:$0xff]
      %v1017 = vld [vmem:[%s1009 + $0x38] sm:$0xff]
      %v1018 = vld [vmem:[%s1009 + $0x40] sm:$0xff]
      %v1019 = vld [vmem:[%s1009 + $0x48] sm:$0xff]
      %v1020 = vld [vmem:[%s1009 + $0x50] sm:$0xff]
      %v1021 = vld [vmem:[%s1009 + $0x58] sm:$0xff]
      %v1022 = vld [vmem:[%s1009 + $0x60] sm:$0xff]
      %v1023 = vld [vmem:[%s1009 + $0x68] sm:$0xff]
      %v1024 = vld [vmem:[%s1009 + $0x70] sm:$0xff]
      %v1025 = vld [vmem:[%s1009 + $0x78] sm:$0xff]
      %1026 = vmatpush.msra.mxu0 %v456
      %1027 = vmatpush.msra.mxu0 %v455
      %1028 = vmatpush.msra.mxu0 %v454
      %1029 = vmatpush.msra.mxu0 %v453
      %1030 = vmatpush.msra.mxu0 %v452
      %1031 = vmatpush.msra.mxu0 %v451
      %1032 = vmatpush.msra.mxu0 %v450
      %1033 = vmatpush.msra.mxu0 %v449
      %1034 = vmatpush.msra.mxu0 %v448
      %1035 = vmatpush.msra.mxu0 %v447
      %1036 = vmatpush.msra.mxu0 %v446
      %1037 = vmatpush.msra.mxu0 %v445
      %1038 = vmatpush.msra.mxu0 %v444
      %1039 = vmatpush.msra.mxu0 %v443
      %1040 = vmatpush.msra.mxu0 %v442
      %1041 = vmatpush.msra.mxu0 %v441
      %1042 = vmatmul.f32.gmra.mxu0 %v1010
      %v1043 = vpop.f32.mrf.mxu0
      %v1044 = vadd.f32 0.0, %v1043
      %1045 = vmatmul.f32.gmra.mxu0 %v1012
      %v1046 = vpop.f32.mrf.mxu0
      %v1047 = vadd.f32 0.0, %v1046
      %1048 = vmatmul.f32.gmra.mxu0 %v1014
      %v1049 = vpop.f32.mrf.mxu0
      %v1050 = vadd.f32 0.0, %v1049
      %1051 = vmatmul.f32.gmra.mxu0 %v1016
      %v1052 = vpop.f32.mrf.mxu0
      %v1053 = vadd.f32 0.0, %v1052
      %1054 = vmatmul.f32.gmra.mxu0 %v1018
      %v1055 = vpop.f32.mrf.mxu0
      %v1056 = vadd.f32 0.0, %v1055
      %1057 = vmatmul.f32.gmra.mxu0 %v1020
      %v1058 = vpop.f32.mrf.mxu0
      %v1059 = vadd.f32 0.0, %v1058
      %1060 = vmatmul.f32.gmra.mxu0 %v1022
      %v1061 = vpop.f32.mrf.mxu0
      %v1062 = vadd.f32 0.0, %v1061
      %1063 = vmatmul.f32.gmra.mxu0 %v1024
      %v1064 = vpop.f32.mrf.mxu0
      %v1065 = vadd.f32 0.0, %v1064
      %1066 = vdwg.mxu0
      %1067 = vmatpush.msra.mxu0 %v472
      %1068 = vmatpush.msra.mxu0 %v471
      %1069 = vmatpush.msra.mxu0 %v470
      %1070 = vmatpush.msra.mxu0 %v469
      %1071 = vmatpush.msra.mxu0 %v468
      %1072 = vmatpush.msra.mxu0 %v467
      %1073 = vmatpush.msra.mxu0 %v466
      %1074 = vmatpush.msra.mxu0 %v465
      %1075 = vmatpush.msra.mxu0 %v464
      %1076 = vmatpush.msra.mxu0 %v463
      %1077 = vmatpush.msra.mxu0 %v462
      %1078 = vmatpush.msra.mxu0 %v461
      %1079 = vmatpush.msra.mxu0 %v460
      %1080 = vmatpush.msra.mxu0 %v459
      %1081 = vmatpush.msra.mxu0 %v458
      %1082 = vmatpush.msra.mxu0 %v457
      %1083 = vmatmul.f32.gmra.mxu0 %v1011
      %v1084 = vpop.f32.mrf.mxu0
      %v1085 = vadd.f32 %v1044, %v1084
      %1086 = vmatmul.f32.gmra.mxu0 %v1013
      %v1087 = vpop.f32.mrf.mxu0
      %v1088 = vadd.f32 %v1047, %v1087
      %1089 = vmatmul.f32.gmra.mxu0 %v1015
      %v1090 = vpop.f32.mrf.mxu0
      %v1091 = vadd.f32 %v1050, %v1090
      %1092 = vmatmul.f32.gmra.mxu0 %v1017
      %v1093 = vpop.f32.mrf.mxu0
      %v1094 = vadd.f32 %v1053, %v1093
      %1095 = vmatmul.f32.gmra.mxu0 %v1019
      %v1096 = vpop.f32.mrf.mxu0
      %v1097 = vadd.f32 %v1056, %v1096
      %1098 = vmatmul.f32.gmra.mxu0 %v1021
      %v1099 = vpop.f32.mrf.mxu0
      %v1100 = vadd.f32 %v1059, %v1099
      %1101 = vmatmul.f32.gmra.mxu0 %v1023
      %v1102 = vpop.f32.mrf.mxu0
      %v1103 = vadd.f32 %v1062, %v1102
      %1104 = vmatmul.f32.gmra.mxu0 %v1025
      %v1105 = vpop.f32.mrf.mxu0
      %v1106 = vadd.f32 %v1065, %v1105
      %1107 = vdwg.mxu0
      %s1108 = scalar_lea.vmem %s2, 12
      %v1109 = vld [vmem:[%s1108] sm:$0xf]
      %v1111 = vsel %vm577, %v1085, 0
      %v1114 = vsel %vm577, %v1088, 0
      %v1117 = vsel %vm577, %v1091, 0
      %v1120 = vsel %vm577, %v1094, 0
      %v1123 = vsel %vm577, %v1097, 0
      %v1126 = vsel %vm577, %v1100, 0
      %v1129 = vsel %vm577, %v1103, 0
      %v1132 = vsel %vm577, %v1106, 0
      %v1135 = vsel %vm602, %v1109, 0
      %1137 = vmatpush.msra.mxu0 0.0
      %1138 = vmatpush.msra.mxu0 0.0
      %1139 = vmatpush.msra.mxu0 0.0
      %1140 = vmatpush.msra.mxu0 0.0
      %1141 = vmatpush.msra.mxu0 0.0
      %1142 = vmatpush.msra.mxu0 0.0
      %1143 = vmatpush.msra.mxu0 0.0
      %1144 = vmatpush.msra.mxu0 0.0
      %1145 = vmatpush.msra.mxu0 0.0
      %1146 = vmatpush.msra.mxu0 0.0
      %1147 = vmatpush.msra.mxu0 0.0
      %1148 = vmatpush.msra.mxu0 0.0
      %1149 = vmatpush.msra.mxu0 0.0
      %1150 = vmatpush.msra.mxu0 0.0
      %1151 = vmatpush.msra.mxu0 0.0
      %1152 = vmatpush.msra.mxu0 %v1135
      %1153 = vmatmul.f32.gmra.mxu0 %v1111
      %v1154 = vpop.f32.mrf.mxu0
      %v1155 = vadd.f32 0.0, %v1154
      %1156 = vmatmul.f32.gmra.mxu0 %v1114
      %v1157 = vpop.f32.mrf.mxu0
      %v1158 = vadd.f32 0.0, %v1157
      %1159 = vmatmul.f32.gmra.mxu0 %v1117
      %v1160 = vpop.f32.mrf.mxu0
      %v1161 = vadd.f32 0.0, %v1160
      %1162 = vmatmul.f32.gmra.mxu0 %v1120
      %v1163 = vpop.f32.mrf.mxu0
      %v1164 = vadd.f32 0.0, %v1163
      %1165 = vmatmul.f32.gmra.mxu0 %v1123
      %v1166 = vpop.f32.mrf.mxu0
      %v1167 = vadd.f32 0.0, %v1166
      %1168 = vmatmul.f32.gmra.mxu0 %v1126
      %v1169 = vpop.f32.mrf.mxu0
      %v1170 = vadd.f32 0.0, %v1169
      %1171 = vmatmul.f32.gmra.mxu0 %v1129
      %v1172 = vpop.f32.mrf.mxu0
      %v1173 = vadd.f32 0.0, %v1172
      %1174 = vmatmul.f32.gmra.mxu0 %v1132
      %v1175 = vpop.f32.mrf.mxu0
      %v1176 = vadd.f32 0.0, %v1175
      %1177 = vdwg.mxu0
      %v1178 = vadd.f32 %v1001, %v1155
      %v1179 = vadd.f32 %v1002, %v1158
      %v1180 = vadd.f32 %v1003, %v1161
      %v1181 = vadd.f32 %v1004, %v1164
      %v1182 = vadd.f32 %v1005, %v1167
      %v1183 = vadd.f32 %v1006, %v1170
      %v1184 = vadd.f32 %v1007, %v1173
      %v1185 = vadd.f32 %v1008, %v1176
      %s1186 = scalar_lea.vmem %s1, 512
      %v1187 = vld [vmem:[%s1186] sm:$0xff]
      %v1188 = vld [vmem:[%s1186 + $0x8] sm:$0xff]
      %v1189 = vld [vmem:[%s1186 + $0x10] sm:$0xff]
      %v1190 = vld [vmem:[%s1186 + $0x18] sm:$0xff]
      %v1191 = vld [vmem:[%s1186 + $0x20] sm:$0xff]
      %v1192 = vld [vmem:[%s1186 + $0x28] sm:$0xff]
      %v1193 = vld [vmem:[%s1186 + $0x30] sm:$0xff]
      %v1194 = vld [vmem:[%s1186 + $0x38] sm:$0xff]
      %v1195 = vld [vmem:[%s1186 + $0x40] sm:$0xff]
      %v1196 = vld [vmem:[%s1186 + $0x48] sm:$0xff]
      %v1197 = vld [vmem:[%s1186 + $0x50] sm:$0xff]
      %v1198 = vld [vmem:[%s1186 + $0x58] sm:$0xff]
      %v1199 = vld [vmem:[%s1186 + $0x60] sm:$0xff]
      %v1200 = vld [vmem:[%s1186 + $0x68] sm:$0xff]
      %v1201 = vld [vmem:[%s1186 + $0x70] sm:$0xff]
      %v1202 = vld [vmem:[%s1186 + $0x78] sm:$0xff]
      %1203 = vmatpush.msra.mxu0 %v456
      %1204 = vmatpush.msra.mxu0 %v455
      %1205 = vmatpush.msra.mxu0 %v454
      %1206 = vmatpush.msra.mxu0 %v453
      %1207 = vmatpush.msra.mxu0 %v452
      %1208 = vmatpush.msra.mxu0 %v451
      %1209 = vmatpush.msra.mxu0 %v450
      %1210 = vmatpush.msra.mxu0 %v449
      %1211 = vmatpush.msra.mxu0 %v448
      %1212 = vmatpush.msra.mxu0 %v447
      %1213 = vmatpush.msra.mxu0 %v446
      %1214 = vmatpush.msra.mxu0 %v445
      %1215 = vmatpush.msra.mxu0 %v444
      %1216 = vmatpush.msra.mxu0 %v443
      %1217 = vmatpush.msra.mxu0 %v442
      %1218 = vmatpush.msra.mxu0 %v441
      %1219 = vmatmul.f32.gmra.mxu0 %v1187
      %v1220 = vpop.f32.mrf.mxu0
      %v1221 = vadd.f32 0.0, %v1220
      %1222 = vmatmul.f32.gmra.mxu0 %v1189
      %v1223 = vpop.f32.mrf.mxu0
      %v1224 = vadd.f32 0.0, %v1223
      %1225 = vmatmul.f32.gmra.mxu0 %v1191
      %v1226 = vpop.f32.mrf.mxu0
      %v1227 = vadd.f32 0.0, %v1226
      %1228 = vmatmul.f32.gmra.mxu0 %v1193
      %v1229 = vpop.f32.mrf.mxu0
      %v1230 = vadd.f32 0.0, %v1229
      %1231 = vmatmul.f32.gmra.mxu0 %v1195
      %v1232 = vpop.f32.mrf.mxu0
      %v1233 = vadd.f32 0.0, %v1232
      %1234 = vmatmul.f32.gmra.mxu0 %v1197
      %v1235 = vpop.f32.mrf.mxu0
      %v1236 = vadd.f32 0.0, %v1235
      %1237 = vmatmul.f32.gmra.mxu0 %v1199
      %v1238 = vpop.f32.mrf.mxu0
      %v1239 = vadd.f32 0.0, %v1238
      %1240 = vmatmul.f32.gmra.mxu0 %v1201
      %v1241 = vpop.f32.mrf.mxu0
      %v1242 = vadd.f32 0.0, %v1241
      %1243 = vdwg.mxu0
      %1244 = vmatpush.msra.mxu0 %v472
      %1245 = vmatpush.msra.mxu0 %v471
      %1246 = vmatpush.msra.mxu0 %v470
      %1247 = vmatpush.msra.mxu0 %v469
      %1248 = vmatpush.msra.mxu0 %v468
      %1249 = vmatpush.msra.mxu0 %v467
      %1250 = vmatpush.msra.mxu0 %v466
      %1251 = vmatpush.msra.mxu0 %v465
      %1252 = vmatpush.msra.mxu0 %v464
      %1253 = vmatpush.msra.mxu0 %v463
      %1254 = vmatpush.msra.mxu0 %v462
      %1255 = vmatpush.msra.mxu0 %v461
      %1256 = vmatpush.msra.mxu0 %v460
      %1257 = vmatpush.msra.mxu0 %v459
      %1258 = vmatpush.msra.mxu0 %v458
      %1259 = vmatpush.msra.mxu0 %v457
      %1260 = vmatmul.f32.gmra.mxu0 %v1188
      %v1261 = vpop.f32.mrf.mxu0
      %v1262 = vadd.f32 %v1221, %v1261
      %1263 = vmatmul.f32.gmra.mxu0 %v1190
      %v1264 = vpop.f32.mrf.mxu0
      %v1265 = vadd.f32 %v1224, %v1264
      %1266 = vmatmul.f32.gmra.mxu0 %v1192
      %v1267 = vpop.f32.mrf.mxu0
      %v1268 = vadd.f32 %v1227, %v1267
      %1269 = vmatmul.f32.gmra.mxu0 %v1194
      %v1270 = vpop.f32.mrf.mxu0
      %v1271 = vadd.f32 %v1230, %v1270
      %1272 = vmatmul.f32.gmra.mxu0 %v1196
      %v1273 = vpop.f32.mrf.mxu0
      %v1274 = vadd.f32 %v1233, %v1273
      %1275 = vmatmul.f32.gmra.mxu0 %v1198
      %v1276 = vpop.f32.mrf.mxu0
      %v1277 = vadd.f32 %v1236, %v1276
      %1278 = vmatmul.f32.gmra.mxu0 %v1200
      %v1279 = vpop.f32.mrf.mxu0
      %v1280 = vadd.f32 %v1239, %v1279
      %1281 = vmatmul.f32.gmra.mxu0 %v1202
      %v1282 = vpop.f32.mrf.mxu0
      %v1283 = vadd.f32 %v1242, %v1282
      %1284 = vdwg.mxu0
      %s1285 = scalar_lea.vmem %s2, 16
      %v1286 = vld [vmem:[%s1285] sm:$0xf]
      %v1288 = vsel %vm577, %v1262, 0
      %v1291 = vsel %vm577, %v1265, 0
      %v1294 = vsel %vm577, %v1268, 0
      %v1297 = vsel %vm577, %v1271, 0
      %v1300 = vsel %vm577, %v1274, 0
      %v1303 = vsel %vm577, %v1277, 0
      %v1306 = vsel %vm577, %v1280, 0
      %v1309 = vsel %vm577, %v1283, 0
      %v1312 = vsel %vm602, %v1286, 0
      %1314 = vmatpush.msra.mxu0 0.0
      %1315 = vmatpush.msra.mxu0 0.0
      %1316 = vmatpush.msra.mxu0 0.0
      %1317 = vmatpush.msra.mxu0 0.0
      %1318 = vmatpush.msra.mxu0 0.0
      %1319 = vmatpush.msra.mxu0 0.0
      %1320 = vmatpush.msra.mxu0 0.0
      %1321 = vmatpush.msra.mxu0 0.0
      %1322 = vmatpush.msra.mxu0 0.0
      %1323 = vmatpush.msra.mxu0 0.0
      %1324 = vmatpush.msra.mxu0 0.0
      %1325 = vmatpush.msra.mxu0 0.0
      %1326 = vmatpush.msra.mxu0 0.0
      %1327 = vmatpush.msra.mxu0 0.0
      %1328 = vmatpush.msra.mxu0 0.0
      %1329 = vmatpush.msra.mxu0 %v1312
      %1330 = vmatmul.f32.gmra.mxu0 %v1288
      %v1331 = vpop.f32.mrf.mxu0
      %v1332 = vadd.f32 0.0, %v1331
      %1333 = vmatmul.f32.gmra.mxu0 %v1291
      %v1334 = vpop.f32.mrf.mxu0
      %v1335 = vadd.f32 0.0, %v1334
      %1336 = vmatmul.f32.gmra.mxu0 %v1294
      %v1337 = vpop.f32.mrf.mxu0
      %v1338 = vadd.f32 0.0, %v1337
      %1339 = vmatmul.f32.gmra.mxu0 %v1297
      %v1340 = vpop.f32.mrf.mxu0
      %v1341 = vadd.f32 0.0, %v1340
      %1342 = vmatmul.f32.gmra.mxu0 %v1300
      %v1343 = vpop.f32.mrf.mxu0
      %v1344 = vadd.f32 0.0, %v1343
      %1345 = vmatmul.f32.gmra.mxu0 %v1303
      %v1346 = vpop.f32.mrf.mxu0
      %v1347 = vadd.f32 0.0, %v1346
      %1348 = vmatmul.f32.gmra.mxu0 %v1306
      %v1349 = vpop.f32.mrf.mxu0
      %v1350 = vadd.f32 0.0, %v1349
      %1351 = vmatmul.f32.gmra.mxu0 %v1309
      %v1352 = vpop.f32.mrf.mxu0
      %v1353 = vadd.f32 0.0, %v1352
      %1354 = vdwg.mxu0
      %v1355 = vadd.f32 %v1178, %v1332
      %v1356 = vadd.f32 %v1179, %v1335
      %v1357 = vadd.f32 %v1180, %v1338
      %v1358 = vadd.f32 %v1181, %v1341
      %v1359 = vadd.f32 %v1182, %v1344
      %v1360 = vadd.f32 %v1183, %v1347
      %v1361 = vadd.f32 %v1184, %v1350
      %v1362 = vadd.f32 %v1185, %v1353
      %s1363 = scalar_lea.vmem %s1, 640
      %v1364 = vld [vmem:[%s1363] sm:$0xff]
      %v1365 = vld [vmem:[%s1363 + $0x8] sm:$0xff]
      %v1366 = vld [vmem:[%s1363 + $0x10] sm:$0xff]
      %v1367 = vld [vmem:[%s1363 + $0x18] sm:$0xff]
      %v1368 = vld [vmem:[%s1363 + $0x20] sm:$0xff]
      %v1369 = vld [vmem:[%s1363 + $0x28] sm:$0xff]
      %v1370 = vld [vmem:[%s1363 + $0x30] sm:$0xff]
      %v1371 = vld [vmem:[%s1363 + $0x38] sm:$0xff]
      %v1372 = vld [vmem:[%s1363 + $0x40] sm:$0xff]
      %v1373 = vld [vmem:[%s1363 + $0x48] sm:$0xff]
      %v1374 = vld [vmem:[%s1363 + $0x50] sm:$0xff]
      %v1375 = vld [vmem:[%s1363 + $0x58] sm:$0xff]
      %v1376 = vld [vmem:[%s1363 + $0x60] sm:$0xff]
      %v1377 = vld [vmem:[%s1363 + $0x68] sm:$0xff]
      %v1378 = vld [vmem:[%s1363 + $0x70] sm:$0xff]
      %v1379 = vld [vmem:[%s1363 + $0x78] sm:$0xff]
      %1380 = vmatpush.msra.mxu0 %v456
      %1381 = vmatpush.msra.mxu0 %v455
      %1382 = vmatpush.msra.mxu0 %v454
      %1383 = vmatpush.msra.mxu0 %v453
      %1384 = vmatpush.msra.mxu0 %v452
      %1385 = vmatpush.msra.mxu0 %v451
      %1386 = vmatpush.msra.mxu0 %v450
      %1387 = vmatpush.msra.mxu0 %v449
      %1388 = vmatpush.msra.mxu0 %v448
      %1389 = vmatpush.msra.mxu0 %v447
      %1390 = vmatpush.msra.mxu0 %v446
      %1391 = vmatpush.msra.mxu0 %v445
      %1392 = vmatpush.msra.mxu0 %v444
      %1393 = vmatpush.msra.mxu0 %v443
      %1394 = vmatpush.msra.mxu0 %v442
      %1395 = vmatpush.msra.mxu0 %v441
      %1396 = vmatmul.f32.gmra.mxu0 %v1364
      %v1397 = vpop.f32.mrf.mxu0
      %v1398 = vadd.f32 0.0, %v1397
      %1399 = vmatmul.f32.gmra.mxu0 %v1366
      %v1400 = vpop.f32.mrf.mxu0
      %v1401 = vadd.f32 0.0, %v1400
      %1402 = vmatmul.f32.gmra.mxu0 %v1368
      %v1403 = vpop.f32.mrf.mxu0
      %v1404 = vadd.f32 0.0, %v1403
      %1405 = vmatmul.f32.gmra.mxu0 %v1370
      %v1406 = vpop.f32.mrf.mxu0
      %v1407 = vadd.f32 0.0, %v1406
      %1408 = vmatmul.f32.gmra.mxu0 %v1372
      %v1409 = vpop.f32.mrf.mxu0
      %v1410 = vadd.f32 0.0, %v1409
      %1411 = vmatmul.f32.gmra.mxu0 %v1374
      %v1412 = vpop.f32.mrf.mxu0
      %v1413 = vadd.f32 0.0, %v1412
      %1414 = vmatmul.f32.gmra.mxu0 %v1376
      %v1415 = vpop.f32.mrf.mxu0
      %v1416 = vadd.f32 0.0, %v1415
      %1417 = vmatmul.f32.gmra.mxu0 %v1378
      %v1418 = vpop.f32.mrf.mxu0
      %v1419 = vadd.f32 0.0, %v1418
      %1420 = vdwg.mxu0
      %1421 = vmatpush.msra.mxu0 %v472
      %1422 = vmatpush.msra.mxu0 %v471
      %1423 = vmatpush.msra.mxu0 %v470
      %1424 = vmatpush.msra.mxu0 %v469
      %1425 = vmatpush.msra.mxu0 %v468
      %1426 = vmatpush.msra.mxu0 %v467
      %1427 = vmatpush.msra.mxu0 %v466
      %1428 = vmatpush.msra.mxu0 %v465
      %1429 = vmatpush.msra.mxu0 %v464
      %1430 = vmatpush.msra.mxu0 %v463
      %1431 = vmatpush.msra.mxu0 %v462
      %1432 = vmatpush.msra.mxu0 %v461
      %1433 = vmatpush.msra.mxu0 %v460
      %1434 = vmatpush.msra.mxu0 %v459
      %1435 = vmatpush.msra.mxu0 %v458
      %1436 = vmatpush.msra.mxu0 %v457
      %1437 = vmatmul.f32.gmra.mxu0 %v1365
      %v1438 = vpop.f32.mrf.mxu0
      %v1439 = vadd.f32 %v1398, %v1438
      %1440 = vmatmul.f32.gmra.mxu0 %v1367
      %v1441 = vpop.f32.mrf.mxu0
      %v1442 = vadd.f32 %v1401, %v1441
      %1443 = vmatmul.f32.gmra.mxu0 %v1369
      %v1444 = vpop.f32.mrf.mxu0
      %v1445 = vadd.f32 %v1404, %v1444
      %1446 = vmatmul.f32.gmra.mxu0 %v1371
      %v1447 = vpop.f32.mrf.mxu0
      %v1448 = vadd.f32 %v1407, %v1447
      %1449 = vmatmul.f32.gmra.mxu0 %v1373
      %v1450 = vpop.f32.mrf.mxu0
      %v1451 = vadd.f32 %v1410, %v1450
      %1452 = vmatmul.f32.gmra.mxu0 %v1375
      %v1453 = vpop.f32.mrf.mxu0
      %v1454 = vadd.f32 %v1413, %v1453
      %1455 = vmatmul.f32.gmra.mxu0 %v1377
      %v1456 = vpop.f32.mrf.mxu0
      %v1457 = vadd.f32 %v1416, %v1456
      %1458 = vmatmul.f32.gmra.mxu0 %v1379
      %v1459 = vpop.f32.mrf.mxu0
      %v1460 = vadd.f32 %v1419, %v1459
      %1461 = vdwg.mxu0
      %s1462 = scalar_lea.vmem %s2, 20
      %v1463 = vld [vmem:[%s1462] sm:$0xf]
      %v1465 = vsel %vm577, %v1439, 0
      %v1468 = vsel %vm577, %v1442, 0
      %v1471 = vsel %vm577, %v1445, 0
      %v1474 = vsel %vm577, %v1448, 0
      %v1477 = vsel %vm577, %v1451, 0
      %v1480 = vsel %vm577, %v1454, 0
      %v1483 = vsel %vm577, %v1457, 0
      %v1486 = vsel %vm577, %v1460, 0
      %v1489 = vsel %vm602, %v1463, 0
      %1491 = vmatpush.msra.mxu0 0.0
      %1492 = vmatpush.msra.mxu0 0.0
      %1493 = vmatpush.msra.mxu0 0.0
      %1494 = vmatpush.msra.mxu0 0.0
      %1495 = vmatpush.msra.mxu0 0.0
      %1496 = vmatpush.msra.mxu0 0.0
      %1497 = vmatpush.msra.mxu0 0.0
      %1498 = vmatpush.msra.mxu0 0.0
      %1499 = vmatpush.msra.mxu0 0.0
      %1500 = vmatpush.msra.mxu0 0.0
      %1501 = vmatpush.msra.mxu0 0.0
      %1502 = vmatpush.msra.mxu0 0.0
      %1503 = vmatpush.msra.mxu0 0.0
      %1504 = vmatpush.msra.mxu0 0.0
      %1505 = vmatpush.msra.mxu0 0.0
      %1506 = vmatpush.msra.mxu0 %v1489
      %1507 = vmatmul.f32.gmra.mxu0 %v1465
      %v1508 = vpop.f32.mrf.mxu0
      %v1509 = vadd.f32 0.0, %v1508
      %1510 = vmatmul.f32.gmra.mxu0 %v1468
      %v1511 = vpop.f32.mrf.mxu0
      %v1512 = vadd.f32 0.0, %v1511
      %1513 = vmatmul.f32.gmra.mxu0 %v1471
      %v1514 = vpop.f32.mrf.mxu0
      %v1515 = vadd.f32 0.0, %v1514
      %1516 = vmatmul.f32.gmra.mxu0 %v1474
      %v1517 = vpop.f32.mrf.mxu0
      %v1518 = vadd.f32 0.0, %v1517
      %1519 = vmatmul.f32.gmra.mxu0 %v1477
      %v1520 = vpop.f32.mrf.mxu0
      %v1521 = vadd.f32 0.0, %v1520
      %1522 = vmatmul.f32.gmra.mxu0 %v1480
      %v1523 = vpop.f32.mrf.mxu0
      %v1524 = vadd.f32 0.0, %v1523
      %1525 = vmatmul.f32.gmra.mxu0 %v1483
      %v1526 = vpop.f32.mrf.mxu0
      %v1527 = vadd.f32 0.0, %v1526
      %1528 = vmatmul.f32.gmra.mxu0 %v1486
      %v1529 = vpop.f32.mrf.mxu0
      %v1530 = vadd.f32 0.0, %v1529
      %1531 = vdwg.mxu0
      %v1532 = vadd.f32 %v1355, %v1509
      %v1533 = vadd.f32 %v1356, %v1512
      %v1534 = vadd.f32 %v1357, %v1515
      %v1535 = vadd.f32 %v1358, %v1518
      %v1536 = vadd.f32 %v1359, %v1521
      %v1537 = vadd.f32 %v1360, %v1524
      %v1538 = vadd.f32 %v1361, %v1527
      %v1539 = vadd.f32 %v1362, %v1530
      %s1540 = scalar_lea.vmem %s1, 768
      %v1541 = vld [vmem:[%s1540] sm:$0xff]
      %v1542 = vld [vmem:[%s1540 + $0x8] sm:$0xff]
      %v1543 = vld [vmem:[%s1540 + $0x10] sm:$0xff]
      %v1544 = vld [vmem:[%s1540 + $0x18] sm:$0xff]
      %v1545 = vld [vmem:[%s1540 + $0x20] sm:$0xff]
      %v1546 = vld [vmem:[%s1540 + $0x28] sm:$0xff]
      %v1547 = vld [vmem:[%s1540 + $0x30] sm:$0xff]
      %v1548 = vld [vmem:[%s1540 + $0x38] sm:$0xff]
      %v1549 = vld [vmem:[%s1540 + $0x40] sm:$0xff]
      %v1550 = vld [vmem:[%s1540 + $0x48] sm:$0xff]
      %v1551 = vld [vmem:[%s1540 + $0x50] sm:$0xff]
      %v1552 = vld [vmem:[%s1540 + $0x58] sm:$0xff]
      %v1553 = vld [vmem:[%s1540 + $0x60] sm:$0xff]
      %v1554 = vld [vmem:[%s1540 + $0x68] sm:$0xff]
      %v1555 = vld [vmem:[%s1540 + $0x70] sm:$0xff]
      %v1556 = vld [vmem:[%s1540 + $0x78] sm:$0xff]
      %1557 = vmatpush.msra.mxu0 %v456
      %1558 = vmatpush.msra.mxu0 %v455
      %1559 = vmatpush.msra.mxu0 %v454
      %1560 = vmatpush.msra.mxu0 %v453
      %1561 = vmatpush.msra.mxu0 %v452
      %1562 = vmatpush.msra.mxu0 %v451
      %1563 = vmatpush.msra.mxu0 %v450
      %1564 = vmatpush.msra.mxu0 %v449
      %1565 = vmatpush.msra.mxu0 %v448
      %1566 = vmatpush.msra.mxu0 %v447
      %1567 = vmatpush.msra.mxu0 %v446
      %1568 = vmatpush.msra.mxu0 %v445
      %1569 = vmatpush.msra.mxu0 %v444
      %1570 = vmatpush.msra.mxu0 %v443
      %1571 = vmatpush.msra.mxu0 %v442
      %1572 = vmatpush.msra.mxu0 %v441
      %1573 = vmatmul.f32.gmra.mxu0 %v1541
      %v1574 = vpop.f32.mrf.mxu0
      %v1575 = vadd.f32 0.0, %v1574
      %1576 = vmatmul.f32.gmra.mxu0 %v1543
      %v1577 = vpop.f32.mrf.mxu0
      %v1578 = vadd.f32 0.0, %v1577
      %1579 = vmatmul.f32.gmra.mxu0 %v1545
      %v1580 = vpop.f32.mrf.mxu0
      %v1581 = vadd.f32 0.0, %v1580
      %1582 = vmatmul.f32.gmra.mxu0 %v1547
      %v1583 = vpop.f32.mrf.mxu0
      %v1584 = vadd.f32 0.0, %v1583
      %1585 = vmatmul.f32.gmra.mxu0 %v1549
      %v1586 = vpop.f32.mrf.mxu0
      %v1587 = vadd.f32 0.0, %v1586
      %1588 = vmatmul.f32.gmra.mxu0 %v1551
      %v1589 = vpop.f32.mrf.mxu0
      %v1590 = vadd.f32 0.0, %v1589
      %1591 = vmatmul.f32.gmra.mxu0 %v1553
      %v1592 = vpop.f32.mrf.mxu0
      %v1593 = vadd.f32 0.0, %v1592
      %1594 = vmatmul.f32.gmra.mxu0 %v1555
      %v1595 = vpop.f32.mrf.mxu0
      %v1596 = vadd.f32 0.0, %v1595
      %1597 = vdwg.mxu0
      %1598 = vmatpush.msra.mxu0 %v472
      %1599 = vmatpush.msra.mxu0 %v471
      %1600 = vmatpush.msra.mxu0 %v470
      %1601 = vmatpush.msra.mxu0 %v469
      %1602 = vmatpush.msra.mxu0 %v468
      %1603 = vmatpush.msra.mxu0 %v467
      %1604 = vmatpush.msra.mxu0 %v466
      %1605 = vmatpush.msra.mxu0 %v465
      %1606 = vmatpush.msra.mxu0 %v464
      %1607 = vmatpush.msra.mxu0 %v463
      %1608 = vmatpush.msra.mxu0 %v462
      %1609 = vmatpush.msra.mxu0 %v461
      %1610 = vmatpush.msra.mxu0 %v460
      %1611 = vmatpush.msra.mxu0 %v459
      %1612 = vmatpush.msra.mxu0 %v458
      %1613 = vmatpush.msra.mxu0 %v457
      %1614 = vmatmul.f32.gmra.mxu0 %v1542
      %v1615 = vpop.f32.mrf.mxu0
      %v1616 = vadd.f32 %v1575, %v1615
      %1617 = vmatmul.f32.gmra.mxu0 %v1544
      %v1618 = vpop.f32.mrf.mxu0
      %v1619 = vadd.f32 %v1578, %v1618
      %1620 = vmatmul.f32.gmra.mxu0 %v1546
      %v1621 = vpop.f32.mrf.mxu0
      %v1622 = vadd.f32 %v1581, %v1621
      %1623 = vmatmul.f32.gmra.mxu0 %v1548
      %v1624 = vpop.f32.mrf.mxu0
      %v1625 = vadd.f32 %v1584, %v1624
      %1626 = vmatmul.f32.gmra.mxu0 %v1550
      %v1627 = vpop.f32.mrf.mxu0
      %v1628 = vadd.f32 %v1587, %v1627
      %1629 = vmatmul.f32.gmra.mxu0 %v1552
      %v1630 = vpop.f32.mrf.mxu0
      %v1631 = vadd.f32 %v1590, %v1630
      %1632 = vmatmul.f32.gmra.mxu0 %v1554
      %v1633 = vpop.f32.mrf.mxu0
      %v1634 = vadd.f32 %v1593, %v1633
      %1635 = vmatmul.f32.gmra.mxu0 %v1556
      %v1636 = vpop.f32.mrf.mxu0
      %v1637 = vadd.f32 %v1596, %v1636
      %1638 = vdwg.mxu0
      %s1639 = scalar_lea.vmem %s2, 24
      %v1640 = vld [vmem:[%s1639] sm:$0xf]
      %v1642 = vsel %vm577, %v1616, 0
      %v1645 = vsel %vm577, %v1619, 0
      %v1648 = vsel %vm577, %v1622, 0
      %v1651 = vsel %vm577, %v1625, 0
      %v1654 = vsel %vm577, %v1628, 0
      %v1657 = vsel %vm577, %v1631, 0
      %v1660 = vsel %vm577, %v1634, 0
      %v1663 = vsel %vm577, %v1637, 0
      %v1666 = vsel %vm602, %v1640, 0
      %1668 = vmatpush.msra.mxu0 0.0
      %1669 = vmatpush.msra.mxu0 0.0
      %1670 = vmatpush.msra.mxu0 0.0
      %1671 = vmatpush.msra.mxu0 0.0
      %1672 = vmatpush.msra.mxu0 0.0
      %1673 = vmatpush.msra.mxu0 0.0
      %1674 = vmatpush.msra.mxu0 0.0
      %1675 = vmatpush.msra.mxu0 0.0
      %1676 = vmatpush.msra.mxu0 0.0
      %1677 = vmatpush.msra.mxu0 0.0
      %1678 = vmatpush.msra.mxu0 0.0
      %1679 = vmatpush.msra.mxu0 0.0
      %1680 = vmatpush.msra.mxu0 0.0
      %1681 = vmatpush.msra.mxu0 0.0
      %1682 = vmatpush.msra.mxu0 0.0
      %1683 = vmatpush.msra.mxu0 %v1666
      %1684 = vmatmul.f32.gmra.mxu0 %v1642
      %v1685 = vpop.f32.mrf.mxu0
      %v1686 = vadd.f32 0.0, %v1685
      %1687 = vmatmul.f32.gmra.mxu0 %v1645
      %v1688 = vpop.f32.mrf.mxu0
      %v1689 = vadd.f32 0.0, %v1688
      %1690 = vmatmul.f32.gmra.mxu0 %v1648
      %v1691 = vpop.f32.mrf.mxu0
      %v1692 = vadd.f32 0.0, %v1691
      %1693 = vmatmul.f32.gmra.mxu0 %v1651
      %v1694 = vpop.f32.mrf.mxu0
      %v1695 = vadd.f32 0.0, %v1694
      %1696 = vmatmul.f32.gmra.mxu0 %v1654
      %v1697 = vpop.f32.mrf.mxu0
      %v1698 = vadd.f32 0.0, %v1697
      %1699 = vmatmul.f32.gmra.mxu0 %v1657
      %v1700 = vpop.f32.mrf.mxu0
      %v1701 = vadd.f32 0.0, %v1700
      %1702 = vmatmul.f32.gmra.mxu0 %v1660
      %v1703 = vpop.f32.mrf.mxu0
      %v1704 = vadd.f32 0.0, %v1703
      %1705 = vmatmul.f32.gmra.mxu0 %v1663
      %v1706 = vpop.f32.mrf.mxu0
      %v1707 = vadd.f32 0.0, %v1706
      %1708 = vdwg.mxu0
      %v1709 = vadd.f32 %v1532, %v1686
      %v1710 = vadd.f32 %v1533, %v1689
      %v1711 = vadd.f32 %v1534, %v1692
      %v1712 = vadd.f32 %v1535, %v1695
      %v1713 = vadd.f32 %v1536, %v1698
      %v1714 = vadd.f32 %v1537, %v1701
      %v1715 = vadd.f32 %v1538, %v1704
      %v1716 = vadd.f32 %v1539, %v1707
      %s1717 = scalar_lea.vmem %s1, 896
      %v1718 = vld [vmem:[%s1717] sm:$0xff]
      %v1719 = vld [vmem:[%s1717 + $0x8] sm:$0xff]
      %v1720 = vld [vmem:[%s1717 + $0x10] sm:$0xff]
      %v1721 = vld [vmem:[%s1717 + $0x18] sm:$0xff]
      %v1722 = vld [vmem:[%s1717 + $0x20] sm:$0xff]
      %v1723 = vld [vmem:[%s1717 + $0x28] sm:$0xff]
      %v1724 = vld [vmem:[%s1717 + $0x30] sm:$0xff]
      %v1725 = vld [vmem:[%s1717 + $0x38] sm:$0xff]
      %v1726 = vld [vmem:[%s1717 + $0x40] sm:$0xff]
      %v1727 = vld [vmem:[%s1717 + $0x48] sm:$0xff]
      %v1728 = vld [vmem:[%s1717 + $0x50] sm:$0xff]
      %v1729 = vld [vmem:[%s1717 + $0x58] sm:$0xff]
      %v1730 = vld [vmem:[%s1717 + $0x60] sm:$0xff]
      %v1731 = vld [vmem:[%s1717 + $0x68] sm:$0xff]
      %v1732 = vld [vmem:[%s1717 + $0x70] sm:$0xff]
      %v1733 = vld [vmem:[%s1717 + $0x78] sm:$0xff]
      %1734 = vmatpush.msra.mxu0 %v456
      %1735 = vmatpush.msra.mxu0 %v455
      %1736 = vmatpush.msra.mxu0 %v454
      %1737 = vmatpush.msra.mxu0 %v453
      %1738 = vmatpush.msra.mxu0 %v452
      %1739 = vmatpush.msra.mxu0 %v451
      %1740 = vmatpush.msra.mxu0 %v450
      %1741 = vmatpush.msra.mxu0 %v449
      %1742 = vmatpush.msra.mxu0 %v448
      %1743 = vmatpush.msra.mxu0 %v447
      %1744 = vmatpush.msra.mxu0 %v446
      %1745 = vmatpush.msra.mxu0 %v445
      %1746 = vmatpush.msra.mxu0 %v444
      %1747 = vmatpush.msra.mxu0 %v443
      %1748 = vmatpush.msra.mxu0 %v442
      %1749 = vmatpush.msra.mxu0 %v441
      %1750 = vmatmul.f32.gmra.mxu0 %v1718
      %v1751 = vpop.f32.mrf.mxu0
      %v1752 = vadd.f32 0.0, %v1751
      %1753 = vmatmul.f32.gmra.mxu0 %v1720
      %v1754 = vpop.f32.mrf.mxu0
      %v1755 = vadd.f32 0.0, %v1754
      %1756 = vmatmul.f32.gmra.mxu0 %v1722
      %v1757 = vpop.f32.mrf.mxu0
      %v1758 = vadd.f32 0.0, %v1757
      %1759 = vmatmul.f32.gmra.mxu0 %v1724
      %v1760 = vpop.f32.mrf.mxu0
      %v1761 = vadd.f32 0.0, %v1760
      %1762 = vmatmul.f32.gmra.mxu0 %v1726
      %v1763 = vpop.f32.mrf.mxu0
      %v1764 = vadd.f32 0.0, %v1763
      %1765 = vmatmul.f32.gmra.mxu0 %v1728
      %v1766 = vpop.f32.mrf.mxu0
      %v1767 = vadd.f32 0.0, %v1766
      %1768 = vmatmul.f32.gmra.mxu0 %v1730
      %v1769 = vpop.f32.mrf.mxu0
      %v1770 = vadd.f32 0.0, %v1769
      %1771 = vmatmul.f32.gmra.mxu0 %v1732
      %v1772 = vpop.f32.mrf.mxu0
      %v1773 = vadd.f32 0.0, %v1772
      %1774 = vdwg.mxu0
      %1775 = vmatpush.msra.mxu0 %v472
      %1776 = vmatpush.msra.mxu0 %v471
      %1777 = vmatpush.msra.mxu0 %v470
      %1778 = vmatpush.msra.mxu0 %v469
      %1779 = vmatpush.msra.mxu0 %v468
      %1780 = vmatpush.msra.mxu0 %v467
      %1781 = vmatpush.msra.mxu0 %v466
      %1782 = vmatpush.msra.mxu0 %v465
      %1783 = vmatpush.msra.mxu0 %v464
      %1784 = vmatpush.msra.mxu0 %v463
      %1785 = vmatpush.msra.mxu0 %v462
      %1786 = vmatpush.msra.mxu0 %v461
      %1787 = vmatpush.msra.mxu0 %v460
      %1788 = vmatpush.msra.mxu0 %v459
      %1789 = vmatpush.msra.mxu0 %v458
      %1790 = vmatpush.msra.mxu0 %v457
      %1791 = vmatmul.f32.gmra.mxu0 %v1719
      %v1792 = vpop.f32.mrf.mxu0
      %v1793 = vadd.f32 %v1752, %v1792
      %1794 = vmatmul.f32.gmra.mxu0 %v1721
      %v1795 = vpop.f32.mrf.mxu0
      %v1796 = vadd.f32 %v1755, %v1795
      %1797 = vmatmul.f32.gmra.mxu0 %v1723
      %v1798 = vpop.f32.mrf.mxu0
      %v1799 = vadd.f32 %v1758, %v1798
      %1800 = vmatmul.f32.gmra.mxu0 %v1725
      %v1801 = vpop.f32.mrf.mxu0
      %v1802 = vadd.f32 %v1761, %v1801
      %1803 = vmatmul.f32.gmra.mxu0 %v1727
      %v1804 = vpop.f32.mrf.mxu0
      %v1805 = vadd.f32 %v1764, %v1804
      %1806 = vmatmul.f32.gmra.mxu0 %v1729
      %v1807 = vpop.f32.mrf.mxu0
      %v1808 = vadd.f32 %v1767, %v1807
      %1809 = vmatmul.f32.gmra.mxu0 %v1731
      %v1810 = vpop.f32.mrf.mxu0
      %v1811 = vadd.f32 %v1770, %v1810
      %1812 = vmatmul.f32.gmra.mxu0 %v1733
      %v1813 = vpop.f32.mrf.mxu0
      %v1814 = vadd.f32 %v1773, %v1813
      %1815 = vdwg.mxu0
      %s1816 = scalar_lea.vmem %s2, 28
      %v1817 = vld [vmem:[%s1816] sm:$0xf]
      %v1819 = vsel %vm577, %v1793, 0
      %v1822 = vsel %vm577, %v1796, 0
      %v1825 = vsel %vm577, %v1799, 0
      %v1828 = vsel %vm577, %v1802, 0
      %v1831 = vsel %vm577, %v1805, 0
      %v1834 = vsel %vm577, %v1808, 0
      %v1837 = vsel %vm577, %v1811, 0
      %v1840 = vsel %vm577, %v1814, 0
      %v1843 = vsel %vm602, %v1817, 0
      %1845 = vmatpush.msra.mxu0 0.0
      %1846 = vmatpush.msra.mxu0 0.0
      %1847 = vmatpush.msra.mxu0 0.0
      %1848 = vmatpush.msra.mxu0 0.0
      %1849 = vmatpush.msra.mxu0 0.0
      %1850 = vmatpush.msra.mxu0 0.0
      %1851 = vmatpush.msra.mxu0 0.0
      %1852 = vmatpush.msra.mxu0 0.0
      %1853 = vmatpush.msra.mxu0 0.0
      %1854 = vmatpush.msra.mxu0 0.0
      %1855 = vmatpush.msra.mxu0 0.0
      %1856 = vmatpush.msra.mxu0 0.0
      %1857 = vmatpush.msra.mxu0 0.0
      %1858 = vmatpush.msra.mxu0 0.0
      %1859 = vmatpush.msra.mxu0 0.0
      %1860 = vmatpush.msra.mxu0 %v1843
      %1861 = vmatmul.f32.gmra.mxu0 %v1819
      %v1862 = vpop.f32.mrf.mxu0
      %v1863 = vadd.f32 0.0, %v1862
      %1864 = vmatmul.f32.gmra.mxu0 %v1822
      %v1865 = vpop.f32.mrf.mxu0
      %v1866 = vadd.f32 0.0, %v1865
      %1867 = vmatmul.f32.gmra.mxu0 %v1825
      %v1868 = vpop.f32.mrf.mxu0
      %v1869 = vadd.f32 0.0, %v1868
      %1870 = vmatmul.f32.gmra.mxu0 %v1828
      %v1871 = vpop.f32.mrf.mxu0
      %v1872 = vadd.f32 0.0, %v1871
      %1873 = vmatmul.f32.gmra.mxu0 %v1831
      %v1874 = vpop.f32.mrf.mxu0
      %v1875 = vadd.f32 0.0, %v1874
      %1876 = vmatmul.f32.gmra.mxu0 %v1834
      %v1877 = vpop.f32.mrf.mxu0
      %v1878 = vadd.f32 0.0, %v1877
      %1879 = vmatmul.f32.gmra.mxu0 %v1837
      %v1880 = vpop.f32.mrf.mxu0
      %v1881 = vadd.f32 0.0, %v1880
      %1882 = vmatmul.f32.gmra.mxu0 %v1840
      %v1883 = vpop.f32.mrf.mxu0
      %v1884 = vadd.f32 0.0, %v1883
      %1885 = vdwg.mxu0
      %v1886 = vadd.f32 %v1709, %v1863
      %v1887 = vadd.f32 %v1710, %v1866
      %v1888 = vadd.f32 %v1711, %v1869
      %v1889 = vadd.f32 %v1712, %v1872
      %v1890 = vadd.f32 %v1713, %v1875
      %v1891 = vadd.f32 %v1714, %v1878
      %v1892 = vadd.f32 %v1715, %v1881
      %v1893 = vadd.f32 %v1716, %v1884
      %s1894 = scalar_lea.vmem %s1, 1024
      %v1895 = vld [vmem:[%s1894] sm:$0xff]
      %v1896 = vld [vmem:[%s1894 + $0x8] sm:$0xff]
      %v1897 = vld [vmem:[%s1894 + $0x10] sm:$0xff]
      %v1898 = vld [vmem:[%s1894 + $0x18] sm:$0xff]
      %v1899 = vld [vmem:[%s1894 + $0x20] sm:$0xff]
      %v1900 = vld [vmem:[%s1894 + $0x28] sm:$0xff]
      %v1901 = vld [vmem:[%s1894 + $0x30] sm:$0xff]
      %v1902 = vld [vmem:[%s1894 + $0x38] sm:$0xff]
      %v1903 = vld [vmem:[%s1894 + $0x40] sm:$0xff]
      %v1904 = vld [vmem:[%s1894 + $0x48] sm:$0xff]
      %v1905 = vld [vmem:[%s1894 + $0x50] sm:$0xff]
      %v1906 = vld [vmem:[%s1894 + $0x58] sm:$0xff]
      %v1907 = vld [vmem:[%s1894 + $0x60] sm:$0xff]
      %v1908 = vld [vmem:[%s1894 + $0x68] sm:$0xff]
      %v1909 = vld [vmem:[%s1894 + $0x70] sm:$0xff]
      %v1910 = vld [vmem:[%s1894 + $0x78] sm:$0xff]
      %1911 = vmatpush.msra.mxu0 %v456
      %1912 = vmatpush.msra.mxu0 %v455
      %1913 = vmatpush.msra.mxu0 %v454
      %1914 = vmatpush.msra.mxu0 %v453
      %1915 = vmatpush.msra.mxu0 %v452
      %1916 = vmatpush.msra.mxu0 %v451
      %1917 = vmatpush.msra.mxu0 %v450
      %1918 = vmatpush.msra.mxu0 %v449
      %1919 = vmatpush.msra.mxu0 %v448
      %1920 = vmatpush.msra.mxu0 %v447
      %1921 = vmatpush.msra.mxu0 %v446
      %1922 = vmatpush.msra.mxu0 %v445
      %1923 = vmatpush.msra.mxu0 %v444
      %1924 = vmatpush.msra.mxu0 %v443
      %1925 = vmatpush.msra.mxu0 %v442
      %1926 = vmatpush.msra.mxu0 %v441
      %1927 = vmatmul.f32.gmra.mxu0 %v1895
      %v1928 = vpop.f32.mrf.mxu0
      %v1929 = vadd.f32 0.0, %v1928
      %1930 = vmatmul.f32.gmra.mxu0 %v1897
      %v1931 = vpop.f32.mrf.mxu0
      %v1932 = vadd.f32 0.0, %v1931
      %1933 = vmatmul.f32.gmra.mxu0 %v1899
      %v1934 = vpop.f32.mrf.mxu0
      %v1935 = vadd.f32 0.0, %v1934
      %1936 = vmatmul.f32.gmra.mxu0 %v1901
      %v1937 = vpop.f32.mrf.mxu0
      %v1938 = vadd.f32 0.0, %v1937
      %1939 = vmatmul.f32.gmra.mxu0 %v1903
      %v1940 = vpop.f32.mrf.mxu0
      %v1941 = vadd.f32 0.0, %v1940
      %1942 = vmatmul.f32.gmra.mxu0 %v1905
      %v1943 = vpop.f32.mrf.mxu0
      %v1944 = vadd.f32 0.0, %v1943
      %1945 = vmatmul.f32.gmra.mxu0 %v1907
      %v1946 = vpop.f32.mrf.mxu0
      %v1947 = vadd.f32 0.0, %v1946
      %1948 = vmatmul.f32.gmra.mxu0 %v1909
      %v1949 = vpop.f32.mrf.mxu0
      %v1950 = vadd.f32 0.0, %v1949
      %1951 = vdwg.mxu0
      %1952 = vmatpush.msra.mxu0 %v472
      %1953 = vmatpush.msra.mxu0 %v471
      %1954 = vmatpush.msra.mxu0 %v470
      %1955 = vmatpush.msra.mxu0 %v469
      %1956 = vmatpush.msra.mxu0 %v468
      %1957 = vmatpush.msra.mxu0 %v467
      %1958 = vmatpush.msra.mxu0 %v466
      %1959 = vmatpush.msra.mxu0 %v465
      %1960 = vmatpush.msra.mxu0 %v464
      %1961 = vmatpush.msra.mxu0 %v463
      %1962 = vmatpush.msra.mxu0 %v462
      %1963 = vmatpush.msra.mxu0 %v461
      %1964 = vmatpush.msra.mxu0 %v460
      %1965 = vmatpush.msra.mxu0 %v459
      %1966 = vmatpush.msra.mxu0 %v458
      %1967 = vmatpush.msra.mxu0 %v457
      %1968 = vmatmul.f32.gmra.mxu0 %v1896
      %v1969 = vpop.f32.mrf.mxu0
      %v1970 = vadd.f32 %v1929, %v1969
      %1971 = vmatmul.f32.gmra.mxu0 %v1898
      %v1972 = vpop.f32.mrf.mxu0
      %v1973 = vadd.f32 %v1932, %v1972
      %1974 = vmatmul.f32.gmra.mxu0 %v1900
      %v1975 = vpop.f32.mrf.mxu0
      %v1976 = vadd.f32 %v1935, %v1975
      %1977 = vmatmul.f32.gmra.mxu0 %v1902
      %v1978 = vpop.f32.mrf.mxu0
      %v1979 = vadd.f32 %v1938, %v1978
      %1980 = vmatmul.f32.gmra.mxu0 %v1904
      %v1981 = vpop.f32.mrf.mxu0
      %v1982 = vadd.f32 %v1941, %v1981
      %1983 = vmatmul.f32.gmra.mxu0 %v1906
      %v1984 = vpop.f32.mrf.mxu0
      %v1985 = vadd.f32 %v1944, %v1984
      %1986 = vmatmul.f32.gmra.mxu0 %v1908
      %v1987 = vpop.f32.mrf.mxu0
      %v1988 = vadd.f32 %v1947, %v1987
      %1989 = vmatmul.f32.gmra.mxu0 %v1910
      %v1990 = vpop.f32.mrf.mxu0
      %v1991 = vadd.f32 %v1950, %v1990
      %1992 = vdwg.mxu0
      %s1993 = scalar_lea.vmem %s2, 32
      %v1994 = vld [vmem:[%s1993] sm:$0xf]
      %v1996 = vsel %vm577, %v1970, 0
      %v1999 = vsel %vm577, %v1973, 0
      %v2002 = vsel %vm577, %v1976, 0
      %v2005 = vsel %vm577, %v1979, 0
      %v2008 = vsel %vm577, %v1982, 0
      %v2011 = vsel %vm577, %v1985, 0
      %v2014 = vsel %vm577, %v1988, 0
      %v2017 = vsel %vm577, %v1991, 0
      %v2020 = vsel %vm602, %v1994, 0
      %2022 = vmatpush.msra.mxu0 0.0
      %2023 = vmatpush.msra.mxu0 0.0
      %2024 = vmatpush.msra.mxu0 0.0
      %2025 = vmatpush.msra.mxu0 0.0
      %2026 = vmatpush.msra.mxu0 0.0
      %2027 = vmatpush.msra.mxu0 0.0
      %2028 = vmatpush.msra.mxu0 0.0
      %2029 = vmatpush.msra.mxu0 0.0
      %2030 = vmatpush.msra.mxu0 0.0
      %2031 = vmatpush.msra.mxu0 0.0
      %2032 = vmatpush.msra.mxu0 0.0
      %2033 = vmatpush.msra.mxu0 0.0
      %2034 = vmatpush.msra.mxu0 0.0
      %2035 = vmatpush.msra.mxu0 0.0
      %2036 = vmatpush.msra.mxu0 0.0
      %2037 = vmatpush.msra.mxu0 %v2020
      %2038 = vmatmul.f32.gmra.mxu0 %v1996
      %v2039 = vpop.f32.mrf.mxu0
      %v2040 = vadd.f32 0.0, %v2039
      %2041 = vmatmul.f32.gmra.mxu0 %v1999
      %v2042 = vpop.f32.mrf.mxu0
      %v2043 = vadd.f32 0.0, %v2042
      %2044 = vmatmul.f32.gmra.mxu0 %v2002
      %v2045 = vpop.f32.mrf.mxu0
      %v2046 = vadd.f32 0.0, %v2045
      %2047 = vmatmul.f32.gmra.mxu0 %v2005
      %v2048 = vpop.f32.mrf.mxu0
      %v2049 = vadd.f32 0.0, %v2048
      %2050 = vmatmul.f32.gmra.mxu0 %v2008
      %v2051 = vpop.f32.mrf.mxu0
      %v2052 = vadd.f32 0.0, %v2051
      %2053 = vmatmul.f32.gmra.mxu0 %v2011
      %v2054 = vpop.f32.mrf.mxu0
      %v2055 = vadd.f32 0.0, %v2054
      %2056 = vmatmul.f32.gmra.mxu0 %v2014
      %v2057 = vpop.f32.mrf.mxu0
      %v2058 = vadd.f32 0.0, %v2057
      %2059 = vmatmul.f32.gmra.mxu0 %v2017
      %v2060 = vpop.f32.mrf.mxu0
      %v2061 = vadd.f32 0.0, %v2060
      %2062 = vdwg.mxu0
      %v2063 = vadd.f32 %v1886, %v2040
      %v2064 = vadd.f32 %v1887, %v2043
      %v2065 = vadd.f32 %v1888, %v2046
      %v2066 = vadd.f32 %v1889, %v2049
      %v2067 = vadd.f32 %v1890, %v2052
      %v2068 = vadd.f32 %v1891, %v2055
      %v2069 = vadd.f32 %v1892, %v2058
      %v2070 = vadd.f32 %v1893, %v2061
      %v2071 = vxor.u32 %v2063, 2147483648
      %v2072 = vxor.u32 %v2064, 2147483648
      %v2073 = vxor.u32 %v2065, 2147483648
      %v2074 = vxor.u32 %v2066, 2147483648
      %v2075 = vxor.u32 %v2067, 2147483648
      %v2076 = vxor.u32 %v2068, 2147483648
      %v2077 = vxor.u32 %v2069, 2147483648
      %v2078 = vxor.u32 %v2070, 2147483648
      %v2079 = vmul.f32 %v2071, 1.442695
      %v2080 = vpow.pop %v2079
      %v2081 = vmul.f32 %v2072, 1.442695
      %v2082 = vpow.pop %v2081
      %v2083 = vmul.f32 %v2073, 1.442695
      %v2084 = vpow.pop %v2083
      %v2085 = vmul.f32 %v2074, 1.442695
      %v2086 = vpow.pop %v2085
      %v2087 = vmul.f32 %v2075, 1.442695
      %v2088 = vpow.pop %v2087
      %v2089 = vmul.f32 %v2076, 1.442695
      %v2090 = vpow.pop %v2089
      %v2091 = vmul.f32 %v2077, 1.442695
      %v2092 = vpow.pop %v2091
      %v2093 = vmul.f32 %v2078, 1.442695
      %v2094 = vpow.pop %v2093
      %v2095 = vadd.f32 %v2080, 1.0
      %v2096 = vadd.f32 %v2082, 1.0
      %v2097 = vadd.f32 %v2084, 1.0
      %v2098 = vadd.f32 %v2086, 1.0
      %v2099 = vadd.f32 %v2088, 1.0
      %v2100 = vadd.f32 %v2090, 1.0
      %v2101 = vadd.f32 %v2092, 1.0
      %v2102 = vadd.f32 %v2094, 1.0
      %v2103 = vrcp.pop %v2095
      %v2104 = vmul.f32 %v2095, %v2103
      %v2105 = vsub.f32 1.0, %v2104
      %v2106 = vmul.f32 %v2103, %v2105
      %v2107 = vadd.f32 %v2103, %v2106
      %vm2108 = vweird.f32 %v2095
      %vm2109 = vweird.f32 %v2103
      %vm2110 = vmor %vm2108, %vm2109
      %v2111 = vsel %vm2110, %v2103, %v2107
      %v2112 = vand.u32 2147483647, %v2095
      %vm2113 = vcmp.eq.f32.partialorder %v2112, 8.507059e+37
      %v2114 = vand.u32 %v2095, 2147483648
      %v2115 = vor.u32 1.1754944e-38, %v2114
      %v2116 = vsel %vm2113, %v2115, %v2111
      %v2117 = vmul.f32 1.0, %v2116
      %v2118 = vrcp.pop %v2096
      %v2119 = vmul.f32 %v2096, %v2118
      %v2120 = vsub.f32 1.0, %v2119
      %v2121 = vmul.f32 %v2118, %v2120
      %v2122 = vadd.f32 %v2118, %v2121
      %vm2123 = vweird.f32 %v2096
      %vm2124 = vweird.f32 %v2118
      %vm2125 = vmor %vm2123, %vm2124
      %v2126 = vsel %vm2125, %v2118, %v2122
      %v2127 = vand.u32 2147483647, %v2096
      %vm2128 = vcmp.eq.f32.partialorder %v2127, 8.507059e+37
      %v2129 = vand.u32 %v2096, 2147483648
      %v2130 = vor.u32 1.1754944e-38, %v2129
      %v2131 = vsel %vm2128, %v2130, %v2126
      %v2132 = vmul.f32 1.0, %v2131
      %v2133 = vrcp.pop %v2097
      %v2134 = vmul.f32 %v2097, %v2133
      %v2135 = vsub.f32 1.0, %v2134
      %v2136 = vmul.f32 %v2133, %v2135
      %v2137 = vadd.f32 %v2133, %v2136
      %vm2138 = vweird.f32 %v2097
      %vm2139 = vweird.f32 %v2133
      %vm2140 = vmor %vm2138, %vm2139
      %v2141 = vsel %vm2140, %v2133, %v2137
      %v2142 = vand.u32 2147483647, %v2097
      %vm2143 = vcmp.eq.f32.partialorder %v2142, 8.507059e+37
      %v2144 = vand.u32 %v2097, 2147483648
      %v2145 = vor.u32 1.1754944e-38, %v2144
      %v2146 = vsel %vm2143, %v2145, %v2141
      %v2147 = vmul.f32 1.0, %v2146
      %v2148 = vrcp.pop %v2098
      %v2149 = vmul.f32 %v2098, %v2148
      %v2150 = vsub.f32 1.0, %v2149
      %v2151 = vmul.f32 %v2148, %v2150
      %v2152 = vadd.f32 %v2148, %v2151
      %vm2153 = vweird.f32 %v2098
      %vm2154 = vweird.f32 %v2148
      %vm2155 = vmor %vm2153, %vm2154
      %v2156 = vsel %vm2155, %v2148, %v2152
      %v2157 = vand.u32 2147483647, %v2098
      %vm2158 = vcmp.eq.f32.partialorder %v2157, 8.507059e+37
      %v2159 = vand.u32 %v2098, 2147483648
      %v2160 = vor.u32 1.1754944e-38, %v2159
      %v2161 = vsel %vm2158, %v2160, %v2156
      %v2162 = vmul.f32 1.0, %v2161
      %v2163 = vrcp.pop %v2099
      %v2164 = vmul.f32 %v2099, %v2163
      %v2165 = vsub.f32 1.0, %v2164
      %v2166 = vmul.f32 %v2163, %v2165
      %v2167 = vadd.f32 %v2163, %v2166
      %vm2168 = vweird.f32 %v2099
      %vm2169 = vweird.f32 %v2163
      %vm2170 = vmor %vm2168, %vm2169
      %v2171 = vsel %vm2170, %v2163, %v2167
      %v2172 = vand.u32 2147483647, %v2099
      %vm2173 = vcmp.eq.f32.partialorder %v2172, 8.507059e+37
      %v2174 = vand.u32 %v2099, 2147483648
      %v2175 = vor.u32 1.1754944e-38, %v2174
      %v2176 = vsel %vm2173, %v2175, %v2171
      %v2177 = vmul.f32 1.0, %v2176
      %v2178 = vrcp.pop %v2100
      %v2179 = vmul.f32 %v2100, %v2178
      %v2180 = vsub.f32 1.0, %v2179
      %v2181 = vmul.f32 %v2178, %v2180
      %v2182 = vadd.f32 %v2178, %v2181
      %vm2183 = vweird.f32 %v2100
      %vm2184 = vweird.f32 %v2178
      %vm2185 = vmor %vm2183, %vm2184
      %v2186 = vsel %vm2185, %v2178, %v2182
      %v2187 = vand.u32 2147483647, %v2100
      %vm2188 = vcmp.eq.f32.partialorder %v2187, 8.507059e+37
      %v2189 = vand.u32 %v2100, 2147483648
      %v2190 = vor.u32 1.1754944e-38, %v2189
      %v2191 = vsel %vm2188, %v2190, %v2186
      %v2192 = vmul.f32 1.0, %v2191
      %v2193 = vrcp.pop %v2101
      %v2194 = vmul.f32 %v2101, %v2193
      %v2195 = vsub.f32 1.0, %v2194
      %v2196 = vmul.f32 %v2193, %v2195
      %v2197 = vadd.f32 %v2193, %v2196
      %vm2198 = vweird.f32 %v2101
      %vm2199 = vweird.f32 %v2193
      %vm2200 = vmor %vm2198, %vm2199
      %v2201 = vsel %vm2200, %v2193, %v2197
      %v2202 = vand.u32 2147483647, %v2101
      %vm2203 = vcmp.eq.f32.partialorder %v2202, 8.507059e+37
      %v2204 = vand.u32 %v2101, 2147483648
      %v2205 = vor.u32 1.1754944e-38, %v2204
      %v2206 = vsel %vm2203, %v2205, %v2201
      %v2207 = vmul.f32 1.0, %v2206
      %v2208 = vrcp.pop %v2102
      %v2209 = vmul.f32 %v2102, %v2208
      %v2210 = vsub.f32 1.0, %v2209
      %v2211 = vmul.f32 %v2208, %v2210
      %v2212 = vadd.f32 %v2208, %v2211
      %vm2213 = vweird.f32 %v2102
      %vm2214 = vweird.f32 %v2208
      %vm2215 = vmor %vm2213, %vm2214
      %v2216 = vsel %vm2215, %v2208, %v2212
      %v2217 = vand.u32 2147483647, %v2102
      %vm2218 = vcmp.eq.f32.partialorder %v2217, 8.507059e+37
      %v2219 = vand.u32 %v2102, 2147483648
      %v2220 = vor.u32 1.1754944e-38, %v2219
      %v2221 = vsel %vm2218, %v2220, %v2216
      %v2222 = vmul.f32 1.0, %v2221
      %v2223 = vmul.f32 %v2063, %v2117
      %v2224 = vmul.f32 %v2064, %v2132
      %v2225 = vmul.f32 %v2065, %v2147
      %v2226 = vmul.f32 %v2066, %v2162
      %v2227 = vmul.f32 %v2067, %v2177
      %v2228 = vmul.f32 %v2068, %v2192
      %v2229 = vmul.f32 %v2069, %v2207
      %v2230 = vmul.f32 %v2070, %v2222
      %v2231 = vld [vmem:[%s6] sm:$0x1]
      %v2233 = vperm.slane %v2231, 0
      %v2235 = vadd.f32 %v2233, 0.0
      %v2236 = vld [vmem:[%s4] sm:$0xff]
      %v2237 = vld [vmem:[%s4 + $0x8] sm:$0xff]
      %vm2238 = vcmask 523264
      %v2240 = vsel %vm2238, %v2236, 0
      %v2243 = vsel %vm2238, %v2237, 0
      %2245 = vmatpush.msra.mxu0 0.0
      %2246 = vmatpush.msra.mxu0 0.0
      %2247 = vmatpush.msra.mxu0 0.0
      %2248 = vmatpush.msra.mxu0 0.0
      %2249 = vmatpush.msra.mxu0 0.0
      %2250 = vmatpush.msra.mxu0 0.0
      %2251 = vmatpush.msra.mxu0 0.0
      %2252 = vmatpush.msra.mxu0 0.0
      %2253 = vmatpush.msra.mxu0 %v2230
      %2254 = vmatpush.msra.mxu0 %v2229
      %2255 = vmatpush.msra.mxu0 %v2228
      %2256 = vmatpush.msra.mxu0 %v2227
      %2257 = vmatpush.msra.mxu0 %v2226
      %2258 = vmatpush.msra.mxu0 %v2225
      %2259 = vmatpush.msra.mxu0 %v2224
      %2260 = vmatpush.msra.mxu0 %v2223
      %2261 = vmatmul.f32.gmra.mxu0 %v2240
      %v2262 = vpop.f32.mrf.mxu0
      %v2263 = vadd.f32 0.0, %v2262
      %2264 = vmatmul.f32.gmra.mxu0 %v2243
      %v2265 = vpop.f32.mrf.mxu0
      %v2266 = vadd.f32 0.0, %v2265
      %2267 = vdwg.mxu0
      %v2268 = vld [vmem:[%s5] sm:$0xff]
      %v2269 = vld [vmem:[%s5 + $0x8] sm:$0xff]
      %vm2270 = vcmask 130048
      %v2272 = vsel %vm2270, %v2263, 0
      %v2275 = vsel %vm2270, %v2266, 0
      %2277 = vmatpush.msra.mxu0 0.0
      %2278 = vmatpush.msra.mxu0 0.0
      %2279 = vmatpush.msra.mxu0 0.0
      %2280 = vmatpush.msra.mxu0 0.0
      %2281 = vmatpush.msra.mxu0 0.0
      %2282 = vmatpush.msra.mxu0 0.0
      %2283 = vmatpush.msra.mxu0 0.0
      %2284 = vmatpush.msra.mxu0 0.0
      %2285 = vmatpush.msra.mxu0 0.0
      %2286 = vmatpush.msra.mxu0 0.0
      %2287 = vmatpush.msra.mxu0 0.0
      %2288 = vmatpush.msra.mxu0 0.0
      %2289 = vmatpush.msra.mxu0 0.0
      %2290 = vmatpush.msra.mxu0 0.0
      %2291 = vmatpush.msra.mxu0 %v2269
      %2292 = vmatpush.msra.mxu0 %v2268
      %2293 = vmatmul.f32.gmra.mxu0 %v2272
      %v2294 = vpop.f32.mrf.mxu0
      %v2295 = vadd.f32 0.0, %v2294
      %2296 = vmatmul.f32.gmra.mxu0 %v2275
      %v2297 = vpop.f32.mrf.mxu0
      %v2298 = vadd.f32 0.0, %v2297
      %2299 = vdwg.mxu0
      %v2300 = vadd.f32 %v2235, %v2295
      %v2301 = vadd.f32 %v2235, %v2298
      %s2302 = scalar_lea.vmem %s4, 16
      %v2303 = vld [vmem:[%s2302] sm:$0xff]
      %v2304 = vld [vmem:[%s2302 + $0x8] sm:$0xff]
      %v2306 = vsel %vm2238, %v2303, 0
      %v2309 = vsel %vm2238, %v2304, 0
      %2311 = vmatpush.msra.mxu0 0.0
      %2312 = vmatpush.msra.mxu0 0.0
      %2313 = vmatpush.msra.mxu0 0.0
      %2314 = vmatpush.msra.mxu0 0.0
      %2315 = vmatpush.msra.mxu0 0.0
      %2316 = vmatpush.msra.mxu0 0.0
      %2317 = vmatpush.msra.mxu0 0.0
      %2318 = vmatpush.msra.mxu0 0.0
      %2319 = vmatpush.msra.mxu0 %v2230
      %2320 = vmatpush.msra.mxu0 %v2229
      %2321 = vmatpush.msra.mxu0 %v2228
      %2322 = vmatpush.msra.mxu0 %v2227
      %2323 = vmatpush.msra.mxu0 %v2226
      %2324 = vmatpush.msra.mxu0 %v2225
      %2325 = vmatpush.msra.mxu0 %v2224
      %2326 = vmatpush.msra.mxu0 %v2223
      %2327 = vmatmul.f32.gmra.mxu0 %v2306
      %v2328 = vpop.f32.mrf.mxu0
      %v2329 = vadd.f32 0.0, %v2328
      %2330 = vmatmul.f32.gmra.mxu0 %v2309
      %v2331 = vpop.f32.mrf.mxu0
      %v2332 = vadd.f32 0.0, %v2331
      %2333 = vdwg.mxu0
      %s2334 = scalar_lea.vmem %s5, 16
      %v2335 = vld [vmem:[%s2334] sm:$0xff]
      %v2336 = vld [vmem:[%s2334 + $0x8] sm:$0xff]
      %v2338 = vsel %vm2270, %v2329, 0
      %v2341 = vsel %vm2270, %v2332, 0
      %2343 = vmatpush.msra.mxu0 0.0
      %2344 = vmatpush.msra.mxu0 0.0
      %2345 = vmatpush.msra.mxu0 0.0
      %2346 = vmatpush.msra.mxu0 0.0
      %2347 = vmatpush.msra.mxu0 0.0
      %2348 = vmatpush.msra.mxu0 0.0
      %2349 = vmatpush.msra.mxu0 0.0
      %2350 = vmatpush.msra.mxu0 0.0
      %2351 = vmatpush.msra.mxu0 0.0
      %2352 = vmatpush.msra.mxu0 0.0
      %2353 = vmatpush.msra.mxu0 0.0
      %2354 = vmatpush.msra.mxu0 0.0
      %2355 = vmatpush.msra.mxu0 0.0
      %2356 = vmatpush.msra.mxu0 0.0
      %2357 = vmatpush.msra.mxu0 %v2336
      %2358 = vmatpush.msra.mxu0 %v2335
      %2359 = vmatmul.f32.gmra.mxu0 %v2338
      %v2360 = vpop.f32.mrf.mxu0
      %v2361 = vadd.f32 0.0, %v2360
      %2362 = vmatmul.f32.gmra.mxu0 %v2341
      %v2363 = vpop.f32.mrf.mxu0
      %v2364 = vadd.f32 0.0, %v2363
      %2365 = vdwg.mxu0
      %v2366 = vadd.f32 %v2300, %v2361
      %v2367 = vadd.f32 %v2301, %v2364
      %s2368 = scalar_lea.vmem %s4, 32
      %v2369 = vld [vmem:[%s2368] sm:$0xff]
      %v2370 = vld [vmem:[%s2368 + $0x8] sm:$0xff]
      %v2372 = vsel %vm2238, %v2369, 0
      %v2375 = vsel %vm2238, %v2370, 0
      %2377 = vmatpush.msra.mxu0 0.0
      %2378 = vmatpush.msra.mxu0 0.0
      %2379 = vmatpush.msra.mxu0 0.0
      %2380 = vmatpush.msra.mxu0 0.0
      %2381 = vmatpush.msra.mxu0 0.0
      %2382 = vmatpush.msra.mxu0 0.0
      %2383 = vmatpush.msra.mxu0 0.0
      %2384 = vmatpush.msra.mxu0 0.0
      %2385 = vmatpush.msra.mxu0 %v2230
      %2386 = vmatpush.msra.mxu0 %v2229
      %2387 = vmatpush.msra.mxu0 %v2228
      %2388 = vmatpush.msra.mxu0 %v2227
      %2389 = vmatpush.msra.mxu0 %v2226
      %2390 = vmatpush.msra.mxu0 %v2225
      %2391 = vmatpush.msra.mxu0 %v2224
      %2392 = vmatpush.msra.mxu0 %v2223
      %2393 = vmatmul.f32.gmra.mxu0 %v2372
      %v2394 = vpop.f32.mrf.mxu0
      %v2395 = vadd.f32 0.0, %v2394
      %2396 = vmatmul.f32.gmra.mxu0 %v2375
      %v2397 = vpop.f32.mrf.mxu0
      %v2398 = vadd.f32 0.0, %v2397
      %2399 = vdwg.mxu0
      %s2400 = scalar_lea.vmem %s5, 32
      %v2401 = vld [vmem:[%s2400] sm:$0xff]
      %v2402 = vld [vmem:[%s2400 + $0x8] sm:$0xff]
      %v2404 = vsel %vm2270, %v2395, 0
      %v2407 = vsel %vm2270, %v2398, 0
      %2409 = vmatpush.msra.mxu0 0.0
      %2410 = vmatpush.msra.mxu0 0.0
      %2411 = vmatpush.msra.mxu0 0.0
      %2412 = vmatpush.msra.mxu0 0.0
      %2413 = vmatpush.msra.mxu0 0.0
      %2414 = vmatpush.msra.mxu0 0.0
      %2415 = vmatpush.msra.mxu0 0.0
      %2416 = vmatpush.msra.mxu0 0.0
      %2417 = vmatpush.msra.mxu0 0.0
      %2418 = vmatpush.msra.mxu0 0.0
      %2419 = vmatpush.msra.mxu0 0.0
      %2420 = vmatpush.msra.mxu0 0.0
      %2421 = vmatpush.msra.mxu0 0.0
      %2422 = vmatpush.msra.mxu0 0.0
      %2423 = vmatpush.msra.mxu0 %v2402
      %2424 = vmatpush.msra.mxu0 %v2401
      %2425 = vmatmul.f32.gmra.mxu0 %v2404
      %v2426 = vpop.f32.mrf.mxu0
      %v2427 = vadd.f32 0.0, %v2426
      %2428 = vmatmul.f32.gmra.mxu0 %v2407
      %v2429 = vpop.f32.mrf.mxu0
      %v2430 = vadd.f32 0.0, %v2429
      %2431 = vdwg.mxu0
      %v2432 = vadd.f32 %v2366, %v2427
      %v2433 = vadd.f32 %v2367, %v2430
      %s2434 = scalar_lea.vmem %s4, 48
      %v2435 = vld [vmem:[%s2434] sm:$0xff]
      %v2436 = vld [vmem:[%s2434 + $0x8] sm:$0xff]
      %v2438 = vsel %vm2238, %v2435, 0
      %v2441 = vsel %vm2238, %v2436, 0
      %2443 = vmatpush.msra.mxu0 0.0
      %2444 = vmatpush.msra.mxu0 0.0
      %2445 = vmatpush.msra.mxu0 0.0
      %2446 = vmatpush.msra.mxu0 0.0
      %2447 = vmatpush.msra.mxu0 0.0
      %2448 = vmatpush.msra.mxu0 0.0
      %2449 = vmatpush.msra.mxu0 0.0
      %2450 = vmatpush.msra.mxu0 0.0
      %2451 = vmatpush.msra.mxu0 %v2230
      %2452 = vmatpush.msra.mxu0 %v2229
      %2453 = vmatpush.msra.mxu0 %v2228
      %2454 = vmatpush.msra.mxu0 %v2227
      %2455 = vmatpush.msra.mxu0 %v2226
      %2456 = vmatpush.msra.mxu0 %v2225
      %2457 = vmatpush.msra.mxu0 %v2224
      %2458 = vmatpush.msra.mxu0 %v2223
      %2459 = vmatmul.f32.gmra.mxu0 %v2438
      %v2460 = vpop.f32.mrf.mxu0
      %v2461 = vadd.f32 0.0, %v2460
      %2462 = vmatmul.f32.gmra.mxu0 %v2441
      %v2463 = vpop.f32.mrf.mxu0
      %v2464 = vadd.f32 0.0, %v2463
      %2465 = vdwg.mxu0
      %s2466 = scalar_lea.vmem %s5, 48
      %v2467 = vld [vmem:[%s2466] sm:$0xff]
      %v2468 = vld [vmem:[%s2466 + $0x8] sm:$0xff]
      %v2470 = vsel %vm2270, %v2461, 0
      %v2473 = vsel %vm2270, %v2464, 0
      %2475 = vmatpush.msra.mxu0 0.0
      %2476 = vmatpush.msra.mxu0 0.0
      %2477 = vmatpush.msra.mxu0 0.0
      %2478 = vmatpush.msra.mxu0 0.0
      %2479 = vmatpush.msra.mxu0 0.0
      %2480 = vmatpush.msra.mxu0 0.0
      %2481 = vmatpush.msra.mxu0 0.0
      %2482 = vmatpush.msra.mxu0 0.0
      %2483 = vmatpush.msra.mxu0 0.0
      %2484 = vmatpush.msra.mxu0 0.0
      %2485 = vmatpush.msra.mxu0 0.0
      %2486 = vmatpush.msra.mxu0 0.0
      %2487 = vmatpush.msra.mxu0 0.0
      %2488 = vmatpush.msra.mxu0 0.0
      %2489 = vmatpush.msra.mxu0 %v2468
      %2490 = vmatpush.msra.mxu0 %v2467
      %2491 = vmatmul.f32.gmra.mxu0 %v2470
      %v2492 = vpop.f32.mrf.mxu0
      %v2493 = vadd.f32 0.0, %v2492
      %2494 = vmatmul.f32.gmra.mxu0 %v2473
      %v2495 = vpop.f32.mrf.mxu0
      %v2496 = vadd.f32 0.0, %v2495
      %2497 = vdwg.mxu0
      %v2498 = vadd.f32 %v2432, %v2493
      %v2499 = vadd.f32 %v2433, %v2496
      %s2500 = scalar_lea.vmem %s4, 64
      %v2501 = vld [vmem:[%s2500] sm:$0xff]
      %v2502 = vld [vmem:[%s2500 + $0x8] sm:$0xff]
      %v2504 = vsel %vm2238, %v2501, 0
      %v2507 = vsel %vm2238, %v2502, 0
      %2509 = vmatpush.msra.mxu0 0.0
      %2510 = vmatpush.msra.mxu0 0.0
      %2511 = vmatpush.msra.mxu0 0.0
      %2512 = vmatpush.msra.mxu0 0.0
      %2513 = vmatpush.msra.mxu0 0.0
      %2514 = vmatpush.msra.mxu0 0.0
      %2515 = vmatpush.msra.mxu0 0.0
      %2516 = vmatpush.msra.mxu0 0.0
      %2517 = vmatpush.msra.mxu0 %v2230
      %2518 = vmatpush.msra.mxu0 %v2229
      %2519 = vmatpush.msra.mxu0 %v2228
      %2520 = vmatpush.msra.mxu0 %v2227
      %2521 = vmatpush.msra.mxu0 %v2226
      %2522 = vmatpush.msra.mxu0 %v2225
      %2523 = vmatpush.msra.mxu0 %v2224
      %2524 = vmatpush.msra.mxu0 %v2223
      %2525 = vmatmul.f32.gmra.mxu0 %v2504
      %v2526 = vpop.f32.mrf.mxu0
      %v2527 = vadd.f32 0.0, %v2526
      %2528 = vmatmul.f32.gmra.mxu0 %v2507
      %v2529 = vpop.f32.mrf.mxu0
      %v2530 = vadd.f32 0.0, %v2529
      %2531 = vdwg.mxu0
      %s2532 = scalar_lea.vmem %s5, 64
      %v2533 = vld [vmem:[%s2532] sm:$0xff]
      %v2534 = vld [vmem:[%s2532 + $0x8] sm:$0xff]
      %v2536 = vsel %vm2270, %v2527, 0
      %v2539 = vsel %vm2270, %v2530, 0
      %2541 = vmatpush.msra.mxu0 0.0
      %2542 = vmatpush.msra.mxu0 0.0
      %2543 = vmatpush.msra.mxu0 0.0
      %2544 = vmatpush.msra.mxu0 0.0
      %2545 = vmatpush.msra.mxu0 0.0
      %2546 = vmatpush.msra.mxu0 0.0
      %2547 = vmatpush.msra.mxu0 0.0
      %2548 = vmatpush.msra.mxu0 0.0
      %2549 = vmatpush.msra.mxu0 0.0
      %2550 = vmatpush.msra.mxu0 0.0
      %2551 = vmatpush.msra.mxu0 0.0
      %2552 = vmatpush.msra.mxu0 0.0
      %2553 = vmatpush.msra.mxu0 0.0
      %2554 = vmatpush.msra.mxu0 0.0
      %2555 = vmatpush.msra.mxu0 %v2534
      %2556 = vmatpush.msra.mxu0 %v2533
      %2557 = vmatmul.f32.gmra.mxu0 %v2536
      %v2558 = vpop.f32.mrf.mxu0
      %v2559 = vadd.f32 0.0, %v2558
      %2560 = vmatmul.f32.gmra.mxu0 %v2539
      %v2561 = vpop.f32.mrf.mxu0
      %v2562 = vadd.f32 0.0, %v2561
      %2563 = vdwg.mxu0
      %v2564 = vadd.f32 %v2498, %v2559
      %v2565 = vadd.f32 %v2499, %v2562
      %s2566 = scalar_lea.vmem %s4, 80
      %v2567 = vld [vmem:[%s2566] sm:$0xff]
      %v2568 = vld [vmem:[%s2566 + $0x8] sm:$0xff]
      %v2570 = vsel %vm2238, %v2567, 0
      %v2573 = vsel %vm2238, %v2568, 0
      %2575 = vmatpush.msra.mxu0 0.0
      %2576 = vmatpush.msra.mxu0 0.0
      %2577 = vmatpush.msra.mxu0 0.0
      %2578 = vmatpush.msra.mxu0 0.0
      %2579 = vmatpush.msra.mxu0 0.0
      %2580 = vmatpush.msra.mxu0 0.0
      %2581 = vmatpush.msra.mxu0 0.0
      %2582 = vmatpush.msra.mxu0 0.0
      %2583 = vmatpush.msra.mxu0 %v2230
      %2584 = vmatpush.msra.mxu0 %v2229
      %2585 = vmatpush.msra.mxu0 %v2228
      %2586 = vmatpush.msra.mxu0 %v2227
      %2587 = vmatpush.msra.mxu0 %v2226
      %2588 = vmatpush.msra.mxu0 %v2225
      %2589 = vmatpush.msra.mxu0 %v2224
      %2590 = vmatpush.msra.mxu0 %v2223
      %2591 = vmatmul.f32.gmra.mxu0 %v2570
      %v2592 = vpop.f32.mrf.mxu0
      %v2593 = vadd.f32 0.0, %v2592
      %2594 = vmatmul.f32.gmra.mxu0 %v2573
      %v2595 = vpop.f32.mrf.mxu0
      %v2596 = vadd.f32 0.0, %v2595
      %2597 = vdwg.mxu0
      %s2598 = scalar_lea.vmem %s5, 80
      %v2599 = vld [vmem:[%s2598] sm:$0xff]
      %v2600 = vld [vmem:[%s2598 + $0x8] sm:$0xff]
      %v2602 = vsel %vm2270, %v2593, 0
      %v2605 = vsel %vm2270, %v2596, 0
      %2607 = vmatpush.msra.mxu0 0.0
      %2608 = vmatpush.msra.mxu0 0.0
      %2609 = vmatpush.msra.mxu0 0.0
      %2610 = vmatpush.msra.mxu0 0.0
      %2611 = vmatpush.msra.mxu0 0.0
      %2612 = vmatpush.msra.mxu0 0.0
      %2613 = vmatpush.msra.mxu0 0.0
      %2614 = vmatpush.msra.mxu0 0.0
      %2615 = vmatpush.msra.mxu0 0.0
      %2616 = vmatpush.msra.mxu0 0.0
      %2617 = vmatpush.msra.mxu0 0.0
      %2618 = vmatpush.msra.mxu0 0.0
      %2619 = vmatpush.msra.mxu0 0.0
      %2620 = vmatpush.msra.mxu0 0.0
      %2621 = vmatpush.msra.mxu0 %v2600
      %2622 = vmatpush.msra.mxu0 %v2599
      %2623 = vmatmul.f32.gmra.mxu0 %v2602
      %v2624 = vpop.f32.mrf.mxu0
      %v2625 = vadd.f32 0.0, %v2624
      %2626 = vmatmul.f32.gmra.mxu0 %v2605
      %v2627 = vpop.f32.mrf.mxu0
      %v2628 = vadd.f32 0.0, %v2627
      %2629 = vdwg.mxu0
      %v2630 = vadd.f32 %v2564, %v2625
      %v2631 = vadd.f32 %v2565, %v2628
      %s2632 = scalar_lea.vmem %s4, 96
      %v2633 = vld [vmem:[%s2632] sm:$0xff]
      %v2634 = vld [vmem:[%s2632 + $0x8] sm:$0xff]
      %v2636 = vsel %vm2238, %v2633, 0
      %v2639 = vsel %vm2238, %v2634, 0
      %2641 = vmatpush.msra.mxu0 0.0
      %2642 = vmatpush.msra.mxu0 0.0
      %2643 = vmatpush.msra.mxu0 0.0
      %2644 = vmatpush.msra.mxu0 0.0
      %2645 = vmatpush.msra.mxu0 0.0
      %2646 = vmatpush.msra.mxu0 0.0
      %2647 = vmatpush.msra.mxu0 0.0
      %2648 = vmatpush.msra.mxu0 0.0
      %2649 = vmatpush.msra.mxu0 %v2230
      %2650 = vmatpush.msra.mxu0 %v2229
      %2651 = vmatpush.msra.mxu0 %v2228
      %2652 = vmatpush.msra.mxu0 %v2227
      %2653 = vmatpush.msra.mxu0 %v2226
      %2654 = vmatpush.msra.mxu0 %v2225
      %2655 = vmatpush.msra.mxu0 %v2224
      %2656 = vmatpush.msra.mxu0 %v2223
      %2657 = vmatmul.f32.gmra.mxu0 %v2636
      %v2658 = vpop.f32.mrf.mxu0
      %v2659 = vadd.f32 0.0, %v2658
      %2660 = vmatmul.f32.gmra.mxu0 %v2639
      %v2661 = vpop.f32.mrf.mxu0
      %v2662 = vadd.f32 0.0, %v2661
      %2663 = vdwg.mxu0
      %s2664 = scalar_lea.vmem %s5, 96
      %v2665 = vld [vmem:[%s2664] sm:$0xff]
      %v2666 = vld [vmem:[%s2664 + $0x8] sm:$0xff]
      %v2668 = vsel %vm2270, %v2659, 0
      %v2671 = vsel %vm2270, %v2662, 0
      %2673 = vmatpush.msra.mxu0 0.0
      %2674 = vmatpush.msra.mxu0 0.0
      %2675 = vmatpush.msra.mxu0 0.0
      %2676 = vmatpush.msra.mxu0 0.0
      %2677 = vmatpush.msra.mxu0 0.0
      %2678 = vmatpush.msra.mxu0 0.0
      %2679 = vmatpush.msra.mxu0 0.0
      %2680 = vmatpush.msra.mxu0 0.0
      %2681 = vmatpush.msra.mxu0 0.0
      %2682 = vmatpush.msra.mxu0 0.0
      %2683 = vmatpush.msra.mxu0 0.0
      %2684 = vmatpush.msra.mxu0 0.0
      %2685 = vmatpush.msra.mxu0 0.0
      %2686 = vmatpush.msra.mxu0 0.0
      %2687 = vmatpush.msra.mxu0 %v2666
      %2688 = vmatpush.msra.mxu0 %v2665
      %2689 = vmatmul.f32.gmra.mxu0 %v2668
      %v2690 = vpop.f32.mrf.mxu0
      %v2691 = vadd.f32 0.0, %v2690
      %2692 = vmatmul.f32.gmra.mxu0 %v2671
      %v2693 = vpop.f32.mrf.mxu0
      %v2694 = vadd.f32 0.0, %v2693
      %2695 = vdwg.mxu0
      %v2696 = vadd.f32 %v2630, %v2691
      %v2697 = vadd.f32 %v2631, %v2694
      %s2698 = scalar_lea.vmem %s4, 112
      %v2699 = vld [vmem:[%s2698] sm:$0xff]
      %v2700 = vld [vmem:[%s2698 + $0x8] sm:$0xff]
      %v2702 = vsel %vm2238, %v2699, 0
      %v2705 = vsel %vm2238, %v2700, 0
      %2707 = vmatpush.msra.mxu0 0.0
      %2708 = vmatpush.msra.mxu0 0.0
      %2709 = vmatpush.msra.mxu0 0.0
      %2710 = vmatpush.msra.mxu0 0.0
      %2711 = vmatpush.msra.mxu0 0.0
      %2712 = vmatpush.msra.mxu0 0.0
      %2713 = vmatpush.msra.mxu0 0.0
      %2714 = vmatpush.msra.mxu0 0.0
      %2715 = vmatpush.msra.mxu0 %v2230
      %2716 = vmatpush.msra.mxu0 %v2229
      %2717 = vmatpush.msra.mxu0 %v2228
      %2718 = vmatpush.msra.mxu0 %v2227
      %2719 = vmatpush.msra.mxu0 %v2226
      %2720 = vmatpush.msra.mxu0 %v2225
      %2721 = vmatpush.msra.mxu0 %v2224
      %2722 = vmatpush.msra.mxu0 %v2223
      %2723 = vmatmul.f32.gmra.mxu0 %v2702
      %v2724 = vpop.f32.mrf.mxu0
      %v2725 = vadd.f32 0.0, %v2724
      %2726 = vmatmul.f32.gmra.mxu0 %v2705
      %v2727 = vpop.f32.mrf.mxu0
      %v2728 = vadd.f32 0.0, %v2727
      %2729 = vdwg.mxu0
      %s2730 = scalar_lea.vmem %s5, 112
      %v2731 = vld [vmem:[%s2730] sm:$0xff]
      %v2732 = vld [vmem:[%s2730 + $0x8] sm:$0xff]
      %v2734 = vsel %vm2270, %v2725, 0
      %v2737 = vsel %vm2270, %v2728, 0
      %2739 = vmatpush.msra.mxu0 0.0
      %2740 = vmatpush.msra.mxu0 0.0
      %2741 = vmatpush.msra.mxu0 0.0
      %2742 = vmatpush.msra.mxu0 0.0
      %2743 = vmatpush.msra.mxu0 0.0
      %2744 = vmatpush.msra.mxu0 0.0
      %2745 = vmatpush.msra.mxu0 0.0
      %2746 = vmatpush.msra.mxu0 0.0
      %2747 = vmatpush.msra.mxu0 0.0
      %2748 = vmatpush.msra.mxu0 0.0
      %2749 = vmatpush.msra.mxu0 0.0
      %2750 = vmatpush.msra.mxu0 0.0
      %2751 = vmatpush.msra.mxu0 0.0
      %2752 = vmatpush.msra.mxu0 0.0
      %2753 = vmatpush.msra.mxu0 %v2732
      %2754 = vmatpush.msra.mxu0 %v2731
      %2755 = vmatmul.f32.gmra.mxu0 %v2734
      %v2756 = vpop.f32.mrf.mxu0
      %v2757 = vadd.f32 0.0, %v2756
      %2758 = vmatmul.f32.gmra.mxu0 %v2737
      %v2759 = vpop.f32.mrf.mxu0
      %v2760 = vadd.f32 0.0, %v2759
      %2761 = vdwg.mxu0
      %v2762 = vadd.f32 %v2696, %v2757
      %v2763 = vadd.f32 %v2697, %v2760
      %s2764 = scalar_lea.vmem %s4, 128
      %v2765 = vld [vmem:[%s2764] sm:$0xff]
      %v2766 = vld [vmem:[%s2764 + $0x8] sm:$0xff]
      %v2768 = vsel %vm2238, %v2765, 0
      %v2771 = vsel %vm2238, %v2766, 0
      %2773 = vmatpush.msra.mxu0 0.0
      %2774 = vmatpush.msra.mxu0 0.0
      %2775 = vmatpush.msra.mxu0 0.0
      %2776 = vmatpush.msra.mxu0 0.0
      %2777 = vmatpush.msra.mxu0 0.0
      %2778 = vmatpush.msra.mxu0 0.0
      %2779 = vmatpush.msra.mxu0 0.0
      %2780 = vmatpush.msra.mxu0 0.0
      %2781 = vmatpush.msra.mxu0 %v2230
      %2782 = vmatpush.msra.mxu0 %v2229
      %2783 = vmatpush.msra.mxu0 %v2228
      %2784 = vmatpush.msra.mxu0 %v2227
      %2785 = vmatpush.msra.mxu0 %v2226
      %2786 = vmatpush.msra.mxu0 %v2225
      %2787 = vmatpush.msra.mxu0 %v2224
      %2788 = vmatpush.msra.mxu0 %v2223
      %2789 = vmatmul.f32.gmra.mxu0 %v2768
      %v2790 = vpop.f32.mrf.mxu0
      %v2791 = vadd.f32 0.0, %v2790
      %2792 = vmatmul.f32.gmra.mxu0 %v2771
      %v2793 = vpop.f32.mrf.mxu0
      %v2794 = vadd.f32 0.0, %v2793
      %2795 = vdwg.mxu0
      %s2796 = scalar_lea.vmem %s5, 128
      %v2797 = vld [vmem:[%s2796] sm:$0xff]
      %v2798 = vld [vmem:[%s2796 + $0x8] sm:$0xff]
      %v2800 = vsel %vm2270, %v2791, 0
      %v2803 = vsel %vm2270, %v2794, 0
      %2805 = vmatpush.msra.mxu0 0.0
      %2806 = vmatpush.msra.mxu0 0.0
      %2807 = vmatpush.msra.mxu0 0.0
      %2808 = vmatpush.msra.mxu0 0.0
      %2809 = vmatpush.msra.mxu0 0.0
      %2810 = vmatpush.msra.mxu0 0.0
      %2811 = vmatpush.msra.mxu0 0.0
      %2812 = vmatpush.msra.mxu0 0.0
      %2813 = vmatpush.msra.mxu0 0.0
      %2814 = vmatpush.msra.mxu0 0.0
      %2815 = vmatpush.msra.mxu0 0.0
      %2816 = vmatpush.msra.mxu0 0.0
      %2817 = vmatpush.msra.mxu0 0.0
      %2818 = vmatpush.msra.mxu0 0.0
      %2819 = vmatpush.msra.mxu0 %v2798
      %2820 = vmatpush.msra.mxu0 %v2797
      %2821 = vmatmul.f32.gmra.mxu0 %v2800
      %v2822 = vpop.f32.mrf.mxu0
      %v2823 = vadd.f32 0.0, %v2822
      %2824 = vmatmul.f32.gmra.mxu0 %v2803
      %v2825 = vpop.f32.mrf.mxu0
      %v2826 = vadd.f32 0.0, %v2825
      %2827 = vdwg.mxu0
      %v2828 = vadd.f32 %v2762, %v2823
      %v2829 = vadd.f32 %v2763, %v2826
      %v2830 = vxor.u32 %v2828, 2147483648
      %v2831 = vxor.u32 %v2829, 2147483648
      %v2832 = vmul.f32 %v2830, 1.442695
      %v2833 = vpow.pop %v2832
      %v2834 = vmul.f32 %v2831, 1.442695
      %v2835 = vpow.pop %v2834
      %v2836 = vadd.f32 %v2833, 1.0
      %v2837 = vadd.f32 %v2835, 1.0
      %v2838 = vrcp.pop %v2836
      %v2839 = vmul.f32 %v2836, %v2838
      %v2840 = vsub.f32 1.0, %v2839
      %v2841 = vmul.f32 %v2838, %v2840
      %v2842 = vadd.f32 %v2838, %v2841
      %vm2843 = vweird.f32 %v2836
      %vm2844 = vweird.f32 %v2838
      %vm2845 = vmor %vm2843, %vm2844
      %v2846 = vsel %vm2845, %v2838, %v2842
      %v2847 = vand.u32 2147483647, %v2836
      %vm2848 = vcmp.eq.f32.partialorder %v2847, 8.507059e+37
      %v2849 = vand.u32 %v2836, 2147483648
      %v2850 = vor.u32 1.1754944e-38, %v2849
      %v2851 = vsel %vm2848, %v2850, %v2846
      %v2852 = vmul.f32 1.0, %v2851
      %v2853 = vrcp.pop %v2837
      %v2854 = vmul.f32 %v2837, %v2853
      %v2855 = vsub.f32 1.0, %v2854
      %v2856 = vmul.f32 %v2853, %v2855
      %v2857 = vadd.f32 %v2853, %v2856
      %vm2858 = vweird.f32 %v2837
      %vm2859 = vweird.f32 %v2853
      %vm2860 = vmor %vm2858, %vm2859
      %v2861 = vsel %vm2860, %v2853, %v2857
      %v2862 = vand.u32 2147483647, %v2837
      %vm2863 = vcmp.eq.f32.partialorder %v2862, 8.507059e+37
      %v2864 = vand.u32 %v2837, 2147483648
      %v2865 = vor.u32 1.1754944e-38, %v2864
      %v2866 = vsel %vm2863, %v2865, %v2861
      %v2867 = vmul.f32 1.0, %v2866
      %v2868 = vmul.f32 %v2828, %v2852
      %v2869 = vmul.f32 %v2829, %v2867
      %v2870 = vld [vmem:[%s9] sm:$0x1]
      %v2872 = vperm.slane %v2870, 0
      %v2874 = vadd.f32 %v2872, 0.0
      %v2875 = vld [vmem:[%s7] sm:$0xff]
      %v2876 = vld [vmem:[%s7 + $0x8] sm:$0xff]
      %v2877 = vld [vmem:[%s7 + $0x10] sm:$0xff]
      %v2878 = vld [vmem:[%s7 + $0x18] sm:$0xff]
      %v2879 = vld [vmem:[%s7 + $0x20] sm:$0xff]
      %v2880 = vld [vmem:[%s7 + $0x28] sm:$0xff]
      %v2881 = vld [vmem:[%s7 + $0x30] sm:$0xff]
      %v2882 = vld [vmem:[%s7 + $0x38] sm:$0xff]
      %v2884 = vsel %vm2270, %v2875, 0
      %v2887 = vsel %vm2270, %v2876, 0
      %v2890 = vsel %vm2270, %v2877, 0
      %v2893 = vsel %vm2270, %v2878, 0
      %v2896 = vsel %vm2270, %v2879, 0
      %v2899 = vsel %vm2270, %v2880, 0
      %v2902 = vsel %vm2270, %v2881, 0
      %v2905 = vsel %vm2270, %v2882, 0
      %2907 = vmatpush.msra.mxu0 0.0
      %2908 = vmatpush.msra.mxu0 0.0
      %2909 = vmatpush.msra.mxu0 0.0
      %2910 = vmatpush.msra.mxu0 0.0
      %2911 = vmatpush.msra.mxu0 0.0
      %2912 = vmatpush.msra.mxu0 0.0
      %2913 = vmatpush.msra.mxu0 0.0
      %2914 = vmatpush.msra.mxu0 0.0
      %2915 = vmatpush.msra.mxu0 0.0
      %2916 = vmatpush.msra.mxu0 0.0
      %2917 = vmatpush.msra.mxu0 0.0
      %2918 = vmatpush.msra.mxu0 0.0
      %2919 = vmatpush.msra.mxu0 0.0
      %2920 = vmatpush.msra.mxu0 0.0
      %2921 = vmatpush.msra.mxu0 %v2869
      %2922 = vmatpush.msra.mxu0 %v2868
      %2923 = vmatmul.f32.gmra.mxu0 %v2884
      %v2924 = vpop.f32.mrf.mxu0
      %v2925 = vadd.f32 0.0, %v2924
      %2926 = vmatmul.f32.gmra.mxu0 %v2887
      %v2927 = vpop.f32.mrf.mxu0
      %v2928 = vadd.f32 0.0, %v2927
      %2929 = vmatmul.f32.gmra.mxu0 %v2890
      %v2930 = vpop.f32.mrf.mxu0
      %v2931 = vadd.f32 0.0, %v2930
      %2932 = vmatmul.f32.gmra.mxu0 %v2893
      %v2933 = vpop.f32.mrf.mxu0
      %v2934 = vadd.f32 0.0, %v2933
      %2935 = vmatmul.f32.gmra.mxu0 %v2896
      %v2936 = vpop.f32.mrf.mxu0
      %v2937 = vadd.f32 0.0, %v2936
      %2938 = vmatmul.f32.gmra.mxu0 %v2899
      %v2939 = vpop.f32.mrf.mxu0
      %v2940 = vadd.f32 0.0, %v2939
      %2941 = vmatmul.f32.gmra.mxu0 %v2902
      %v2942 = vpop.f32.mrf.mxu0
      %v2943 = vadd.f32 0.0, %v2942
      %2944 = vmatmul.f32.gmra.mxu0 %v2905
      %v2945 = vpop.f32.mrf.mxu0
      %v2946 = vadd.f32 0.0, %v2945
      %2947 = vdwg.mxu0
      %v2948 = vld [vmem:[%s8] sm:$0xff]
      %v2949 = vld [vmem:[%s8 + $0x8] sm:$0xff]
      %v2950 = vld [vmem:[%s8 + $0x10] sm:$0xff]
      %v2951 = vld [vmem:[%s8 + $0x18] sm:$0xff]
      %vm2952 = vcmask 261120
      %v2954 = vsel %vm2952, %v2925, 0
      %v2957 = vsel %vm2952, %v2928, 0
      %v2960 = vsel %vm2952, %v2931, 0
      %v2963 = vsel %vm2952, %v2934, 0
      %v2966 = vsel %vm2952, %v2937, 0
      %v2969 = vsel %vm2952, %v2940, 0
      %v2972 = vsel %vm2952, %v2943, 0
      %v2975 = vsel %vm2952, %v2946, 0
      %2977 = vmatpush.msra.mxu0 0.0
      %2978 = vmatpush.msra.mxu0 0.0
      %2979 = vmatpush.msra.mxu0 0.0
      %2980 = vmatpush.msra.mxu0 0.0
      %2981 = vmatpush.msra.mxu0 0.0
      %2982 = vmatpush.msra.mxu0 0.0
      %2983 = vmatpush.msra.mxu0 0.0
      %2984 = vmatpush.msra.mxu0 0.0
      %2985 = vmatpush.msra.mxu0 0.0
      %2986 = vmatpush.msra.mxu0 0.0
      %2987 = vmatpush.msra.mxu0 0.0
      %2988 = vmatpush.msra.mxu0 0.0
      %2989 = vmatpush.msra.mxu0 %v2951
      %2990 = vmatpush.msra.mxu0 %v2950
      %2991 = vmatpush.msra.mxu0 %v2949
      %2992 = vmatpush.msra.mxu0 %v2948
      %2993 = vmatmul.f32.gmra.mxu0 %v2954
      %v2994 = vpop.f32.mrf.mxu0
      %v2995 = vadd.f32 0.0, %v2994
      %2996 = vmatmul.f32.gmra.mxu0 %v2957
      %v2997 = vpop.f32.mrf.mxu0
      %v2998 = vadd.f32 0.0, %v2997
      %2999 = vmatmul.f32.gmra.mxu0 %v2960
      %v3000 = vpop.f32.mrf.mxu0
      %v3001 = vadd.f32 0.0, %v3000
      %3002 = vmatmul.f32.gmra.mxu0 %v2963
      %v3003 = vpop.f32.mrf.mxu0
      %v3004 = vadd.f32 0.0, %v3003
      %3005 = vmatmul.f32.gmra.mxu0 %v2966
      %v3006 = vpop.f32.mrf.mxu0
      %v3007 = vadd.f32 0.0, %v3006
      %3008 = vmatmul.f32.gmra.mxu0 %v2969
      %v3009 = vpop.f32.mrf.mxu0
      %v3010 = vadd.f32 0.0, %v3009
      %3011 = vmatmul.f32.gmra.mxu0 %v2972
      %v3012 = vpop.f32.mrf.mxu0
      %v3013 = vadd.f32 0.0, %v3012
      %3014 = vmatmul.f32.gmra.mxu0 %v2975
      %v3015 = vpop.f32.mrf.mxu0
      %v3016 = vadd.f32 0.0, %v3015
      %3017 = vdwg.mxu0
      %v3018 = vadd.f32 %v2874, %v2995
      %v3019 = vadd.f32 %v2874, %v2998
      %v3020 = vadd.f32 %v2874, %v3001
      %v3021 = vadd.f32 %v2874, %v3004
      %v3022 = vadd.f32 %v2874, %v3007
      %v3023 = vadd.f32 %v2874, %v3010
      %v3024 = vadd.f32 %v2874, %v3013
      %v3025 = vadd.f32 %v2874, %v3016
      %s3026 = scalar_lea.vmem %s7, 64
      %v3027 = vld [vmem:[%s3026] sm:$0xff]
      %v3028 = vld [vmem:[%s3026 + $0x8] sm:$0xff]
      %v3029 = vld [vmem:[%s3026 + $0x10] sm:$0xff]
      %v3030 = vld [vmem:[%s3026 + $0x18] sm:$0xff]
      %v3031 = vld [vmem:[%s3026 + $0x20] sm:$0xff]
      %v3032 = vld [vmem:[%s3026 + $0x28] sm:$0xff]
      %v3033 = vld [vmem:[%s3026 + $0x30] sm:$0xff]
      %v3034 = vld [vmem:[%s3026 + $0x38] sm:$0xff]
      %v3036 = vsel %vm2270, %v3027, 0
      %v3039 = vsel %vm2270, %v3028, 0
      %v3042 = vsel %vm2270, %v3029, 0
      %v3045 = vsel %vm2270, %v3030, 0
      %v3048 = vsel %vm2270, %v3031, 0
      %v3051 = vsel %vm2270, %v3032, 0
      %v3054 = vsel %vm2270, %v3033, 0
      %v3057 = vsel %vm2270, %v3034, 0
      %3059 = vmatpush.msra.mxu0 0.0
      %3060 = vmatpush.msra.mxu0 0.0
      %3061 = vmatpush.msra.mxu0 0.0
      %3062 = vmatpush.msra.mxu0 0.0
      %3063 = vmatpush.msra.mxu0 0.0
      %3064 = vmatpush.msra.mxu0 0.0
      %3065 = vmatpush.msra.mxu0 0.0
      %3066 = vmatpush.msra.mxu0 0.0
      %3067 = vmatpush.msra.mxu0 0.0
      %3068 = vmatpush.msra.mxu0 0.0
      %3069 = vmatpush.msra.mxu0 0.0
      %3070 = vmatpush.msra.mxu0 0.0
      %3071 = vmatpush.msra.mxu0 0.0
      %3072 = vmatpush.msra.mxu0 0.0
      %3073 = vmatpush.msra.mxu0 %v2869
      %3074 = vmatpush.msra.mxu0 %v2868
      %3075 = vmatmul.f32.gmra.mxu0 %v3036
      %v3076 = vpop.f32.mrf.mxu0
      %v3077 = vadd.f32 0.0, %v3076
      %3078 = vmatmul.f32.gmra.mxu0 %v3039
      %v3079 = vpop.f32.mrf.mxu0
      %v3080 = vadd.f32 0.0, %v3079
      %3081 = vmatmul.f32.gmra.mxu0 %v3042
      %v3082 = vpop.f32.mrf.mxu0
      %v3083 = vadd.f32 0.0, %v3082
      %3084 = vmatmul.f32.gmra.mxu0 %v3045
      %v3085 = vpop.f32.mrf.mxu0
      %v3086 = vadd.f32 0.0, %v3085
      %3087 = vmatmul.f32.gmra.mxu0 %v3048
      %v3088 = vpop.f32.mrf.mxu0
      %v3089 = vadd.f32 0.0, %v3088
      %3090 = vmatmul.f32.gmra.mxu0 %v3051
      %v3091 = vpop.f32.mrf.mxu0
      %v3092 = vadd.f32 0.0, %v3091
      %3093 = vmatmul.f32.gmra.mxu0 %v3054
      %v3094 = vpop.f32.mrf.mxu0
      %v3095 = vadd.f32 0.0, %v3094
      %3096 = vmatmul.f32.gmra.mxu0 %v3057
      %v3097 = vpop.f32.mrf.mxu0
      %v3098 = vadd.f32 0.0, %v3097
      %3099 = vdwg.mxu0
      %s3100 = scalar_lea.vmem %s8, 32
      %v3101 = vld [vmem:[%s3100] sm:$0xff]
      %v3102 = vld [vmem:[%s3100 + $0x8] sm:$0xff]
      %v3103 = vld [vmem:[%s3100 + $0x10] sm:$0xff]
      %v3104 = vld [vmem:[%s3100 + $0x18] sm:$0xff]
      %v3106 = vsel %vm2952, %v3077, 0
      %v3109 = vsel %vm2952, %v3080, 0
      %v3112 = vsel %vm2952, %v3083, 0
      %v3115 = vsel %vm2952, %v3086, 0
      %v3118 = vsel %vm2952, %v3089, 0
      %v3121 = vsel %vm2952, %v3092, 0
      %v3124 = vsel %vm2952, %v3095, 0
      %v3127 = vsel %vm2952, %v3098, 0
      %3129 = vmatpush.msra.mxu0 0.0
      %3130 = vmatpush.msra.mxu0 0.0
      %3131 = vmatpush.msra.mxu0 0.0
      %3132 = vmatpush.msra.mxu0 0.0
      %3133 = vmatpush.msra.mxu0 0.0
      %3134 = vmatpush.msra.mxu0 0.0
      %3135 = vmatpush.msra.mxu0 0.0
      %3136 = vmatpush.msra.mxu0 0.0
      %3137 = vmatpush.msra.mxu0 0.0
      %3138 = vmatpush.msra.mxu0 0.0
      %3139 = vmatpush.msra.mxu0 0.0
      %3140 = vmatpush.msra.mxu0 0.0
      %3141 = vmatpush.msra.mxu0 %v3104
      %3142 = vmatpush.msra.mxu0 %v3103
      %3143 = vmatpush.msra.mxu0 %v3102
      %3144 = vmatpush.msra.mxu0 %v3101
      %3145 = vmatmul.f32.gmra.mxu0 %v3106
      %v3146 = vpop.f32.mrf.mxu0
      %v3147 = vadd.f32 0.0, %v3146
      %3148 = vmatmul.f32.gmra.mxu0 %v3109
      %v3149 = vpop.f32.mrf.mxu0
      %v3150 = vadd.f32 0.0, %v3149
      %3151 = vmatmul.f32.gmra.mxu0 %v3112
      %v3152 = vpop.f32.mrf.mxu0
      %v3153 = vadd.f32 0.0, %v3152
      %3154 = vmatmul.f32.gmra.mxu0 %v3115
      %v3155 = vpop.f32.mrf.mxu0
      %v3156 = vadd.f32 0.0, %v3155
      %3157 = vmatmul.f32.gmra.mxu0 %v3118
      %v3158 = vpop.f32.mrf.mxu0
      %v3159 = vadd.f32 0.0, %v3158
      %3160 = vmatmul.f32.gmra.mxu0 %v3121
      %v3161 = vpop.f32.mrf.mxu0
      %v3162 = vadd.f32 0.0, %v3161
      %3163 = vmatmul.f32.gmra.mxu0 %v3124
      %v3164 = vpop.f32.mrf.mxu0
      %v3165 = vadd.f32 0.0, %v3164
      %3166 = vmatmul.f32.gmra.mxu0 %v3127
      %v3167 = vpop.f32.mrf.mxu0
      %v3168 = vadd.f32 0.0, %v3167
      %3169 = vdwg.mxu0
      %v3170 = vadd.f32 %v3018, %v3147
      %v3171 = vadd.f32 %v3019, %v3150
      %v3172 = vadd.f32 %v3020, %v3153
      %v3173 = vadd.f32 %v3021, %v3156
      %v3174 = vadd.f32 %v3022, %v3159
      %v3175 = vadd.f32 %v3023, %v3162
      %v3176 = vadd.f32 %v3024, %v3165
      %v3177 = vadd.f32 %v3025, %v3168
      %s3178 = scalar_lea.vmem %s7, 128
      %v3179 = vld [vmem:[%s3178] sm:$0xff]
      %v3180 = vld [vmem:[%s3178 + $0x8] sm:$0xff]
      %v3181 = vld [vmem:[%s3178 + $0x10] sm:$0xff]
      %v3182 = vld [vmem:[%s3178 + $0x18] sm:$0xff]
      %v3183 = vld [vmem:[%s3178 + $0x20] sm:$0xff]
      %v3184 = vld [vmem:[%s3178 + $0x28] sm:$0xff]
      %v3185 = vld [vmem:[%s3178 + $0x30] sm:$0xff]
      %v3186 = vld [vmem:[%s3178 + $0x38] sm:$0xff]
      %v3188 = vsel %vm2270, %v3179, 0
      %v3191 = vsel %vm2270, %v3180, 0
      %v3194 = vsel %vm2270, %v3181, 0
      %v3197 = vsel %vm2270, %v3182, 0
      %v3200 = vsel %vm2270, %v3183, 0
      %v3203 = vsel %vm2270, %v3184, 0
      %v3206 = vsel %vm2270, %v3185, 0
      %v3209 = vsel %vm2270, %v3186, 0
      %3211 = vmatpush.msra.mxu0 0.0
      %3212 = vmatpush.msra.mxu0 0.0
      %3213 = vmatpush.msra.mxu0 0.0
      %3214 = vmatpush.msra.mxu0 0.0
      %3215 = vmatpush.msra.mxu0 0.0
      %3216 = vmatpush.msra.mxu0 0.0
      %3217 = vmatpush.msra.mxu0 0.0
      %3218 = vmatpush.msra.mxu0 0.0
      %3219 = vmatpush.msra.mxu0 0.0
      %3220 = vmatpush.msra.mxu0 0.0
      %3221 = vmatpush.msra.mxu0 0.0
      %3222 = vmatpush.msra.mxu0 0.0
      %3223 = vmatpush.msra.mxu0 0.0
      %3224 = vmatpush.msra.mxu0 0.0
      %3225 = vmatpush.msra.mxu0 %v2869
      %3226 = vmatpush.msra.mxu0 %v2868
      %3227 = vmatmul.f32.gmra.mxu0 %v3188
      %v3228 = vpop.f32.mrf.mxu0
      %v3229 = vadd.f32 0.0, %v3228
      %3230 = vmatmul.f32.gmra.mxu0 %v3191
      %v3231 = vpop.f32.mrf.mxu0
      %v3232 = vadd.f32 0.0, %v3231
      %3233 = vmatmul.f32.gmra.mxu0 %v3194
      %v3234 = vpop.f32.mrf.mxu0
      %v3235 = vadd.f32 0.0, %v3234
      %3236 = vmatmul.f32.gmra.mxu0 %v3197
      %v3237 = vpop.f32.mrf.mxu0
      %v3238 = vadd.f32 0.0, %v3237
      %3239 = vmatmul.f32.gmra.mxu0 %v3200
      %v3240 = vpop.f32.mrf.mxu0
      %v3241 = vadd.f32 0.0, %v3240
      %3242 = vmatmul.f32.gmra.mxu0 %v3203
      %v3243 = vpop.f32.mrf.mxu0
      %v3244 = vadd.f32 0.0, %v3243
      %3245 = vmatmul.f32.gmra.mxu0 %v3206
      %v3246 = vpop.f32.mrf.mxu0
      %v3247 = vadd.f32 0.0, %v3246
      %3248 = vmatmul.f32.gmra.mxu0 %v3209
      %v3249 = vpop.f32.mrf.mxu0
      %v3250 = vadd.f32 0.0, %v3249
      %3251 = vdwg.mxu0
      %s3252 = scalar_lea.vmem %s8, 64
      %v3253 = vld [vmem:[%s3252] sm:$0xff]
      %v3254 = vld [vmem:[%s3252 + $0x8] sm:$0xff]
      %v3255 = vld [vmem:[%s3252 + $0x10] sm:$0xff]
      %v3256 = vld [vmem:[%s3252 + $0x18] sm:$0xff]
      %v3258 = vsel %vm2952, %v3229, 0
      %v3261 = vsel %vm2952, %v3232, 0
      %v3264 = vsel %vm2952, %v3235, 0
      %v3267 = vsel %vm2952, %v3238, 0
      %v3270 = vsel %vm2952, %v3241, 0
      %v3273 = vsel %vm2952, %v3244, 0
      %v3276 = vsel %vm2952, %v3247, 0
      %v3279 = vsel %vm2952, %v3250, 0
      %3281 = vmatpush.msra.mxu0 0.0
      %3282 = vmatpush.msra.mxu0 0.0
      %3283 = vmatpush.msra.mxu0 0.0
      %3284 = vmatpush.msra.mxu0 0.0
      %3285 = vmatpush.msra.mxu0 0.0
      %3286 = vmatpush.msra.mxu0 0.0
      %3287 = vmatpush.msra.mxu0 0.0
      %3288 = vmatpush.msra.mxu0 0.0
      %3289 = vmatpush.msra.mxu0 0.0
      %3290 = vmatpush.msra.mxu0 0.0
      %3291 = vmatpush.msra.mxu0 0.0
      %3292 = vmatpush.msra.mxu0 0.0
      %3293 = vmatpush.msra.mxu0 %v3256
      %3294 = vmatpush.msra.mxu0 %v3255
      %3295 = vmatpush.msra.mxu0 %v3254
      %3296 = vmatpush.msra.mxu0 %v3253
      %3297 = vmatmul.f32.gmra.mxu0 %v3258
      %v3298 = vpop.f32.mrf.mxu0
      %v3299 = vadd.f32 0.0, %v3298
      %3300 = vmatmul.f32.gmra.mxu0 %v3261
      %v3301 = vpop.f32.mrf.mxu0
      %v3302 = vadd.f32 0.0, %v3301
      %3303 = vmatmul.f32.gmra.mxu0 %v3264
      %v3304 = vpop.f32.mrf.mxu0
      %v3305 = vadd.f32 0.0, %v3304
      %3306 = vmatmul.f32.gmra.mxu0 %v3267
      %v3307 = vpop.f32.mrf.mxu0
      %v3308 = vadd.f32 0.0, %v3307
      %3309 = vmatmul.f32.gmra.mxu0 %v3270
      %v3310 = vpop.f32.mrf.mxu0
      %v3311 = vadd.f32 0.0, %v3310
      %3312 = vmatmul.f32.gmra.mxu0 %v3273
      %v3313 = vpop.f32.mrf.mxu0
      %v3314 = vadd.f32 0.0, %v3313
      %3315 = vmatmul.f32.gmra.mxu0 %v3276
      %v3316 = vpop.f32.mrf.mxu0
      %v3317 = vadd.f32 0.0, %v3316
      %3318 = vmatmul.f32.gmra.mxu0 %v3279
      %v3319 = vpop.f32.mrf.mxu0
      %v3320 = vadd.f32 0.0, %v3319
      %3321 = vdwg.mxu0
      %v3322 = vadd.f32 %v3170, %v3299
      %v3323 = vadd.f32 %v3171, %v3302
      %v3324 = vadd.f32 %v3172, %v3305
      %v3325 = vadd.f32 %v3173, %v3308
      %v3326 = vadd.f32 %v3174, %v3311
      %v3327 = vadd.f32 %v3175, %v3314
      %v3328 = vadd.f32 %v3176, %v3317
      %v3329 = vadd.f32 %v3177, %v3320
      %s3330 = scalar_lea.vmem %s7, 192
      %v3331 = vld [vmem:[%s3330] sm:$0xff]
      %v3332 = vld [vmem:[%s3330 + $0x8] sm:$0xff]
      %v3333 = vld [vmem:[%s3330 + $0x10] sm:$0xff]
      %v3334 = vld [vmem:[%s3330 + $0x18] sm:$0xff]
      %v3335 = vld [vmem:[%s3330 + $0x20] sm:$0xff]
      %v3336 = vld [vmem:[%s3330 + $0x28] sm:$0xff]
      %v3337 = vld [vmem:[%s3330 + $0x30] sm:$0xff]
      %v3338 = vld [vmem:[%s3330 + $0x38] sm:$0xff]
      %v3340 = vsel %vm2270, %v3331, 0
      %v3343 = vsel %vm2270, %v3332, 0
      %v3346 = vsel %vm2270, %v3333, 0
      %v3349 = vsel %vm2270, %v3334, 0
      %v3352 = vsel %vm2270, %v3335, 0
      %v3355 = vsel %vm2270, %v3336, 0
      %v3358 = vsel %vm2270, %v3337, 0
      %v3361 = vsel %vm2270, %v3338, 0
      %3363 = vmatpush.msra.mxu0 0.0
      %3364 = vmatpush.msra.mxu0 0.0
      %3365 = vmatpush.msra.mxu0 0.0
      %3366 = vmatpush.msra.mxu0 0.0
      %3367 = vmatpush.msra.mxu0 0.0
      %3368 = vmatpush.msra.mxu0 0.0
      %3369 = vmatpush.msra.mxu0 0.0
      %3370 = vmatpush.msra.mxu0 0.0
      %3371 = vmatpush.msra.mxu0 0.0
      %3372 = vmatpush.msra.mxu0 0.0
      %3373 = vmatpush.msra.mxu0 0.0
      %3374 = vmatpush.msra.mxu0 0.0
      %3375 = vmatpush.msra.mxu0 0.0
      %3376 = vmatpush.msra.mxu0 0.0
      %3377 = vmatpush.msra.mxu0 %v2869
      %3378 = vmatpush.msra.mxu0 %v2868
      %3379 = vmatmul.f32.gmra.mxu0 %v3340
      %v3380 = vpop.f32.mrf.mxu0
      %v3381 = vadd.f32 0.0, %v3380
      %3382 = vmatmul.f32.gmra.mxu0 %v3343
      %v3383 = vpop.f32.mrf.mxu0
      %v3384 = vadd.f32 0.0, %v3383
      %3385 = vmatmul.f32.gmra.mxu0 %v3346
      %v3386 = vpop.f32.mrf.mxu0
      %v3387 = vadd.f32 0.0, %v3386
      %3388 = vmatmul.f32.gmra.mxu0 %v3349
      %v3389 = vpop.f32.mrf.mxu0
      %v3390 = vadd.f32 0.0, %v3389
      %3391 = vmatmul.f32.gmra.mxu0 %v3352
      %v3392 = vpop.f32.mrf.mxu0
      %v3393 = vadd.f32 0.0, %v3392
      %3394 = vmatmul.f32.gmra.mxu0 %v3355
      %v3395 = vpop.f32.mrf.mxu0
      %v3396 = vadd.f32 0.0, %v3395
      %3397 = vmatmul.f32.gmra.mxu0 %v3358
      %v3398 = vpop.f32.mrf.mxu0
      %v3399 = vadd.f32 0.0, %v3398
      %3400 = vmatmul.f32.gmra.mxu0 %v3361
      %v3401 = vpop.f32.mrf.mxu0
      %v3402 = vadd.f32 0.0, %v3401
      %3403 = vdwg.mxu0
      %s3404 = scalar_lea.vmem %s8, 96
      %v3405 = vld [vmem:[%s3404] sm:$0xff]
      %v3406 = vld [vmem:[%s3404 + $0x8] sm:$0xff]
      %v3407 = vld [vmem:[%s3404 + $0x10] sm:$0xff]
      %v3408 = vld [vmem:[%s3404 + $0x18] sm:$0xff]
      %v3410 = vsel %vm2952, %v3381, 0
      %v3413 = vsel %vm2952, %v3384, 0
      %v3416 = vsel %vm2952, %v3387, 0
      %v3419 = vsel %vm2952, %v3390, 0
      %v3422 = vsel %vm2952, %v3393, 0
      %v3425 = vsel %vm2952, %v3396, 0
      %v3428 = vsel %vm2952, %v3399, 0
      %v3431 = vsel %vm2952, %v3402, 0
      %3433 = vmatpush.msra.mxu0 0.0
      %3434 = vmatpush.msra.mxu0 0.0
      %3435 = vmatpush.msra.mxu0 0.0
      %3436 = vmatpush.msra.mxu0 0.0
      %3437 = vmatpush.msra.mxu0 0.0
      %3438 = vmatpush.msra.mxu0 0.0
      %3439 = vmatpush.msra.mxu0 0.0
      %3440 = vmatpush.msra.mxu0 0.0
      %3441 = vmatpush.msra.mxu0 0.0
      %3442 = vmatpush.msra.mxu0 0.0
      %3443 = vmatpush.msra.mxu0 0.0
      %3444 = vmatpush.msra.mxu0 0.0
      %3445 = vmatpush.msra.mxu0 %v3408
      %3446 = vmatpush.msra.mxu0 %v3407
      %3447 = vmatpush.msra.mxu0 %v3406
      %3448 = vmatpush.msra.mxu0 %v3405
      %3449 = vmatmul.f32.gmra.mxu0 %v3410
      %v3450 = vpop.f32.mrf.mxu0
      %v3451 = vadd.f32 0.0, %v3450
      %3452 = vmatmul.f32.gmra.mxu0 %v3413
      %v3453 = vpop.f32.mrf.mxu0
      %v3454 = vadd.f32 0.0, %v3453
      %3455 = vmatmul.f32.gmra.mxu0 %v3416
      %v3456 = vpop.f32.mrf.mxu0
      %v3457 = vadd.f32 0.0, %v3456
      %3458 = vmatmul.f32.gmra.mxu0 %v3419
      %v3459 = vpop.f32.mrf.mxu0
      %v3460 = vadd.f32 0.0, %v3459
      %3461 = vmatmul.f32.gmra.mxu0 %v3422
      %v3462 = vpop.f32.mrf.mxu0
      %v3463 = vadd.f32 0.0, %v3462
      %3464 = vmatmul.f32.gmra.mxu0 %v3425
      %v3465 = vpop.f32.mrf.mxu0
      %v3466 = vadd.f32 0.0, %v3465
      %3467 = vmatmul.f32.gmra.mxu0 %v3428
      %v3468 = vpop.f32.mrf.mxu0
      %v3469 = vadd.f32 0.0, %v3468
      %3470 = vmatmul.f32.gmra.mxu0 %v3431
      %v3471 = vpop.f32.mrf.mxu0
      %v3472 = vadd.f32 0.0, %v3471
      %3473 = vdwg.mxu0
      %v3474 = vadd.f32 %v3322, %v3451
      %v3475 = vadd.f32 %v3323, %v3454
      %v3476 = vadd.f32 %v3324, %v3457
      %v3477 = vadd.f32 %v3325, %v3460
      %v3478 = vadd.f32 %v3326, %v3463
      %v3479 = vadd.f32 %v3327, %v3466
      %v3480 = vadd.f32 %v3328, %v3469
      %v3481 = vadd.f32 %v3329, %v3472
      %s3482 = scalar_lea.vmem %s7, 256
      %v3483 = vld [vmem:[%s3482] sm:$0xff]
      %v3484 = vld [vmem:[%s3482 + $0x8] sm:$0xff]
      %v3485 = vld [vmem:[%s3482 + $0x10] sm:$0xff]
      %v3486 = vld [vmem:[%s3482 + $0x18] sm:$0xff]
      %v3487 = vld [vmem:[%s3482 + $0x20] sm:$0xff]
      %v3488 = vld [vmem:[%s3482 + $0x28] sm:$0xff]
      %v3489 = vld [vmem:[%s3482 + $0x30] sm:$0xff]
      %v3490 = vld [vmem:[%s3482 + $0x38] sm:$0xff]
      %v3492 = vsel %vm2270, %v3483, 0
      %v3495 = vsel %vm2270, %v3484, 0
      %v3498 = vsel %vm2270, %v3485, 0
      %v3501 = vsel %vm2270, %v3486, 0
      %v3504 = vsel %vm2270, %v3487, 0
      %v3507 = vsel %vm2270, %v3488, 0
      %v3510 = vsel %vm2270, %v3489, 0
      %v3513 = vsel %vm2270, %v3490, 0
      %3515 = vmatpush.msra.mxu0 0.0
      %3516 = vmatpush.msra.mxu0 0.0
      %3517 = vmatpush.msra.mxu0 0.0
      %3518 = vmatpush.msra.mxu0 0.0
      %3519 = vmatpush.msra.mxu0 0.0
      %3520 = vmatpush.msra.mxu0 0.0
      %3521 = vmatpush.msra.mxu0 0.0
      %3522 = vmatpush.msra.mxu0 0.0
      %3523 = vmatpush.msra.mxu0 0.0
      %3524 = vmatpush.msra.mxu0 0.0
      %3525 = vmatpush.msra.mxu0 0.0
      %3526 = vmatpush.msra.mxu0 0.0
      %3527 = vmatpush.msra.mxu0 0.0
      %3528 = vmatpush.msra.mxu0 0.0
      %3529 = vmatpush.msra.mxu0 %v2869
      %3530 = vmatpush.msra.mxu0 %v2868
      %3531 = vmatmul.f32.gmra.mxu0 %v3492
      %v3532 = vpop.f32.mrf.mxu0
      %v3533 = vadd.f32 0.0, %v3532
      %3534 = vmatmul.f32.gmra.mxu0 %v3495
      %v3535 = vpop.f32.mrf.mxu0
      %v3536 = vadd.f32 0.0, %v3535
      %3537 = vmatmul.f32.gmra.mxu0 %v3498
      %v3538 = vpop.f32.mrf.mxu0
      %v3539 = vadd.f32 0.0, %v3538
      %3540 = vmatmul.f32.gmra.mxu0 %v3501
      %v3541 = vpop.f32.mrf.mxu0
      %v3542 = vadd.f32 0.0, %v3541
      %3543 = vmatmul.f32.gmra.mxu0 %v3504
      %v3544 = vpop.f32.mrf.mxu0
      %v3545 = vadd.f32 0.0, %v3544
      %3546 = vmatmul.f32.gmra.mxu0 %v3507
      %v3547 = vpop.f32.mrf.mxu0
      %v3548 = vadd.f32 0.0, %v3547
      %3549 = vmatmul.f32.gmra.mxu0 %v3510
      %v3550 = vpop.f32.mrf.mxu0
      %v3551 = vadd.f32 0.0, %v3550
      %3552 = vmatmul.f32.gmra.mxu0 %v3513
      %v3553 = vpop.f32.mrf.mxu0
      %v3554 = vadd.f32 0.0, %v3553
      %3555 = vdwg.mxu0
      %s3556 = scalar_lea.vmem %s8, 128
      %v3557 = vld [vmem:[%s3556] sm:$0xff]
      %v3558 = vld [vmem:[%s3556 + $0x8] sm:$0xff]
      %v3559 = vld [vmem:[%s3556 + $0x10] sm:$0xff]
      %v3560 = vld [vmem:[%s3556 + $0x18] sm:$0xff]
      %v3562 = vsel %vm2952, %v3533, 0
      %v3565 = vsel %vm2952, %v3536, 0
      %v3568 = vsel %vm2952, %v3539, 0
      %v3571 = vsel %vm2952, %v3542, 0
      %v3574 = vsel %vm2952, %v3545, 0
      %v3577 = vsel %vm2952, %v3548, 0
      %v3580 = vsel %vm2952, %v3551, 0
      %v3583 = vsel %vm2952, %v3554, 0
      %3585 = vmatpush.msra.mxu0 0.0
      %3586 = vmatpush.msra.mxu0 0.0
      %3587 = vmatpush.msra.mxu0 0.0
      %3588 = vmatpush.msra.mxu0 0.0
      %3589 = vmatpush.msra.mxu0 0.0
      %3590 = vmatpush.msra.mxu0 0.0
      %3591 = vmatpush.msra.mxu0 0.0
      %3592 = vmatpush.msra.mxu0 0.0
      %3593 = vmatpush.msra.mxu0 0.0
      %3594 = vmatpush.msra.mxu0 0.0
      %3595 = vmatpush.msra.mxu0 0.0
      %3596 = vmatpush.msra.mxu0 0.0
      %3597 = vmatpush.msra.mxu0 %v3560
      %3598 = vmatpush.msra.mxu0 %v3559
      %3599 = vmatpush.msra.mxu0 %v3558
      %3600 = vmatpush.msra.mxu0 %v3557
      %3601 = vmatmul.f32.gmra.mxu0 %v3562
      %v3602 = vpop.f32.mrf.mxu0
      %v3603 = vadd.f32 0.0, %v3602
      %3604 = vmatmul.f32.gmra.mxu0 %v3565
      %v3605 = vpop.f32.mrf.mxu0
      %v3606 = vadd.f32 0.0, %v3605
      %3607 = vmatmul.f32.gmra.mxu0 %v3568
      %v3608 = vpop.f32.mrf.mxu0
      %v3609 = vadd.f32 0.0, %v3608
      %3610 = vmatmul.f32.gmra.mxu0 %v3571
      %v3611 = vpop.f32.mrf.mxu0
      %v3612 = vadd.f32 0.0, %v3611
      %3613 = vmatmul.f32.gmra.mxu0 %v3574
      %v3614 = vpop.f32.mrf.mxu0
      %v3615 = vadd.f32 0.0, %v3614
      %3616 = vmatmul.f32.gmra.mxu0 %v3577
      %v3617 = vpop.f32.mrf.mxu0
      %v3618 = vadd.f32 0.0, %v3617
      %3619 = vmatmul.f32.gmra.mxu0 %v3580
      %v3620 = vpop.f32.mrf.mxu0
      %v3621 = vadd.f32 0.0, %v3620
      %3622 = vmatmul.f32.gmra.mxu0 %v3583
      %v3623 = vpop.f32.mrf.mxu0
      %v3624 = vadd.f32 0.0, %v3623
      %3625 = vdwg.mxu0
      %v3626 = vadd.f32 %v3474, %v3603
      %v3627 = vadd.f32 %v3475, %v3606
      %v3628 = vadd.f32 %v3476, %v3609
      %v3629 = vadd.f32 %v3477, %v3612
      %v3630 = vadd.f32 %v3478, %v3615
      %v3631 = vadd.f32 %v3479, %v3618
      %v3632 = vadd.f32 %v3480, %v3621
      %v3633 = vadd.f32 %v3481, %v3624
      %s3634 = scalar_lea.vmem %s7, 320
      %v3635 = vld [vmem:[%s3634] sm:$0xff]
      %v3636 = vld [vmem:[%s3634 + $0x8] sm:$0xff]
      %v3637 = vld [vmem:[%s3634 + $0x10] sm:$0xff]
      %v3638 = vld [vmem:[%s3634 + $0x18] sm:$0xff]
      %v3639 = vld [vmem:[%s3634 + $0x20] sm:$0xff]
      %v3640 = vld [vmem:[%s3634 + $0x28] sm:$0xff]
      %v3641 = vld [vmem:[%s3634 + $0x30] sm:$0xff]
      %v3642 = vld [vmem:[%s3634 + $0x38] sm:$0xff]
      %v3644 = vsel %vm2270, %v3635, 0
      %v3647 = vsel %vm2270, %v3636, 0
      %v3650 = vsel %vm2270, %v3637, 0
      %v3653 = vsel %vm2270, %v3638, 0
      %v3656 = vsel %vm2270, %v3639, 0
      %v3659 = vsel %vm2270, %v3640, 0
      %v3662 = vsel %vm2270, %v3641, 0
      %v3665 = vsel %vm2270, %v3642, 0
      %3667 = vmatpush.msra.mxu0 0.0
      %3668 = vmatpush.msra.mxu0 0.0
      %3669 = vmatpush.msra.mxu0 0.0
      %3670 = vmatpush.msra.mxu0 0.0
      %3671 = vmatpush.msra.mxu0 0.0
      %3672 = vmatpush.msra.mxu0 0.0
      %3673 = vmatpush.msra.mxu0 0.0
      %3674 = vmatpush.msra.mxu0 0.0
      %3675 = vmatpush.msra.mxu0 0.0
      %3676 = vmatpush.msra.mxu0 0.0
      %3677 = vmatpush.msra.mxu0 0.0
      %3678 = vmatpush.msra.mxu0 0.0
      %3679 = vmatpush.msra.mxu0 0.0
      %3680 = vmatpush.msra.mxu0 0.0
      %3681 = vmatpush.msra.mxu0 %v2869
      %3682 = vmatpush.msra.mxu0 %v2868
      %3683 = vmatmul.f32.gmra.mxu0 %v3644
      %v3684 = vpop.f32.mrf.mxu0
      %v3685 = vadd.f32 0.0, %v3684
      %3686 = vmatmul.f32.gmra.mxu0 %v3647
      %v3687 = vpop.f32.mrf.mxu0
      %v3688 = vadd.f32 0.0, %v3687
      %3689 = vmatmul.f32.gmra.mxu0 %v3650
      %v3690 = vpop.f32.mrf.mxu0
      %v3691 = vadd.f32 0.0, %v3690
      %3692 = vmatmul.f32.gmra.mxu0 %v3653
      %v3693 = vpop.f32.mrf.mxu0
      %v3694 = vadd.f32 0.0, %v3693
      %3695 = vmatmul.f32.gmra.mxu0 %v3656
      %v3696 = vpop.f32.mrf.mxu0
      %v3697 = vadd.f32 0.0, %v3696
      %3698 = vmatmul.f32.gmra.mxu0 %v3659
      %v3699 = vpop.f32.mrf.mxu0
      %v3700 = vadd.f32 0.0, %v3699
      %3701 = vmatmul.f32.gmra.mxu0 %v3662
      %v3702 = vpop.f32.mrf.mxu0
      %v3703 = vadd.f32 0.0, %v3702
      %3704 = vmatmul.f32.gmra.mxu0 %v3665
      %v3705 = vpop.f32.mrf.mxu0
      %v3706 = vadd.f32 0.0, %v3705
      %3707 = vdwg.mxu0
      %s3708 = scalar_lea.vmem %s8, 160
      %v3709 = vld [vmem:[%s3708] sm:$0xff]
      %v3710 = vld [vmem:[%s3708 + $0x8] sm:$0xff]
      %v3711 = vld [vmem:[%s3708 + $0x10] sm:$0xff]
      %v3712 = vld [vmem:[%s3708 + $0x18] sm:$0xff]
      %v3714 = vsel %vm2952, %v3685, 0
      %v3717 = vsel %vm2952, %v3688, 0
      %v3720 = vsel %vm2952, %v3691, 0
      %v3723 = vsel %vm2952, %v3694, 0
      %v3726 = vsel %vm2952, %v3697, 0
      %v3729 = vsel %vm2952, %v3700, 0
      %v3732 = vsel %vm2952, %v3703, 0
      %v3735 = vsel %vm2952, %v3706, 0
      %3737 = vmatpush.msra.mxu0 0.0
      %3738 = vmatpush.msra.mxu0 0.0
      %3739 = vmatpush.msra.mxu0 0.0
      %3740 = vmatpush.msra.mxu0 0.0
      %3741 = vmatpush.msra.mxu0 0.0
      %3742 = vmatpush.msra.mxu0 0.0
      %3743 = vmatpush.msra.mxu0 0.0
      %3744 = vmatpush.msra.mxu0 0.0
      %3745 = vmatpush.msra.mxu0 0.0
      %3746 = vmatpush.msra.mxu0 0.0
      %3747 = vmatpush.msra.mxu0 0.0
      %3748 = vmatpush.msra.mxu0 0.0
      %3749 = vmatpush.msra.mxu0 %v3712
      %3750 = vmatpush.msra.mxu0 %v3711
      %3751 = vmatpush.msra.mxu0 %v3710
      %3752 = vmatpush.msra.mxu0 %v3709
      %3753 = vmatmul.f32.gmra.mxu0 %v3714
      %v3754 = vpop.f32.mrf.mxu0
      %v3755 = vadd.f32 0.0, %v3754
      %3756 = vmatmul.f32.gmra.mxu0 %v3717
      %v3757 = vpop.f32.mrf.mxu0
      %v3758 = vadd.f32 0.0, %v3757
      %3759 = vmatmul.f32.gmra.mxu0 %v3720
      %v3760 = vpop.f32.mrf.mxu0
      %v3761 = vadd.f32 0.0, %v3760
      %3762 = vmatmul.f32.gmra.mxu0 %v3723
      %v3763 = vpop.f32.mrf.mxu0
      %v3764 = vadd.f32 0.0, %v3763
      %3765 = vmatmul.f32.gmra.mxu0 %v3726
      %v3766 = vpop.f32.mrf.mxu0
      %v3767 = vadd.f32 0.0, %v3766
      %3768 = vmatmul.f32.gmra.mxu0 %v3729
      %v3769 = vpop.f32.mrf.mxu0
      %v3770 = vadd.f32 0.0, %v3769
      %3771 = vmatmul.f32.gmra.mxu0 %v3732
      %v3772 = vpop.f32.mrf.mxu0
      %v3773 = vadd.f32 0.0, %v3772
      %3774 = vmatmul.f32.gmra.mxu0 %v3735
      %v3775 = vpop.f32.mrf.mxu0
      %v3776 = vadd.f32 0.0, %v3775
      %3777 = vdwg.mxu0
      %v3778 = vadd.f32 %v3626, %v3755
      %v3779 = vadd.f32 %v3627, %v3758
      %v3780 = vadd.f32 %v3628, %v3761
      %v3781 = vadd.f32 %v3629, %v3764
      %v3782 = vadd.f32 %v3630, %v3767
      %v3783 = vadd.f32 %v3631, %v3770
      %v3784 = vadd.f32 %v3632, %v3773
      %v3785 = vadd.f32 %v3633, %v3776
      %s3786 = scalar_lea.vmem %s7, 384
      %v3787 = vld [vmem:[%s3786] sm:$0xff]
      %v3788 = vld [vmem:[%s3786 + $0x8] sm:$0xff]
      %v3789 = vld [vmem:[%s3786 + $0x10] sm:$0xff]
      %v3790 = vld [vmem:[%s3786 + $0x18] sm:$0xff]
      %v3791 = vld [vmem:[%s3786 + $0x20] sm:$0xff]
      %v3792 = vld [vmem:[%s3786 + $0x28] sm:$0xff]
      %v3793 = vld [vmem:[%s3786 + $0x30] sm:$0xff]
      %v3794 = vld [vmem:[%s3786 + $0x38] sm:$0xff]
      %v3796 = vsel %vm2270, %v3787, 0
      %v3799 = vsel %vm2270, %v3788, 0
      %v3802 = vsel %vm2270, %v3789, 0
      %v3805 = vsel %vm2270, %v3790, 0
      %v3808 = vsel %vm2270, %v3791, 0
      %v3811 = vsel %vm2270, %v3792, 0
      %v3814 = vsel %vm2270, %v3793, 0
      %v3817 = vsel %vm2270, %v3794, 0
      %3819 = vmatpush.msra.mxu0 0.0
      %3820 = vmatpush.msra.mxu0 0.0
      %3821 = vmatpush.msra.mxu0 0.0
      %3822 = vmatpush.msra.mxu0 0.0
      %3823 = vmatpush.msra.mxu0 0.0
      %3824 = vmatpush.msra.mxu0 0.0
      %3825 = vmatpush.msra.mxu0 0.0
      %3826 = vmatpush.msra.mxu0 0.0
      %3827 = vmatpush.msra.mxu0 0.0
      %3828 = vmatpush.msra.mxu0 0.0
      %3829 = vmatpush.msra.mxu0 0.0
      %3830 = vmatpush.msra.mxu0 0.0
      %3831 = vmatpush.msra.mxu0 0.0
      %3832 = vmatpush.msra.mxu0 0.0
      %3833 = vmatpush.msra.mxu0 %v2869
      %3834 = vmatpush.msra.mxu0 %v2868
      %3835 = vmatmul.f32.gmra.mxu0 %v3796
      %v3836 = vpop.f32.mrf.mxu0
      %v3837 = vadd.f32 0.0, %v3836
      %3838 = vmatmul.f32.gmra.mxu0 %v3799
      %v3839 = vpop.f32.mrf.mxu0
      %v3840 = vadd.f32 0.0, %v3839
      %3841 = vmatmul.f32.gmra.mxu0 %v3802
      %v3842 = vpop.f32.mrf.mxu0
      %v3843 = vadd.f32 0.0, %v3842
      %3844 = vmatmul.f32.gmra.mxu0 %v3805
      %v3845 = vpop.f32.mrf.mxu0
      %v3846 = vadd.f32 0.0, %v3845
      %3847 = vmatmul.f32.gmra.mxu0 %v3808
      %v3848 = vpop.f32.mrf.mxu0
      %v3849 = vadd.f32 0.0, %v3848
      %3850 = vmatmul.f32.gmra.mxu0 %v3811
      %v3851 = vpop.f32.mrf.mxu0
      %v3852 = vadd.f32 0.0, %v3851
      %3853 = vmatmul.f32.gmra.mxu0 %v3814
      %v3854 = vpop.f32.mrf.mxu0
      %v3855 = vadd.f32 0.0, %v3854
      %3856 = vmatmul.f32.gmra.mxu0 %v3817
      %v3857 = vpop.f32.mrf.mxu0
      %v3858 = vadd.f32 0.0, %v3857
      %3859 = vdwg.mxu0
      %s3860 = scalar_lea.vmem %s8, 192
      %v3861 = vld [vmem:[%s3860] sm:$0xff]
      %v3862 = vld [vmem:[%s3860 + $0x8] sm:$0xff]
      %v3863 = vld [vmem:[%s3860 + $0x10] sm:$0xff]
      %v3864 = vld [vmem:[%s3860 + $0x18] sm:$0xff]
      %v3866 = vsel %vm2952, %v3837, 0
      %v3869 = vsel %vm2952, %v3840, 0
      %v3872 = vsel %vm2952, %v3843, 0
      %v3875 = vsel %vm2952, %v3846, 0
      %v3878 = vsel %vm2952, %v3849, 0
      %v3881 = vsel %vm2952, %v3852, 0
      %v3884 = vsel %vm2952, %v3855, 0
      %v3887 = vsel %vm2952, %v3858, 0
      %3889 = vmatpush.msra.mxu0 0.0
      %3890 = vmatpush.msra.mxu0 0.0
      %3891 = vmatpush.msra.mxu0 0.0
      %3892 = vmatpush.msra.mxu0 0.0
      %3893 = vmatpush.msra.mxu0 0.0
      %3894 = vmatpush.msra.mxu0 0.0
      %3895 = vmatpush.msra.mxu0 0.0
      %3896 = vmatpush.msra.mxu0 0.0
      %3897 = vmatpush.msra.mxu0 0.0
      %3898 = vmatpush.msra.mxu0 0.0
      %3899 = vmatpush.msra.mxu0 0.0
      %3900 = vmatpush.msra.mxu0 0.0
      %3901 = vmatpush.msra.mxu0 %v3864
      %3902 = vmatpush.msra.mxu0 %v3863
      %3903 = vmatpush.msra.mxu0 %v3862
      %3904 = vmatpush.msra.mxu0 %v3861
      %3905 = vmatmul.f32.gmra.mxu0 %v3866
      %v3906 = vpop.f32.mrf.mxu0
      %v3907 = vadd.f32 0.0, %v3906
      %3908 = vmatmul.f32.gmra.mxu0 %v3869
      %v3909 = vpop.f32.mrf.mxu0
      %v3910 = vadd.f32 0.0, %v3909
      %3911 = vmatmul.f32.gmra.mxu0 %v3872
      %v3912 = vpop.f32.mrf.mxu0
      %v3913 = vadd.f32 0.0, %v3912
      %3914 = vmatmul.f32.gmra.mxu0 %v3875
      %v3915 = vpop.f32.mrf.mxu0
      %v3916 = vadd.f32 0.0, %v3915
      %3917 = vmatmul.f32.gmra.mxu0 %v3878
      %v3918 = vpop.f32.mrf.mxu0
      %v3919 = vadd.f32 0.0, %v3918
      %3920 = vmatmul.f32.gmra.mxu0 %v3881
      %v3921 = vpop.f32.mrf.mxu0
      %v3922 = vadd.f32 0.0, %v3921
      %3923 = vmatmul.f32.gmra.mxu0 %v3884
      %v3924 = vpop.f32.mrf.mxu0
      %v3925 = vadd.f32 0.0, %v3924
      %3926 = vmatmul.f32.gmra.mxu0 %v3887
      %v3927 = vpop.f32.mrf.mxu0
      %v3928 = vadd.f32 0.0, %v3927
      %3929 = vdwg.mxu0
      %v3930 = vadd.f32 %v3778, %v3907
      %v3931 = vadd.f32 %v3779, %v3910
      %v3932 = vadd.f32 %v3780, %v3913
      %v3933 = vadd.f32 %v3781, %v3916
      %v3934 = vadd.f32 %v3782, %v3919
      %v3935 = vadd.f32 %v3783, %v3922
      %v3936 = vadd.f32 %v3784, %v3925
      %v3937 = vadd.f32 %v3785, %v3928
      %s3938 = scalar_lea.vmem %s7, 448
      %v3939 = vld [vmem:[%s3938] sm:$0xff]
      %v3940 = vld [vmem:[%s3938 + $0x8] sm:$0xff]
      %v3941 = vld [vmem:[%s3938 + $0x10] sm:$0xff]
      %v3942 = vld [vmem:[%s3938 + $0x18] sm:$0xff]
      %v3943 = vld [vmem:[%s3938 + $0x20] sm:$0xff]
      %v3944 = vld [vmem:[%s3938 + $0x28] sm:$0xff]
      %v3945 = vld [vmem:[%s3938 + $0x30] sm:$0xff]
      %v3946 = vld [vmem:[%s3938 + $0x38] sm:$0xff]
      %v3948 = vsel %vm2270, %v3939, 0
      %v3951 = vsel %vm2270, %v3940, 0
      %v3954 = vsel %vm2270, %v3941, 0
      %v3957 = vsel %vm2270, %v3942, 0
      %v3960 = vsel %vm2270, %v3943, 0
      %v3963 = vsel %vm2270, %v3944, 0
      %v3966 = vsel %vm2270, %v3945, 0
      %v3969 = vsel %vm2270, %v3946, 0
      %3971 = vmatpush.msra.mxu0 0.0
      %3972 = vmatpush.msra.mxu0 0.0
      %3973 = vmatpush.msra.mxu0 0.0
      %3974 = vmatpush.msra.mxu0 0.0
      %3975 = vmatpush.msra.mxu0 0.0
      %3976 = vmatpush.msra.mxu0 0.0
      %3977 = vmatpush.msra.mxu0 0.0
      %3978 = vmatpush.msra.mxu0 0.0
      %3979 = vmatpush.msra.mxu0 0.0
      %3980 = vmatpush.msra.mxu0 0.0
      %3981 = vmatpush.msra.mxu0 0.0
      %3982 = vmatpush.msra.mxu0 0.0
      %3983 = vmatpush.msra.mxu0 0.0
      %3984 = vmatpush.msra.mxu0 0.0
      %3985 = vmatpush.msra.mxu0 %v2869
      %3986 = vmatpush.msra.mxu0 %v2868
      %3987 = vmatmul.f32.gmra.mxu0 %v3948
      %v3988 = vpop.f32.mrf.mxu0
      %v3989 = vadd.f32 0.0, %v3988
      %3990 = vmatmul.f32.gmra.mxu0 %v3951
      %v3991 = vpop.f32.mrf.mxu0
      %v3992 = vadd.f32 0.0, %v3991
      %3993 = vmatmul.f32.gmra.mxu0 %v3954
      %v3994 = vpop.f32.mrf.mxu0
      %v3995 = vadd.f32 0.0, %v3994
      %3996 = vmatmul.f32.gmra.mxu0 %v3957
      %v3997 = vpop.f32.mrf.mxu0
      %v3998 = vadd.f32 0.0, %v3997
      %3999 = vmatmul.f32.gmra.mxu0 %v3960
      %v4000 = vpop.f32.mrf.mxu0
      %v4001 = vadd.f32 0.0, %v4000
      %4002 = vmatmul.f32.gmra.mxu0 %v3963
      %v4003 = vpop.f32.mrf.mxu0
      %v4004 = vadd.f32 0.0, %v4003
      %4005 = vmatmul.f32.gmra.mxu0 %v3966
      %v4006 = vpop.f32.mrf.mxu0
      %v4007 = vadd.f32 0.0, %v4006
      %4008 = vmatmul.f32.gmra.mxu0 %v3969
      %v4009 = vpop.f32.mrf.mxu0
      %v4010 = vadd.f32 0.0, %v4009
      %4011 = vdwg.mxu0
      %s4012 = scalar_lea.vmem %s8, 224
      %v4013 = vld [vmem:[%s4012] sm:$0xff]
      %v4014 = vld [vmem:[%s4012 + $0x8] sm:$0xff]
      %v4015 = vld [vmem:[%s4012 + $0x10] sm:$0xff]
      %v4016 = vld [vmem:[%s4012 + $0x18] sm:$0xff]
      %v4018 = vsel %vm2952, %v3989, 0
      %v4021 = vsel %vm2952, %v3992, 0
      %v4024 = vsel %vm2952, %v3995, 0
      %v4027 = vsel %vm2952, %v3998, 0
      %v4030 = vsel %vm2952, %v4001, 0
      %v4033 = vsel %vm2952, %v4004, 0
      %v4036 = vsel %vm2952, %v4007, 0
      %v4039 = vsel %vm2952, %v4010, 0
      %4041 = vmatpush.msra.mxu0 0.0
      %4042 = vmatpush.msra.mxu0 0.0
      %4043 = vmatpush.msra.mxu0 0.0
      %4044 = vmatpush.msra.mxu0 0.0
      %4045 = vmatpush.msra.mxu0 0.0
      %4046 = vmatpush.msra.mxu0 0.0
      %4047 = vmatpush.msra.mxu0 0.0
      %4048 = vmatpush.msra.mxu0 0.0
      %4049 = vmatpush.msra.mxu0 0.0
      %4050 = vmatpush.msra.mxu0 0.0
      %4051 = vmatpush.msra.mxu0 0.0
      %4052 = vmatpush.msra.mxu0 0.0
      %4053 = vmatpush.msra.mxu0 %v4016
      %4054 = vmatpush.msra.mxu0 %v4015
      %4055 = vmatpush.msra.mxu0 %v4014
      %4056 = vmatpush.msra.mxu0 %v4013
      %4057 = vmatmul.f32.gmra.mxu0 %v4018
      %v4058 = vpop.f32.mrf.mxu0
      %v4059 = vadd.f32 0.0, %v4058
      %4060 = vmatmul.f32.gmra.mxu0 %v4021
      %v4061 = vpop.f32.mrf.mxu0
      %v4062 = vadd.f32 0.0, %v4061
      %4063 = vmatmul.f32.gmra.mxu0 %v4024
      %v4064 = vpop.f32.mrf.mxu0
      %v4065 = vadd.f32 0.0, %v4064
      %4066 = vmatmul.f32.gmra.mxu0 %v4027
      %v4067 = vpop.f32.mrf.mxu0
      %v4068 = vadd.f32 0.0, %v4067
      %4069 = vmatmul.f32.gmra.mxu0 %v4030
      %v4070 = vpop.f32.mrf.mxu0
      %v4071 = vadd.f32 0.0, %v4070
      %4072 = vmatmul.f32.gmra.mxu0 %v4033
      %v4073 = vpop.f32.mrf.mxu0
      %v4074 = vadd.f32 0.0, %v4073
      %4075 = vmatmul.f32.gmra.mxu0 %v4036
      %v4076 = vpop.f32.mrf.mxu0
      %v4077 = vadd.f32 0.0, %v4076
      %4078 = vmatmul.f32.gmra.mxu0 %v4039
      %v4079 = vpop.f32.mrf.mxu0
      %v4080 = vadd.f32 0.0, %v4079
      %4081 = vdwg.mxu0
      %v4082 = vadd.f32 %v3930, %v4059
      %v4083 = vadd.f32 %v3931, %v4062
      %v4084 = vadd.f32 %v3932, %v4065
      %v4085 = vadd.f32 %v3933, %v4068
      %v4086 = vadd.f32 %v3934, %v4071
      %v4087 = vadd.f32 %v3935, %v4074
      %v4088 = vadd.f32 %v3936, %v4077
      %v4089 = vadd.f32 %v3937, %v4080
      %s4090 = scalar_lea.vmem %s7, 512
      %v4091 = vld [vmem:[%s4090] sm:$0xff]
      %v4092 = vld [vmem:[%s4090 + $0x8] sm:$0xff]
      %v4093 = vld [vmem:[%s4090 + $0x10] sm:$0xff]
      %v4094 = vld [vmem:[%s4090 + $0x18] sm:$0xff]
      %v4095 = vld [vmem:[%s4090 + $0x20] sm:$0xff]
      %v4096 = vld [vmem:[%s4090 + $0x28] sm:$0xff]
      %v4097 = vld [vmem:[%s4090 + $0x30] sm:$0xff]
      %v4098 = vld [vmem:[%s4090 + $0x38] sm:$0xff]
      %v4100 = vsel %vm2270, %v4091, 0
      %v4103 = vsel %vm2270, %v4092, 0
      %v4106 = vsel %vm2270, %v4093, 0
      %v4109 = vsel %vm2270, %v4094, 0
      %v4112 = vsel %vm2270, %v4095, 0
      %v4115 = vsel %vm2270, %v4096, 0
      %v4118 = vsel %vm2270, %v4097, 0
      %v4121 = vsel %vm2270, %v4098, 0
      %4123 = vmatpush.msra.mxu0 0.0
      %4124 = vmatpush.msra.mxu0 0.0
      %4125 = vmatpush.msra.mxu0 0.0
      %4126 = vmatpush.msra.mxu0 0.0
      %4127 = vmatpush.msra.mxu0 0.0
      %4128 = vmatpush.msra.mxu0 0.0
      %4129 = vmatpush.msra.mxu0 0.0
      %4130 = vmatpush.msra.mxu0 0.0
      %4131 = vmatpush.msra.mxu0 0.0
      %4132 = vmatpush.msra.mxu0 0.0
      %4133 = vmatpush.msra.mxu0 0.0
      %4134 = vmatpush.msra.mxu0 0.0
      %4135 = vmatpush.msra.mxu0 0.0
      %4136 = vmatpush.msra.mxu0 0.0
      %4137 = vmatpush.msra.mxu0 %v2869
      %4138 = vmatpush.msra.mxu0 %v2868
      %4139 = vmatmul.f32.gmra.mxu0 %v4100
      %v4140 = vpop.f32.mrf.mxu0
      %v4141 = vadd.f32 0.0, %v4140
      %4142 = vmatmul.f32.gmra.mxu0 %v4103
      %v4143 = vpop.f32.mrf.mxu0
      %v4144 = vadd.f32 0.0, %v4143
      %4145 = vmatmul.f32.gmra.mxu0 %v4106
      %v4146 = vpop.f32.mrf.mxu0
      %v4147 = vadd.f32 0.0, %v4146
      %4148 = vmatmul.f32.gmra.mxu0 %v4109
      %v4149 = vpop.f32.mrf.mxu0
      %v4150 = vadd.f32 0.0, %v4149
      %4151 = vmatmul.f32.gmra.mxu0 %v4112
      %v4152 = vpop.f32.mrf.mxu0
      %v4153 = vadd.f32 0.0, %v4152
      %4154 = vmatmul.f32.gmra.mxu0 %v4115
      %v4155 = vpop.f32.mrf.mxu0
      %v4156 = vadd.f32 0.0, %v4155
      %4157 = vmatmul.f32.gmra.mxu0 %v4118
      %v4158 = vpop.f32.mrf.mxu0
      %v4159 = vadd.f32 0.0, %v4158
      %4160 = vmatmul.f32.gmra.mxu0 %v4121
      %v4161 = vpop.f32.mrf.mxu0
      %v4162 = vadd.f32 0.0, %v4161
      %4163 = vdwg.mxu0
      %s4164 = scalar_lea.vmem %s8, 256
      %v4165 = vld [vmem:[%s4164] sm:$0xff]
      %v4166 = vld [vmem:[%s4164 + $0x8] sm:$0xff]
      %v4167 = vld [vmem:[%s4164 + $0x10] sm:$0xff]
      %v4168 = vld [vmem:[%s4164 + $0x18] sm:$0xff]
      %v4170 = vsel %vm2952, %v4141, 0
      %v4173 = vsel %vm2952, %v4144, 0
      %v4176 = vsel %vm2952, %v4147, 0
      %v4179 = vsel %vm2952, %v4150, 0
      %v4182 = vsel %vm2952, %v4153, 0
      %v4185 = vsel %vm2952, %v4156, 0
      %v4188 = vsel %vm2952, %v4159, 0
      %v4191 = vsel %vm2952, %v4162, 0
      %4193 = vmatpush.msra.mxu0 0.0
      %4194 = vmatpush.msra.mxu0 0.0
      %4195 = vmatpush.msra.mxu0 0.0
      %4196 = vmatpush.msra.mxu0 0.0
      %4197 = vmatpush.msra.mxu0 0.0
      %4198 = vmatpush.msra.mxu0 0.0
      %4199 = vmatpush.msra.mxu0 0.0
      %4200 = vmatpush.msra.mxu0 0.0
      %4201 = vmatpush.msra.mxu0 0.0
      %4202 = vmatpush.msra.mxu0 0.0
      %4203 = vmatpush.msra.mxu0 0.0
      %4204 = vmatpush.msra.mxu0 0.0
      %4205 = vmatpush.msra.mxu0 %v4168
      %4206 = vmatpush.msra.mxu0 %v4167
      %4207 = vmatpush.msra.mxu0 %v4166
      %4208 = vmatpush.msra.mxu0 %v4165
      %4209 = vmatmul.f32.gmra.mxu0 %v4170
      %v4210 = vpop.f32.mrf.mxu0
      %v4211 = vadd.f32 0.0, %v4210
      %4212 = vmatmul.f32.gmra.mxu0 %v4173
      %v4213 = vpop.f32.mrf.mxu0
      %v4214 = vadd.f32 0.0, %v4213
      %4215 = vmatmul.f32.gmra.mxu0 %v4176
      %v4216 = vpop.f32.mrf.mxu0
      %v4217 = vadd.f32 0.0, %v4216
      %4218 = vmatmul.f32.gmra.mxu0 %v4179
      %v4219 = vpop.f32.mrf.mxu0
      %v4220 = vadd.f32 0.0, %v4219
      %4221 = vmatmul.f32.gmra.mxu0 %v4182
      %v4222 = vpop.f32.mrf.mxu0
      %v4223 = vadd.f32 0.0, %v4222
      %4224 = vmatmul.f32.gmra.mxu0 %v4185
      %v4225 = vpop.f32.mrf.mxu0
      %v4226 = vadd.f32 0.0, %v4225
      %4227 = vmatmul.f32.gmra.mxu0 %v4188
      %v4228 = vpop.f32.mrf.mxu0
      %v4229 = vadd.f32 0.0, %v4228
      %4230 = vmatmul.f32.gmra.mxu0 %v4191
      %v4231 = vpop.f32.mrf.mxu0
      %v4232 = vadd.f32 0.0, %v4231
      %4233 = vdwg.mxu0
      %v4234 = vadd.f32 %v4082, %v4211
      %v4235 = vadd.f32 %v4083, %v4214
      %v4236 = vadd.f32 %v4084, %v4217
      %v4237 = vadd.f32 %v4085, %v4220
      %v4238 = vadd.f32 %v4086, %v4223
      %v4239 = vadd.f32 %v4087, %v4226
      %v4240 = vadd.f32 %v4088, %v4229
      %v4241 = vadd.f32 %v4089, %v4232
      %v4242 = vxor.u32 %v4234, 2147483648
      %v4243 = vxor.u32 %v4235, 2147483648
      %v4244 = vxor.u32 %v4236, 2147483648
      %v4245 = vxor.u32 %v4237, 2147483648
      %v4246 = vxor.u32 %v4238, 2147483648
      %v4247 = vxor.u32 %v4239, 2147483648
      %v4248 = vxor.u32 %v4240, 2147483648
      %v4249 = vxor.u32 %v4241, 2147483648
      %v4250 = vmul.f32 %v4242, 1.442695
      %v4251 = vpow.pop %v4250
      %v4252 = vmul.f32 %v4243, 1.442695
      %v4253 = vpow.pop %v4252
      %v4254 = vmul.f32 %v4244, 1.442695
      %v4255 = vpow.pop %v4254
      %v4256 = vmul.f32 %v4245, 1.442695
      %v4257 = vpow.pop %v4256
      %v4258 = vmul.f32 %v4246, 1.442695
      %v4259 = vpow.pop %v4258
      %v4260 = vmul.f32 %v4247, 1.442695
      %v4261 = vpow.pop %v4260
      %v4262 = vmul.f32 %v4248, 1.442695
      %v4263 = vpow.pop %v4262
      %v4264 = vmul.f32 %v4249, 1.442695
      %v4265 = vpow.pop %v4264
      %v4266 = vadd.f32 %v4251, 1.0
      %v4267 = vadd.f32 %v4253, 1.0
      %v4268 = vadd.f32 %v4255, 1.0
      %v4269 = vadd.f32 %v4257, 1.0
      %v4270 = vadd.f32 %v4259, 1.0
      %v4271 = vadd.f32 %v4261, 1.0
      %v4272 = vadd.f32 %v4263, 1.0
      %v4273 = vadd.f32 %v4265, 1.0
      %v4274 = vrcp.pop %v4266
      %v4275 = vmul.f32 %v4266, %v4274
      %v4276 = vsub.f32 1.0, %v4275
      %v4277 = vmul.f32 %v4274, %v4276
      %v4278 = vadd.f32 %v4274, %v4277
      %vm4279 = vweird.f32 %v4266
      %vm4280 = vweird.f32 %v4274
      %vm4281 = vmor %vm4279, %vm4280
      %v4282 = vsel %vm4281, %v4274, %v4278
      %v4283 = vand.u32 2147483647, %v4266
      %vm4284 = vcmp.eq.f32.partialorder %v4283, 8.507059e+37
      %v4285 = vand.u32 %v4266, 2147483648
      %v4286 = vor.u32 1.1754944e-38, %v4285
      %v4287 = vsel %vm4284, %v4286, %v4282
      %v4288 = vmul.f32 1.0, %v4287
      %v4289 = vrcp.pop %v4267
      %v4290 = vmul.f32 %v4267, %v4289
      %v4291 = vsub.f32 1.0, %v4290
      %v4292 = vmul.f32 %v4289, %v4291
      %v4293 = vadd.f32 %v4289, %v4292
      %vm4294 = vweird.f32 %v4267
      %vm4295 = vweird.f32 %v4289
      %vm4296 = vmor %vm4294, %vm4295
      %v4297 = vsel %vm4296, %v4289, %v4293
      %v4298 = vand.u32 2147483647, %v4267
      %vm4299 = vcmp.eq.f32.partialorder %v4298, 8.507059e+37
      %v4300 = vand.u32 %v4267, 2147483648
      %v4301 = vor.u32 1.1754944e-38, %v4300
      %v4302 = vsel %vm4299, %v4301, %v4297
      %v4303 = vmul.f32 1.0, %v4302
      %v4304 = vrcp.pop %v4268
      %v4305 = vmul.f32 %v4268, %v4304
      %v4306 = vsub.f32 1.0, %v4305
      %v4307 = vmul.f32 %v4304, %v4306
      %v4308 = vadd.f32 %v4304, %v4307
      %vm4309 = vweird.f32 %v4268
      %vm4310 = vweird.f32 %v4304
      %vm4311 = vmor %vm4309, %vm4310
      %v4312 = vsel %vm4311, %v4304, %v4308
      %v4313 = vand.u32 2147483647, %v4268
      %vm4314 = vcmp.eq.f32.partialorder %v4313, 8.507059e+37
      %v4315 = vand.u32 %v4268, 2147483648
      %v4316 = vor.u32 1.1754944e-38, %v4315
      %v4317 = vsel %vm4314, %v4316, %v4312
      %v4318 = vmul.f32 1.0, %v4317
      %v4319 = vrcp.pop %v4269
      %v4320 = vmul.f32 %v4269, %v4319
      %v4321 = vsub.f32 1.0, %v4320
      %v4322 = vmul.f32 %v4319, %v4321
      %v4323 = vadd.f32 %v4319, %v4322
      %vm4324 = vweird.f32 %v4269
      %vm4325 = vweird.f32 %v4319
      %vm4326 = vmor %vm4324, %vm4325
      %v4327 = vsel %vm4326, %v4319, %v4323
      %v4328 = vand.u32 2147483647, %v4269
      %vm4329 = vcmp.eq.f32.partialorder %v4328, 8.507059e+37
      %v4330 = vand.u32 %v4269, 2147483648
      %v4331 = vor.u32 1.1754944e-38, %v4330
      %v4332 = vsel %vm4329, %v4331, %v4327
      %v4333 = vmul.f32 1.0, %v4332
      %v4334 = vrcp.pop %v4270
      %v4335 = vmul.f32 %v4270, %v4334
      %v4336 = vsub.f32 1.0, %v4335
      %v4337 = vmul.f32 %v4334, %v4336
      %v4338 = vadd.f32 %v4334, %v4337
      %vm4339 = vweird.f32 %v4270
      %vm4340 = vweird.f32 %v4334
      %vm4341 = vmor %vm4339, %vm4340
      %v4342 = vsel %vm4341, %v4334, %v4338
      %v4343 = vand.u32 2147483647, %v4270
      %vm4344 = vcmp.eq.f32.partialorder %v4343, 8.507059e+37
      %v4345 = vand.u32 %v4270, 2147483648
      %v4346 = vor.u32 1.1754944e-38, %v4345
      %v4347 = vsel %vm4344, %v4346, %v4342
      %v4348 = vmul.f32 1.0, %v4347
      %v4349 = vrcp.pop %v4271
      %v4350 = vmul.f32 %v4271, %v4349
      %v4351 = vsub.f32 1.0, %v4350
      %v4352 = vmul.f32 %v4349, %v4351
      %v4353 = vadd.f32 %v4349, %v4352
      %vm4354 = vweird.f32 %v4271
      %vm4355 = vweird.f32 %v4349
      %vm4356 = vmor %vm4354, %vm4355
      %v4357 = vsel %vm4356, %v4349, %v4353
      %v4358 = vand.u32 2147483647, %v4271
      %vm4359 = vcmp.eq.f32.partialorder %v4358, 8.507059e+37
      %v4360 = vand.u32 %v4271, 2147483648
      %v4361 = vor.u32 1.1754944e-38, %v4360
      %v4362 = vsel %vm4359, %v4361, %v4357
      %v4363 = vmul.f32 1.0, %v4362
      %v4364 = vrcp.pop %v4272
      %v4365 = vmul.f32 %v4272, %v4364
      %v4366 = vsub.f32 1.0, %v4365
      %v4367 = vmul.f32 %v4364, %v4366
      %v4368 = vadd.f32 %v4364, %v4367
      %vm4369 = vweird.f32 %v4272
      %vm4370 = vweird.f32 %v4364
      %vm4371 = vmor %vm4369, %vm4370
      %v4372 = vsel %vm4371, %v4364, %v4368
      %v4373 = vand.u32 2147483647, %v4272
      %vm4374 = vcmp.eq.f32.partialorder %v4373, 8.507059e+37
      %v4375 = vand.u32 %v4272, 2147483648
      %v4376 = vor.u32 1.1754944e-38, %v4375
      %v4377 = vsel %vm4374, %v4376, %v4372
      %v4378 = vmul.f32 1.0, %v4377
      %v4379 = vrcp.pop %v4273
      %v4380 = vmul.f32 %v4273, %v4379
      %v4381 = vsub.f32 1.0, %v4380
      %v4382 = vmul.f32 %v4379, %v4381
      %v4383 = vadd.f32 %v4379, %v4382
      %vm4384 = vweird.f32 %v4273
      %vm4385 = vweird.f32 %v4379
      %vm4386 = vmor %vm4384, %vm4385
      %v4387 = vsel %vm4386, %v4379, %v4383
      %v4388 = vand.u32 2147483647, %v4273
      %vm4389 = vcmp.eq.f32.partialorder %v4388, 8.507059e+37
      %v4390 = vand.u32 %v4273, 2147483648
      %v4391 = vor.u32 1.1754944e-38, %v4390
      %v4392 = vsel %vm4389, %v4391, %v4387
      %v4393 = vmul.f32 1.0, %v4392
      %v4394 = vmul.f32 %v4234, %v4288
      %v4395 = vmul.f32 %v4235, %v4303
      %v4396 = vmul.f32 %v4236, %v4318
      %v4397 = vmul.f32 %v4237, %v4333
      %v4398 = vmul.f32 %v4238, %v4348
      %v4399 = vmul.f32 %v4239, %v4363
      %v4400 = vmul.f32 %v4240, %v4378
      %v4401 = vmul.f32 %v4241, %v4393
      %v4402 = vld [vmem:[%s12] sm:$0x1]
      %v4404 = vperm.slane %v4402, 0
      %v4406 = vadd.f32 %v4404, 0.0
      %v4407 = vld [vmem:[%s10] sm:$0xff]
      %v4408 = vld [vmem:[%s10 + $0x8] sm:$0xff]
      %v4409 = vld [vmem:[%s10 + $0x10] sm:$0xff]
      %v4410 = vld [vmem:[%s10 + $0x18] sm:$0xff]
      %v4411 = vld [vmem:[%s10 + $0x20] sm:$0xff]
      %v4412 = vld [vmem:[%s10 + $0x28] sm:$0xff]
      %v4413 = vld [vmem:[%s10 + $0x30] sm:$0xff]
      %v4414 = vld [vmem:[%s10 + $0x38] sm:$0xff]
      %v4415 = vld [vmem:[%s10 + $0x40] sm:$0xff]
      %v4416 = vld [vmem:[%s10 + $0x48] sm:$0xff]
      %v4417 = vld [vmem:[%s10 + $0x50] sm:$0xff]
      %v4418 = vld [vmem:[%s10 + $0x58] sm:$0xff]
      %v4419 = vld [vmem:[%s10 + $0x60] sm:$0xff]
      %v4420 = vld [vmem:[%s10 + $0x68] sm:$0xff]
      %v4421 = vld [vmem:[%s10 + $0x70] sm:$0xff]
      %v4422 = vld [vmem:[%s10 + $0x78] sm:$0xff]
      %v4423 = vld [vmem:[%s10 + $0x80] sm:$0xff]
      %v4424 = vld [vmem:[%s10 + $0x88] sm:$0xff]
      %v4425 = vld [vmem:[%s10 + $0x90] sm:$0xff]
      %v4426 = vld [vmem:[%s10 + $0x98] sm:$0xff]
      %v4427 = vld [vmem:[%s10 + $0xa0] sm:$0xff]
      %v4428 = vld [vmem:[%s10 + $0xa8] sm:$0xff]
      %v4429 = vld [vmem:[%s10 + $0xb0] sm:$0xff]
      %v4430 = vld [vmem:[%s10 + $0xb8] sm:$0xff]
      %v4431 = vld [vmem:[%s10 + $0xc0] sm:$0xff]
      %v4432 = vld [vmem:[%s10 + $0xc8] sm:$0xff]
      %v4433 = vld [vmem:[%s10 + $0xd0] sm:$0xff]
      %v4434 = vld [vmem:[%s10 + $0xd8] sm:$0xff]
      %v4435 = vld [vmem:[%s10 + $0xe0] sm:$0xff]
      %v4436 = vld [vmem:[%s10 + $0xe8] sm:$0xff]
      %v4437 = vld [vmem:[%s10 + $0xf0] sm:$0xff]
      %v4438 = vld [vmem:[%s10 + $0xf8] sm:$0xff]
      %v4440 = vsel %vm2238, %v4407, 0
      %v4443 = vsel %vm2238, %v4408, 0
      %v4446 = vsel %vm2238, %v4409, 0
      %v4449 = vsel %vm2238, %v4410, 0
      %v4452 = vsel %vm2238, %v4411, 0
      %v4455 = vsel %vm2238, %v4412, 0
      %v4458 = vsel %vm2238, %v4413, 0
      %v4461 = vsel %vm2238, %v4414, 0
      %v4464 = vsel %vm2238, %v4415, 0
      %v4467 = vsel %vm2238, %v4416, 0
      %v4470 = vsel %vm2238, %v4417, 0
      %v4473 = vsel %vm2238, %v4418, 0
      %v4476 = vsel %vm2238, %v4419, 0
      %v4479 = vsel %vm2238, %v4420, 0
      %v4482 = vsel %vm2238, %v4421, 0
      %v4485 = vsel %vm2238, %v4422, 0
      %v4488 = vsel %vm2238, %v4423, 0
      %v4491 = vsel %vm2238, %v4424, 0
      %v4494 = vsel %vm2238, %v4425, 0
      %v4497 = vsel %vm2238, %v4426, 0
      %v4500 = vsel %vm2238, %v4427, 0
      %v4503 = vsel %vm2238, %v4428, 0
      %v4506 = vsel %vm2238, %v4429, 0
      %v4509 = vsel %vm2238, %v4430, 0
      %v4512 = vsel %vm2238, %v4431, 0
      %v4515 = vsel %vm2238, %v4432, 0
      %v4518 = vsel %vm2238, %v4433, 0
      %v4521 = vsel %vm2238, %v4434, 0
      %v4524 = vsel %vm2238, %v4435, 0
      %v4527 = vsel %vm2238, %v4436, 0
      %v4530 = vsel %vm2238, %v4437, 0
      %v4533 = vsel %vm2238, %v4438, 0
      %4535 = vmatpush.msra.mxu0 0.0
      %4536 = vmatpush.msra.mxu0 0.0
      %4537 = vmatpush.msra.mxu0 0.0
      %4538 = vmatpush.msra.mxu0 0.0
      %4539 = vmatpush.msra.mxu0 0.0
      %4540 = vmatpush.msra.mxu0 0.0
      %4541 = vmatpush.msra.mxu0 0.0
      %4542 = vmatpush.msra.mxu0 0.0
      %4543 = vmatpush.msra.mxu0 %v4401
      %4544 = vmatpush.msra.mxu0 %v4400
      %4545 = vmatpush.msra.mxu0 %v4399
      %4546 = vmatpush.msra.mxu0 %v4398
      %4547 = vmatpush.msra.mxu0 %v4397
      %4548 = vmatpush.msra.mxu0 %v4396
      %4549 = vmatpush.msra.mxu0 %v4395
      %4550 = vmatpush.msra.mxu0 %v4394
      %4551 = vmatmul.f32.gmra.mxu0 %v4440
      %v4552 = vpop.f32.mrf.mxu0
      %v4553 = vadd.f32 0.0, %v4552
      %4554 = vmatmul.f32.gmra.mxu0 %v4443
      %v4555 = vpop.f32.mrf.mxu0
      %v4556 = vadd.f32 0.0, %v4555
      %4557 = vmatmul.f32.gmra.mxu0 %v4446
      %v4558 = vpop.f32.mrf.mxu0
      %v4559 = vadd.f32 0.0, %v4558
      %4560 = vmatmul.f32.gmra.mxu0 %v4449
      %v4561 = vpop.f32.mrf.mxu0
      %v4562 = vadd.f32 0.0, %v4561
      %4563 = vmatmul.f32.gmra.mxu0 %v4452
      %v4564 = vpop.f32.mrf.mxu0
      %v4565 = vadd.f32 0.0, %v4564
      %4566 = vmatmul.f32.gmra.mxu0 %v4455
      %v4567 = vpop.f32.mrf.mxu0
      %v4568 = vadd.f32 0.0, %v4567
      %4569 = vmatmul.f32.gmra.mxu0 %v4458
      %v4570 = vpop.f32.mrf.mxu0
      %v4571 = vadd.f32 0.0, %v4570
      %4572 = vmatmul.f32.gmra.mxu0 %v4461
      %v4573 = vpop.f32.mrf.mxu0
      %v4574 = vadd.f32 0.0, %v4573
      %4575 = vmatmul.f32.gmra.mxu0 %v4464
      %v4576 = vpop.f32.mrf.mxu0
      %v4577 = vadd.f32 0.0, %v4576
      %4578 = vmatmul.f32.gmra.mxu0 %v4467
      %v4579 = vpop.f32.mrf.mxu0
      %v4580 = vadd.f32 0.0, %v4579
      %4581 = vmatmul.f32.gmra.mxu0 %v4470
      %v4582 = vpop.f32.mrf.mxu0
      %v4583 = vadd.f32 0.0, %v4582
      %4584 = vmatmul.f32.gmra.mxu0 %v4473
      %v4585 = vpop.f32.mrf.mxu0
      %v4586 = vadd.f32 0.0, %v4585
      %4587 = vmatmul.f32.gmra.mxu0 %v4476
      %v4588 = vpop.f32.mrf.mxu0
      %v4589 = vadd.f32 0.0, %v4588
      %4590 = vmatmul.f32.gmra.mxu0 %v4479
      %v4591 = vpop.f32.mrf.mxu0
      %v4592 = vadd.f32 0.0, %v4591
      %4593 = vmatmul.f32.gmra.mxu0 %v4482
      %v4594 = vpop.f32.mrf.mxu0
      %v4595 = vadd.f32 0.0, %v4594
      %4596 = vmatmul.f32.gmra.mxu0 %v4485
      %v4597 = vpop.f32.mrf.mxu0
      %v4598 = vadd.f32 0.0, %v4597
      %4599 = vmatmul.f32.gmra.mxu0 %v4488
      %v4600 = vpop.f32.mrf.mxu0
      %v4601 = vadd.f32 0.0, %v4600
      %4602 = vmatmul.f32.gmra.mxu0 %v4491
      %v4603 = vpop.f32.mrf.mxu0
      %v4604 = vadd.f32 0.0, %v4603
      %4605 = vmatmul.f32.gmra.mxu0 %v4494
      %v4606 = vpop.f32.mrf.mxu0
      %v4607 = vadd.f32 0.0, %v4606
      %4608 = vmatmul.f32.gmra.mxu0 %v4497
      %v4609 = vpop.f32.mrf.mxu0
      %v4610 = vadd.f32 0.0, %v4609
      %4611 = vmatmul.f32.gmra.mxu0 %v4500
      %v4612 = vpop.f32.mrf.mxu0
      %v4613 = vadd.f32 0.0, %v4612
      %4614 = vmatmul.f32.gmra.mxu0 %v4503
      %v4615 = vpop.f32.mrf.mxu0
      %v4616 = vadd.f32 0.0, %v4615
      %4617 = vmatmul.f32.gmra.mxu0 %v4506
      %v4618 = vpop.f32.mrf.mxu0
      %v4619 = vadd.f32 0.0, %v4618
      %4620 = vmatmul.f32.gmra.mxu0 %v4509
      %v4621 = vpop.f32.mrf.mxu0
      %v4622 = vadd.f32 0.0, %v4621
      %4623 = vmatmul.f32.gmra.mxu0 %v4512
      %v4624 = vpop.f32.mrf.mxu0
      %v4625 = vadd.f32 0.0, %v4624
      %4626 = vmatmul.f32.gmra.mxu0 %v4515
      %v4627 = vpop.f32.mrf.mxu0
      %v4628 = vadd.f32 0.0, %v4627
      %4629 = vmatmul.f32.gmra.mxu0 %v4518
      %v4630 = vpop.f32.mrf.mxu0
      %v4631 = vadd.f32 0.0, %v4630
      %4632 = vmatmul.f32.gmra.mxu0 %v4521
      %v4633 = vpop.f32.mrf.mxu0
      %v4634 = vadd.f32 0.0, %v4633
      %4635 = vmatmul.f32.gmra.mxu0 %v4524
      %v4636 = vpop.f32.mrf.mxu0
      %v4637 = vadd.f32 0.0, %v4636
      %4638 = vmatmul.f32.gmra.mxu0 %v4527
      %v4639 = vpop.f32.mrf.mxu0
      %v4640 = vadd.f32 0.0, %v4639
      %4641 = vmatmul.f32.gmra.mxu0 %v4530
      %v4642 = vpop.f32.mrf.mxu0
      %v4643 = vadd.f32 0.0, %v4642
      %4644 = vmatmul.f32.gmra.mxu0 %v4533
      %v4645 = vpop.f32.mrf.mxu0
      %v4646 = vadd.f32 0.0, %v4645
      %4647 = vdwg.mxu0
      %v4648 = vld [vmem:[%s11] sm:$0xff]
      %v4649 = vld [vmem:[%s11 + $0x8] sm:$0xff]
      %v4651 = vsel %vm2270, %v4553, 0
      %v4654 = vsel %vm2270, %v4556, 0
      %v4657 = vsel %vm2270, %v4559, 0
      %v4660 = vsel %vm2270, %v4562, 0
      %v4663 = vsel %vm2270, %v4565, 0
      %v4666 = vsel %vm2270, %v4568, 0
      %v4669 = vsel %vm2270, %v4571, 0
      %v4672 = vsel %vm2270, %v4574, 0
      %v4675 = vsel %vm2270, %v4577, 0
      %v4678 = vsel %vm2270, %v4580, 0
      %v4681 = vsel %vm2270, %v4583, 0
      %v4684 = vsel %vm2270, %v4586, 0
      %v4687 = vsel %vm2270, %v4589, 0
      %v4690 = vsel %vm2270, %v4592, 0
      %v4693 = vsel %vm2270, %v4595, 0
      %v4696 = vsel %vm2270, %v4598, 0
      %v4699 = vsel %vm2270, %v4601, 0
      %v4702 = vsel %vm2270, %v4604, 0
      %v4705 = vsel %vm2270, %v4607, 0
      %v4708 = vsel %vm2270, %v4610, 0
      %v4711 = vsel %vm2270, %v4613, 0
      %v4714 = vsel %vm2270, %v4616, 0
      %v4717 = vsel %vm2270, %v4619, 0
      %v4720 = vsel %vm2270, %v4622, 0
      %v4723 = vsel %vm2270, %v4625, 0
      %v4726 = vsel %vm2270, %v4628, 0
      %v4729 = vsel %vm2270, %v4631, 0
      %v4732 = vsel %vm2270, %v4634, 0
      %v4735 = vsel %vm2270, %v4637, 0
      %v4738 = vsel %vm2270, %v4640, 0
      %v4741 = vsel %vm2270, %v4643, 0
      %v4744 = vsel %vm2270, %v4646, 0
      %4746 = vmatpush.msra.mxu0 0.0
      %4747 = vmatpush.msra.mxu0 0.0
      %4748 = vmatpush.msra.mxu0 0.0
      %4749 = vmatpush.msra.mxu0 0.0
      %4750 = vmatpush.msra.mxu0 0.0
      %4751 = vmatpush.msra.mxu0 0.0
      %4752 = vmatpush.msra.mxu0 0.0
      %4753 = vmatpush.msra.mxu0 0.0
      %4754 = vmatpush.msra.mxu0 0.0
      %4755 = vmatpush.msra.mxu0 0.0
      %4756 = vmatpush.msra.mxu0 0.0
      %4757 = vmatpush.msra.mxu0 0.0
      %4758 = vmatpush.msra.mxu0 0.0
      %4759 = vmatpush.msra.mxu0 0.0
      %4760 = vmatpush.msra.mxu0 %v4649
      %4761 = vmatpush.msra.mxu0 %v4648
      %4762 = vmatmul.f32.gmra.mxu0 %v4651
      %v4763 = vpop.f32.mrf.mxu0
      %v4764 = vadd.f32 0.0, %v4763
      %4765 = vmatmul.f32.gmra.mxu0 %v4654
      %v4766 = vpop.f32.mrf.mxu0
      %v4767 = vadd.f32 0.0, %v4766
      %4768 = vmatmul.f32.gmra.mxu0 %v4657
      %v4769 = vpop.f32.mrf.mxu0
      %v4770 = vadd.f32 0.0, %v4769
      %4771 = vmatmul.f32.gmra.mxu0 %v4660
      %v4772 = vpop.f32.mrf.mxu0
      %v4773 = vadd.f32 0.0, %v4772
      %4774 = vmatmul.f32.gmra.mxu0 %v4663
      %v4775 = vpop.f32.mrf.mxu0
      %v4776 = vadd.f32 0.0, %v4775
      %4777 = vmatmul.f32.gmra.mxu0 %v4666
      %v4778 = vpop.f32.mrf.mxu0
      %v4779 = vadd.f32 0.0, %v4778
      %4780 = vmatmul.f32.gmra.mxu0 %v4669
      %v4781 = vpop.f32.mrf.mxu0
      %v4782 = vadd.f32 0.0, %v4781
      %4783 = vmatmul.f32.gmra.mxu0 %v4672
      %v4784 = vpop.f32.mrf.mxu0
      %v4785 = vadd.f32 0.0, %v4784
      %4786 = vmatmul.f32.gmra.mxu0 %v4675
      %v4787 = vpop.f32.mrf.mxu0
      %v4788 = vadd.f32 0.0, %v4787
      %4789 = vmatmul.f32.gmra.mxu0 %v4678
      %v4790 = vpop.f32.mrf.mxu0
      %v4791 = vadd.f32 0.0, %v4790
      %4792 = vmatmul.f32.gmra.mxu0 %v4681
      %v4793 = vpop.f32.mrf.mxu0
      %v4794 = vadd.f32 0.0, %v4793
      %4795 = vmatmul.f32.gmra.mxu0 %v4684
      %v4796 = vpop.f32.mrf.mxu0
      %v4797 = vadd.f32 0.0, %v4796
      %4798 = vmatmul.f32.gmra.mxu0 %v4687
      %v4799 = vpop.f32.mrf.mxu0
      %v4800 = vadd.f32 0.0, %v4799
      %4801 = vmatmul.f32.gmra.mxu0 %v4690
      %v4802 = vpop.f32.mrf.mxu0
      %v4803 = vadd.f32 0.0, %v4802
      %4804 = vmatmul.f32.gmra.mxu0 %v4693
      %v4805 = vpop.f32.mrf.mxu0
      %v4806 = vadd.f32 0.0, %v4805
      %4807 = vmatmul.f32.gmra.mxu0 %v4696
      %v4808 = vpop.f32.mrf.mxu0
      %v4809 = vadd.f32 0.0, %v4808
      %4810 = vmatmul.f32.gmra.mxu0 %v4699
      %v4811 = vpop.f32.mrf.mxu0
      %v4812 = vadd.f32 0.0, %v4811
      %4813 = vmatmul.f32.gmra.mxu0 %v4702
      %v4814 = vpop.f32.mrf.mxu0
      %v4815 = vadd.f32 0.0, %v4814
      %4816 = vmatmul.f32.gmra.mxu0 %v4705
      %v4817 = vpop.f32.mrf.mxu0
      %v4818 = vadd.f32 0.0, %v4817
      %4819 = vmatmul.f32.gmra.mxu0 %v4708
      %v4820 = vpop.f32.mrf.mxu0
      %v4821 = vadd.f32 0.0, %v4820
      %4822 = vmatmul.f32.gmra.mxu0 %v4711
      %v4823 = vpop.f32.mrf.mxu0
      %v4824 = vadd.f32 0.0, %v4823
      %4825 = vmatmul.f32.gmra.mxu0 %v4714
      %v4826 = vpop.f32.mrf.mxu0
      %v4827 = vadd.f32 0.0, %v4826
      %4828 = vmatmul.f32.gmra.mxu0 %v4717
      %v4829 = vpop.f32.mrf.mxu0
      %v4830 = vadd.f32 0.0, %v4829
      %4831 = vmatmul.f32.gmra.mxu0 %v4720
      %v4832 = vpop.f32.mrf.mxu0
      %v4833 = vadd.f32 0.0, %v4832
      %4834 = vmatmul.f32.gmra.mxu0 %v4723
      %v4835 = vpop.f32.mrf.mxu0
      %v4836 = vadd.f32 0.0, %v4835
      %4837 = vmatmul.f32.gmra.mxu0 %v4726
      %v4838 = vpop.f32.mrf.mxu0
      %v4839 = vadd.f32 0.0, %v4838
      %4840 = vmatmul.f32.gmra.mxu0 %v4729
      %v4841 = vpop.f32.mrf.mxu0
      %v4842 = vadd.f32 0.0, %v4841
      %4843 = vmatmul.f32.gmra.mxu0 %v4732
      %v4844 = vpop.f32.mrf.mxu0
      %v4845 = vadd.f32 0.0, %v4844
      %4846 = vmatmul.f32.gmra.mxu0 %v4735
      %v4847 = vpop.f32.mrf.mxu0
      %v4848 = vadd.f32 0.0, %v4847
      %4849 = vmatmul.f32.gmra.mxu0 %v4738
      %v4850 = vpop.f32.mrf.mxu0
      %v4851 = vadd.f32 0.0, %v4850
      %4852 = vmatmul.f32.gmra.mxu0 %v4741
      %v4853 = vpop.f32.mrf.mxu0
      %v4854 = vadd.f32 0.0, %v4853
      %4855 = vmatmul.f32.gmra.mxu0 %v4744
      %v4856 = vpop.f32.mrf.mxu0
      %v4857 = vadd.f32 0.0, %v4856
      %4858 = vdwg.mxu0
      %v4859 = vadd.f32 %v4406, %v4764
      %v4860 = vadd.f32 %v4406, %v4767
      %v4861 = vadd.f32 %v4406, %v4770
      %v4862 = vadd.f32 %v4406, %v4773
      %v4863 = vadd.f32 %v4406, %v4776
      %v4864 = vadd.f32 %v4406, %v4779
      %v4865 = vadd.f32 %v4406, %v4782
      %v4866 = vadd.f32 %v4406, %v4785
      %v4867 = vadd.f32 %v4406, %v4788
      %v4868 = vadd.f32 %v4406, %v4791
      %v4869 = vadd.f32 %v4406, %v4794
      %v4870 = vadd.f32 %v4406, %v4797
      %v4871 = vadd.f32 %v4406, %v4800
      %v4872 = vadd.f32 %v4406, %v4803
      %v4873 = vadd.f32 %v4406, %v4806
      %v4874 = vadd.f32 %v4406, %v4809
      %v4875 = vadd.f32 %v4406, %v4812
      %v4876 = vadd.f32 %v4406, %v4815
      %v4877 = vadd.f32 %v4406, %v4818
      %v4878 = vadd.f32 %v4406, %v4821
      %v4879 = vadd.f32 %v4406, %v4824
      %v4880 = vadd.f32 %v4406, %v4827
      %v4881 = vadd.f32 %v4406, %v4830
      %v4882 = vadd.f32 %v4406, %v4833
      %v4883 = vadd.f32 %v4406, %v4836
      %v4884 = vadd.f32 %v4406, %v4839
      %v4885 = vadd.f32 %v4406, %v4842
      %v4886 = vadd.f32 %v4406, %v4845
      %v4887 = vadd.f32 %v4406, %v4848
      %v4888 = vadd.f32 %v4406, %v4851
      %v4889 = vadd.f32 %v4406, %v4854
      %v4890 = vadd.f32 %v4406, %v4857
      %s4891 = scalar_lea.vmem %s10, 256
      %v4892 = vld [vmem:[%s4891] sm:$0xff]
      %v4893 = vld [vmem:[%s4891 + $0x8] sm:$0xff]
      %v4894 = vld [vmem:[%s4891 + $0x10] sm:$0xff]
      %v4895 = vld [vmem:[%s4891 + $0x18] sm:$0xff]
      %v4896 = vld [vmem:[%s4891 + $0x20] sm:$0xff]
      %v4897 = vld [vmem:[%s4891 + $0x28] sm:$0xff]
      %v4898 = vld [vmem:[%s4891 + $0x30] sm:$0xff]
      %v4899 = vld [vmem:[%s4891 + $0x38] sm:$0xff]
      %v4900 = vld [vmem:[%s4891 + $0x40] sm:$0xff]
      %v4901 = vld [vmem:[%s4891 + $0x48] sm:$0xff]
      %v4902 = vld [vmem:[%s4891 + $0x50] sm:$0xff]
      %v4903 = vld [vmem:[%s4891 + $0x58] sm:$0xff]
      %v4904 = vld [vmem:[%s4891 + $0x60] sm:$0xff]
      %v4905 = vld [vmem:[%s4891 + $0x68] sm:$0xff]
      %v4906 = vld [vmem:[%s4891 + $0x70] sm:$0xff]
      %v4907 = vld [vmem:[%s4891 + $0x78] sm:$0xff]
      %v4908 = vld [vmem:[%s4891 + $0x80] sm:$0xff]
      %v4909 = vld [vmem:[%s4891 + $0x88] sm:$0xff]
      %v4910 = vld [vmem:[%s4891 + $0x90] sm:$0xff]
      %v4911 = vld [vmem:[%s4891 + $0x98] sm:$0xff]
      %v4912 = vld [vmem:[%s4891 + $0xa0] sm:$0xff]
      %v4913 = vld [vmem:[%s4891 + $0xa8] sm:$0xff]
      %v4914 = vld [vmem:[%s4891 + $0xb0] sm:$0xff]
      %v4915 = vld [vmem:[%s4891 + $0xb8] sm:$0xff]
      %v4916 = vld [vmem:[%s4891 + $0xc0] sm:$0xff]
      %v4917 = vld [vmem:[%s4891 + $0xc8] sm:$0xff]
      %v4918 = vld [vmem:[%s4891 + $0xd0] sm:$0xff]
      %v4919 = vld [vmem:[%s4891 + $0xd8] sm:$0xff]
      %v4920 = vld [vmem:[%s4891 + $0xe0] sm:$0xff]
      %v4921 = vld [vmem:[%s4891 + $0xe8] sm:$0xff]
      %v4922 = vld [vmem:[%s4891 + $0xf0] sm:$0xff]
      %v4923 = vld [vmem:[%s4891 + $0xf8] sm:$0xff]
      %v4925 = vsel %vm2238, %v4892, 0
      %v4928 = vsel %vm2238, %v4893, 0
      %v4931 = vsel %vm2238, %v4894, 0
      %v4934 = vsel %vm2238, %v4895, 0
      %v4937 = vsel %vm2238, %v4896, 0
      %v4940 = vsel %vm2238, %v4897, 0
      %v4943 = vsel %vm2238, %v4898, 0
      %v4946 = vsel %vm2238, %v4899, 0
      %v4949 = vsel %vm2238, %v4900, 0
      %v4952 = vsel %vm2238, %v4901, 0
      %v4955 = vsel %vm2238, %v4902, 0
      %v4958 = vsel %vm2238, %v4903, 0
      %v4961 = vsel %vm2238, %v4904, 0
      %v4964 = vsel %vm2238, %v4905, 0
      %v4967 = vsel %vm2238, %v4906, 0
      %v4970 = vsel %vm2238, %v4907, 0
      %v4973 = vsel %vm2238, %v4908, 0
      %v4976 = vsel %vm2238, %v4909, 0
      %v4979 = vsel %vm2238, %v4910, 0
      %v4982 = vsel %vm2238, %v4911, 0
      %v4985 = vsel %vm2238, %v4912, 0
      %v4988 = vsel %vm2238, %v4913, 0
      %v4991 = vsel %vm2238, %v4914, 0
      %v4994 = vsel %vm2238, %v4915, 0
      %v4997 = vsel %vm2238, %v4916, 0
      %v5000 = vsel %vm2238, %v4917, 0
      %v5003 = vsel %vm2238, %v4918, 0
      %v5006 = vsel %vm2238, %v4919, 0
      %v5009 = vsel %vm2238, %v4920, 0
      %v5012 = vsel %vm2238, %v4921, 0
      %v5015 = vsel %vm2238, %v4922, 0
      %v5018 = vsel %vm2238, %v4923, 0
      %5020 = vmatpush.msra.mxu0 0.0
      %5021 = vmatpush.msra.mxu0 0.0
      %5022 = vmatpush.msra.mxu0 0.0
      %5023 = vmatpush.msra.mxu0 0.0
      %5024 = vmatpush.msra.mxu0 0.0
      %5025 = vmatpush.msra.mxu0 0.0
      %5026 = vmatpush.msra.mxu0 0.0
      %5027 = vmatpush.msra.mxu0 0.0
      %5028 = vmatpush.msra.mxu0 %v4401
      %5029 = vmatpush.msra.mxu0 %v4400
      %5030 = vmatpush.msra.mxu0 %v4399
      %5031 = vmatpush.msra.mxu0 %v4398
      %5032 = vmatpush.msra.mxu0 %v4397
      %5033 = vmatpush.msra.mxu0 %v4396
      %5034 = vmatpush.msra.mxu0 %v4395
      %5035 = vmatpush.msra.mxu0 %v4394
      %5036 = vmatmul.f32.gmra.mxu0 %v4925
      %v5037 = vpop.f32.mrf.mxu0
      %v5038 = vadd.f32 0.0, %v5037
      %5039 = vmatmul.f32.gmra.mxu0 %v4928
      %v5040 = vpop.f32.mrf.mxu0
      %v5041 = vadd.f32 0.0, %v5040
      %5042 = vmatmul.f32.gmra.mxu0 %v4931
      %v5043 = vpop.f32.mrf.mxu0
      %v5044 = vadd.f32 0.0, %v5043
      %5045 = vmatmul.f32.gmra.mxu0 %v4934
      %v5046 = vpop.f32.mrf.mxu0
      %v5047 = vadd.f32 0.0, %v5046
      %5048 = vmatmul.f32.gmra.mxu0 %v4937
      %v5049 = vpop.f32.mrf.mxu0
      %v5050 = vadd.f32 0.0, %v5049
      %5051 = vmatmul.f32.gmra.mxu0 %v4940
      %v5052 = vpop.f32.mrf.mxu0
      %v5053 = vadd.f32 0.0, %v5052
      %5054 = vmatmul.f32.gmra.mxu0 %v4943
      %v5055 = vpop.f32.mrf.mxu0
      %v5056 = vadd.f32 0.0, %v5055
      %5057 = vmatmul.f32.gmra.mxu0 %v4946
      %v5058 = vpop.f32.mrf.mxu0
      %v5059 = vadd.f32 0.0, %v5058
      %5060 = vmatmul.f32.gmra.mxu0 %v4949
      %v5061 = vpop.f32.mrf.mxu0
      %v5062 = vadd.f32 0.0, %v5061
      %5063 = vmatmul.f32.gmra.mxu0 %v4952
      %v5064 = vpop.f32.mrf.mxu0
      %v5065 = vadd.f32 0.0, %v5064
      %5066 = vmatmul.f32.gmra.mxu0 %v4955
      %v5067 = vpop.f32.mrf.mxu0
      %v5068 = vadd.f32 0.0, %v5067
      %5069 = vmatmul.f32.gmra.mxu0 %v4958
      %v5070 = vpop.f32.mrf.mxu0
      %v5071 = vadd.f32 0.0, %v5070
      %5072 = vmatmul.f32.gmra.mxu0 %v4961
      %v5073 = vpop.f32.mrf.mxu0
      %v5074 = vadd.f32 0.0, %v5073
      %5075 = vmatmul.f32.gmra.mxu0 %v4964
      %v5076 = vpop.f32.mrf.mxu0
      %v5077 = vadd.f32 0.0, %v5076
      %5078 = vmatmul.f32.gmra.mxu0 %v4967
      %v5079 = vpop.f32.mrf.mxu0
      %v5080 = vadd.f32 0.0, %v5079
      %5081 = vmatmul.f32.gmra.mxu0 %v4970
      %v5082 = vpop.f32.mrf.mxu0
      %v5083 = vadd.f32 0.0, %v5082
      %5084 = vmatmul.f32.gmra.mxu0 %v4973
      %v5085 = vpop.f32.mrf.mxu0
      %v5086 = vadd.f32 0.0, %v5085
      %5087 = vmatmul.f32.gmra.mxu0 %v4976
      %v5088 = vpop.f32.mrf.mxu0
      %v5089 = vadd.f32 0.0, %v5088
      %5090 = vmatmul.f32.gmra.mxu0 %v4979
      %v5091 = vpop.f32.mrf.mxu0
      %v5092 = vadd.f32 0.0, %v5091
      %5093 = vmatmul.f32.gmra.mxu0 %v4982
      %v5094 = vpop.f32.mrf.mxu0
      %v5095 = vadd.f32 0.0, %v5094
      %5096 = vmatmul.f32.gmra.mxu0 %v4985
      %v5097 = vpop.f32.mrf.mxu0
      %v5098 = vadd.f32 0.0, %v5097
      %5099 = vmatmul.f32.gmra.mxu0 %v4988
      %v5100 = vpop.f32.mrf.mxu0
      %v5101 = vadd.f32 0.0, %v5100
      %5102 = vmatmul.f32.gmra.mxu0 %v4991
      %v5103 = vpop.f32.mrf.mxu0
      %v5104 = vadd.f32 0.0, %v5103
      %5105 = vmatmul.f32.gmra.mxu0 %v4994
      %v5106 = vpop.f32.mrf.mxu0
      %v5107 = vadd.f32 0.0, %v5106
      %5108 = vmatmul.f32.gmra.mxu0 %v4997
      %v5109 = vpop.f32.mrf.mxu0
      %v5110 = vadd.f32 0.0, %v5109
      %5111 = vmatmul.f32.gmra.mxu0 %v5000
      %v5112 = vpop.f32.mrf.mxu0
      %v5113 = vadd.f32 0.0, %v5112
      %5114 = vmatmul.f32.gmra.mxu0 %v5003
      %v5115 = vpop.f32.mrf.mxu0
      %v5116 = vadd.f32 0.0, %v5115
      %5117 = vmatmul.f32.gmra.mxu0 %v5006
      %v5118 = vpop.f32.mrf.mxu0
      %v5119 = vadd.f32 0.0, %v5118
      %5120 = vmatmul.f32.gmra.mxu0 %v5009
      %v5121 = vpop.f32.mrf.mxu0
      %v5122 = vadd.f32 0.0, %v5121
      %5123 = vmatmul.f32.gmra.mxu0 %v5012
      %v5124 = vpop.f32.mrf.mxu0
      %v5125 = vadd.f32 0.0, %v5124
      %5126 = vmatmul.f32.gmra.mxu0 %v5015
      %v5127 = vpop.f32.mrf.mxu0
      %v5128 = vadd.f32 0.0, %v5127
      %5129 = vmatmul.f32.gmra.mxu0 %v5018
      %v5130 = vpop.f32.mrf.mxu0
      %v5131 = vadd.f32 0.0, %v5130
      %5132 = vdwg.mxu0
      %s5133 = scalar_lea.vmem %s11, 16
      %v5134 = vld [vmem:[%s5133] sm:$0xff]
      %v5135 = vld [vmem:[%s5133 + $0x8] sm:$0xff]
      %v5137 = vsel %vm2270, %v5038, 0
      %v5140 = vsel %vm2270, %v5041, 0
      %v5143 = vsel %vm2270, %v5044, 0
      %v5146 = vsel %vm2270, %v5047, 0
      %v5149 = vsel %vm2270, %v5050, 0
      %v5152 = vsel %vm2270, %v5053, 0
      %v5155 = vsel %vm2270, %v5056, 0
      %v5158 = vsel %vm2270, %v5059, 0
      %v5161 = vsel %vm2270, %v5062, 0
      %v5164 = vsel %vm2270, %v5065, 0
      %v5167 = vsel %vm2270, %v5068, 0
      %v5170 = vsel %vm2270, %v5071, 0
      %v5173 = vsel %vm2270, %v5074, 0
      %v5176 = vsel %vm2270, %v5077, 0
      %v5179 = vsel %vm2270, %v5080, 0
      %v5182 = vsel %vm2270, %v5083, 0
      %v5185 = vsel %vm2270, %v5086, 0
      %v5188 = vsel %vm2270, %v5089, 0
      %v5191 = vsel %vm2270, %v5092, 0
      %v5194 = vsel %vm2270, %v5095, 0
      %v5197 = vsel %vm2270, %v5098, 0
      %v5200 = vsel %vm2270, %v5101, 0
      %v5203 = vsel %vm2270, %v5104, 0
      %v5206 = vsel %vm2270, %v5107, 0
      %v5209 = vsel %vm2270, %v5110, 0
      %v5212 = vsel %vm2270, %v5113, 0
      %v5215 = vsel %vm2270, %v5116, 0
      %v5218 = vsel %vm2270, %v5119, 0
      %v5221 = vsel %vm2270, %v5122, 0
      %v5224 = vsel %vm2270, %v5125, 0
      %v5227 = vsel %vm2270, %v5128, 0
      %v5230 = vsel %vm2270, %v5131, 0
      %5232 = vmatpush.msra.mxu0 0.0
      %5233 = vmatpush.msra.mxu0 0.0
      %5234 = vmatpush.msra.mxu0 0.0
      %5235 = vmatpush.msra.mxu0 0.0
      %5236 = vmatpush.msra.mxu0 0.0
      %5237 = vmatpush.msra.mxu0 0.0
      %5238 = vmatpush.msra.mxu0 0.0
      %5239 = vmatpush.msra.mxu0 0.0
      %5240 = vmatpush.msra.mxu0 0.0
      %5241 = vmatpush.msra.mxu0 0.0
      %5242 = vmatpush.msra.mxu0 0.0
      %5243 = vmatpush.msra.mxu0 0.0
      %5244 = vmatpush.msra.mxu0 0.0
      %5245 = vmatpush.msra.mxu0 0.0
      %5246 = vmatpush.msra.mxu0 %v5135
      %5247 = vmatpush.msra.mxu0 %v5134
      %5248 = vmatmul.f32.gmra.mxu0 %v5137
      %v5249 = vpop.f32.mrf.mxu0
      %v5250 = vadd.f32 0.0, %v5249
      %5251 = vmatmul.f32.gmra.mxu0 %v5140
      %v5252 = vpop.f32.mrf.mxu0
      %v5253 = vadd.f32 0.0, %v5252
      %5254 = vmatmul.f32.gmra.mxu0 %v5143
      %v5255 = vpop.f32.mrf.mxu0
      %v5256 = vadd.f32 0.0, %v5255
      %5257 = vmatmul.f32.gmra.mxu0 %v5146
      %v5258 = vpop.f32.mrf.mxu0
      %v5259 = vadd.f32 0.0, %v5258
      %5260 = vmatmul.f32.gmra.mxu0 %v5149
      %v5261 = vpop.f32.mrf.mxu0
      %v5262 = vadd.f32 0.0, %v5261
      %5263 = vmatmul.f32.gmra.mxu0 %v5152
      %v5264 = vpop.f32.mrf.mxu0
      %v5265 = vadd.f32 0.0, %v5264
      %5266 = vmatmul.f32.gmra.mxu0 %v5155
      %v5267 = vpop.f32.mrf.mxu0
      %v5268 = vadd.f32 0.0, %v5267
      %5269 = vmatmul.f32.gmra.mxu0 %v5158
      %v5270 = vpop.f32.mrf.mxu0
      %v5271 = vadd.f32 0.0, %v5270
      %5272 = vmatmul.f32.gmra.mxu0 %v5161
      %v5273 = vpop.f32.mrf.mxu0
      %v5274 = vadd.f32 0.0, %v5273
      %5275 = vmatmul.f32.gmra.mxu0 %v5164
      %v5276 = vpop.f32.mrf.mxu0
      %v5277 = vadd.f32 0.0, %v5276
      %5278 = vmatmul.f32.gmra.mxu0 %v5167
      %v5279 = vpop.f32.mrf.mxu0
      %v5280 = vadd.f32 0.0, %v5279
      %5281 = vmatmul.f32.gmra.mxu0 %v5170
      %v5282 = vpop.f32.mrf.mxu0
      %v5283 = vadd.f32 0.0, %v5282
      %5284 = vmatmul.f32.gmra.mxu0 %v5173
      %v5285 = vpop.f32.mrf.mxu0
      %v5286 = vadd.f32 0.0, %v5285
      %5287 = vmatmul.f32.gmra.mxu0 %v5176
      %v5288 = vpop.f32.mrf.mxu0
      %v5289 = vadd.f32 0.0, %v5288
      %5290 = vmatmul.f32.gmra.mxu0 %v5179
      %v5291 = vpop.f32.mrf.mxu0
      %v5292 = vadd.f32 0.0, %v5291
      %5293 = vmatmul.f32.gmra.mxu0 %v5182
      %v5294 = vpop.f32.mrf.mxu0
      %v5295 = vadd.f32 0.0, %v5294
      %5296 = vmatmul.f32.gmra.mxu0 %v5185
      %v5297 = vpop.f32.mrf.mxu0
      %v5298 = vadd.f32 0.0, %v5297
      %5299 = vmatmul.f32.gmra.mxu0 %v5188
      %v5300 = vpop.f32.mrf.mxu0
      %v5301 = vadd.f32 0.0, %v5300
      %5302 = vmatmul.f32.gmra.mxu0 %v5191
      %v5303 = vpop.f32.mrf.mxu0
      %v5304 = vadd.f32 0.0, %v5303
      %5305 = vmatmul.f32.gmra.mxu0 %v5194
      %v5306 = vpop.f32.mrf.mxu0
      %v5307 = vadd.f32 0.0, %v5306
      %5308 = vmatmul.f32.gmra.mxu0 %v5197
      %v5309 = vpop.f32.mrf.mxu0
      %v5310 = vadd.f32 0.0, %v5309
      %5311 = vmatmul.f32.gmra.mxu0 %v5200
      %v5312 = vpop.f32.mrf.mxu0
      %v5313 = vadd.f32 0.0, %v5312
      %5314 = vmatmul.f32.gmra.mxu0 %v5203
      %v5315 = vpop.f32.mrf.mxu0
      %v5316 = vadd.f32 0.0, %v5315
      %5317 = vmatmul.f32.gmra.mxu0 %v5206
      %v5318 = vpop.f32.mrf.mxu0
      %v5319 = vadd.f32 0.0, %v5318
      %5320 = vmatmul.f32.gmra.mxu0 %v5209
      %v5321 = vpop.f32.mrf.mxu0
      %v5322 = vadd.f32 0.0, %v5321
      %5323 = vmatmul.f32.gmra.mxu0 %v5212
      %v5324 = vpop.f32.mrf.mxu0
      %v5325 = vadd.f32 0.0, %v5324
      %5326 = vmatmul.f32.gmra.mxu0 %v5215
      %v5327 = vpop.f32.mrf.mxu0
      %v5328 = vadd.f32 0.0, %v5327
      %5329 = vmatmul.f32.gmra.mxu0 %v5218
      %v5330 = vpop.f32.mrf.mxu0
      %v5331 = vadd.f32 0.0, %v5330
      %5332 = vmatmul.f32.gmra.mxu0 %v5221
      %v5333 = vpop.f32.mrf.mxu0
      %v5334 = vadd.f32 0.0, %v5333
      %5335 = vmatmul.f32.gmra.mxu0 %v5224
      %v5336 = vpop.f32.mrf.mxu0
      %v5337 = vadd.f32 0.0, %v5336
      %5338 = vmatmul.f32.gmra.mxu0 %v5227
      %v5339 = vpop.f32.mrf.mxu0
      %v5340 = vadd.f32 0.0, %v5339
      %5341 = vmatmul.f32.gmra.mxu0 %v5230
      %v5342 = vpop.f32.mrf.mxu0
      %v5343 = vadd.f32 0.0, %v5342
      %5344 = vdwg.mxu0
      %v5345 = vadd.f32 %v4859, %v5250
      %v5346 = vadd.f32 %v4860, %v5253
      %v5347 = vadd.f32 %v4861, %v5256
      %v5348 = vadd.f32 %v4862, %v5259
      %v5349 = vadd.f32 %v4863, %v5262
      %v5350 = vadd.f32 %v4864, %v5265
      %v5351 = vadd.f32 %v4865, %v5268
      %v5352 = vadd.f32 %v4866, %v5271
      %v5353 = vadd.f32 %v4867, %v5274
      %v5354 = vadd.f32 %v4868, %v5277
      %v5355 = vadd.f32 %v4869, %v5280
      %v5356 = vadd.f32 %v4870, %v5283
      %v5357 = vadd.f32 %v4871, %v5286
      %v5358 = vadd.f32 %v4872, %v5289
      %v5359 = vadd.f32 %v4873, %v5292
      %v5360 = vadd.f32 %v4874, %v5295
      %v5361 = vadd.f32 %v4875, %v5298
      %v5362 = vadd.f32 %v4876, %v5301
      %v5363 = vadd.f32 %v4877, %v5304
      %v5364 = vadd.f32 %v4878, %v5307
      %v5365 = vadd.f32 %v4879, %v5310
      %v5366 = vadd.f32 %v4880, %v5313
      %v5367 = vadd.f32 %v4881, %v5316
      %v5368 = vadd.f32 %v4882, %v5319
      %v5369 = vadd.f32 %v4883, %v5322
      %v5370 = vadd.f32 %v4884, %v5325
      %v5371 = vadd.f32 %v4885, %v5328
      %v5372 = vadd.f32 %v4886, %v5331
      %v5373 = vadd.f32 %v4887, %v5334
      %v5374 = vadd.f32 %v4888, %v5337
      %v5375 = vadd.f32 %v4889, %v5340
      %v5376 = vadd.f32 %v4890, %v5343
      %s5377 = scalar_lea.vmem %s10, 512
      %v5378 = vld [vmem:[%s5377] sm:$0xff]
      %v5379 = vld [vmem:[%s5377 + $0x8] sm:$0xff]
      %v5380 = vld [vmem:[%s5377 + $0x10] sm:$0xff]
      %v5381 = vld [vmem:[%s5377 + $0x18] sm:$0xff]
      %v5382 = vld [vmem:[%s5377 + $0x20] sm:$0xff]
      %v5383 = vld [vmem:[%s5377 + $0x28] sm:$0xff]
      %v5384 = vld [vmem:[%s5377 + $0x30] sm:$0xff]
      %v5385 = vld [vmem:[%s5377 + $0x38] sm:$0xff]
      %v5386 = vld [vmem:[%s5377 + $0x40] sm:$0xff]
      %v5387 = vld [vmem:[%s5377 + $0x48] sm:$0xff]
      %v5388 = vld [vmem:[%s5377 + $0x50] sm:$0xff]
      %v5389 = vld [vmem:[%s5377 + $0x58] sm:$0xff]
      %v5390 = vld [vmem:[%s5377 + $0x60] sm:$0xff]
      %v5391 = vld [vmem:[%s5377 + $0x68] sm:$0xff]
      %v5392 = vld [vmem:[%s5377 + $0x70] sm:$0xff]
      %v5393 = vld [vmem:[%s5377 + $0x78] sm:$0xff]
      %v5394 = vld [vmem:[%s5377 + $0x80] sm:$0xff]
      %v5395 = vld [vmem:[%s5377 + $0x88] sm:$0xff]
      %v5396 = vld [vmem:[%s5377 + $0x90] sm:$0xff]
      %v5397 = vld [vmem:[%s5377 + $0x98] sm:$0xff]
      %v5398 = vld [vmem:[%s5377 + $0xa0] sm:$0xff]
      %v5399 = vld [vmem:[%s5377 + $0xa8] sm:$0xff]
      %v5400 = vld [vmem:[%s5377 + $0xb0] sm:$0xff]
      %v5401 = vld [vmem:[%s5377 + $0xb8] sm:$0xff]
      %v5402 = vld [vmem:[%s5377 + $0xc0] sm:$0xff]
      %v5403 = vld [vmem:[%s5377 + $0xc8] sm:$0xff]
      %v5404 = vld [vmem:[%s5377 + $0xd0] sm:$0xff]
      %v5405 = vld [vmem:[%s5377 + $0xd8] sm:$0xff]
      %v5406 = vld [vmem:[%s5377 + $0xe0] sm:$0xff]
      %v5407 = vld [vmem:[%s5377 + $0xe8] sm:$0xff]
      %v5408 = vld [vmem:[%s5377 + $0xf0] sm:$0xff]
      %v5409 = vld [vmem:[%s5377 + $0xf8] sm:$0xff]
      %v5411 = vsel %vm2238, %v5378, 0
      %v5414 = vsel %vm2238, %v5379, 0
      %v5417 = vsel %vm2238, %v5380, 0
      %v5420 = vsel %vm2238, %v5381, 0
      %v5423 = vsel %vm2238, %v5382, 0
      %v5426 = vsel %vm2238, %v5383, 0
      %v5429 = vsel %vm2238, %v5384, 0
      %v5432 = vsel %vm2238, %v5385, 0
      %v5435 = vsel %vm2238, %v5386, 0
      %v5438 = vsel %vm2238, %v5387, 0
      %v5441 = vsel %vm2238, %v5388, 0
      %v5444 = vsel %vm2238, %v5389, 0
      %v5447 = vsel %vm2238, %v5390, 0
      %v5450 = vsel %vm2238, %v5391, 0
      %v5453 = vsel %vm2238, %v5392, 0
      %v5456 = vsel %vm2238, %v5393, 0
      %v5459 = vsel %vm2238, %v5394, 0
      %v5462 = vsel %vm2238, %v5395, 0
      %v5465 = vsel %vm2238, %v5396, 0
      %v5468 = vsel %vm2238, %v5397, 0
      %v5471 = vsel %vm2238, %v5398, 0
      %v5474 = vsel %vm2238, %v5399, 0
      %v5477 = vsel %vm2238, %v5400, 0
      %v5480 = vsel %vm2238, %v5401, 0
      %v5483 = vsel %vm2238, %v5402, 0
      %v5486 = vsel %vm2238, %v5403, 0
      %v5489 = vsel %vm2238, %v5404, 0
      %v5492 = vsel %vm2238, %v5405, 0
      %v5495 = vsel %vm2238, %v5406, 0
      %v5498 = vsel %vm2238, %v5407, 0
      %v5501 = vsel %vm2238, %v5408, 0
      %v5504 = vsel %vm2238, %v5409, 0
      %5506 = vmatpush.msra.mxu0 0.0
      %5507 = vmatpush.msra.mxu0 0.0
      %5508 = vmatpush.msra.mxu0 0.0
      %5509 = vmatpush.msra.mxu0 0.0
      %5510 = vmatpush.msra.mxu0 0.0
      %5511 = vmatpush.msra.mxu0 0.0
      %5512 = vmatpush.msra.mxu0 0.0
      %5513 = vmatpush.msra.mxu0 0.0
      %5514 = vmatpush.msra.mxu0 %v4401
      %5515 = vmatpush.msra.mxu0 %v4400
      %5516 = vmatpush.msra.mxu0 %v4399
      %5517 = vmatpush.msra.mxu0 %v4398
      %5518 = vmatpush.msra.mxu0 %v4397
      %5519 = vmatpush.msra.mxu0 %v4396
      %5520 = vmatpush.msra.mxu0 %v4395
      %5521 = vmatpush.msra.mxu0 %v4394
      %5522 = vmatmul.f32.gmra.mxu0 %v5411
      %v5523 = vpop.f32.mrf.mxu0
      %v5524 = vadd.f32 0.0, %v5523
      %5525 = vmatmul.f32.gmra.mxu0 %v5414
      %v5526 = vpop.f32.mrf.mxu0
      %v5527 = vadd.f32 0.0, %v5526
      %5528 = vmatmul.f32.gmra.mxu0 %v5417
      %v5529 = vpop.f32.mrf.mxu0
      %v5530 = vadd.f32 0.0, %v5529
      %5531 = vmatmul.f32.gmra.mxu0 %v5420
      %v5532 = vpop.f32.mrf.mxu0
      %v5533 = vadd.f32 0.0, %v5532
      %5534 = vmatmul.f32.gmra.mxu0 %v5423
      %v5535 = vpop.f32.mrf.mxu0
      %v5536 = vadd.f32 0.0, %v5535
      %5537 = vmatmul.f32.gmra.mxu0 %v5426
      %v5538 = vpop.f32.mrf.mxu0
      %v5539 = vadd.f32 0.0, %v5538
      %5540 = vmatmul.f32.gmra.mxu0 %v5429
      %v5541 = vpop.f32.mrf.mxu0
      %v5542 = vadd.f32 0.0, %v5541
      %5543 = vmatmul.f32.gmra.mxu0 %v5432
      %v5544 = vpop.f32.mrf.mxu0
      %v5545 = vadd.f32 0.0, %v5544
      %5546 = vmatmul.f32.gmra.mxu0 %v5435
      %v5547 = vpop.f32.mrf.mxu0
      %v5548 = vadd.f32 0.0, %v5547
      %5549 = vmatmul.f32.gmra.mxu0 %v5438
      %v5550 = vpop.f32.mrf.mxu0
      %v5551 = vadd.f32 0.0, %v5550
      %5552 = vmatmul.f32.gmra.mxu0 %v5441
      %v5553 = vpop.f32.mrf.mxu0
      %v5554 = vadd.f32 0.0, %v5553
      %5555 = vmatmul.f32.gmra.mxu0 %v5444
      %v5556 = vpop.f32.mrf.mxu0
      %v5557 = vadd.f32 0.0, %v5556
      %5558 = vmatmul.f32.gmra.mxu0 %v5447
      %v5559 = vpop.f32.mrf.mxu0
      %v5560 = vadd.f32 0.0, %v5559
      %5561 = vmatmul.f32.gmra.mxu0 %v5450
      %v5562 = vpop.f32.mrf.mxu0
      %v5563 = vadd.f32 0.0, %v5562
      %5564 = vmatmul.f32.gmra.mxu0 %v5453
      %v5565 = vpop.f32.mrf.mxu0
      %v5566 = vadd.f32 0.0, %v5565
      %5567 = vmatmul.f32.gmra.mxu0 %v5456
      %v5568 = vpop.f32.mrf.mxu0
      %v5569 = vadd.f32 0.0, %v5568
      %5570 = vmatmul.f32.gmra.mxu0 %v5459
      %v5571 = vpop.f32.mrf.mxu0
      %v5572 = vadd.f32 0.0, %v5571
      %5573 = vmatmul.f32.gmra.mxu0 %v5462
      %v5574 = vpop.f32.mrf.mxu0
      %v5575 = vadd.f32 0.0, %v5574
      %5576 = vmatmul.f32.gmra.mxu0 %v5465
      %v5577 = vpop.f32.mrf.mxu0
      %v5578 = vadd.f32 0.0, %v5577
      %5579 = vmatmul.f32.gmra.mxu0 %v5468
      %v5580 = vpop.f32.mrf.mxu0
      %v5581 = vadd.f32 0.0, %v5580
      %5582 = vmatmul.f32.gmra.mxu0 %v5471
      %v5583 = vpop.f32.mrf.mxu0
      %v5584 = vadd.f32 0.0, %v5583
      %5585 = vmatmul.f32.gmra.mxu0 %v5474
      %v5586 = vpop.f32.mrf.mxu0
      %v5587 = vadd.f32 0.0, %v5586
      %5588 = vmatmul.f32.gmra.mxu0 %v5477
      %v5589 = vpop.f32.mrf.mxu0
      %v5590 = vadd.f32 0.0, %v5589
      %5591 = vmatmul.f32.gmra.mxu0 %v5480
      %v5592 = vpop.f32.mrf.mxu0
      %v5593 = vadd.f32 0.0, %v5592
      %5594 = vmatmul.f32.gmra.mxu0 %v5483
      %v5595 = vpop.f32.mrf.mxu0
      %v5596 = vadd.f32 0.0, %v5595
      %5597 = vmatmul.f32.gmra.mxu0 %v5486
      %v5598 = vpop.f32.mrf.mxu0
      %v5599 = vadd.f32 0.0, %v5598
      %5600 = vmatmul.f32.gmra.mxu0 %v5489
      %v5601 = vpop.f32.mrf.mxu0
      %v5602 = vadd.f32 0.0, %v5601
      %5603 = vmatmul.f32.gmra.mxu0 %v5492
      %v5604 = vpop.f32.mrf.mxu0
      %v5605 = vadd.f32 0.0, %v5604
      %5606 = vmatmul.f32.gmra.mxu0 %v5495
      %v5607 = vpop.f32.mrf.mxu0
      %v5608 = vadd.f32 0.0, %v5607
      %5609 = vmatmul.f32.gmra.mxu0 %v5498
      %v5610 = vpop.f32.mrf.mxu0
      %v5611 = vadd.f32 0.0, %v5610
      %5612 = vmatmul.f32.gmra.mxu0 %v5501
      %v5613 = vpop.f32.mrf.mxu0
      %v5614 = vadd.f32 0.0, %v5613
      %5615 = vmatmul.f32.gmra.mxu0 %v5504
      %v5616 = vpop.f32.mrf.mxu0
      %v5617 = vadd.f32 0.0, %v5616
      %5618 = vdwg.mxu0
      %s5619 = scalar_lea.vmem %s11, 32
      %v5620 = vld [vmem:[%s5619] sm:$0xff]
      %v5621 = vld [vmem:[%s5619 + $0x8] sm:$0xff]
      %v5623 = vsel %vm2270, %v5524, 0
      %v5626 = vsel %vm2270, %v5527, 0
      %v5629 = vsel %vm2270, %v5530, 0
      %v5632 = vsel %vm2270, %v5533, 0
      %v5635 = vsel %vm2270, %v5536, 0
      %v5638 = vsel %vm2270, %v5539, 0
      %v5641 = vsel %vm2270, %v5542, 0
      %v5644 = vsel %vm2270, %v5545, 0
      %v5647 = vsel %vm2270, %v5548, 0
      %v5650 = vsel %vm2270, %v5551, 0
      %v5653 = vsel %vm2270, %v5554, 0
      %v5656 = vsel %vm2270, %v5557, 0
      %v5659 = vsel %vm2270, %v5560, 0
      %v5662 = vsel %vm2270, %v5563, 0
      %v5665 = vsel %vm2270, %v5566, 0
      %v5668 = vsel %vm2270, %v5569, 0
      %v5671 = vsel %vm2270, %v5572, 0
      %v5674 = vsel %vm2270, %v5575, 0
      %v5677 = vsel %vm2270, %v5578, 0
      %v5680 = vsel %vm2270, %v5581, 0
      %v5683 = vsel %vm2270, %v5584, 0
      %v5686 = vsel %vm2270, %v5587, 0
      %v5689 = vsel %vm2270, %v5590, 0
      %v5692 = vsel %vm2270, %v5593, 0
      %v5695 = vsel %vm2270, %v5596, 0
      %v5698 = vsel %vm2270, %v5599, 0
      %v5701 = vsel %vm2270, %v5602, 0
      %v5704 = vsel %vm2270, %v5605, 0
      %v5707 = vsel %vm2270, %v5608, 0
      %v5710 = vsel %vm2270, %v5611, 0
      %v5713 = vsel %vm2270, %v5614, 0
      %v5716 = vsel %vm2270, %v5617, 0
      %5718 = vmatpush.msra.mxu0 0.0
      %5719 = vmatpush.msra.mxu0 0.0
      %5720 = vmatpush.msra.mxu0 0.0
      %5721 = vmatpush.msra.mxu0 0.0
      %5722 = vmatpush.msra.mxu0 0.0
      %5723 = vmatpush.msra.mxu0 0.0
      %5724 = vmatpush.msra.mxu0 0.0
      %5725 = vmatpush.msra.mxu0 0.0
      %5726 = vmatpush.msra.mxu0 0.0
      %5727 = vmatpush.msra.mxu0 0.0
      %5728 = vmatpush.msra.mxu0 0.0
      %5729 = vmatpush.msra.mxu0 0.0
      %5730 = vmatpush.msra.mxu0 0.0
      %5731 = vmatpush.msra.mxu0 0.0
      %5732 = vmatpush.msra.mxu0 %v5621
      %5733 = vmatpush.msra.mxu0 %v5620
      %5734 = vmatmul.f32.gmra.mxu0 %v5623
      %v5735 = vpop.f32.mrf.mxu0
      %v5736 = vadd.f32 0.0, %v5735
      %5737 = vmatmul.f32.gmra.mxu0 %v5626
      %v5738 = vpop.f32.mrf.mxu0
      %v5739 = vadd.f32 0.0, %v5738
      %5740 = vmatmul.f32.gmra.mxu0 %v5629
      %v5741 = vpop.f32.mrf.mxu0
      %v5742 = vadd.f32 0.0, %v5741
      %5743 = vmatmul.f32.gmra.mxu0 %v5632
      %v5744 = vpop.f32.mrf.mxu0
      %v5745 = vadd.f32 0.0, %v5744
      %5746 = vmatmul.f32.gmra.mxu0 %v5635
      %v5747 = vpop.f32.mrf.mxu0
      %v5748 = vadd.f32 0.0, %v5747
      %5749 = vmatmul.f32.gmra.mxu0 %v5638
      %v5750 = vpop.f32.mrf.mxu0
      %v5751 = vadd.f32 0.0, %v5750
      %5752 = vmatmul.f32.gmra.mxu0 %v5641
      %v5753 = vpop.f32.mrf.mxu0
      %v5754 = vadd.f32 0.0, %v5753
      %5755 = vmatmul.f32.gmra.mxu0 %v5644
      %v5756 = vpop.f32.mrf.mxu0
      %v5757 = vadd.f32 0.0, %v5756
      %5758 = vmatmul.f32.gmra.mxu0 %v5647
      %v5759 = vpop.f32.mrf.mxu0
      %v5760 = vadd.f32 0.0, %v5759
      %5761 = vmatmul.f32.gmra.mxu0 %v5650
      %v5762 = vpop.f32.mrf.mxu0
      %v5763 = vadd.f32 0.0, %v5762
      %5764 = vmatmul.f32.gmra.mxu0 %v5653
      %v5765 = vpop.f32.mrf.mxu0
      %v5766 = vadd.f32 0.0, %v5765
      %5767 = vmatmul.f32.gmra.mxu0 %v5656
      %v5768 = vpop.f32.mrf.mxu0
      %v5769 = vadd.f32 0.0, %v5768
      %5770 = vmatmul.f32.gmra.mxu0 %v5659
      %v5771 = vpop.f32.mrf.mxu0
      %v5772 = vadd.f32 0.0, %v5771
      %5773 = vmatmul.f32.gmra.mxu0 %v5662
      %v5774 = vpop.f32.mrf.mxu0
      %v5775 = vadd.f32 0.0, %v5774
      %5776 = vmatmul.f32.gmra.mxu0 %v5665
      %v5777 = vpop.f32.mrf.mxu0
      %v5778 = vadd.f32 0.0, %v5777
      %5779 = vmatmul.f32.gmra.mxu0 %v5668
      %v5780 = vpop.f32.mrf.mxu0
      %v5781 = vadd.f32 0.0, %v5780
      %5782 = vmatmul.f32.gmra.mxu0 %v5671
      %v5783 = vpop.f32.mrf.mxu0
      %v5784 = vadd.f32 0.0, %v5783
      %5785 = vmatmul.f32.gmra.mxu0 %v5674
      %v5786 = vpop.f32.mrf.mxu0
      %v5787 = vadd.f32 0.0, %v5786
      %5788 = vmatmul.f32.gmra.mxu0 %v5677
      %v5789 = vpop.f32.mrf.mxu0
      %v5790 = vadd.f32 0.0, %v5789
      %5791 = vmatmul.f32.gmra.mxu0 %v5680
      %v5792 = vpop.f32.mrf.mxu0
      %v5793 = vadd.f32 0.0, %v5792
      %5794 = vmatmul.f32.gmra.mxu0 %v5683
      %v5795 = vpop.f32.mrf.mxu0
      %v5796 = vadd.f32 0.0, %v5795
      %5797 = vmatmul.f32.gmra.mxu0 %v5686
      %v5798 = vpop.f32.mrf.mxu0
      %v5799 = vadd.f32 0.0, %v5798
      %5800 = vmatmul.f32.gmra.mxu0 %v5689
      %v5801 = vpop.f32.mrf.mxu0
      %v5802 = vadd.f32 0.0, %v5801
      %5803 = vmatmul.f32.gmra.mxu0 %v5692
      %v5804 = vpop.f32.mrf.mxu0
      %v5805 = vadd.f32 0.0, %v5804
      %5806 = vmatmul.f32.gmra.mxu0 %v5695
      %v5807 = vpop.f32.mrf.mxu0
      %v5808 = vadd.f32 0.0, %v5807
      %5809 = vmatmul.f32.gmra.mxu0 %v5698
      %v5810 = vpop.f32.mrf.mxu0
      %v5811 = vadd.f32 0.0, %v5810
      %5812 = vmatmul.f32.gmra.mxu0 %v5701
      %v5813 = vpop.f32.mrf.mxu0
      %v5814 = vadd.f32 0.0, %v5813
      %5815 = vmatmul.f32.gmra.mxu0 %v5704
      %v5816 = vpop.f32.mrf.mxu0
      %v5817 = vadd.f32 0.0, %v5816
      %5818 = vmatmul.f32.gmra.mxu0 %v5707
      %v5819 = vpop.f32.mrf.mxu0
      %v5820 = vadd.f32 0.0, %v5819
      %5821 = vmatmul.f32.gmra.mxu0 %v5710
      %v5822 = vpop.f32.mrf.mxu0
      %v5823 = vadd.f32 0.0, %v5822
      %5824 = vmatmul.f32.gmra.mxu0 %v5713
      %v5825 = vpop.f32.mrf.mxu0
      %v5826 = vadd.f32 0.0, %v5825
      %5827 = vmatmul.f32.gmra.mxu0 %v5716
      %v5828 = vpop.f32.mrf.mxu0
      %v5829 = vadd.f32 0.0, %v5828
      %5830 = vdwg.mxu0
      %v5831 = vadd.f32 %v5345, %v5736
      %v5832 = vadd.f32 %v5346, %v5739
      %v5833 = vadd.f32 %v5347, %v5742
      %v5834 = vadd.f32 %v5348, %v5745
      %v5835 = vadd.f32 %v5349, %v5748
      %v5836 = vadd.f32 %v5350, %v5751
      %v5837 = vadd.f32 %v5351, %v5754
      %v5838 = vadd.f32 %v5352, %v5757
      %v5839 = vadd.f32 %v5353, %v5760
      %v5840 = vadd.f32 %v5354, %v5763
      %v5841 = vadd.f32 %v5355, %v5766
      %v5842 = vadd.f32 %v5356, %v5769
      %v5843 = vadd.f32 %v5357, %v5772
      %v5844 = vadd.f32 %v5358, %v5775
      %v5845 = vadd.f32 %v5359, %v5778
      %v5846 = vadd.f32 %v5360, %v5781
      %v5847 = vadd.f32 %v5361, %v5784
      %v5848 = vadd.f32 %v5362, %v5787
      %v5849 = vadd.f32 %v5363, %v5790
      %v5850 = vadd.f32 %v5364, %v5793
      %v5851 = vadd.f32 %v5365, %v5796
      %v5852 = vadd.f32 %v5366, %v5799
      %v5853 = vadd.f32 %v5367, %v5802
      %v5854 = vadd.f32 %v5368, %v5805
      %v5855 = vadd.f32 %v5369, %v5808
      %v5856 = vadd.f32 %v5370, %v5811
      %v5857 = vadd.f32 %v5371, %v5814
      %v5858 = vadd.f32 %v5372, %v5817
      %v5859 = vadd.f32 %v5373, %v5820
      %v5860 = vadd.f32 %v5374, %v5823
      %v5861 = vadd.f32 %v5375, %v5826
      %v5862 = vadd.f32 %v5376, %v5829
      %s5863 = scalar_lea.vmem %s10, 768
      %v5864 = vld [vmem:[%s5863] sm:$0xff]
      %v5865 = vld [vmem:[%s5863 + $0x8] sm:$0xff]
      %v5866 = vld [vmem:[%s5863 + $0x10] sm:$0xff]
      %v5867 = vld [vmem:[%s5863 + $0x18] sm:$0xff]
      %v5868 = vld [vmem:[%s5863 + $0x20] sm:$0xff]
      %v5869 = vld [vmem:[%s5863 + $0x28] sm:$0xff]
      %v5870 = vld [vmem:[%s5863 + $0x30] sm:$0xff]
      %v5871 = vld [vmem:[%s5863 + $0x38] sm:$0xff]
      %v5872 = vld [vmem:[%s5863 + $0x40] sm:$0xff]
      %v5873 = vld [vmem:[%s5863 + $0x48] sm:$0xff]
      %v5874 = vld [vmem:[%s5863 + $0x50] sm:$0xff]
      %v5875 = vld [vmem:[%s5863 + $0x58] sm:$0xff]
      %v5876 = vld [vmem:[%s5863 + $0x60] sm:$0xff]
      %v5877 = vld [vmem:[%s5863 + $0x68] sm:$0xff]
      %v5878 = vld [vmem:[%s5863 + $0x70] sm:$0xff]
      %v5879 = vld [vmem:[%s5863 + $0x78] sm:$0xff]
      %v5880 = vld [vmem:[%s5863 + $0x80] sm:$0xff]
      %v5881 = vld [vmem:[%s5863 + $0x88] sm:$0xff]
      %v5882 = vld [vmem:[%s5863 + $0x90] sm:$0xff]
      %v5883 = vld [vmem:[%s5863 + $0x98] sm:$0xff]
      %v5884 = vld [vmem:[%s5863 + $0xa0] sm:$0xff]
      %v5885 = vld [vmem:[%s5863 + $0xa8] sm:$0xff]
      %v5886 = vld [vmem:[%s5863 + $0xb0] sm:$0xff]
      %v5887 = vld [vmem:[%s5863 + $0xb8] sm:$0xff]
      %v5888 = vld [vmem:[%s5863 + $0xc0] sm:$0xff]
      %v5889 = vld [vmem:[%s5863 + $0xc8] sm:$0xff]
      %v5890 = vld [vmem:[%s5863 + $0xd0] sm:$0xff]
      %v5891 = vld [vmem:[%s5863 + $0xd8] sm:$0xff]
      %v5892 = vld [vmem:[%s5863 + $0xe0] sm:$0xff]
      %v5893 = vld [vmem:[%s5863 + $0xe8] sm:$0xff]
      %v5894 = vld [vmem:[%s5863 + $0xf0] sm:$0xff]
      %v5895 = vld [vmem:[%s5863 + $0xf8] sm:$0xff]
      %v5897 = vsel %vm2238, %v5864, 0
      %v5900 = vsel %vm2238, %v5865, 0
      %v5903 = vsel %vm2238, %v5866, 0
      %v5906 = vsel %vm2238, %v5867, 0
      %v5909 = vsel %vm2238, %v5868, 0
      %v5912 = vsel %vm2238, %v5869, 0
      %v5915 = vsel %vm2238, %v5870, 0
      %v5918 = vsel %vm2238, %v5871, 0
      %v5921 = vsel %vm2238, %v5872, 0
      %v5924 = vsel %vm2238, %v5873, 0
      %v5927 = vsel %vm2238, %v5874, 0
      %v5930 = vsel %vm2238, %v5875, 0
      %v5933 = vsel %vm2238, %v5876, 0
      %v5936 = vsel %vm2238, %v5877, 0
      %v5939 = vsel %vm2238, %v5878, 0
      %v5942 = vsel %vm2238, %v5879, 0
      %v5945 = vsel %vm2238, %v5880, 0
      %v5948 = vsel %vm2238, %v5881, 0
      %v5951 = vsel %vm2238, %v5882, 0
      %v5954 = vsel %vm2238, %v5883, 0
      %v5957 = vsel %vm2238, %v5884, 0
      %v5960 = vsel %vm2238, %v5885, 0
      %v5963 = vsel %vm2238, %v5886, 0
      %v5966 = vsel %vm2238, %v5887, 0
      %v5969 = vsel %vm2238, %v5888, 0
      %v5972 = vsel %vm2238, %v5889, 0
      %v5975 = vsel %vm2238, %v5890, 0
      %v5978 = vsel %vm2238, %v5891, 0
      %v5981 = vsel %vm2238, %v5892, 0
      %v5984 = vsel %vm2238, %v5893, 0
      %v5987 = vsel %vm2238, %v5894, 0
      %v5990 = vsel %vm2238, %v5895, 0
      %5992 = vmatpush.msra.mxu0 0.0
      %5993 = vmatpush.msra.mxu0 0.0
      %5994 = vmatpush.msra.mxu0 0.0
      %5995 = vmatpush.msra.mxu0 0.0
      %5996 = vmatpush.msra.mxu0 0.0
      %5997 = vmatpush.msra.mxu0 0.0
      %5998 = vmatpush.msra.mxu0 0.0
      %5999 = vmatpush.msra.mxu0 0.0
      %6000 = vmatpush.msra.mxu0 %v4401
      %6001 = vmatpush.msra.mxu0 %v4400
      %6002 = vmatpush.msra.mxu0 %v4399
      %6003 = vmatpush.msra.mxu0 %v4398
      %6004 = vmatpush.msra.mxu0 %v4397
      %6005 = vmatpush.msra.mxu0 %v4396
      %6006 = vmatpush.msra.mxu0 %v4395
      %6007 = vmatpush.msra.mxu0 %v4394
      %6008 = vmatmul.f32.gmra.mxu0 %v5897
      %v6009 = vpop.f32.mrf.mxu0
      %v6010 = vadd.f32 0.0, %v6009
      %6011 = vmatmul.f32.gmra.mxu0 %v5900
      %v6012 = vpop.f32.mrf.mxu0
      %v6013 = vadd.f32 0.0, %v6012
      %6014 = vmatmul.f32.gmra.mxu0 %v5903
      %v6015 = vpop.f32.mrf.mxu0
      %v6016 = vadd.f32 0.0, %v6015
      %6017 = vmatmul.f32.gmra.mxu0 %v5906
      %v6018 = vpop.f32.mrf.mxu0
      %v6019 = vadd.f32 0.0, %v6018
      %6020 = vmatmul.f32.gmra.mxu0 %v5909
      %v6021 = vpop.f32.mrf.mxu0
      %v6022 = vadd.f32 0.0, %v6021
      %6023 = vmatmul.f32.gmra.mxu0 %v5912
      %v6024 = vpop.f32.mrf.mxu0
      %v6025 = vadd.f32 0.0, %v6024
      %6026 = vmatmul.f32.gmra.mxu0 %v5915
      %v6027 = vpop.f32.mrf.mxu0
      %v6028 = vadd.f32 0.0, %v6027
      %6029 = vmatmul.f32.gmra.mxu0 %v5918
      %v6030 = vpop.f32.mrf.mxu0
      %v6031 = vadd.f32 0.0, %v6030
      %6032 = vmatmul.f32.gmra.mxu0 %v5921
      %v6033 = vpop.f32.mrf.mxu0
      %v6034 = vadd.f32 0.0, %v6033
      %6035 = vmatmul.f32.gmra.mxu0 %v5924
      %v6036 = vpop.f32.mrf.mxu0
      %v6037 = vadd.f32 0.0, %v6036
      %6038 = vmatmul.f32.gmra.mxu0 %v5927
      %v6039 = vpop.f32.mrf.mxu0
      %v6040 = vadd.f32 0.0, %v6039
      %6041 = vmatmul.f32.gmra.mxu0 %v5930
      %v6042 = vpop.f32.mrf.mxu0
      %v6043 = vadd.f32 0.0, %v6042
      %6044 = vmatmul.f32.gmra.mxu0 %v5933
      %v6045 = vpop.f32.mrf.mxu0
      %v6046 = vadd.f32 0.0, %v6045
      %6047 = vmatmul.f32.gmra.mxu0 %v5936
      %v6048 = vpop.f32.mrf.mxu0
      %v6049 = vadd.f32 0.0, %v6048
      %6050 = vmatmul.f32.gmra.mxu0 %v5939
      %v6051 = vpop.f32.mrf.mxu0
      %v6052 = vadd.f32 0.0, %v6051
      %6053 = vmatmul.f32.gmra.mxu0 %v5942
      %v6054 = vpop.f32.mrf.mxu0
      %v6055 = vadd.f32 0.0, %v6054
      %6056 = vmatmul.f32.gmra.mxu0 %v5945
      %v6057 = vpop.f32.mrf.mxu0
      %v6058 = vadd.f32 0.0, %v6057
      %6059 = vmatmul.f32.gmra.mxu0 %v5948
      %v6060 = vpop.f32.mrf.mxu0
      %v6061 = vadd.f32 0.0, %v6060
      %6062 = vmatmul.f32.gmra.mxu0 %v5951
      %v6063 = vpop.f32.mrf.mxu0
      %v6064 = vadd.f32 0.0, %v6063
      %6065 = vmatmul.f32.gmra.mxu0 %v5954
      %v6066 = vpop.f32.mrf.mxu0
      %v6067 = vadd.f32 0.0, %v6066
      %6068 = vmatmul.f32.gmra.mxu0 %v5957
      %v6069 = vpop.f32.mrf.mxu0
      %v6070 = vadd.f32 0.0, %v6069
      %6071 = vmatmul.f32.gmra.mxu0 %v5960
      %v6072 = vpop.f32.mrf.mxu0
      %v6073 = vadd.f32 0.0, %v6072
      %6074 = vmatmul.f32.gmra.mxu0 %v5963
      %v6075 = vpop.f32.mrf.mxu0
      %v6076 = vadd.f32 0.0, %v6075
      %6077 = vmatmul.f32.gmra.mxu0 %v5966
      %v6078 = vpop.f32.mrf.mxu0
      %v6079 = vadd.f32 0.0, %v6078
      %6080 = vmatmul.f32.gmra.mxu0 %v5969
      %v6081 = vpop.f32.mrf.mxu0
      %v6082 = vadd.f32 0.0, %v6081
      %6083 = vmatmul.f32.gmra.mxu0 %v5972
      %v6084 = vpop.f32.mrf.mxu0
      %v6085 = vadd.f32 0.0, %v6084
      %6086 = vmatmul.f32.gmra.mxu0 %v5975
      %v6087 = vpop.f32.mrf.mxu0
      %v6088 = vadd.f32 0.0, %v6087
      %6089 = vmatmul.f32.gmra.mxu0 %v5978
      %v6090 = vpop.f32.mrf.mxu0
      %v6091 = vadd.f32 0.0, %v6090
      %6092 = vmatmul.f32.gmra.mxu0 %v5981
      %v6093 = vpop.f32.mrf.mxu0
      %v6094 = vadd.f32 0.0, %v6093
      %6095 = vmatmul.f32.gmra.mxu0 %v5984
      %v6096 = vpop.f32.mrf.mxu0
      %v6097 = vadd.f32 0.0, %v6096
      %6098 = vmatmul.f32.gmra.mxu0 %v5987
      %v6099 = vpop.f32.mrf.mxu0
      %v6100 = vadd.f32 0.0, %v6099
      %6101 = vmatmul.f32.gmra.mxu0 %v5990
      %v6102 = vpop.f32.mrf.mxu0
      %v6103 = vadd.f32 0.0, %v6102
      %6104 = vdwg.mxu0
      %s6105 = scalar_lea.vmem %s11, 48
      %v6106 = vld [vmem:[%s6105] sm:$0xff]
      %v6107 = vld [vmem:[%s6105 + $0x8] sm:$0xff]
      %v6109 = vsel %vm2270, %v6010, 0
      %v6112 = vsel %vm2270, %v6013, 0
      %v6115 = vsel %vm2270, %v6016, 0
      %v6118 = vsel %vm2270, %v6019, 0
      %v6121 = vsel %vm2270, %v6022, 0
      %v6124 = vsel %vm2270, %v6025, 0
      %v6127 = vsel %vm2270, %v6028, 0
      %v6130 = vsel %vm2270, %v6031, 0
      %v6133 = vsel %vm2270, %v6034, 0
      %v6136 = vsel %vm2270, %v6037, 0
      %v6139 = vsel %vm2270, %v6040, 0
      %v6142 = vsel %vm2270, %v6043, 0
      %v6145 = vsel %vm2270, %v6046, 0
      %v6148 = vsel %vm2270, %v6049, 0
      %v6151 = vsel %vm2270, %v6052, 0
      %v6154 = vsel %vm2270, %v6055, 0
      %v6157 = vsel %vm2270, %v6058, 0
      %v6160 = vsel %vm2270, %v6061, 0
      %v6163 = vsel %vm2270, %v6064, 0
      %v6166 = vsel %vm2270, %v6067, 0
      %v6169 = vsel %vm2270, %v6070, 0
      %v6172 = vsel %vm2270, %v6073, 0
      %v6175 = vsel %vm2270, %v6076, 0
      %v6178 = vsel %vm2270, %v6079, 0
      %v6181 = vsel %vm2270, %v6082, 0
      %v6184 = vsel %vm2270, %v6085, 0
      %v6187 = vsel %vm2270, %v6088, 0
      %v6190 = vsel %vm2270, %v6091, 0
      %v6193 = vsel %vm2270, %v6094, 0
      %v6196 = vsel %vm2270, %v6097, 0
      %v6199 = vsel %vm2270, %v6100, 0
      %v6202 = vsel %vm2270, %v6103, 0
      %6204 = vmatpush.msra.mxu0 0.0
      %6205 = vmatpush.msra.mxu0 0.0
      %6206 = vmatpush.msra.mxu0 0.0
      %6207 = vmatpush.msra.mxu0 0.0
      %6208 = vmatpush.msra.mxu0 0.0
      %6209 = vmatpush.msra.mxu0 0.0
      %6210 = vmatpush.msra.mxu0 0.0
      %6211 = vmatpush.msra.mxu0 0.0
      %6212 = vmatpush.msra.mxu0 0.0
      %6213 = vmatpush.msra.mxu0 0.0
      %6214 = vmatpush.msra.mxu0 0.0
      %6215 = vmatpush.msra.mxu0 0.0
      %6216 = vmatpush.msra.mxu0 0.0
      %6217 = vmatpush.msra.mxu0 0.0
      %6218 = vmatpush.msra.mxu0 %v6107
      %6219 = vmatpush.msra.mxu0 %v6106
      %6220 = vmatmul.f32.gmra.mxu0 %v6109
      %v6221 = vpop.f32.mrf.mxu0
      %v6222 = vadd.f32 0.0, %v6221
      %6223 = vmatmul.f32.gmra.mxu0 %v6112
      %v6224 = vpop.f32.mrf.mxu0
      %v6225 = vadd.f32 0.0, %v6224
      %6226 = vmatmul.f32.gmra.mxu0 %v6115
      %v6227 = vpop.f32.mrf.mxu0
      %v6228 = vadd.f32 0.0, %v6227
      %6229 = vmatmul.f32.gmra.mxu0 %v6118
      %v6230 = vpop.f32.mrf.mxu0
      %v6231 = vadd.f32 0.0, %v6230
      %6232 = vmatmul.f32.gmra.mxu0 %v6121
      %v6233 = vpop.f32.mrf.mxu0
      %v6234 = vadd.f32 0.0, %v6233
      %6235 = vmatmul.f32.gmra.mxu0 %v6124
      %v6236 = vpop.f32.mrf.mxu0
      %v6237 = vadd.f32 0.0, %v6236
      %6238 = vmatmul.f32.gmra.mxu0 %v6127
      %v6239 = vpop.f32.mrf.mxu0
      %v6240 = vadd.f32 0.0, %v6239
      %6241 = vmatmul.f32.gmra.mxu0 %v6130
      %v6242 = vpop.f32.mrf.mxu0
      %v6243 = vadd.f32 0.0, %v6242
      %6244 = vmatmul.f32.gmra.mxu0 %v6133
      %v6245 = vpop.f32.mrf.mxu0
      %v6246 = vadd.f32 0.0, %v6245
      %6247 = vmatmul.f32.gmra.mxu0 %v6136
      %v6248 = vpop.f32.mrf.mxu0
      %v6249 = vadd.f32 0.0, %v6248
      %6250 = vmatmul.f32.gmra.mxu0 %v6139
      %v6251 = vpop.f32.mrf.mxu0
      %v6252 = vadd.f32 0.0, %v6251
      %6253 = vmatmul.f32.gmra.mxu0 %v6142
      %v6254 = vpop.f32.mrf.mxu0
      %v6255 = vadd.f32 0.0, %v6254
      %6256 = vmatmul.f32.gmra.mxu0 %v6145
      %v6257 = vpop.f32.mrf.mxu0
      %v6258 = vadd.f32 0.0, %v6257
      %6259 = vmatmul.f32.gmra.mxu0 %v6148
      %v6260 = vpop.f32.mrf.mxu0
      %v6261 = vadd.f32 0.0, %v6260
      %6262 = vmatmul.f32.gmra.mxu0 %v6151
      %v6263 = vpop.f32.mrf.mxu0
      %v6264 = vadd.f32 0.0, %v6263
      %6265 = vmatmul.f32.gmra.mxu0 %v6154
      %v6266 = vpop.f32.mrf.mxu0
      %v6267 = vadd.f32 0.0, %v6266
      %6268 = vmatmul.f32.gmra.mxu0 %v6157
      %v6269 = vpop.f32.mrf.mxu0
      %v6270 = vadd.f32 0.0, %v6269
      %6271 = vmatmul.f32.gmra.mxu0 %v6160
      %v6272 = vpop.f32.mrf.mxu0
      %v6273 = vadd.f32 0.0, %v6272
      %6274 = vmatmul.f32.gmra.mxu0 %v6163
      %v6275 = vpop.f32.mrf.mxu0
      %v6276 = vadd.f32 0.0, %v6275
      %6277 = vmatmul.f32.gmra.mxu0 %v6166
      %v6278 = vpop.f32.mrf.mxu0
      %v6279 = vadd.f32 0.0, %v6278
      %6280 = vmatmul.f32.gmra.mxu0 %v6169
      %v6281 = vpop.f32.mrf.mxu0
      %v6282 = vadd.f32 0.0, %v6281
      %6283 = vmatmul.f32.gmra.mxu0 %v6172
      %v6284 = vpop.f32.mrf.mxu0
      %v6285 = vadd.f32 0.0, %v6284
      %6286 = vmatmul.f32.gmra.mxu0 %v6175
      %v6287 = vpop.f32.mrf.mxu0
      %v6288 = vadd.f32 0.0, %v6287
      %6289 = vmatmul.f32.gmra.mxu0 %v6178
      %v6290 = vpop.f32.mrf.mxu0
      %v6291 = vadd.f32 0.0, %v6290
      %6292 = vmatmul.f32.gmra.mxu0 %v6181
      %v6293 = vpop.f32.mrf.mxu0
      %v6294 = vadd.f32 0.0, %v6293
      %6295 = vmatmul.f32.gmra.mxu0 %v6184
      %v6296 = vpop.f32.mrf.mxu0
      %v6297 = vadd.f32 0.0, %v6296
      %6298 = vmatmul.f32.gmra.mxu0 %v6187
      %v6299 = vpop.f32.mrf.mxu0
      %v6300 = vadd.f32 0.0, %v6299
      %6301 = vmatmul.f32.gmra.mxu0 %v6190
      %v6302 = vpop.f32.mrf.mxu0
      %v6303 = vadd.f32 0.0, %v6302
      %6304 = vmatmul.f32.gmra.mxu0 %v6193
      %v6305 = vpop.f32.mrf.mxu0
      %v6306 = vadd.f32 0.0, %v6305
      %6307 = vmatmul.f32.gmra.mxu0 %v6196
      %v6308 = vpop.f32.mrf.mxu0
      %v6309 = vadd.f32 0.0, %v6308
      %6310 = vmatmul.f32.gmra.mxu0 %v6199
      %v6311 = vpop.f32.mrf.mxu0
      %v6312 = vadd.f32 0.0, %v6311
      %6313 = vmatmul.f32.gmra.mxu0 %v6202
      %v6314 = vpop.f32.mrf.mxu0
      %v6315 = vadd.f32 0.0, %v6314
      %6316 = vdwg.mxu0
      %v6317 = vadd.f32 %v5831, %v6222
      %v6318 = vadd.f32 %v5832, %v6225
      %v6319 = vadd.f32 %v5833, %v6228
      %v6320 = vadd.f32 %v5834, %v6231
      %v6321 = vadd.f32 %v5835, %v6234
      %v6322 = vadd.f32 %v5836, %v6237
      %v6323 = vadd.f32 %v5837, %v6240
      %v6324 = vadd.f32 %v5838, %v6243
      %v6325 = vadd.f32 %v5839, %v6246
      %v6326 = vadd.f32 %v5840, %v6249
      %v6327 = vadd.f32 %v5841, %v6252
      %v6328 = vadd.f32 %v5842, %v6255
      %v6329 = vadd.f32 %v5843, %v6258
      %v6330 = vadd.f32 %v5844, %v6261
      %v6331 = vadd.f32 %v5845, %v6264
      %v6332 = vadd.f32 %v5846, %v6267
      %v6333 = vadd.f32 %v5847, %v6270
      %v6334 = vadd.f32 %v5848, %v6273
      %v6335 = vadd.f32 %v5849, %v6276
      %v6336 = vadd.f32 %v5850, %v6279
      %v6337 = vadd.f32 %v5851, %v6282
      %v6338 = vadd.f32 %v5852, %v6285
      %v6339 = vadd.f32 %v5853, %v6288
      %v6340 = vadd.f32 %v5854, %v6291
      %v6341 = vadd.f32 %v5855, %v6294
      %v6342 = vadd.f32 %v5856, %v6297
      %v6343 = vadd.f32 %v5857, %v6300
      %v6344 = vadd.f32 %v5858, %v6303
      %v6345 = vadd.f32 %v5859, %v6306
      %v6346 = vadd.f32 %v5860, %v6309
      %v6347 = vadd.f32 %v5861, %v6312
      %v6348 = vadd.f32 %v5862, %v6315
      %s6349 = scalar_lea.vmem %s10, 1024
      %v6350 = vld [vmem:[%s6349] sm:$0xff]
      %v6351 = vld [vmem:[%s6349 + $0x8] sm:$0xff]
      %v6352 = vld [vmem:[%s6349 + $0x10] sm:$0xff]
      %v6353 = vld [vmem:[%s6349 + $0x18] sm:$0xff]
      %v6354 = vld [vmem:[%s6349 + $0x20] sm:$0xff]
      %v6355 = vld [vmem:[%s6349 + $0x28] sm:$0xff]
      %v6356 = vld [vmem:[%s6349 + $0x30] sm:$0xff]
      %v6357 = vld [vmem:[%s6349 + $0x38] sm:$0xff]
      %v6358 = vld [vmem:[%s6349 + $0x40] sm:$0xff]
      %v6359 = vld [vmem:[%s6349 + $0x48] sm:$0xff]
      %v6360 = vld [vmem:[%s6349 + $0x50] sm:$0xff]
      %v6361 = vld [vmem:[%s6349 + $0x58] sm:$0xff]
      %v6362 = vld [vmem:[%s6349 + $0x60] sm:$0xff]
      %v6363 = vld [vmem:[%s6349 + $0x68] sm:$0xff]
      %v6364 = vld [vmem:[%s6349 + $0x70] sm:$0xff]
      %v6365 = vld [vmem:[%s6349 + $0x78] sm:$0xff]
      %v6366 = vld [vmem:[%s6349 + $0x80] sm:$0xff]
      %v6367 = vld [vmem:[%s6349 + $0x88] sm:$0xff]
      %v6368 = vld [vmem:[%s6349 + $0x90] sm:$0xff]
      %v6369 = vld [vmem:[%s6349 + $0x98] sm:$0xff]
      %v6370 = vld [vmem:[%s6349 + $0xa0] sm:$0xff]
      %v6371 = vld [vmem:[%s6349 + $0xa8] sm:$0xff]
      %v6372 = vld [vmem:[%s6349 + $0xb0] sm:$0xff]
      %v6373 = vld [vmem:[%s6349 + $0xb8] sm:$0xff]
      %v6374 = vld [vmem:[%s6349 + $0xc0] sm:$0xff]
      %v6375 = vld [vmem:[%s6349 + $0xc8] sm:$0xff]
      %v6376 = vld [vmem:[%s6349 + $0xd0] sm:$0xff]
      %v6377 = vld [vmem:[%s6349 + $0xd8] sm:$0xff]
      %v6378 = vld [vmem:[%s6349 + $0xe0] sm:$0xff]
      %v6379 = vld [vmem:[%s6349 + $0xe8] sm:$0xff]
      %v6380 = vld [vmem:[%s6349 + $0xf0] sm:$0xff]
      %v6381 = vld [vmem:[%s6349 + $0xf8] sm:$0xff]
      %v6383 = vsel %vm2238, %v6350, 0
      %v6386 = vsel %vm2238, %v6351, 0
      %v6389 = vsel %vm2238, %v6352, 0
      %v6392 = vsel %vm2238, %v6353, 0
      %v6395 = vsel %vm2238, %v6354, 0
      %v6398 = vsel %vm2238, %v6355, 0
      %v6401 = vsel %vm2238, %v6356, 0
      %v6404 = vsel %vm2238, %v6357, 0
      %v6407 = vsel %vm2238, %v6358, 0
      %v6410 = vsel %vm2238, %v6359, 0
      %v6413 = vsel %vm2238, %v6360, 0
      %v6416 = vsel %vm2238, %v6361, 0
      %v6419 = vsel %vm2238, %v6362, 0
      %v6422 = vsel %vm2238, %v6363, 0
      %v6425 = vsel %vm2238, %v6364, 0
      %v6428 = vsel %vm2238, %v6365, 0
      %v6431 = vsel %vm2238, %v6366, 0
      %v6434 = vsel %vm2238, %v6367, 0
      %v6437 = vsel %vm2238, %v6368, 0
      %v6440 = vsel %vm2238, %v6369, 0
      %v6443 = vsel %vm2238, %v6370, 0
      %v6446 = vsel %vm2238, %v6371, 0
      %v6449 = vsel %vm2238, %v6372, 0
      %v6452 = vsel %vm2238, %v6373, 0
      %v6455 = vsel %vm2238, %v6374, 0
      %v6458 = vsel %vm2238, %v6375, 0
      %v6461 = vsel %vm2238, %v6376, 0
      %v6464 = vsel %vm2238, %v6377, 0
      %v6467 = vsel %vm2238, %v6378, 0
      %v6470 = vsel %vm2238, %v6379, 0
      %v6473 = vsel %vm2238, %v6380, 0
      %v6476 = vsel %vm2238, %v6381, 0
      %6478 = vmatpush.msra.mxu0 0.0
      %6479 = vmatpush.msra.mxu0 0.0
      %6480 = vmatpush.msra.mxu0 0.0
      %6481 = vmatpush.msra.mxu0 0.0
      %6482 = vmatpush.msra.mxu0 0.0
      %6483 = vmatpush.msra.mxu0 0.0
      %6484 = vmatpush.msra.mxu0 0.0
      %6485 = vmatpush.msra.mxu0 0.0
      %6486 = vmatpush.msra.mxu0 %v4401
      %6487 = vmatpush.msra.mxu0 %v4400
      %6488 = vmatpush.msra.mxu0 %v4399
      %6489 = vmatpush.msra.mxu0 %v4398
      %6490 = vmatpush.msra.mxu0 %v4397
      %6491 = vmatpush.msra.mxu0 %v4396
      %6492 = vmatpush.msra.mxu0 %v4395
      %6493 = vmatpush.msra.mxu0 %v4394
      %6494 = vmatmul.f32.gmra.mxu0 %v6383
      %v6495 = vpop.f32.mrf.mxu0
      %v6496 = vadd.f32 0.0, %v6495
      %6497 = vmatmul.f32.gmra.mxu0 %v6386
      %v6498 = vpop.f32.mrf.mxu0
      %v6499 = vadd.f32 0.0, %v6498
      %6500 = vmatmul.f32.gmra.mxu0 %v6389
      %v6501 = vpop.f32.mrf.mxu0
      %v6502 = vadd.f32 0.0, %v6501
      %6503 = vmatmul.f32.gmra.mxu0 %v6392
      %v6504 = vpop.f32.mrf.mxu0
      %v6505 = vadd.f32 0.0, %v6504
      %6506 = vmatmul.f32.gmra.mxu0 %v6395
      %v6507 = vpop.f32.mrf.mxu0
      %v6508 = vadd.f32 0.0, %v6507
      %6509 = vmatmul.f32.gmra.mxu0 %v6398
      %v6510 = vpop.f32.mrf.mxu0
      %v6511 = vadd.f32 0.0, %v6510
      %6512 = vmatmul.f32.gmra.mxu0 %v6401
      %v6513 = vpop.f32.mrf.mxu0
      %v6514 = vadd.f32 0.0, %v6513
      %6515 = vmatmul.f32.gmra.mxu0 %v6404
      %v6516 = vpop.f32.mrf.mxu0
      %v6517 = vadd.f32 0.0, %v6516
      %6518 = vmatmul.f32.gmra.mxu0 %v6407
      %v6519 = vpop.f32.mrf.mxu0
      %v6520 = vadd.f32 0.0, %v6519
      %6521 = vmatmul.f32.gmra.mxu0 %v6410
      %v6522 = vpop.f32.mrf.mxu0
      %v6523 = vadd.f32 0.0, %v6522
      %6524 = vmatmul.f32.gmra.mxu0 %v6413
      %v6525 = vpop.f32.mrf.mxu0
      %v6526 = vadd.f32 0.0, %v6525
      %6527 = vmatmul.f32.gmra.mxu0 %v6416
      %v6528 = vpop.f32.mrf.mxu0
      %v6529 = vadd.f32 0.0, %v6528
      %6530 = vmatmul.f32.gmra.mxu0 %v6419
      %v6531 = vpop.f32.mrf.mxu0
      %v6532 = vadd.f32 0.0, %v6531
      %6533 = vmatmul.f32.gmra.mxu0 %v6422
      %v6534 = vpop.f32.mrf.mxu0
      %v6535 = vadd.f32 0.0, %v6534
      %6536 = vmatmul.f32.gmra.mxu0 %v6425
      %v6537 = vpop.f32.mrf.mxu0
      %v6538 = vadd.f32 0.0, %v6537
      %6539 = vmatmul.f32.gmra.mxu0 %v6428
      %v6540 = vpop.f32.mrf.mxu0
      %v6541 = vadd.f32 0.0, %v6540
      %6542 = vmatmul.f32.gmra.mxu0 %v6431
      %v6543 = vpop.f32.mrf.mxu0
      %v6544 = vadd.f32 0.0, %v6543
      %6545 = vmatmul.f32.gmra.mxu0 %v6434
      %v6546 = vpop.f32.mrf.mxu0
      %v6547 = vadd.f32 0.0, %v6546
      %6548 = vmatmul.f32.gmra.mxu0 %v6437
      %v6549 = vpop.f32.mrf.mxu0
      %v6550 = vadd.f32 0.0, %v6549
      %6551 = vmatmul.f32.gmra.mxu0 %v6440
      %v6552 = vpop.f32.mrf.mxu0
      %v6553 = vadd.f32 0.0, %v6552
      %6554 = vmatmul.f32.gmra.mxu0 %v6443
      %v6555 = vpop.f32.mrf.mxu0
      %v6556 = vadd.f32 0.0, %v6555
      %6557 = vmatmul.f32.gmra.mxu0 %v6446
      %v6558 = vpop.f32.mrf.mxu0
      %v6559 = vadd.f32 0.0, %v6558
      %6560 = vmatmul.f32.gmra.mxu0 %v6449
      %v6561 = vpop.f32.mrf.mxu0
      %v6562 = vadd.f32 0.0, %v6561
      %6563 = vmatmul.f32.gmra.mxu0 %v6452
      %v6564 = vpop.f32.mrf.mxu0
      %v6565 = vadd.f32 0.0, %v6564
      %6566 = vmatmul.f32.gmra.mxu0 %v6455
      %v6567 = vpop.f32.mrf.mxu0
      %v6568 = vadd.f32 0.0, %v6567
      %6569 = vmatmul.f32.gmra.mxu0 %v6458
      %v6570 = vpop.f32.mrf.mxu0
      %v6571 = vadd.f32 0.0, %v6570
      %6572 = vmatmul.f32.gmra.mxu0 %v6461
      %v6573 = vpop.f32.mrf.mxu0
      %v6574 = vadd.f32 0.0, %v6573
      %6575 = vmatmul.f32.gmra.mxu0 %v6464
      %v6576 = vpop.f32.mrf.mxu0
      %v6577 = vadd.f32 0.0, %v6576
      %6578 = vmatmul.f32.gmra.mxu0 %v6467
      %v6579 = vpop.f32.mrf.mxu0
      %v6580 = vadd.f32 0.0, %v6579
      %6581 = vmatmul.f32.gmra.mxu0 %v6470
      %v6582 = vpop.f32.mrf.mxu0
      %v6583 = vadd.f32 0.0, %v6582
      %6584 = vmatmul.f32.gmra.mxu0 %v6473
      %v6585 = vpop.f32.mrf.mxu0
      %v6586 = vadd.f32 0.0, %v6585
      %6587 = vmatmul.f32.gmra.mxu0 %v6476
      %v6588 = vpop.f32.mrf.mxu0
      %v6589 = vadd.f32 0.0, %v6588
      %6590 = vdwg.mxu0
      %s6591 = scalar_lea.vmem %s11, 64
      %v6592 = vld [vmem:[%s6591] sm:$0xff]
      %v6593 = vld [vmem:[%s6591 + $0x8] sm:$0xff]
      %v6595 = vsel %vm2270, %v6496, 0
      %v6598 = vsel %vm2270, %v6499, 0
      %v6601 = vsel %vm2270, %v6502, 0
      %v6604 = vsel %vm2270, %v6505, 0
      %v6607 = vsel %vm2270, %v6508, 0
      %v6610 = vsel %vm2270, %v6511, 0
      %v6613 = vsel %vm2270, %v6514, 0
      %v6616 = vsel %vm2270, %v6517, 0
      %v6619 = vsel %vm2270, %v6520, 0
      %v6622 = vsel %vm2270, %v6523, 0
      %v6625 = vsel %vm2270, %v6526, 0
      %v6628 = vsel %vm2270, %v6529, 0
      %v6631 = vsel %vm2270, %v6532, 0
      %v6634 = vsel %vm2270, %v6535, 0
      %v6637 = vsel %vm2270, %v6538, 0
      %v6640 = vsel %vm2270, %v6541, 0
      %v6643 = vsel %vm2270, %v6544, 0
      %v6646 = vsel %vm2270, %v6547, 0
      %v6649 = vsel %vm2270, %v6550, 0
      %v6652 = vsel %vm2270, %v6553, 0
      %v6655 = vsel %vm2270, %v6556, 0
      %v6658 = vsel %vm2270, %v6559, 0
      %v6661 = vsel %vm2270, %v6562, 0
      %v6664 = vsel %vm2270, %v6565, 0
      %v6667 = vsel %vm2270, %v6568, 0
      %v6670 = vsel %vm2270, %v6571, 0
      %v6673 = vsel %vm2270, %v6574, 0
      %v6676 = vsel %vm2270, %v6577, 0
      %v6679 = vsel %vm2270, %v6580, 0
      %v6682 = vsel %vm2270, %v6583, 0
      %v6685 = vsel %vm2270, %v6586, 0
      %v6688 = vsel %vm2270, %v6589, 0
      %6690 = vmatpush.msra.mxu0 0.0
      %6691 = vmatpush.msra.mxu0 0.0
      %6692 = vmatpush.msra.mxu0 0.0
      %6693 = vmatpush.msra.mxu0 0.0
      %6694 = vmatpush.msra.mxu0 0.0
      %6695 = vmatpush.msra.mxu0 0.0
      %6696 = vmatpush.msra.mxu0 0.0
      %6697 = vmatpush.msra.mxu0 0.0
      %6698 = vmatpush.msra.mxu0 0.0
      %6699 = vmatpush.msra.mxu0 0.0
      %6700 = vmatpush.msra.mxu0 0.0
      %6701 = vmatpush.msra.mxu0 0.0
      %6702 = vmatpush.msra.mxu0 0.0
      %6703 = vmatpush.msra.mxu0 0.0
      %6704 = vmatpush.msra.mxu0 %v6593
      %6705 = vmatpush.msra.mxu0 %v6592
      %6706 = vmatmul.f32.gmra.mxu0 %v6595
      %v6707 = vpop.f32.mrf.mxu0
      %v6708 = vadd.f32 0.0, %v6707
      %6709 = vmatmul.f32.gmra.mxu0 %v6598
      %v6710 = vpop.f32.mrf.mxu0
      %v6711 = vadd.f32 0.0, %v6710
      %6712 = vmatmul.f32.gmra.mxu0 %v6601
      %v6713 = vpop.f32.mrf.mxu0
      %v6714 = vadd.f32 0.0, %v6713
      %6715 = vmatmul.f32.gmra.mxu0 %v6604
      %v6716 = vpop.f32.mrf.mxu0
      %v6717 = vadd.f32 0.0, %v6716
      %6718 = vmatmul.f32.gmra.mxu0 %v6607
      %v6719 = vpop.f32.mrf.mxu0
      %v6720 = vadd.f32 0.0, %v6719
      %6721 = vmatmul.f32.gmra.mxu0 %v6610
      %v6722 = vpop.f32.mrf.mxu0
      %v6723 = vadd.f32 0.0, %v6722
      %6724 = vmatmul.f32.gmra.mxu0 %v6613
      %v6725 = vpop.f32.mrf.mxu0
      %v6726 = vadd.f32 0.0, %v6725
      %6727 = vmatmul.f32.gmra.mxu0 %v6616
      %v6728 = vpop.f32.mrf.mxu0
      %v6729 = vadd.f32 0.0, %v6728
      %6730 = vmatmul.f32.gmra.mxu0 %v6619
      %v6731 = vpop.f32.mrf.mxu0
      %v6732 = vadd.f32 0.0, %v6731
      %6733 = vmatmul.f32.gmra.mxu0 %v6622
      %v6734 = vpop.f32.mrf.mxu0
      %v6735 = vadd.f32 0.0, %v6734
      %6736 = vmatmul.f32.gmra.mxu0 %v6625
      %v6737 = vpop.f32.mrf.mxu0
      %v6738 = vadd.f32 0.0, %v6737
      %6739 = vmatmul.f32.gmra.mxu0 %v6628
      %v6740 = vpop.f32.mrf.mxu0
      %v6741 = vadd.f32 0.0, %v6740
      %6742 = vmatmul.f32.gmra.mxu0 %v6631
      %v6743 = vpop.f32.mrf.mxu0
      %v6744 = vadd.f32 0.0, %v6743
      %6745 = vmatmul.f32.gmra.mxu0 %v6634
      %v6746 = vpop.f32.mrf.mxu0
      %v6747 = vadd.f32 0.0, %v6746
      %6748 = vmatmul.f32.gmra.mxu0 %v6637
      %v6749 = vpop.f32.mrf.mxu0
      %v6750 = vadd.f32 0.0, %v6749
      %6751 = vmatmul.f32.gmra.mxu0 %v6640
      %v6752 = vpop.f32.mrf.mxu0
      %v6753 = vadd.f32 0.0, %v6752
      %6754 = vmatmul.f32.gmra.mxu0 %v6643
      %v6755 = vpop.f32.mrf.mxu0
      %v6756 = vadd.f32 0.0, %v6755
      %6757 = vmatmul.f32.gmra.mxu0 %v6646
      %v6758 = vpop.f32.mrf.mxu0
      %v6759 = vadd.f32 0.0, %v6758
      %6760 = vmatmul.f32.gmra.mxu0 %v6649
      %v6761 = vpop.f32.mrf.mxu0
      %v6762 = vadd.f32 0.0, %v6761
      %6763 = vmatmul.f32.gmra.mxu0 %v6652
      %v6764 = vpop.f32.mrf.mxu0
      %v6765 = vadd.f32 0.0, %v6764
      %6766 = vmatmul.f32.gmra.mxu0 %v6655
      %v6767 = vpop.f32.mrf.mxu0
      %v6768 = vadd.f32 0.0, %v6767
      %6769 = vmatmul.f32.gmra.mxu0 %v6658
      %v6770 = vpop.f32.mrf.mxu0
      %v6771 = vadd.f32 0.0, %v6770
      %6772 = vmatmul.f32.gmra.mxu0 %v6661
      %v6773 = vpop.f32.mrf.mxu0
      %v6774 = vadd.f32 0.0, %v6773
      %6775 = vmatmul.f32.gmra.mxu0 %v6664
      %v6776 = vpop.f32.mrf.mxu0
      %v6777 = vadd.f32 0.0, %v6776
      %6778 = vmatmul.f32.gmra.mxu0 %v6667
      %v6779 = vpop.f32.mrf.mxu0
      %v6780 = vadd.f32 0.0, %v6779
      %6781 = vmatmul.f32.gmra.mxu0 %v6670
      %v6782 = vpop.f32.mrf.mxu0
      %v6783 = vadd.f32 0.0, %v6782
      %6784 = vmatmul.f32.gmra.mxu0 %v6673
      %v6785 = vpop.f32.mrf.mxu0
      %v6786 = vadd.f32 0.0, %v6785
      %6787 = vmatmul.f32.gmra.mxu0 %v6676
      %v6788 = vpop.f32.mrf.mxu0
      %v6789 = vadd.f32 0.0, %v6788
      %6790 = vmatmul.f32.gmra.mxu0 %v6679
      %v6791 = vpop.f32.mrf.mxu0
      %v6792 = vadd.f32 0.0, %v6791
      %6793 = vmatmul.f32.gmra.mxu0 %v6682
      %v6794 = vpop.f32.mrf.mxu0
      %v6795 = vadd.f32 0.0, %v6794
      %6796 = vmatmul.f32.gmra.mxu0 %v6685
      %v6797 = vpop.f32.mrf.mxu0
      %v6798 = vadd.f32 0.0, %v6797
      %6799 = vmatmul.f32.gmra.mxu0 %v6688
      %v6800 = vpop.f32.mrf.mxu0
      %v6801 = vadd.f32 0.0, %v6800
      %6802 = vdwg.mxu0
      %v6803 = vadd.f32 %v6317, %v6708
      %v6804 = vadd.f32 %v6318, %v6711
      %v6805 = vadd.f32 %v6319, %v6714
      %v6806 = vadd.f32 %v6320, %v6717
      %v6807 = vadd.f32 %v6321, %v6720
      %v6808 = vadd.f32 %v6322, %v6723
      %v6809 = vadd.f32 %v6323, %v6726
      %v6810 = vadd.f32 %v6324, %v6729
      %v6811 = vadd.f32 %v6325, %v6732
      %v6812 = vadd.f32 %v6326, %v6735
      %v6813 = vadd.f32 %v6327, %v6738
      %v6814 = vadd.f32 %v6328, %v6741
      %v6815 = vadd.f32 %v6329, %v6744
      %v6816 = vadd.f32 %v6330, %v6747
      %v6817 = vadd.f32 %v6331, %v6750
      %v6818 = vadd.f32 %v6332, %v6753
      %v6819 = vadd.f32 %v6333, %v6756
      %v6820 = vadd.f32 %v6334, %v6759
      %v6821 = vadd.f32 %v6335, %v6762
      %v6822 = vadd.f32 %v6336, %v6765
      %v6823 = vadd.f32 %v6337, %v6768
      %v6824 = vadd.f32 %v6338, %v6771
      %v6825 = vadd.f32 %v6339, %v6774
      %v6826 = vadd.f32 %v6340, %v6777
      %v6827 = vadd.f32 %v6341, %v6780
      %v6828 = vadd.f32 %v6342, %v6783
      %v6829 = vadd.f32 %v6343, %v6786
      %v6830 = vadd.f32 %v6344, %v6789
      %v6831 = vadd.f32 %v6345, %v6792
      %v6832 = vadd.f32 %v6346, %v6795
      %v6833 = vadd.f32 %v6347, %v6798
      %v6834 = vadd.f32 %v6348, %v6801
      %s6835 = scalar_lea.vmem %s10, 1280
      %v6836 = vld [vmem:[%s6835] sm:$0xff]
      %v6837 = vld [vmem:[%s6835 + $0x8] sm:$0xff]
      %v6838 = vld [vmem:[%s6835 + $0x10] sm:$0xff]
      %v6839 = vld [vmem:[%s6835 + $0x18] sm:$0xff]
      %v6840 = vld [vmem:[%s6835 + $0x20] sm:$0xff]
      %v6841 = vld [vmem:[%s6835 + $0x28] sm:$0xff]
      %v6842 = vld [vmem:[%s6835 + $0x30] sm:$0xff]
      %v6843 = vld [vmem:[%s6835 + $0x38] sm:$0xff]
      %v6844 = vld [vmem:[%s6835 + $0x40] sm:$0xff]
      %v6845 = vld [vmem:[%s6835 + $0x48] sm:$0xff]
      %v6846 = vld [vmem:[%s6835 + $0x50] sm:$0xff]
      %v6847 = vld [vmem:[%s6835 + $0x58] sm:$0xff]
      %v6848 = vld [vmem:[%s6835 + $0x60] sm:$0xff]
      %v6849 = vld [vmem:[%s6835 + $0x68] sm:$0xff]
      %v6850 = vld [vmem:[%s6835 + $0x70] sm:$0xff]
      %v6851 = vld [vmem:[%s6835 + $0x78] sm:$0xff]
      %v6852 = vld [vmem:[%s6835 + $0x80] sm:$0xff]
      %v6853 = vld [vmem:[%s6835 + $0x88] sm:$0xff]
      %v6854 = vld [vmem:[%s6835 + $0x90] sm:$0xff]
      %v6855 = vld [vmem:[%s6835 + $0x98] sm:$0xff]
      %v6856 = vld [vmem:[%s6835 + $0xa0] sm:$0xff]
      %v6857 = vld [vmem:[%s6835 + $0xa8] sm:$0xff]
      %v6858 = vld [vmem:[%s6835 + $0xb0] sm:$0xff]
      %v6859 = vld [vmem:[%s6835 + $0xb8] sm:$0xff]
      %v6860 = vld [vmem:[%s6835 + $0xc0] sm:$0xff]
      %v6861 = vld [vmem:[%s6835 + $0xc8] sm:$0xff]
      %v6862 = vld [vmem:[%s6835 + $0xd0] sm:$0xff]
      %v6863 = vld [vmem:[%s6835 + $0xd8] sm:$0xff]
      %v6864 = vld [vmem:[%s6835 + $0xe0] sm:$0xff]
      %v6865 = vld [vmem:[%s6835 + $0xe8] sm:$0xff]
      %v6866 = vld [vmem:[%s6835 + $0xf0] sm:$0xff]
      %v6867 = vld [vmem:[%s6835 + $0xf8] sm:$0xff]
      %v6869 = vsel %vm2238, %v6836, 0
      %v6872 = vsel %vm2238, %v6837, 0
      %v6875 = vsel %vm2238, %v6838, 0
      %v6878 = vsel %vm2238, %v6839, 0
      %v6881 = vsel %vm2238, %v6840, 0
      %v6884 = vsel %vm2238, %v6841, 0
      %v6887 = vsel %vm2238, %v6842, 0
      %v6890 = vsel %vm2238, %v6843, 0
      %v6893 = vsel %vm2238, %v6844, 0
      %v6896 = vsel %vm2238, %v6845, 0
      %v6899 = vsel %vm2238, %v6846, 0
      %v6902 = vsel %vm2238, %v6847, 0
      %v6905 = vsel %vm2238, %v6848, 0
      %v6908 = vsel %vm2238, %v6849, 0
      %v6911 = vsel %vm2238, %v6850, 0
      %v6914 = vsel %vm2238, %v6851, 0
      %v6917 = vsel %vm2238, %v6852, 0
      %v6920 = vsel %vm2238, %v6853, 0
      %v6923 = vsel %vm2238, %v6854, 0
      %v6926 = vsel %vm2238, %v6855, 0
      %v6929 = vsel %vm2238, %v6856, 0
      %v6932 = vsel %vm2238, %v6857, 0
      %v6935 = vsel %vm2238, %v6858, 0
      %v6938 = vsel %vm2238, %v6859, 0
      %v6941 = vsel %vm2238, %v6860, 0
      %v6944 = vsel %vm2238, %v6861, 0
      %v6947 = vsel %vm2238, %v6862, 0
      %v6950 = vsel %vm2238, %v6863, 0
      %v6953 = vsel %vm2238, %v6864, 0
      %v6956 = vsel %vm2238, %v6865, 0
      %v6959 = vsel %vm2238, %v6866, 0
      %v6962 = vsel %vm2238, %v6867, 0
      %6964 = vmatpush.msra.mxu0 0.0
      %6965 = vmatpush.msra.mxu0 0.0
      %6966 = vmatpush.msra.mxu0 0.0
      %6967 = vmatpush.msra.mxu0 0.0
      %6968 = vmatpush.msra.mxu0 0.0
      %6969 = vmatpush.msra.mxu0 0.0
      %6970 = vmatpush.msra.mxu0 0.0
      %6971 = vmatpush.msra.mxu0 0.0
      %6972 = vmatpush.msra.mxu0 %v4401
      %6973 = vmatpush.msra.mxu0 %v4400
      %6974 = vmatpush.msra.mxu0 %v4399
      %6975 = vmatpush.msra.mxu0 %v4398
      %6976 = vmatpush.msra.mxu0 %v4397
      %6977 = vmatpush.msra.mxu0 %v4396
      %6978 = vmatpush.msra.mxu0 %v4395
      %6979 = vmatpush.msra.mxu0 %v4394
      %6980 = vmatmul.f32.gmra.mxu0 %v6869
      %v6981 = vpop.f32.mrf.mxu0
      %v6982 = vadd.f32 0.0, %v6981
      %6983 = vmatmul.f32.gmra.mxu0 %v6872
      %v6984 = vpop.f32.mrf.mxu0
      %v6985 = vadd.f32 0.0, %v6984
      %6986 = vmatmul.f32.gmra.mxu0 %v6875
      %v6987 = vpop.f32.mrf.mxu0
      %v6988 = vadd.f32 0.0, %v6987
      %6989 = vmatmul.f32.gmra.mxu0 %v6878
      %v6990 = vpop.f32.mrf.mxu0
      %v6991 = vadd.f32 0.0, %v6990
      %6992 = vmatmul.f32.gmra.mxu0 %v6881
      %v6993 = vpop.f32.mrf.mxu0
      %v6994 = vadd.f32 0.0, %v6993
      %6995 = vmatmul.f32.gmra.mxu0 %v6884
      %v6996 = vpop.f32.mrf.mxu0
      %v6997 = vadd.f32 0.0, %v6996
      %6998 = vmatmul.f32.gmra.mxu0 %v6887
      %v6999 = vpop.f32.mrf.mxu0
      %v7000 = vadd.f32 0.0, %v6999
      %7001 = vmatmul.f32.gmra.mxu0 %v6890
      %v7002 = vpop.f32.mrf.mxu0
      %v7003 = vadd.f32 0.0, %v7002
      %7004 = vmatmul.f32.gmra.mxu0 %v6893
      %v7005 = vpop.f32.mrf.mxu0
      %v7006 = vadd.f32 0.0, %v7005
      %7007 = vmatmul.f32.gmra.mxu0 %v6896
      %v7008 = vpop.f32.mrf.mxu0
      %v7009 = vadd.f32 0.0, %v7008
      %7010 = vmatmul.f32.gmra.mxu0 %v6899
      %v7011 = vpop.f32.mrf.mxu0
      %v7012 = vadd.f32 0.0, %v7011
      %7013 = vmatmul.f32.gmra.mxu0 %v6902
      %v7014 = vpop.f32.mrf.mxu0
      %v7015 = vadd.f32 0.0, %v7014
      %7016 = vmatmul.f32.gmra.mxu0 %v6905
      %v7017 = vpop.f32.mrf.mxu0
      %v7018 = vadd.f32 0.0, %v7017
      %7019 = vmatmul.f32.gmra.mxu0 %v6908
      %v7020 = vpop.f32.mrf.mxu0
      %v7021 = vadd.f32 0.0, %v7020
      %7022 = vmatmul.f32.gmra.mxu0 %v6911
      %v7023 = vpop.f32.mrf.mxu0
      %v7024 = vadd.f32 0.0, %v7023
      %7025 = vmatmul.f32.gmra.mxu0 %v6914
      %v7026 = vpop.f32.mrf.mxu0
      %v7027 = vadd.f32 0.0, %v7026
      %7028 = vmatmul.f32.gmra.mxu0 %v6917
      %v7029 = vpop.f32.mrf.mxu0
      %v7030 = vadd.f32 0.0, %v7029
      %7031 = vmatmul.f32.gmra.mxu0 %v6920
      %v7032 = vpop.f32.mrf.mxu0
      %v7033 = vadd.f32 0.0, %v7032
      %7034 = vmatmul.f32.gmra.mxu0 %v6923
      %v7035 = vpop.f32.mrf.mxu0
      %v7036 = vadd.f32 0.0, %v7035
      %7037 = vmatmul.f32.gmra.mxu0 %v6926
      %v7038 = vpop.f32.mrf.mxu0
      %v7039 = vadd.f32 0.0, %v7038
      %7040 = vmatmul.f32.gmra.mxu0 %v6929
      %v7041 = vpop.f32.mrf.mxu0
      %v7042 = vadd.f32 0.0, %v7041
      %7043 = vmatmul.f32.gmra.mxu0 %v6932
      %v7044 = vpop.f32.mrf.mxu0
      %v7045 = vadd.f32 0.0, %v7044
      %7046 = vmatmul.f32.gmra.mxu0 %v6935
      %v7047 = vpop.f32.mrf.mxu0
      %v7048 = vadd.f32 0.0, %v7047
      %7049 = vmatmul.f32.gmra.mxu0 %v6938
      %v7050 = vpop.f32.mrf.mxu0
      %v7051 = vadd.f32 0.0, %v7050
      %7052 = vmatmul.f32.gmra.mxu0 %v6941
      %v7053 = vpop.f32.mrf.mxu0
      %v7054 = vadd.f32 0.0, %v7053
      %7055 = vmatmul.f32.gmra.mxu0 %v6944
      %v7056 = vpop.f32.mrf.mxu0
      %v7057 = vadd.f32 0.0, %v7056
      %7058 = vmatmul.f32.gmra.mxu0 %v6947
      %v7059 = vpop.f32.mrf.mxu0
      %v7060 = vadd.f32 0.0, %v7059
      %7061 = vmatmul.f32.gmra.mxu0 %v6950
      %v7062 = vpop.f32.mrf.mxu0
      %v7063 = vadd.f32 0.0, %v7062
      %7064 = vmatmul.f32.gmra.mxu0 %v6953
      %v7065 = vpop.f32.mrf.mxu0
      %v7066 = vadd.f32 0.0, %v7065
      %7067 = vmatmul.f32.gmra.mxu0 %v6956
      %v7068 = vpop.f32.mrf.mxu0
      %v7069 = vadd.f32 0.0, %v7068
      %7070 = vmatmul.f32.gmra.mxu0 %v6959
      %v7071 = vpop.f32.mrf.mxu0
      %v7072 = vadd.f32 0.0, %v7071
      %7073 = vmatmul.f32.gmra.mxu0 %v6962
      %v7074 = vpop.f32.mrf.mxu0
      %v7075 = vadd.f32 0.0, %v7074
      %7076 = vdwg.mxu0
      %s7077 = scalar_lea.vmem %s11, 80
      %v7078 = vld [vmem:[%s7077] sm:$0xff]
      %v7079 = vld [vmem:[%s7077 + $0x8] sm:$0xff]
      %v7081 = vsel %vm2270, %v6982, 0
      %v7084 = vsel %vm2270, %v6985, 0
      %v7087 = vsel %vm2270, %v6988, 0
      %v7090 = vsel %vm2270, %v6991, 0
      %v7093 = vsel %vm2270, %v6994, 0
      %v7096 = vsel %vm2270, %v6997, 0
      %v7099 = vsel %vm2270, %v7000, 0
      %v7102 = vsel %vm2270, %v7003, 0
      %v7105 = vsel %vm2270, %v7006, 0
      %v7108 = vsel %vm2270, %v7009, 0
      %v7111 = vsel %vm2270, %v7012, 0
      %v7114 = vsel %vm2270, %v7015, 0
      %v7117 = vsel %vm2270, %v7018, 0
      %v7120 = vsel %vm2270, %v7021, 0
      %v7123 = vsel %vm2270, %v7024, 0
      %v7126 = vsel %vm2270, %v7027, 0
      %v7129 = vsel %vm2270, %v7030, 0
      %v7132 = vsel %vm2270, %v7033, 0
      %v7135 = vsel %vm2270, %v7036, 0
      %v7138 = vsel %vm2270, %v7039, 0
      %v7141 = vsel %vm2270, %v7042, 0
      %v7144 = vsel %vm2270, %v7045, 0
      %v7147 = vsel %vm2270, %v7048, 0
      %v7150 = vsel %vm2270, %v7051, 0
      %v7153 = vsel %vm2270, %v7054, 0
      %v7156 = vsel %vm2270, %v7057, 0
      %v7159 = vsel %vm2270, %v7060, 0
      %v7162 = vsel %vm2270, %v7063, 0
      %v7165 = vsel %vm2270, %v7066, 0
      %v7168 = vsel %vm2270, %v7069, 0
      %v7171 = vsel %vm2270, %v7072, 0
      %v7174 = vsel %vm2270, %v7075, 0
      %7176 = vmatpush.msra.mxu0 0.0
      %7177 = vmatpush.msra.mxu0 0.0
      %7178 = vmatpush.msra.mxu0 0.0
      %7179 = vmatpush.msra.mxu0 0.0
      %7180 = vmatpush.msra.mxu0 0.0
      %7181 = vmatpush.msra.mxu0 0.0
      %7182 = vmatpush.msra.mxu0 0.0
      %7183 = vmatpush.msra.mxu0 0.0
      %7184 = vmatpush.msra.mxu0 0.0
      %7185 = vmatpush.msra.mxu0 0.0
      %7186 = vmatpush.msra.mxu0 0.0
      %7187 = vmatpush.msra.mxu0 0.0
      %7188 = vmatpush.msra.mxu0 0.0
      %7189 = vmatpush.msra.mxu0 0.0
      %7190 = vmatpush.msra.mxu0 %v7079
      %7191 = vmatpush.msra.mxu0 %v7078
      %7192 = vmatmul.f32.gmra.mxu0 %v7081
      %v7193 = vpop.f32.mrf.mxu0
      %v7194 = vadd.f32 0.0, %v7193
      %7195 = vmatmul.f32.gmra.mxu0 %v7084
      %v7196 = vpop.f32.mrf.mxu0
      %v7197 = vadd.f32 0.0, %v7196
      %7198 = vmatmul.f32.gmra.mxu0 %v7087
      %v7199 = vpop.f32.mrf.mxu0
      %v7200 = vadd.f32 0.0, %v7199
      %7201 = vmatmul.f32.gmra.mxu0 %v7090
      %v7202 = vpop.f32.mrf.mxu0
      %v7203 = vadd.f32 0.0, %v7202
      %7204 = vmatmul.f32.gmra.mxu0 %v7093
      %v7205 = vpop.f32.mrf.mxu0
      %v7206 = vadd.f32 0.0, %v7205
      %7207 = vmatmul.f32.gmra.mxu0 %v7096
      %v7208 = vpop.f32.mrf.mxu0
      %v7209 = vadd.f32 0.0, %v7208
      %7210 = vmatmul.f32.gmra.mxu0 %v7099
      %v7211 = vpop.f32.mrf.mxu0
      %v7212 = vadd.f32 0.0, %v7211
      %7213 = vmatmul.f32.gmra.mxu0 %v7102
      %v7214 = vpop.f32.mrf.mxu0
      %v7215 = vadd.f32 0.0, %v7214
      %7216 = vmatmul.f32.gmra.mxu0 %v7105
      %v7217 = vpop.f32.mrf.mxu0
      %v7218 = vadd.f32 0.0, %v7217
      %7219 = vmatmul.f32.gmra.mxu0 %v7108
      %v7220 = vpop.f32.mrf.mxu0
      %v7221 = vadd.f32 0.0, %v7220
      %7222 = vmatmul.f32.gmra.mxu0 %v7111
      %v7223 = vpop.f32.mrf.mxu0
      %v7224 = vadd.f32 0.0, %v7223
      %7225 = vmatmul.f32.gmra.mxu0 %v7114
      %v7226 = vpop.f32.mrf.mxu0
      %v7227 = vadd.f32 0.0, %v7226
      %7228 = vmatmul.f32.gmra.mxu0 %v7117
      %v7229 = vpop.f32.mrf.mxu0
      %v7230 = vadd.f32 0.0, %v7229
      %7231 = vmatmul.f32.gmra.mxu0 %v7120
      %v7232 = vpop.f32.mrf.mxu0
      %v7233 = vadd.f32 0.0, %v7232
      %7234 = vmatmul.f32.gmra.mxu0 %v7123
      %v7235 = vpop.f32.mrf.mxu0
      %v7236 = vadd.f32 0.0, %v7235
      %7237 = vmatmul.f32.gmra.mxu0 %v7126
      %v7238 = vpop.f32.mrf.mxu0
      %v7239 = vadd.f32 0.0, %v7238
      %7240 = vmatmul.f32.gmra.mxu0 %v7129
      %v7241 = vpop.f32.mrf.mxu0
      %v7242 = vadd.f32 0.0, %v7241
      %7243 = vmatmul.f32.gmra.mxu0 %v7132
      %v7244 = vpop.f32.mrf.mxu0
      %v7245 = vadd.f32 0.0, %v7244
      %7246 = vmatmul.f32.gmra.mxu0 %v7135
      %v7247 = vpop.f32.mrf.mxu0
      %v7248 = vadd.f32 0.0, %v7247
      %7249 = vmatmul.f32.gmra.mxu0 %v7138
      %v7250 = vpop.f32.mrf.mxu0
      %v7251 = vadd.f32 0.0, %v7250
      %7252 = vmatmul.f32.gmra.mxu0 %v7141
      %v7253 = vpop.f32.mrf.mxu0
      %v7254 = vadd.f32 0.0, %v7253
      %7255 = vmatmul.f32.gmra.mxu0 %v7144
      %v7256 = vpop.f32.mrf.mxu0
      %v7257 = vadd.f32 0.0, %v7256
      %7258 = vmatmul.f32.gmra.mxu0 %v7147
      %v7259 = vpop.f32.mrf.mxu0
      %v7260 = vadd.f32 0.0, %v7259
      %7261 = vmatmul.f32.gmra.mxu0 %v7150
      %v7262 = vpop.f32.mrf.mxu0
      %v7263 = vadd.f32 0.0, %v7262
      %7264 = vmatmul.f32.gmra.mxu0 %v7153
      %v7265 = vpop.f32.mrf.mxu0
      %v7266 = vadd.f32 0.0, %v7265
      %7267 = vmatmul.f32.gmra.mxu0 %v7156
      %v7268 = vpop.f32.mrf.mxu0
      %v7269 = vadd.f32 0.0, %v7268
      %7270 = vmatmul.f32.gmra.mxu0 %v7159
      %v7271 = vpop.f32.mrf.mxu0
      %v7272 = vadd.f32 0.0, %v7271
      %7273 = vmatmul.f32.gmra.mxu0 %v7162
      %v7274 = vpop.f32.mrf.mxu0
      %v7275 = vadd.f32 0.0, %v7274
      %7276 = vmatmul.f32.gmra.mxu0 %v7165
      %v7277 = vpop.f32.mrf.mxu0
      %v7278 = vadd.f32 0.0, %v7277
      %7279 = vmatmul.f32.gmra.mxu0 %v7168
      %v7280 = vpop.f32.mrf.mxu0
      %v7281 = vadd.f32 0.0, %v7280
      %7282 = vmatmul.f32.gmra.mxu0 %v7171
      %v7283 = vpop.f32.mrf.mxu0
      %v7284 = vadd.f32 0.0, %v7283
      %7285 = vmatmul.f32.gmra.mxu0 %v7174
      %v7286 = vpop.f32.mrf.mxu0
      %v7287 = vadd.f32 0.0, %v7286
      %7288 = vdwg.mxu0
      %v7289 = vadd.f32 %v6803, %v7194
      %v7290 = vadd.f32 %v6804, %v7197
      %v7291 = vadd.f32 %v6805, %v7200
      %v7292 = vadd.f32 %v6806, %v7203
      %v7293 = vadd.f32 %v6807, %v7206
      %v7294 = vadd.f32 %v6808, %v7209
      %v7295 = vadd.f32 %v6809, %v7212
      %v7296 = vadd.f32 %v6810, %v7215
      %v7297 = vadd.f32 %v6811, %v7218
      %v7298 = vadd.f32 %v6812, %v7221
      %v7299 = vadd.f32 %v6813, %v7224
      %v7300 = vadd.f32 %v6814, %v7227
      %v7301 = vadd.f32 %v6815, %v7230
      %v7302 = vadd.f32 %v6816, %v7233
      %v7303 = vadd.f32 %v6817, %v7236
      %v7304 = vadd.f32 %v6818, %v7239
      %v7305 = vadd.f32 %v6819, %v7242
      %v7306 = vadd.f32 %v6820, %v7245
      %v7307 = vadd.f32 %v6821, %v7248
      %v7308 = vadd.f32 %v6822, %v7251
      %v7309 = vadd.f32 %v6823, %v7254
      %v7310 = vadd.f32 %v6824, %v7257
      %v7311 = vadd.f32 %v6825, %v7260
      %v7312 = vadd.f32 %v6826, %v7263
      %v7313 = vadd.f32 %v6827, %v7266
      %v7314 = vadd.f32 %v6828, %v7269
      %v7315 = vadd.f32 %v6829, %v7272
      %v7316 = vadd.f32 %v6830, %v7275
      %v7317 = vadd.f32 %v6831, %v7278
      %v7318 = vadd.f32 %v6832, %v7281
      %v7319 = vadd.f32 %v6833, %v7284
      %v7320 = vadd.f32 %v6834, %v7287
      %s7321 = scalar_lea.vmem %s10, 1536
      %v7322 = vld [vmem:[%s7321] sm:$0xff]
      %v7323 = vld [vmem:[%s7321 + $0x8] sm:$0xff]
      %v7324 = vld [vmem:[%s7321 + $0x10] sm:$0xff]
      %v7325 = vld [vmem:[%s7321 + $0x18] sm:$0xff]
      %v7326 = vld [vmem:[%s7321 + $0x20] sm:$0xff]
      %v7327 = vld [vmem:[%s7321 + $0x28] sm:$0xff]
      %v7328 = vld [vmem:[%s7321 + $0x30] sm:$0xff]
      %v7329 = vld [vmem:[%s7321 + $0x38] sm:$0xff]
      %v7330 = vld [vmem:[%s7321 + $0x40] sm:$0xff]
      %v7331 = vld [vmem:[%s7321 + $0x48] sm:$0xff]
      %v7332 = vld [vmem:[%s7321 + $0x50] sm:$0xff]
      %v7333 = vld [vmem:[%s7321 + $0x58] sm:$0xff]
      %v7334 = vld [vmem:[%s7321 + $0x60] sm:$0xff]
      %v7335 = vld [vmem:[%s7321 + $0x68] sm:$0xff]
      %v7336 = vld [vmem:[%s7321 + $0x70] sm:$0xff]
      %v7337 = vld [vmem:[%s7321 + $0x78] sm:$0xff]
      %v7338 = vld [vmem:[%s7321 + $0x80] sm:$0xff]
      %v7339 = vld [vmem:[%s7321 + $0x88] sm:$0xff]
      %v7340 = vld [vmem:[%s7321 + $0x90] sm:$0xff]
      %v7341 = vld [vmem:[%s7321 + $0x98] sm:$0xff]
      %v7342 = vld [vmem:[%s7321 + $0xa0] sm:$0xff]
      %v7343 = vld [vmem:[%s7321 + $0xa8] sm:$0xff]
      %v7344 = vld [vmem:[%s7321 + $0xb0] sm:$0xff]
      %v7345 = vld [vmem:[%s7321 + $0xb8] sm:$0xff]
      %v7346 = vld [vmem:[%s7321 + $0xc0] sm:$0xff]
      %v7347 = vld [vmem:[%s7321 + $0xc8] sm:$0xff]
      %v7348 = vld [vmem:[%s7321 + $0xd0] sm:$0xff]
      %v7349 = vld [vmem:[%s7321 + $0xd8] sm:$0xff]
      %v7350 = vld [vmem:[%s7321 + $0xe0] sm:$0xff]
      %v7351 = vld [vmem:[%s7321 + $0xe8] sm:$0xff]
      %v7352 = vld [vmem:[%s7321 + $0xf0] sm:$0xff]
      %v7353 = vld [vmem:[%s7321 + $0xf8] sm:$0xff]
      %v7355 = vsel %vm2238, %v7322, 0
      %v7358 = vsel %vm2238, %v7323, 0
      %v7361 = vsel %vm2238, %v7324, 0
      %v7364 = vsel %vm2238, %v7325, 0
      %v7367 = vsel %vm2238, %v7326, 0
      %v7370 = vsel %vm2238, %v7327, 0
      %v7373 = vsel %vm2238, %v7328, 0
      %v7376 = vsel %vm2238, %v7329, 0
      %v7379 = vsel %vm2238, %v7330, 0
      %v7382 = vsel %vm2238, %v7331, 0
      %v7385 = vsel %vm2238, %v7332, 0
      %v7388 = vsel %vm2238, %v7333, 0
      %v7391 = vsel %vm2238, %v7334, 0
      %v7394 = vsel %vm2238, %v7335, 0
      %v7397 = vsel %vm2238, %v7336, 0
      %v7400 = vsel %vm2238, %v7337, 0
      %v7403 = vsel %vm2238, %v7338, 0
      %v7406 = vsel %vm2238, %v7339, 0
      %v7409 = vsel %vm2238, %v7340, 0
      %v7412 = vsel %vm2238, %v7341, 0
      %v7415 = vsel %vm2238, %v7342, 0
      %v7418 = vsel %vm2238, %v7343, 0
      %v7421 = vsel %vm2238, %v7344, 0
      %v7424 = vsel %vm2238, %v7345, 0
      %v7427 = vsel %vm2238, %v7346, 0
      %v7430 = vsel %vm2238, %v7347, 0
      %v7433 = vsel %vm2238, %v7348, 0
      %v7436 = vsel %vm2238, %v7349, 0
      %v7439 = vsel %vm2238, %v7350, 0
      %v7442 = vsel %vm2238, %v7351, 0
      %v7445 = vsel %vm2238, %v7352, 0
      %v7448 = vsel %vm2238, %v7353, 0
      %7450 = vmatpush.msra.mxu0 0.0
      %7451 = vmatpush.msra.mxu0 0.0
      %7452 = vmatpush.msra.mxu0 0.0
      %7453 = vmatpush.msra.mxu0 0.0
      %7454 = vmatpush.msra.mxu0 0.0
      %7455 = vmatpush.msra.mxu0 0.0
      %7456 = vmatpush.msra.mxu0 0.0
      %7457 = vmatpush.msra.mxu0 0.0
      %7458 = vmatpush.msra.mxu0 %v4401
      %7459 = vmatpush.msra.mxu0 %v4400
      %7460 = vmatpush.msra.mxu0 %v4399
      %7461 = vmatpush.msra.mxu0 %v4398
      %7462 = vmatpush.msra.mxu0 %v4397
      %7463 = vmatpush.msra.mxu0 %v4396
      %7464 = vmatpush.msra.mxu0 %v4395
      %7465 = vmatpush.msra.mxu0 %v4394
      %7466 = vmatmul.f32.gmra.mxu0 %v7355
      %v7467 = vpop.f32.mrf.mxu0
      %v7468 = vadd.f32 0.0, %v7467
      %7469 = vmatmul.f32.gmra.mxu0 %v7358
      %v7470 = vpop.f32.mrf.mxu0
      %v7471 = vadd.f32 0.0, %v7470
      %7472 = vmatmul.f32.gmra.mxu0 %v7361
      %v7473 = vpop.f32.mrf.mxu0
      %v7474 = vadd.f32 0.0, %v7473
      %7475 = vmatmul.f32.gmra.mxu0 %v7364
      %v7476 = vpop.f32.mrf.mxu0
      %v7477 = vadd.f32 0.0, %v7476
      %7478 = vmatmul.f32.gmra.mxu0 %v7367
      %v7479 = vpop.f32.mrf.mxu0
      %v7480 = vadd.f32 0.0, %v7479
      %7481 = vmatmul.f32.gmra.mxu0 %v7370
      %v7482 = vpop.f32.mrf.mxu0
      %v7483 = vadd.f32 0.0, %v7482
      %7484 = vmatmul.f32.gmra.mxu0 %v7373
      %v7485 = vpop.f32.mrf.mxu0
      %v7486 = vadd.f32 0.0, %v7485
      %7487 = vmatmul.f32.gmra.mxu0 %v7376
      %v7488 = vpop.f32.mrf.mxu0
      %v7489 = vadd.f32 0.0, %v7488
      %7490 = vmatmul.f32.gmra.mxu0 %v7379
      %v7491 = vpop.f32.mrf.mxu0
      %v7492 = vadd.f32 0.0, %v7491
      %7493 = vmatmul.f32.gmra.mxu0 %v7382
      %v7494 = vpop.f32.mrf.mxu0
      %v7495 = vadd.f32 0.0, %v7494
      %7496 = vmatmul.f32.gmra.mxu0 %v7385
      %v7497 = vpop.f32.mrf.mxu0
      %v7498 = vadd.f32 0.0, %v7497
      %7499 = vmatmul.f32.gmra.mxu0 %v7388
      %v7500 = vpop.f32.mrf.mxu0
      %v7501 = vadd.f32 0.0, %v7500
      %7502 = vmatmul.f32.gmra.mxu0 %v7391
      %v7503 = vpop.f32.mrf.mxu0
      %v7504 = vadd.f32 0.0, %v7503
      %7505 = vmatmul.f32.gmra.mxu0 %v7394
      %v7506 = vpop.f32.mrf.mxu0
      %v7507 = vadd.f32 0.0, %v7506
      %7508 = vmatmul.f32.gmra.mxu0 %v7397
      %v7509 = vpop.f32.mrf.mxu0
      %v7510 = vadd.f32 0.0, %v7509
      %7511 = vmatmul.f32.gmra.mxu0 %v7400
      %v7512 = vpop.f32.mrf.mxu0
      %v7513 = vadd.f32 0.0, %v7512
      %7514 = vmatmul.f32.gmra.mxu0 %v7403
      %v7515 = vpop.f32.mrf.mxu0
      %v7516 = vadd.f32 0.0, %v7515
      %7517 = vmatmul.f32.gmra.mxu0 %v7406
      %v7518 = vpop.f32.mrf.mxu0
      %v7519 = vadd.f32 0.0, %v7518
      %7520 = vmatmul.f32.gmra.mxu0 %v7409
      %v7521 = vpop.f32.mrf.mxu0
      %v7522 = vadd.f32 0.0, %v7521
      %7523 = vmatmul.f32.gmra.mxu0 %v7412
      %v7524 = vpop.f32.mrf.mxu0
      %v7525 = vadd.f32 0.0, %v7524
      %7526 = vmatmul.f32.gmra.mxu0 %v7415
      %v7527 = vpop.f32.mrf.mxu0
      %v7528 = vadd.f32 0.0, %v7527
      %7529 = vmatmul.f32.gmra.mxu0 %v7418
      %v7530 = vpop.f32.mrf.mxu0
      %v7531 = vadd.f32 0.0, %v7530
      %7532 = vmatmul.f32.gmra.mxu0 %v7421
      %v7533 = vpop.f32.mrf.mxu0
      %v7534 = vadd.f32 0.0, %v7533
      %7535 = vmatmul.f32.gmra.mxu0 %v7424
      %v7536 = vpop.f32.mrf.mxu0
      %v7537 = vadd.f32 0.0, %v7536
      %7538 = vmatmul.f32.gmra.mxu0 %v7427
      %v7539 = vpop.f32.mrf.mxu0
      %v7540 = vadd.f32 0.0, %v7539
      %7541 = vmatmul.f32.gmra.mxu0 %v7430
      %v7542 = vpop.f32.mrf.mxu0
      %v7543 = vadd.f32 0.0, %v7542
      %7544 = vmatmul.f32.gmra.mxu0 %v7433
      %v7545 = vpop.f32.mrf.mxu0
      %v7546 = vadd.f32 0.0, %v7545
      %7547 = vmatmul.f32.gmra.mxu0 %v7436
      %v7548 = vpop.f32.mrf.mxu0
      %v7549 = vadd.f32 0.0, %v7548
      %7550 = vmatmul.f32.gmra.mxu0 %v7439
      %v7551 = vpop.f32.mrf.mxu0
      %v7552 = vadd.f32 0.0, %v7551
      %7553 = vmatmul.f32.gmra.mxu0 %v7442
      %v7554 = vpop.f32.mrf.mxu0
      %v7555 = vadd.f32 0.0, %v7554
      %7556 = vmatmul.f32.gmra.mxu0 %v7445
      %v7557 = vpop.f32.mrf.mxu0
      %v7558 = vadd.f32 0.0, %v7557
      %7559 = vmatmul.f32.gmra.mxu0 %v7448
      %v7560 = vpop.f32.mrf.mxu0
      %v7561 = vadd.f32 0.0, %v7560
      %7562 = vdwg.mxu0
      %s7563 = scalar_lea.vmem %s11, 96
      %v7564 = vld [vmem:[%s7563] sm:$0xff]
      %v7565 = vld [vmem:[%s7563 + $0x8] sm:$0xff]
      %v7567 = vsel %vm2270, %v7468, 0
      %v7570 = vsel %vm2270, %v7471, 0
      %v7573 = vsel %vm2270, %v7474, 0
      %v7576 = vsel %vm2270, %v7477, 0
      %v7579 = vsel %vm2270, %v7480, 0
      %v7582 = vsel %vm2270, %v7483, 0
      %v7585 = vsel %vm2270, %v7486, 0
      %v7588 = vsel %vm2270, %v7489, 0
      %v7591 = vsel %vm2270, %v7492, 0
      %v7594 = vsel %vm2270, %v7495, 0
      %v7597 = vsel %vm2270, %v7498, 0
      %v7600 = vsel %vm2270, %v7501, 0
      %v7603 = vsel %vm2270, %v7504, 0
      %v7606 = vsel %vm2270, %v7507, 0
      %v7609 = vsel %vm2270, %v7510, 0
      %v7612 = vsel %vm2270, %v7513, 0
      %v7615 = vsel %vm2270, %v7516, 0
      %v7618 = vsel %vm2270, %v7519, 0
      %v7621 = vsel %vm2270, %v7522, 0
      %v7624 = vsel %vm2270, %v7525, 0
      %v7627 = vsel %vm2270, %v7528, 0
      %v7630 = vsel %vm2270, %v7531, 0
      %v7633 = vsel %vm2270, %v7534, 0
      %v7636 = vsel %vm2270, %v7537, 0
      %v7639 = vsel %vm2270, %v7540, 0
      %v7642 = vsel %vm2270, %v7543, 0
      %v7645 = vsel %vm2270, %v7546, 0
      %v7648 = vsel %vm2270, %v7549, 0
      %v7651 = vsel %vm2270, %v7552, 0
      %v7654 = vsel %vm2270, %v7555, 0
      %v7657 = vsel %vm2270, %v7558, 0
      %v7660 = vsel %vm2270, %v7561, 0
      %7662 = vmatpush.msra.mxu0 0.0
      %7663 = vmatpush.msra.mxu0 0.0
      %7664 = vmatpush.msra.mxu0 0.0
      %7665 = vmatpush.msra.mxu0 0.0
      %7666 = vmatpush.msra.mxu0 0.0
      %7667 = vmatpush.msra.mxu0 0.0
      %7668 = vmatpush.msra.mxu0 0.0
      %7669 = vmatpush.msra.mxu0 0.0
      %7670 = vmatpush.msra.mxu0 0.0
      %7671 = vmatpush.msra.mxu0 0.0
      %7672 = vmatpush.msra.mxu0 0.0
      %7673 = vmatpush.msra.mxu0 0.0
      %7674 = vmatpush.msra.mxu0 0.0
      %7675 = vmatpush.msra.mxu0 0.0
      %7676 = vmatpush.msra.mxu0 %v7565
      %7677 = vmatpush.msra.mxu0 %v7564
      %7678 = vmatmul.f32.gmra.mxu0 %v7567
      %v7679 = vpop.f32.mrf.mxu0
      %v7680 = vadd.f32 0.0, %v7679
      %7681 = vmatmul.f32.gmra.mxu0 %v7570
      %v7682 = vpop.f32.mrf.mxu0
      %v7683 = vadd.f32 0.0, %v7682
      %7684 = vmatmul.f32.gmra.mxu0 %v7573
      %v7685 = vpop.f32.mrf.mxu0
      %v7686 = vadd.f32 0.0, %v7685
      %7687 = vmatmul.f32.gmra.mxu0 %v7576
      %v7688 = vpop.f32.mrf.mxu0
      %v7689 = vadd.f32 0.0, %v7688
      %7690 = vmatmul.f32.gmra.mxu0 %v7579
      %v7691 = vpop.f32.mrf.mxu0
      %v7692 = vadd.f32 0.0, %v7691
      %7693 = vmatmul.f32.gmra.mxu0 %v7582
      %v7694 = vpop.f32.mrf.mxu0
      %v7695 = vadd.f32 0.0, %v7694
      %7696 = vmatmul.f32.gmra.mxu0 %v7585
      %v7697 = vpop.f32.mrf.mxu0
      %v7698 = vadd.f32 0.0, %v7697
      %7699 = vmatmul.f32.gmra.mxu0 %v7588
      %v7700 = vpop.f32.mrf.mxu0
      %v7701 = vadd.f32 0.0, %v7700
      %7702 = vmatmul.f32.gmra.mxu0 %v7591
      %v7703 = vpop.f32.mrf.mxu0
      %v7704 = vadd.f32 0.0, %v7703
      %7705 = vmatmul.f32.gmra.mxu0 %v7594
      %v7706 = vpop.f32.mrf.mxu0
      %v7707 = vadd.f32 0.0, %v7706
      %7708 = vmatmul.f32.gmra.mxu0 %v7597
      %v7709 = vpop.f32.mrf.mxu0
      %v7710 = vadd.f32 0.0, %v7709
      %7711 = vmatmul.f32.gmra.mxu0 %v7600
      %v7712 = vpop.f32.mrf.mxu0
      %v7713 = vadd.f32 0.0, %v7712
      %7714 = vmatmul.f32.gmra.mxu0 %v7603
      %v7715 = vpop.f32.mrf.mxu0
      %v7716 = vadd.f32 0.0, %v7715
      %7717 = vmatmul.f32.gmra.mxu0 %v7606
      %v7718 = vpop.f32.mrf.mxu0
      %v7719 = vadd.f32 0.0, %v7718
      %7720 = vmatmul.f32.gmra.mxu0 %v7609
      %v7721 = vpop.f32.mrf.mxu0
      %v7722 = vadd.f32 0.0, %v7721
      %7723 = vmatmul.f32.gmra.mxu0 %v7612
      %v7724 = vpop.f32.mrf.mxu0
      %v7725 = vadd.f32 0.0, %v7724
      %7726 = vmatmul.f32.gmra.mxu0 %v7615
      %v7727 = vpop.f32.mrf.mxu0
      %v7728 = vadd.f32 0.0, %v7727
      %7729 = vmatmul.f32.gmra.mxu0 %v7618
      %v7730 = vpop.f32.mrf.mxu0
      %v7731 = vadd.f32 0.0, %v7730
      %7732 = vmatmul.f32.gmra.mxu0 %v7621
      %v7733 = vpop.f32.mrf.mxu0
      %v7734 = vadd.f32 0.0, %v7733
      %7735 = vmatmul.f32.gmra.mxu0 %v7624
      %v7736 = vpop.f32.mrf.mxu0
      %v7737 = vadd.f32 0.0, %v7736
      %7738 = vmatmul.f32.gmra.mxu0 %v7627
      %v7739 = vpop.f32.mrf.mxu0
      %v7740 = vadd.f32 0.0, %v7739
      %7741 = vmatmul.f32.gmra.mxu0 %v7630
      %v7742 = vpop.f32.mrf.mxu0
      %v7743 = vadd.f32 0.0, %v7742
      %7744 = vmatmul.f32.gmra.mxu0 %v7633
      %v7745 = vpop.f32.mrf.mxu0
      %v7746 = vadd.f32 0.0, %v7745
      %7747 = vmatmul.f32.gmra.mxu0 %v7636
      %v7748 = vpop.f32.mrf.mxu0
      %v7749 = vadd.f32 0.0, %v7748
      %7750 = vmatmul.f32.gmra.mxu0 %v7639
      %v7751 = vpop.f32.mrf.mxu0
      %v7752 = vadd.f32 0.0, %v7751
      %7753 = vmatmul.f32.gmra.mxu0 %v7642
      %v7754 = vpop.f32.mrf.mxu0
      %v7755 = vadd.f32 0.0, %v7754
      %7756 = vmatmul.f32.gmra.mxu0 %v7645
      %v7757 = vpop.f32.mrf.mxu0
      %v7758 = vadd.f32 0.0, %v7757
      %7759 = vmatmul.f32.gmra.mxu0 %v7648
      %v7760 = vpop.f32.mrf.mxu0
      %v7761 = vadd.f32 0.0, %v7760
      %7762 = vmatmul.f32.gmra.mxu0 %v7651
      %v7763 = vpop.f32.mrf.mxu0
      %v7764 = vadd.f32 0.0, %v7763
      %7765 = vmatmul.f32.gmra.mxu0 %v7654
      %v7766 = vpop.f32.mrf.mxu0
      %v7767 = vadd.f32 0.0, %v7766
      %7768 = vmatmul.f32.gmra.mxu0 %v7657
      %v7769 = vpop.f32.mrf.mxu0
      %v7770 = vadd.f32 0.0, %v7769
      %7771 = vmatmul.f32.gmra.mxu0 %v7660
      %v7772 = vpop.f32.mrf.mxu0
      %v7773 = vadd.f32 0.0, %v7772
      %7774 = vdwg.mxu0
      %v7775 = vadd.f32 %v7289, %v7680
      %v7776 = vadd.f32 %v7290, %v7683
      %v7777 = vadd.f32 %v7291, %v7686
      %v7778 = vadd.f32 %v7292, %v7689
      %v7779 = vadd.f32 %v7293, %v7692
      %v7780 = vadd.f32 %v7294, %v7695
      %v7781 = vadd.f32 %v7295, %v7698
      %v7782 = vadd.f32 %v7296, %v7701
      %v7783 = vadd.f32 %v7297, %v7704
      %v7784 = vadd.f32 %v7298, %v7707
      %v7785 = vadd.f32 %v7299, %v7710
      %v7786 = vadd.f32 %v7300, %v7713
      %v7787 = vadd.f32 %v7301, %v7716
      %v7788 = vadd.f32 %v7302, %v7719
      %v7789 = vadd.f32 %v7303, %v7722
      %v7790 = vadd.f32 %v7304, %v7725
      %v7791 = vadd.f32 %v7305, %v7728
      %v7792 = vadd.f32 %v7306, %v7731
      %v7793 = vadd.f32 %v7307, %v7734
      %v7794 = vadd.f32 %v7308, %v7737
      %v7795 = vadd.f32 %v7309, %v7740
      %v7796 = vadd.f32 %v7310, %v7743
      %v7797 = vadd.f32 %v7311, %v7746
      %v7798 = vadd.f32 %v7312, %v7749
      %v7799 = vadd.f32 %v7313, %v7752
      %v7800 = vadd.f32 %v7314, %v7755
      %v7801 = vadd.f32 %v7315, %v7758
      %v7802 = vadd.f32 %v7316, %v7761
      %v7803 = vadd.f32 %v7317, %v7764
      %v7804 = vadd.f32 %v7318, %v7767
      %v7805 = vadd.f32 %v7319, %v7770
      %v7806 = vadd.f32 %v7320, %v7773
      %s7807 = scalar_lea.vmem %s10, 1792
      %v7808 = vld [vmem:[%s7807] sm:$0xff]
      %v7809 = vld [vmem:[%s7807 + $0x8] sm:$0xff]
      %v7810 = vld [vmem:[%s7807 + $0x10] sm:$0xff]
      %v7811 = vld [vmem:[%s7807 + $0x18] sm:$0xff]
      %v7812 = vld [vmem:[%s7807 + $0x20] sm:$0xff]
      %v7813 = vld [vmem:[%s7807 + $0x28] sm:$0xff]
      %v7814 = vld [vmem:[%s7807 + $0x30] sm:$0xff]
      %v7815 = vld [vmem:[%s7807 + $0x38] sm:$0xff]
      %v7816 = vld [vmem:[%s7807 + $0x40] sm:$0xff]
      %v7817 = vld [vmem:[%s7807 + $0x48] sm:$0xff]
      %v7818 = vld [vmem:[%s7807 + $0x50] sm:$0xff]
      %v7819 = vld [vmem:[%s7807 + $0x58] sm:$0xff]
      %v7820 = vld [vmem:[%s7807 + $0x60] sm:$0xff]
      %v7821 = vld [vmem:[%s7807 + $0x68] sm:$0xff]
      %v7822 = vld [vmem:[%s7807 + $0x70] sm:$0xff]
      %v7823 = vld [vmem:[%s7807 + $0x78] sm:$0xff]
      %v7824 = vld [vmem:[%s7807 + $0x80] sm:$0xff]
      %v7825 = vld [vmem:[%s7807 + $0x88] sm:$0xff]
      %v7826 = vld [vmem:[%s7807 + $0x90] sm:$0xff]
      %v7827 = vld [vmem:[%s7807 + $0x98] sm:$0xff]
      %v7828 = vld [vmem:[%s7807 + $0xa0] sm:$0xff]
      %v7829 = vld [vmem:[%s7807 + $0xa8] sm:$0xff]
      %v7830 = vld [vmem:[%s7807 + $0xb0] sm:$0xff]
      %v7831 = vld [vmem:[%s7807 + $0xb8] sm:$0xff]
      %v7832 = vld [vmem:[%s7807 + $0xc0] sm:$0xff]
      %v7833 = vld [vmem:[%s7807 + $0xc8] sm:$0xff]
      %v7834 = vld [vmem:[%s7807 + $0xd0] sm:$0xff]
      %v7835 = vld [vmem:[%s7807 + $0xd8] sm:$0xff]
      %v7836 = vld [vmem:[%s7807 + $0xe0] sm:$0xff]
      %v7837 = vld [vmem:[%s7807 + $0xe8] sm:$0xff]
      %v7838 = vld [vmem:[%s7807 + $0xf0] sm:$0xff]
      %v7839 = vld [vmem:[%s7807 + $0xf8] sm:$0xff]
      %v7841 = vsel %vm2238, %v7808, 0
      %v7844 = vsel %vm2238, %v7809, 0
      %v7847 = vsel %vm2238, %v7810, 0
      %v7850 = vsel %vm2238, %v7811, 0
      %v7853 = vsel %vm2238, %v7812, 0
      %v7856 = vsel %vm2238, %v7813, 0
      %v7859 = vsel %vm2238, %v7814, 0
      %v7862 = vsel %vm2238, %v7815, 0
      %v7865 = vsel %vm2238, %v7816, 0
      %v7868 = vsel %vm2238, %v7817, 0
      %v7871 = vsel %vm2238, %v7818, 0
      %v7874 = vsel %vm2238, %v7819, 0
      %v7877 = vsel %vm2238, %v7820, 0
      %v7880 = vsel %vm2238, %v7821, 0
      %v7883 = vsel %vm2238, %v7822, 0
      %v7886 = vsel %vm2238, %v7823, 0
      %v7889 = vsel %vm2238, %v7824, 0
      %v7892 = vsel %vm2238, %v7825, 0
      %v7895 = vsel %vm2238, %v7826, 0
      %v7898 = vsel %vm2238, %v7827, 0
      %v7901 = vsel %vm2238, %v7828, 0
      %v7904 = vsel %vm2238, %v7829, 0
      %v7907 = vsel %vm2238, %v7830, 0
      %v7910 = vsel %vm2238, %v7831, 0
      %v7913 = vsel %vm2238, %v7832, 0
      %v7916 = vsel %vm2238, %v7833, 0
      %v7919 = vsel %vm2238, %v7834, 0
      %v7922 = vsel %vm2238, %v7835, 0
      %v7925 = vsel %vm2238, %v7836, 0
      %v7928 = vsel %vm2238, %v7837, 0
      %v7931 = vsel %vm2238, %v7838, 0
      %v7934 = vsel %vm2238, %v7839, 0
      %7936 = vmatpush.msra.mxu0 0.0
      %7937 = vmatpush.msra.mxu0 0.0
      %7938 = vmatpush.msra.mxu0 0.0
      %7939 = vmatpush.msra.mxu0 0.0
      %7940 = vmatpush.msra.mxu0 0.0
      %7941 = vmatpush.msra.mxu0 0.0
      %7942 = vmatpush.msra.mxu0 0.0
      %7943 = vmatpush.msra.mxu0 0.0
      %7944 = vmatpush.msra.mxu0 %v4401
      %7945 = vmatpush.msra.mxu0 %v4400
      %7946 = vmatpush.msra.mxu0 %v4399
      %7947 = vmatpush.msra.mxu0 %v4398
      %7948 = vmatpush.msra.mxu0 %v4397
      %7949 = vmatpush.msra.mxu0 %v4396
      %7950 = vmatpush.msra.mxu0 %v4395
      %7951 = vmatpush.msra.mxu0 %v4394
      %7952 = vmatmul.f32.gmra.mxu0 %v7841
      %v7953 = vpop.f32.mrf.mxu0
      %v7954 = vadd.f32 0.0, %v7953
      %7955 = vmatmul.f32.gmra.mxu0 %v7844
      %v7956 = vpop.f32.mrf.mxu0
      %v7957 = vadd.f32 0.0, %v7956
      %7958 = vmatmul.f32.gmra.mxu0 %v7847
      %v7959 = vpop.f32.mrf.mxu0
      %v7960 = vadd.f32 0.0, %v7959
      %7961 = vmatmul.f32.gmra.mxu0 %v7850
      %v7962 = vpop.f32.mrf.mxu0
      %v7963 = vadd.f32 0.0, %v7962
      %7964 = vmatmul.f32.gmra.mxu0 %v7853
      %v7965 = vpop.f32.mrf.mxu0
      %v7966 = vadd.f32 0.0, %v7965
      %7967 = vmatmul.f32.gmra.mxu0 %v7856
      %v7968 = vpop.f32.mrf.mxu0
      %v7969 = vadd.f32 0.0, %v7968
      %7970 = vmatmul.f32.gmra.mxu0 %v7859
      %v7971 = vpop.f32.mrf.mxu0
      %v7972 = vadd.f32 0.0, %v7971
      %7973 = vmatmul.f32.gmra.mxu0 %v7862
      %v7974 = vpop.f32.mrf.mxu0
      %v7975 = vadd.f32 0.0, %v7974
      %7976 = vmatmul.f32.gmra.mxu0 %v7865
      %v7977 = vpop.f32.mrf.mxu0
      %v7978 = vadd.f32 0.0, %v7977
      %7979 = vmatmul.f32.gmra.mxu0 %v7868
      %v7980 = vpop.f32.mrf.mxu0
      %v7981 = vadd.f32 0.0, %v7980
      %7982 = vmatmul.f32.gmra.mxu0 %v7871
      %v7983 = vpop.f32.mrf.mxu0
      %v7984 = vadd.f32 0.0, %v7983
      %7985 = vmatmul.f32.gmra.mxu0 %v7874
      %v7986 = vpop.f32.mrf.mxu0
      %v7987 = vadd.f32 0.0, %v7986
      %7988 = vmatmul.f32.gmra.mxu0 %v7877
      %v7989 = vpop.f32.mrf.mxu0
      %v7990 = vadd.f32 0.0, %v7989
      %7991 = vmatmul.f32.gmra.mxu0 %v7880
      %v7992 = vpop.f32.mrf.mxu0
      %v7993 = vadd.f32 0.0, %v7992
      %7994 = vmatmul.f32.gmra.mxu0 %v7883
      %v7995 = vpop.f32.mrf.mxu0
      %v7996 = vadd.f32 0.0, %v7995
      %7997 = vmatmul.f32.gmra.mxu0 %v7886
      %v7998 = vpop.f32.mrf.mxu0
      %v7999 = vadd.f32 0.0, %v7998
      %8000 = vmatmul.f32.gmra.mxu0 %v7889
      %v8001 = vpop.f32.mrf.mxu0
      %v8002 = vadd.f32 0.0, %v8001
      %8003 = vmatmul.f32.gmra.mxu0 %v7892
      %v8004 = vpop.f32.mrf.mxu0
      %v8005 = vadd.f32 0.0, %v8004
      %8006 = vmatmul.f32.gmra.mxu0 %v7895
      %v8007 = vpop.f32.mrf.mxu0
      %v8008 = vadd.f32 0.0, %v8007
      %8009 = vmatmul.f32.gmra.mxu0 %v7898
      %v8010 = vpop.f32.mrf.mxu0
      %v8011 = vadd.f32 0.0, %v8010
      %8012 = vmatmul.f32.gmra.mxu0 %v7901
      %v8013 = vpop.f32.mrf.mxu0
      %v8014 = vadd.f32 0.0, %v8013
      %8015 = vmatmul.f32.gmra.mxu0 %v7904
      %v8016 = vpop.f32.mrf.mxu0
      %v8017 = vadd.f32 0.0, %v8016
      %8018 = vmatmul.f32.gmra.mxu0 %v7907
      %v8019 = vpop.f32.mrf.mxu0
      %v8020 = vadd.f32 0.0, %v8019
      %8021 = vmatmul.f32.gmra.mxu0 %v7910
      %v8022 = vpop.f32.mrf.mxu0
      %v8023 = vadd.f32 0.0, %v8022
      %8024 = vmatmul.f32.gmra.mxu0 %v7913
      %v8025 = vpop.f32.mrf.mxu0
      %v8026 = vadd.f32 0.0, %v8025
      %8027 = vmatmul.f32.gmra.mxu0 %v7916
      %v8028 = vpop.f32.mrf.mxu0
      %v8029 = vadd.f32 0.0, %v8028
      %8030 = vmatmul.f32.gmra.mxu0 %v7919
      %v8031 = vpop.f32.mrf.mxu0
      %v8032 = vadd.f32 0.0, %v8031
      %8033 = vmatmul.f32.gmra.mxu0 %v7922
      %v8034 = vpop.f32.mrf.mxu0
      %v8035 = vadd.f32 0.0, %v8034
      %8036 = vmatmul.f32.gmra.mxu0 %v7925
      %v8037 = vpop.f32.mrf.mxu0
      %v8038 = vadd.f32 0.0, %v8037
      %8039 = vmatmul.f32.gmra.mxu0 %v7928
      %v8040 = vpop.f32.mrf.mxu0
      %v8041 = vadd.f32 0.0, %v8040
      %8042 = vmatmul.f32.gmra.mxu0 %v7931
      %v8043 = vpop.f32.mrf.mxu0
      %v8044 = vadd.f32 0.0, %v8043
      %8045 = vmatmul.f32.gmra.mxu0 %v7934
      %v8046 = vpop.f32.mrf.mxu0
      %v8047 = vadd.f32 0.0, %v8046
      %8048 = vdwg.mxu0
      %s8049 = scalar_lea.vmem %s11, 112
      %v8050 = vld [vmem:[%s8049] sm:$0xff]
      %v8051 = vld [vmem:[%s8049 + $0x8] sm:$0xff]
      %v8053 = vsel %vm2270, %v7954, 0
      %v8056 = vsel %vm2270, %v7957, 0
      %v8059 = vsel %vm2270, %v7960, 0
      %v8062 = vsel %vm2270, %v7963, 0
      %v8065 = vsel %vm2270, %v7966, 0
      %v8068 = vsel %vm2270, %v7969, 0
      %v8071 = vsel %vm2270, %v7972, 0
      %v8074 = vsel %vm2270, %v7975, 0
      %v8077 = vsel %vm2270, %v7978, 0
      %v8080 = vsel %vm2270, %v7981, 0
      %v8083 = vsel %vm2270, %v7984, 0
      %v8086 = vsel %vm2270, %v7987, 0
      %v8089 = vsel %vm2270, %v7990, 0
      %v8092 = vsel %vm2270, %v7993, 0
      %v8095 = vsel %vm2270, %v7996, 0
      %v8098 = vsel %vm2270, %v7999, 0
      %v8101 = vsel %vm2270, %v8002, 0
      %v8104 = vsel %vm2270, %v8005, 0
      %v8107 = vsel %vm2270, %v8008, 0
      %v8110 = vsel %vm2270, %v8011, 0
      %v8113 = vsel %vm2270, %v8014, 0
      %v8116 = vsel %vm2270, %v8017, 0
      %v8119 = vsel %vm2270, %v8020, 0
      %v8122 = vsel %vm2270, %v8023, 0
      %v8125 = vsel %vm2270, %v8026, 0
      %v8128 = vsel %vm2270, %v8029, 0
      %v8131 = vsel %vm2270, %v8032, 0
      %v8134 = vsel %vm2270, %v8035, 0
      %v8137 = vsel %vm2270, %v8038, 0
      %v8140 = vsel %vm2270, %v8041, 0
      %v8143 = vsel %vm2270, %v8044, 0
      %v8146 = vsel %vm2270, %v8047, 0
      %8148 = vmatpush.msra.mxu0 0.0
      %8149 = vmatpush.msra.mxu0 0.0
      %8150 = vmatpush.msra.mxu0 0.0
      %8151 = vmatpush.msra.mxu0 0.0
      %8152 = vmatpush.msra.mxu0 0.0
      %8153 = vmatpush.msra.mxu0 0.0
      %8154 = vmatpush.msra.mxu0 0.0
      %8155 = vmatpush.msra.mxu0 0.0
      %8156 = vmatpush.msra.mxu0 0.0
      %8157 = vmatpush.msra.mxu0 0.0
      %8158 = vmatpush.msra.mxu0 0.0
      %8159 = vmatpush.msra.mxu0 0.0
      %8160 = vmatpush.msra.mxu0 0.0
      %8161 = vmatpush.msra.mxu0 0.0
      %8162 = vmatpush.msra.mxu0 %v8051
      %8163 = vmatpush.msra.mxu0 %v8050
      %8164 = vmatmul.f32.gmra.mxu0 %v8053
      %v8165 = vpop.f32.mrf.mxu0
      %v8166 = vadd.f32 0.0, %v8165
      %8167 = vmatmul.f32.gmra.mxu0 %v8056
      %v8168 = vpop.f32.mrf.mxu0
      %v8169 = vadd.f32 0.0, %v8168
      %8170 = vmatmul.f32.gmra.mxu0 %v8059
      %v8171 = vpop.f32.mrf.mxu0
      %v8172 = vadd.f32 0.0, %v8171
      %8173 = vmatmul.f32.gmra.mxu0 %v8062
      %v8174 = vpop.f32.mrf.mxu0
      %v8175 = vadd.f32 0.0, %v8174
      %8176 = vmatmul.f32.gmra.mxu0 %v8065
      %v8177 = vpop.f32.mrf.mxu0
      %v8178 = vadd.f32 0.0, %v8177
      %8179 = vmatmul.f32.gmra.mxu0 %v8068
      %v8180 = vpop.f32.mrf.mxu0
      %v8181 = vadd.f32 0.0, %v8180
      %8182 = vmatmul.f32.gmra.mxu0 %v8071
      %v8183 = vpop.f32.mrf.mxu0
      %v8184 = vadd.f32 0.0, %v8183
      %8185 = vmatmul.f32.gmra.mxu0 %v8074
      %v8186 = vpop.f32.mrf.mxu0
      %v8187 = vadd.f32 0.0, %v8186
      %8188 = vmatmul.f32.gmra.mxu0 %v8077
      %v8189 = vpop.f32.mrf.mxu0
      %v8190 = vadd.f32 0.0, %v8189
      %8191 = vmatmul.f32.gmra.mxu0 %v8080
      %v8192 = vpop.f32.mrf.mxu0
      %v8193 = vadd.f32 0.0, %v8192
      %8194 = vmatmul.f32.gmra.mxu0 %v8083
      %v8195 = vpop.f32.mrf.mxu0
      %v8196 = vadd.f32 0.0, %v8195
      %8197 = vmatmul.f32.gmra.mxu0 %v8086
      %v8198 = vpop.f32.mrf.mxu0
      %v8199 = vadd.f32 0.0, %v8198
      %8200 = vmatmul.f32.gmra.mxu0 %v8089
      %v8201 = vpop.f32.mrf.mxu0
      %v8202 = vadd.f32 0.0, %v8201
      %8203 = vmatmul.f32.gmra.mxu0 %v8092
      %v8204 = vpop.f32.mrf.mxu0
      %v8205 = vadd.f32 0.0, %v8204
      %8206 = vmatmul.f32.gmra.mxu0 %v8095
      %v8207 = vpop.f32.mrf.mxu0
      %v8208 = vadd.f32 0.0, %v8207
      %8209 = vmatmul.f32.gmra.mxu0 %v8098
      %v8210 = vpop.f32.mrf.mxu0
      %v8211 = vadd.f32 0.0, %v8210
      %8212 = vmatmul.f32.gmra.mxu0 %v8101
      %v8213 = vpop.f32.mrf.mxu0
      %v8214 = vadd.f32 0.0, %v8213
      %8215 = vmatmul.f32.gmra.mxu0 %v8104
      %v8216 = vpop.f32.mrf.mxu0
      %v8217 = vadd.f32 0.0, %v8216
      %8218 = vmatmul.f32.gmra.mxu0 %v8107
      %v8219 = vpop.f32.mrf.mxu0
      %v8220 = vadd.f32 0.0, %v8219
      %8221 = vmatmul.f32.gmra.mxu0 %v8110
      %v8222 = vpop.f32.mrf.mxu0
      %v8223 = vadd.f32 0.0, %v8222
      %8224 = vmatmul.f32.gmra.mxu0 %v8113
      %v8225 = vpop.f32.mrf.mxu0
      %v8226 = vadd.f32 0.0, %v8225
      %8227 = vmatmul.f32.gmra.mxu0 %v8116
      %v8228 = vpop.f32.mrf.mxu0
      %v8229 = vadd.f32 0.0, %v8228
      %8230 = vmatmul.f32.gmra.mxu0 %v8119
      %v8231 = vpop.f32.mrf.mxu0
      %v8232 = vadd.f32 0.0, %v8231
      %8233 = vmatmul.f32.gmra.mxu0 %v8122
      %v8234 = vpop.f32.mrf.mxu0
      %v8235 = vadd.f32 0.0, %v8234
      %8236 = vmatmul.f32.gmra.mxu0 %v8125
      %v8237 = vpop.f32.mrf.mxu0
      %v8238 = vadd.f32 0.0, %v8237
      %8239 = vmatmul.f32.gmra.mxu0 %v8128
      %v8240 = vpop.f32.mrf.mxu0
      %v8241 = vadd.f32 0.0, %v8240
      %8242 = vmatmul.f32.gmra.mxu0 %v8131
      %v8243 = vpop.f32.mrf.mxu0
      %v8244 = vadd.f32 0.0, %v8243
      %8245 = vmatmul.f32.gmra.mxu0 %v8134
      %v8246 = vpop.f32.mrf.mxu0
      %v8247 = vadd.f32 0.0, %v8246
      %8248 = vmatmul.f32.gmra.mxu0 %v8137
      %v8249 = vpop.f32.mrf.mxu0
      %v8250 = vadd.f32 0.0, %v8249
      %8251 = vmatmul.f32.gmra.mxu0 %v8140
      %v8252 = vpop.f32.mrf.mxu0
      %v8253 = vadd.f32 0.0, %v8252
      %8254 = vmatmul.f32.gmra.mxu0 %v8143
      %v8255 = vpop.f32.mrf.mxu0
      %v8256 = vadd.f32 0.0, %v8255
      %8257 = vmatmul.f32.gmra.mxu0 %v8146
      %v8258 = vpop.f32.mrf.mxu0
      %v8259 = vadd.f32 0.0, %v8258
      %8260 = vdwg.mxu0
      %v8261 = vadd.f32 %v7775, %v8166
      %v8262 = vadd.f32 %v7776, %v8169
      %v8263 = vadd.f32 %v7777, %v8172
      %v8264 = vadd.f32 %v7778, %v8175
      %v8265 = vadd.f32 %v7779, %v8178
      %v8266 = vadd.f32 %v7780, %v8181
      %v8267 = vadd.f32 %v7781, %v8184
      %v8268 = vadd.f32 %v7782, %v8187
      %v8269 = vadd.f32 %v7783, %v8190
      %v8270 = vadd.f32 %v7784, %v8193
      %v8271 = vadd.f32 %v7785, %v8196
      %v8272 = vadd.f32 %v7786, %v8199
      %v8273 = vadd.f32 %v7787, %v8202
      %v8274 = vadd.f32 %v7788, %v8205
      %v8275 = vadd.f32 %v7789, %v8208
      %v8276 = vadd.f32 %v7790, %v8211
      %v8277 = vadd.f32 %v7791, %v8214
      %v8278 = vadd.f32 %v7792, %v8217
      %v8279 = vadd.f32 %v7793, %v8220
      %v8280 = vadd.f32 %v7794, %v8223
      %v8281 = vadd.f32 %v7795, %v8226
      %v8282 = vadd.f32 %v7796, %v8229
      %v8283 = vadd.f32 %v7797, %v8232
      %v8284 = vadd.f32 %v7798, %v8235
      %v8285 = vadd.f32 %v7799, %v8238
      %v8286 = vadd.f32 %v7800, %v8241
      %v8287 = vadd.f32 %v7801, %v8244
      %v8288 = vadd.f32 %v7802, %v8247
      %v8289 = vadd.f32 %v7803, %v8250
      %v8290 = vadd.f32 %v7804, %v8253
      %v8291 = vadd.f32 %v7805, %v8256
      %v8292 = vadd.f32 %v7806, %v8259
      %s8293 = scalar_lea.vmem %s10, 2048
      %v8294 = vld [vmem:[%s8293] sm:$0xff]
      %v8295 = vld [vmem:[%s8293 + $0x8] sm:$0xff]
      %v8296 = vld [vmem:[%s8293 + $0x10] sm:$0xff]
      %v8297 = vld [vmem:[%s8293 + $0x18] sm:$0xff]
      %v8298 = vld [vmem:[%s8293 + $0x20] sm:$0xff]
      %v8299 = vld [vmem:[%s8293 + $0x28] sm:$0xff]
      %v8300 = vld [vmem:[%s8293 + $0x30] sm:$0xff]
      %v8301 = vld [vmem:[%s8293 + $0x38] sm:$0xff]
      %v8302 = vld [vmem:[%s8293 + $0x40] sm:$0xff]
      %v8303 = vld [vmem:[%s8293 + $0x48] sm:$0xff]
      %v8304 = vld [vmem:[%s8293 + $0x50] sm:$0xff]
      %v8305 = vld [vmem:[%s8293 + $0x58] sm:$0xff]
      %v8306 = vld [vmem:[%s8293 + $0x60] sm:$0xff]
      %v8307 = vld [vmem:[%s8293 + $0x68] sm:$0xff]
      %v8308 = vld [vmem:[%s8293 + $0x70] sm:$0xff]
      %v8309 = vld [vmem:[%s8293 + $0x78] sm:$0xff]
      %v8310 = vld [vmem:[%s8293 + $0x80] sm:$0xff]
      %v8311 = vld [vmem:[%s8293 + $0x88] sm:$0xff]
      %v8312 = vld [vmem:[%s8293 + $0x90] sm:$0xff]
      %v8313 = vld [vmem:[%s8293 + $0x98] sm:$0xff]
      %v8314 = vld [vmem:[%s8293 + $0xa0] sm:$0xff]
      %v8315 = vld [vmem:[%s8293 + $0xa8] sm:$0xff]
      %v8316 = vld [vmem:[%s8293 + $0xb0] sm:$0xff]
      %v8317 = vld [vmem:[%s8293 + $0xb8] sm:$0xff]
      %v8318 = vld [vmem:[%s8293 + $0xc0] sm:$0xff]
      %v8319 = vld [vmem:[%s8293 + $0xc8] sm:$0xff]
      %v8320 = vld [vmem:[%s8293 + $0xd0] sm:$0xff]
      %v8321 = vld [vmem:[%s8293 + $0xd8] sm:$0xff]
      %v8322 = vld [vmem:[%s8293 + $0xe0] sm:$0xff]
      %v8323 = vld [vmem:[%s8293 + $0xe8] sm:$0xff]
      %v8324 = vld [vmem:[%s8293 + $0xf0] sm:$0xff]
      %v8325 = vld [vmem:[%s8293 + $0xf8] sm:$0xff]
      %v8327 = vsel %vm2238, %v8294, 0
      %v8330 = vsel %vm2238, %v8295, 0
      %v8333 = vsel %vm2238, %v8296, 0
      %v8336 = vsel %vm2238, %v8297, 0
      %v8339 = vsel %vm2238, %v8298, 0
      %v8342 = vsel %vm2238, %v8299, 0
      %v8345 = vsel %vm2238, %v8300, 0
      %v8348 = vsel %vm2238, %v8301, 0
      %v8351 = vsel %vm2238, %v8302, 0
      %v8354 = vsel %vm2238, %v8303, 0
      %v8357 = vsel %vm2238, %v8304, 0
      %v8360 = vsel %vm2238, %v8305, 0
      %v8363 = vsel %vm2238, %v8306, 0
      %v8366 = vsel %vm2238, %v8307, 0
      %v8369 = vsel %vm2238, %v8308, 0
      %v8372 = vsel %vm2238, %v8309, 0
      %v8375 = vsel %vm2238, %v8310, 0
      %v8378 = vsel %vm2238, %v8311, 0
      %v8381 = vsel %vm2238, %v8312, 0
      %v8384 = vsel %vm2238, %v8313, 0
      %v8387 = vsel %vm2238, %v8314, 0
      %v8390 = vsel %vm2238, %v8315, 0
      %v8393 = vsel %vm2238, %v8316, 0
      %v8396 = vsel %vm2238, %v8317, 0
      %v8399 = vsel %vm2238, %v8318, 0
      %v8402 = vsel %vm2238, %v8319, 0
      %v8405 = vsel %vm2238, %v8320, 0
      %v8408 = vsel %vm2238, %v8321, 0
      %v8411 = vsel %vm2238, %v8322, 0
      %v8414 = vsel %vm2238, %v8323, 0
      %v8417 = vsel %vm2238, %v8324, 0
      %v8420 = vsel %vm2238, %v8325, 0
      %8422 = vmatpush.msra.mxu0 0.0
      %8423 = vmatpush.msra.mxu0 0.0
      %8424 = vmatpush.msra.mxu0 0.0
      %8425 = vmatpush.msra.mxu0 0.0
      %8426 = vmatpush.msra.mxu0 0.0
      %8427 = vmatpush.msra.mxu0 0.0
      %8428 = vmatpush.msra.mxu0 0.0
      %8429 = vmatpush.msra.mxu0 0.0
      %8430 = vmatpush.msra.mxu0 %v4401
      %8431 = vmatpush.msra.mxu0 %v4400
      %8432 = vmatpush.msra.mxu0 %v4399
      %8433 = vmatpush.msra.mxu0 %v4398
      %8434 = vmatpush.msra.mxu0 %v4397
      %8435 = vmatpush.msra.mxu0 %v4396
      %8436 = vmatpush.msra.mxu0 %v4395
      %8437 = vmatpush.msra.mxu0 %v4394
      %8438 = vmatmul.f32.gmra.mxu0 %v8327
      %v8439 = vpop.f32.mrf.mxu0
      %v8440 = vadd.f32 0.0, %v8439
      %8441 = vmatmul.f32.gmra.mxu0 %v8330
      %v8442 = vpop.f32.mrf.mxu0
      %v8443 = vadd.f32 0.0, %v8442
      %8444 = vmatmul.f32.gmra.mxu0 %v8333
      %v8445 = vpop.f32.mrf.mxu0
      %v8446 = vadd.f32 0.0, %v8445
      %8447 = vmatmul.f32.gmra.mxu0 %v8336
      %v8448 = vpop.f32.mrf.mxu0
      %v8449 = vadd.f32 0.0, %v8448
      %8450 = vmatmul.f32.gmra.mxu0 %v8339
      %v8451 = vpop.f32.mrf.mxu0
      %v8452 = vadd.f32 0.0, %v8451
      %8453 = vmatmul.f32.gmra.mxu0 %v8342
      %v8454 = vpop.f32.mrf.mxu0
      %v8455 = vadd.f32 0.0, %v8454
      %8456 = vmatmul.f32.gmra.mxu0 %v8345
      %v8457 = vpop.f32.mrf.mxu0
      %v8458 = vadd.f32 0.0, %v8457
      %8459 = vmatmul.f32.gmra.mxu0 %v8348
      %v8460 = vpop.f32.mrf.mxu0
      %v8461 = vadd.f32 0.0, %v8460
      %8462 = vmatmul.f32.gmra.mxu0 %v8351
      %v8463 = vpop.f32.mrf.mxu0
      %v8464 = vadd.f32 0.0, %v8463
      %8465 = vmatmul.f32.gmra.mxu0 %v8354
      %v8466 = vpop.f32.mrf.mxu0
      %v8467 = vadd.f32 0.0, %v8466
      %8468 = vmatmul.f32.gmra.mxu0 %v8357
      %v8469 = vpop.f32.mrf.mxu0
      %v8470 = vadd.f32 0.0, %v8469
      %8471 = vmatmul.f32.gmra.mxu0 %v8360
      %v8472 = vpop.f32.mrf.mxu0
      %v8473 = vadd.f32 0.0, %v8472
      %8474 = vmatmul.f32.gmra.mxu0 %v8363
      %v8475 = vpop.f32.mrf.mxu0
      %v8476 = vadd.f32 0.0, %v8475
      %8477 = vmatmul.f32.gmra.mxu0 %v8366
      %v8478 = vpop.f32.mrf.mxu0
      %v8479 = vadd.f32 0.0, %v8478
      %8480 = vmatmul.f32.gmra.mxu0 %v8369
      %v8481 = vpop.f32.mrf.mxu0
      %v8482 = vadd.f32 0.0, %v8481
      %8483 = vmatmul.f32.gmra.mxu0 %v8372
      %v8484 = vpop.f32.mrf.mxu0
      %v8485 = vadd.f32 0.0, %v8484
      %8486 = vmatmul.f32.gmra.mxu0 %v8375
      %v8487 = vpop.f32.mrf.mxu0
      %v8488 = vadd.f32 0.0, %v8487
      %8489 = vmatmul.f32.gmra.mxu0 %v8378
      %v8490 = vpop.f32.mrf.mxu0
      %v8491 = vadd.f32 0.0, %v8490
      %8492 = vmatmul.f32.gmra.mxu0 %v8381
      %v8493 = vpop.f32.mrf.mxu0
      %v8494 = vadd.f32 0.0, %v8493
      %8495 = vmatmul.f32.gmra.mxu0 %v8384
      %v8496 = vpop.f32.mrf.mxu0
      %v8497 = vadd.f32 0.0, %v8496
      %8498 = vmatmul.f32.gmra.mxu0 %v8387
      %v8499 = vpop.f32.mrf.mxu0
      %v8500 = vadd.f32 0.0, %v8499
      %8501 = vmatmul.f32.gmra.mxu0 %v8390
      %v8502 = vpop.f32.mrf.mxu0
      %v8503 = vadd.f32 0.0, %v8502
      %8504 = vmatmul.f32.gmra.mxu0 %v8393
      %v8505 = vpop.f32.mrf.mxu0
      %v8506 = vadd.f32 0.0, %v8505
      %8507 = vmatmul.f32.gmra.mxu0 %v8396
      %v8508 = vpop.f32.mrf.mxu0
      %v8509 = vadd.f32 0.0, %v8508
      %8510 = vmatmul.f32.gmra.mxu0 %v8399
      %v8511 = vpop.f32.mrf.mxu0
      %v8512 = vadd.f32 0.0, %v8511
      %8513 = vmatmul.f32.gmra.mxu0 %v8402
      %v8514 = vpop.f32.mrf.mxu0
      %v8515 = vadd.f32 0.0, %v8514
      %8516 = vmatmul.f32.gmra.mxu0 %v8405
      %v8517 = vpop.f32.mrf.mxu0
      %v8518 = vadd.f32 0.0, %v8517
      %8519 = vmatmul.f32.gmra.mxu0 %v8408
      %v8520 = vpop.f32.mrf.mxu0
      %v8521 = vadd.f32 0.0, %v8520
      %8522 = vmatmul.f32.gmra.mxu0 %v8411
      %v8523 = vpop.f32.mrf.mxu0
      %v8524 = vadd.f32 0.0, %v8523
      %8525 = vmatmul.f32.gmra.mxu0 %v8414
      %v8526 = vpop.f32.mrf.mxu0
      %v8527 = vadd.f32 0.0, %v8526
      %8528 = vmatmul.f32.gmra.mxu0 %v8417
      %v8529 = vpop.f32.mrf.mxu0
      %v8530 = vadd.f32 0.0, %v8529
      %8531 = vmatmul.f32.gmra.mxu0 %v8420
      %v8532 = vpop.f32.mrf.mxu0
      %v8533 = vadd.f32 0.0, %v8532
      %8534 = vdwg.mxu0
      %s8535 = scalar_lea.vmem %s11, 128
      %v8536 = vld [vmem:[%s8535] sm:$0xff]
      %v8537 = vld [vmem:[%s8535 + $0x8] sm:$0xff]
      %v8539 = vsel %vm2270, %v8440, 0
      %v8542 = vsel %vm2270, %v8443, 0
      %v8545 = vsel %vm2270, %v8446, 0
      %v8548 = vsel %vm2270, %v8449, 0
      %v8551 = vsel %vm2270, %v8452, 0
      %v8554 = vsel %vm2270, %v8455, 0
      %v8557 = vsel %vm2270, %v8458, 0
      %v8560 = vsel %vm2270, %v8461, 0
      %v8563 = vsel %vm2270, %v8464, 0
      %v8566 = vsel %vm2270, %v8467, 0
      %v8569 = vsel %vm2270, %v8470, 0
      %v8572 = vsel %vm2270, %v8473, 0
      %v8575 = vsel %vm2270, %v8476, 0
      %v8578 = vsel %vm2270, %v8479, 0
      %v8581 = vsel %vm2270, %v8482, 0
      %v8584 = vsel %vm2270, %v8485, 0
      %v8587 = vsel %vm2270, %v8488, 0
      %v8590 = vsel %vm2270, %v8491, 0
      %v8593 = vsel %vm2270, %v8494, 0
      %v8596 = vsel %vm2270, %v8497, 0
      %v8599 = vsel %vm2270, %v8500, 0
      %v8602 = vsel %vm2270, %v8503, 0
      %v8605 = vsel %vm2270, %v8506, 0
      %v8608 = vsel %vm2270, %v8509, 0
      %v8611 = vsel %vm2270, %v8512, 0
      %v8614 = vsel %vm2270, %v8515, 0
      %v8617 = vsel %vm2270, %v8518, 0
      %v8620 = vsel %vm2270, %v8521, 0
      %v8623 = vsel %vm2270, %v8524, 0
      %v8626 = vsel %vm2270, %v8527, 0
      %v8629 = vsel %vm2270, %v8530, 0
      %v8632 = vsel %vm2270, %v8533, 0
      %8634 = vmatpush.msra.mxu0 0.0
      %8635 = vmatpush.msra.mxu0 0.0
      %8636 = vmatpush.msra.mxu0 0.0
      %8637 = vmatpush.msra.mxu0 0.0
      %8638 = vmatpush.msra.mxu0 0.0
      %8639 = vmatpush.msra.mxu0 0.0
      %8640 = vmatpush.msra.mxu0 0.0
      %8641 = vmatpush.msra.mxu0 0.0
      %8642 = vmatpush.msra.mxu0 0.0
      %8643 = vmatpush.msra.mxu0 0.0
      %8644 = vmatpush.msra.mxu0 0.0
      %8645 = vmatpush.msra.mxu0 0.0
      %8646 = vmatpush.msra.mxu0 0.0
      %8647 = vmatpush.msra.mxu0 0.0
      %8648 = vmatpush.msra.mxu0 %v8537
      %8649 = vmatpush.msra.mxu0 %v8536
      %8650 = vmatmul.f32.gmra.mxu0 %v8539
      %v8651 = vpop.f32.mrf.mxu0
      %v8652 = vadd.f32 0.0, %v8651
      %8653 = vmatmul.f32.gmra.mxu0 %v8542
      %v8654 = vpop.f32.mrf.mxu0
      %v8655 = vadd.f32 0.0, %v8654
      %8656 = vmatmul.f32.gmra.mxu0 %v8545
      %v8657 = vpop.f32.mrf.mxu0
      %v8658 = vadd.f32 0.0, %v8657
      %8659 = vmatmul.f32.gmra.mxu0 %v8548
      %v8660 = vpop.f32.mrf.mxu0
      %v8661 = vadd.f32 0.0, %v8660
      %8662 = vmatmul.f32.gmra.mxu0 %v8551
      %v8663 = vpop.f32.mrf.mxu0
      %v8664 = vadd.f32 0.0, %v8663
      %8665 = vmatmul.f32.gmra.mxu0 %v8554
      %v8666 = vpop.f32.mrf.mxu0
      %v8667 = vadd.f32 0.0, %v8666
      %8668 = vmatmul.f32.gmra.mxu0 %v8557
      %v8669 = vpop.f32.mrf.mxu0
      %v8670 = vadd.f32 0.0, %v8669
      %8671 = vmatmul.f32.gmra.mxu0 %v8560
      %v8672 = vpop.f32.mrf.mxu0
      %v8673 = vadd.f32 0.0, %v8672
      %8674 = vmatmul.f32.gmra.mxu0 %v8563
      %v8675 = vpop.f32.mrf.mxu0
      %v8676 = vadd.f32 0.0, %v8675
      %8677 = vmatmul.f32.gmra.mxu0 %v8566
      %v8678 = vpop.f32.mrf.mxu0
      %v8679 = vadd.f32 0.0, %v8678
      %8680 = vmatmul.f32.gmra.mxu0 %v8569
      %v8681 = vpop.f32.mrf.mxu0
      %v8682 = vadd.f32 0.0, %v8681
      %8683 = vmatmul.f32.gmra.mxu0 %v8572
      %v8684 = vpop.f32.mrf.mxu0
      %v8685 = vadd.f32 0.0, %v8684
      %8686 = vmatmul.f32.gmra.mxu0 %v8575
      %v8687 = vpop.f32.mrf.mxu0
      %v8688 = vadd.f32 0.0, %v8687
      %8689 = vmatmul.f32.gmra.mxu0 %v8578
      %v8690 = vpop.f32.mrf.mxu0
      %v8691 = vadd.f32 0.0, %v8690
      %8692 = vmatmul.f32.gmra.mxu0 %v8581
      %v8693 = vpop.f32.mrf.mxu0
      %v8694 = vadd.f32 0.0, %v8693
      %8695 = vmatmul.f32.gmra.mxu0 %v8584
      %v8696 = vpop.f32.mrf.mxu0
      %v8697 = vadd.f32 0.0, %v8696
      %8698 = vmatmul.f32.gmra.mxu0 %v8587
      %v8699 = vpop.f32.mrf.mxu0
      %v8700 = vadd.f32 0.0, %v8699
      %8701 = vmatmul.f32.gmra.mxu0 %v8590
      %v8702 = vpop.f32.mrf.mxu0
      %v8703 = vadd.f32 0.0, %v8702
      %8704 = vmatmul.f32.gmra.mxu0 %v8593
      %v8705 = vpop.f32.mrf.mxu0
      %v8706 = vadd.f32 0.0, %v8705
      %8707 = vmatmul.f32.gmra.mxu0 %v8596
      %v8708 = vpop.f32.mrf.mxu0
      %v8709 = vadd.f32 0.0, %v8708
      %8710 = vmatmul.f32.gmra.mxu0 %v8599
      %v8711 = vpop.f32.mrf.mxu0
      %v8712 = vadd.f32 0.0, %v8711
      %8713 = vmatmul.f32.gmra.mxu0 %v8602
      %v8714 = vpop.f32.mrf.mxu0
      %v8715 = vadd.f32 0.0, %v8714
      %8716 = vmatmul.f32.gmra.mxu0 %v8605
      %v8717 = vpop.f32.mrf.mxu0
      %v8718 = vadd.f32 0.0, %v8717
      %8719 = vmatmul.f32.gmra.mxu0 %v8608
      %v8720 = vpop.f32.mrf.mxu0
      %v8721 = vadd.f32 0.0, %v8720
      %8722 = vmatmul.f32.gmra.mxu0 %v8611
      %v8723 = vpop.f32.mrf.mxu0
      %v8724 = vadd.f32 0.0, %v8723
      %8725 = vmatmul.f32.gmra.mxu0 %v8614
      %v8726 = vpop.f32.mrf.mxu0
      %v8727 = vadd.f32 0.0, %v8726
      %8728 = vmatmul.f32.gmra.mxu0 %v8617
      %v8729 = vpop.f32.mrf.mxu0
      %v8730 = vadd.f32 0.0, %v8729
      %8731 = vmatmul.f32.gmra.mxu0 %v8620
      %v8732 = vpop.f32.mrf.mxu0
      %v8733 = vadd.f32 0.0, %v8732
      %8734 = vmatmul.f32.gmra.mxu0 %v8623
      %v8735 = vpop.f32.mrf.mxu0
      %v8736 = vadd.f32 0.0, %v8735
      %8737 = vmatmul.f32.gmra.mxu0 %v8626
      %v8738 = vpop.f32.mrf.mxu0
      %v8739 = vadd.f32 0.0, %v8738
      %8740 = vmatmul.f32.gmra.mxu0 %v8629
      %v8741 = vpop.f32.mrf.mxu0
      %v8742 = vadd.f32 0.0, %v8741
      %8743 = vmatmul.f32.gmra.mxu0 %v8632
      %v8744 = vpop.f32.mrf.mxu0
      %v8745 = vadd.f32 0.0, %v8744
      %8746 = vdwg.mxu0
      %v8747 = vadd.f32 %v8261, %v8652
      %v8748 = vadd.f32 %v8262, %v8655
      %v8749 = vadd.f32 %v8263, %v8658
      %v8750 = vadd.f32 %v8264, %v8661
      %v8751 = vadd.f32 %v8265, %v8664
      %v8752 = vadd.f32 %v8266, %v8667
      %v8753 = vadd.f32 %v8267, %v8670
      %v8754 = vadd.f32 %v8268, %v8673
      %v8755 = vadd.f32 %v8269, %v8676
      %v8756 = vadd.f32 %v8270, %v8679
      %v8757 = vadd.f32 %v8271, %v8682
      %v8758 = vadd.f32 %v8272, %v8685
      %v8759 = vadd.f32 %v8273, %v8688
      %v8760 = vadd.f32 %v8274, %v8691
      %v8761 = vadd.f32 %v8275, %v8694
      %v8762 = vadd.f32 %v8276, %v8697
      %v8763 = vadd.f32 %v8277, %v8700
      %v8764 = vadd.f32 %v8278, %v8703
      %v8765 = vadd.f32 %v8279, %v8706
      %v8766 = vadd.f32 %v8280, %v8709
      %v8767 = vadd.f32 %v8281, %v8712
      %v8768 = vadd.f32 %v8282, %v8715
      %v8769 = vadd.f32 %v8283, %v8718
      %v8770 = vadd.f32 %v8284, %v8721
      %v8771 = vadd.f32 %v8285, %v8724
      %v8772 = vadd.f32 %v8286, %v8727
      %v8773 = vadd.f32 %v8287, %v8730
      %v8774 = vadd.f32 %v8288, %v8733
      %v8775 = vadd.f32 %v8289, %v8736
      %v8776 = vadd.f32 %v8290, %v8739
      %v8777 = vadd.f32 %v8291, %v8742
      %v8778 = vadd.f32 %v8292, %v8745
      %v8779 = vxor.u32 %v8747, 2147483648
      %v8780 = vxor.u32 %v8748, 2147483648
      %v8781 = vxor.u32 %v8749, 2147483648
      %v8782 = vxor.u32 %v8750, 2147483648
      %v8783 = vxor.u32 %v8751, 2147483648
      %v8784 = vxor.u32 %v8752, 2147483648
      %v8785 = vxor.u32 %v8753, 2147483648
      %v8786 = vxor.u32 %v8754, 2147483648
      %v8787 = vxor.u32 %v8755, 2147483648
      %v8788 = vxor.u32 %v8756, 2147483648
      %v8789 = vxor.u32 %v8757, 2147483648
      %v8790 = vxor.u32 %v8758, 2147483648
      %v8791 = vxor.u32 %v8759, 2147483648
      %v8792 = vxor.u32 %v8760, 2147483648
      %v8793 = vxor.u32 %v8761, 2147483648
      %v8794 = vxor.u32 %v8762, 2147483648
      %v8795 = vxor.u32 %v8763, 2147483648
      %v8796 = vxor.u32 %v8764, 2147483648
      %v8797 = vxor.u32 %v8765, 2147483648
      %v8798 = vxor.u32 %v8766, 2147483648
      %v8799 = vxor.u32 %v8767, 2147483648
      %v8800 = vxor.u32 %v8768, 2147483648
      %v8801 = vxor.u32 %v8769, 2147483648
      %v8802 = vxor.u32 %v8770, 2147483648
      %v8803 = vxor.u32 %v8771, 2147483648
      %v8804 = vxor.u32 %v8772, 2147483648
      %v8805 = vxor.u32 %v8773, 2147483648
      %v8806 = vxor.u32 %v8774, 2147483648
      %v8807 = vxor.u32 %v8775, 2147483648
      %v8808 = vxor.u32 %v8776, 2147483648
      %v8809 = vxor.u32 %v8777, 2147483648
      %v8810 = vxor.u32 %v8778, 2147483648
      %v8811 = vmul.f32 %v8779, 1.442695
      %v8812 = vpow.pop %v8811
      %v8813 = vmul.f32 %v8780, 1.442695
      %v8814 = vpow.pop %v8813
      %v8815 = vmul.f32 %v8781, 1.442695
      %v8816 = vpow.pop %v8815
      %v8817 = vmul.f32 %v8782, 1.442695
      %v8818 = vpow.pop %v8817
      %v8819 = vmul.f32 %v8783, 1.442695
      %v8820 = vpow.pop %v8819
      %v8821 = vmul.f32 %v8784, 1.442695
      %v8822 = vpow.pop %v8821
      %v8823 = vmul.f32 %v8785, 1.442695
      %v8824 = vpow.pop %v8823
      %v8825 = vmul.f32 %v8786, 1.442695
      %v8826 = vpow.pop %v8825
      %v8827 = vmul.f32 %v8787, 1.442695
      %v8828 = vpow.pop %v8827
      %v8829 = vmul.f32 %v8788, 1.442695
      %v8830 = vpow.pop %v8829
      %v8831 = vmul.f32 %v8789, 1.442695
      %v8832 = vpow.pop %v8831
      %v8833 = vmul.f32 %v8790, 1.442695
      %v8834 = vpow.pop %v8833
      %v8835 = vmul.f32 %v8791, 1.442695
      %v8836 = vpow.pop %v8835
      %v8837 = vmul.f32 %v8792, 1.442695
      %v8838 = vpow.pop %v8837
      %v8839 = vmul.f32 %v8793, 1.442695
      %v8840 = vpow.pop %v8839
      %v8841 = vmul.f32 %v8794, 1.442695
      %v8842 = vpow.pop %v8841
      %v8843 = vmul.f32 %v8795, 1.442695
      %v8844 = vpow.pop %v8843
      %v8845 = vmul.f32 %v8796, 1.442695
      %v8846 = vpow.pop %v8845
      %v8847 = vmul.f32 %v8797, 1.442695
      %v8848 = vpow.pop %v8847
      %v8849 = vmul.f32 %v8798, 1.442695
      %v8850 = vpow.pop %v8849
      %v8851 = vmul.f32 %v8799, 1.442695
      %v8852 = vpow.pop %v8851
      %v8853 = vmul.f32 %v8800, 1.442695
      %v8854 = vpow.pop %v8853
      %v8855 = vmul.f32 %v8801, 1.442695
      %v8856 = vpow.pop %v8855
      %v8857 = vmul.f32 %v8802, 1.442695
      %v8858 = vpow.pop %v8857
      %v8859 = vmul.f32 %v8803, 1.442695
      %v8860 = vpow.pop %v8859
      %v8861 = vmul.f32 %v8804, 1.442695
      %v8862 = vpow.pop %v8861
      %v8863 = vmul.f32 %v8805, 1.442695
      %v8864 = vpow.pop %v8863
      %v8865 = vmul.f32 %v8806, 1.442695
      %v8866 = vpow.pop %v8865
      %v8867 = vmul.f32 %v8807, 1.442695
      %v8868 = vpow.pop %v8867
      %v8869 = vmul.f32 %v8808, 1.442695
      %v8870 = vpow.pop %v8869
      %v8871 = vmul.f32 %v8809, 1.442695
      %v8872 = vpow.pop %v8871
      %v8873 = vmul.f32 %v8810, 1.442695
      %v8874 = vpow.pop %v8873
      %v8875 = vadd.f32 %v8812, 1.0
      %v8876 = vadd.f32 %v8814, 1.0
      %v8877 = vadd.f32 %v8816, 1.0
      %v8878 = vadd.f32 %v8818, 1.0
      %v8879 = vadd.f32 %v8820, 1.0
      %v8880 = vadd.f32 %v8822, 1.0
      %v8881 = vadd.f32 %v8824, 1.0
      %v8882 = vadd.f32 %v8826, 1.0
      %v8883 = vadd.f32 %v8828, 1.0
      %v8884 = vadd.f32 %v8830, 1.0
      %v8885 = vadd.f32 %v8832, 1.0
      %v8886 = vadd.f32 %v8834, 1.0
      %v8887 = vadd.f32 %v8836, 1.0
      %v8888 = vadd.f32 %v8838, 1.0
      %v8889 = vadd.f32 %v8840, 1.0
      %v8890 = vadd.f32 %v8842, 1.0
      %v8891 = vadd.f32 %v8844, 1.0
      %v8892 = vadd.f32 %v8846, 1.0
      %v8893 = vadd.f32 %v8848, 1.0
      %v8894 = vadd.f32 %v8850, 1.0
      %v8895 = vadd.f32 %v8852, 1.0
      %v8896 = vadd.f32 %v8854, 1.0
      %v8897 = vadd.f32 %v8856, 1.0
      %v8898 = vadd.f32 %v8858, 1.0
      %v8899 = vadd.f32 %v8860, 1.0
      %v8900 = vadd.f32 %v8862, 1.0
      %v8901 = vadd.f32 %v8864, 1.0
      %v8902 = vadd.f32 %v8866, 1.0
      %v8903 = vadd.f32 %v8868, 1.0
      %v8904 = vadd.f32 %v8870, 1.0
      %v8905 = vadd.f32 %v8872, 1.0
      %v8906 = vadd.f32 %v8874, 1.0
      %v8907 = vrcp.pop %v8875
      %v8908 = vmul.f32 %v8875, %v8907
      %v8909 = vsub.f32 1.0, %v8908
      %v8910 = vmul.f32 %v8907, %v8909
      %v8911 = vadd.f32 %v8907, %v8910
      %vm8912 = vweird.f32 %v8875
      %vm8913 = vweird.f32 %v8907
      %vm8914 = vmor %vm8912, %vm8913
      %v8915 = vsel %vm8914, %v8907, %v8911
      %v8916 = vand.u32 2147483647, %v8875
      %vm8917 = vcmp.eq.f32.partialorder %v8916, 8.507059e+37
      %v8918 = vand.u32 %v8875, 2147483648
      %v8919 = vor.u32 1.1754944e-38, %v8918
      %v8920 = vsel %vm8917, %v8919, %v8915
      %v8921 = vmul.f32 1.0, %v8920
      %v8922 = vrcp.pop %v8876
      %v8923 = vmul.f32 %v8876, %v8922
      %v8924 = vsub.f32 1.0, %v8923
      %v8925 = vmul.f32 %v8922, %v8924
      %v8926 = vadd.f32 %v8922, %v8925
      %vm8927 = vweird.f32 %v8876
      %vm8928 = vweird.f32 %v8922
      %vm8929 = vmor %vm8927, %vm8928
      %v8930 = vsel %vm8929, %v8922, %v8926
      %v8931 = vand.u32 2147483647, %v8876
      %vm8932 = vcmp.eq.f32.partialorder %v8931, 8.507059e+37
      %v8933 = vand.u32 %v8876, 2147483648
      %v8934 = vor.u32 1.1754944e-38, %v8933
      %v8935 = vsel %vm8932, %v8934, %v8930
      %v8936 = vmul.f32 1.0, %v8935
      %v8937 = vrcp.pop %v8877
      %v8938 = vmul.f32 %v8877, %v8937
      %v8939 = vsub.f32 1.0, %v8938
      %v8940 = vmul.f32 %v8937, %v8939
      %v8941 = vadd.f32 %v8937, %v8940
      %vm8942 = vweird.f32 %v8877
      %vm8943 = vweird.f32 %v8937
      %vm8944 = vmor %vm8942, %vm8943
      %v8945 = vsel %vm8944, %v8937, %v8941
      %v8946 = vand.u32 2147483647, %v8877
      %vm8947 = vcmp.eq.f32.partialorder %v8946, 8.507059e+37
      %v8948 = vand.u32 %v8877, 2147483648
      %v8949 = vor.u32 1.1754944e-38, %v8948
      %v8950 = vsel %vm8947, %v8949, %v8945
      %v8951 = vmul.f32 1.0, %v8950
      %v8952 = vrcp.pop %v8878
      %v8953 = vmul.f32 %v8878, %v8952
      %v8954 = vsub.f32 1.0, %v8953
      %v8955 = vmul.f32 %v8952, %v8954
      %v8956 = vadd.f32 %v8952, %v8955
      %vm8957 = vweird.f32 %v8878
      %vm8958 = vweird.f32 %v8952
      %vm8959 = vmor %vm8957, %vm8958
      %v8960 = vsel %vm8959, %v8952, %v8956
      %v8961 = vand.u32 2147483647, %v8878
      %vm8962 = vcmp.eq.f32.partialorder %v8961, 8.507059e+37
      %v8963 = vand.u32 %v8878, 2147483648
      %v8964 = vor.u32 1.1754944e-38, %v8963
      %v8965 = vsel %vm8962, %v8964, %v8960
      %v8966 = vmul.f32 1.0, %v8965
      %v8967 = vrcp.pop %v8879
      %v8968 = vmul.f32 %v8879, %v8967
      %v8969 = vsub.f32 1.0, %v8968
      %v8970 = vmul.f32 %v8967, %v8969
      %v8971 = vadd.f32 %v8967, %v8970
      %vm8972 = vweird.f32 %v8879
      %vm8973 = vweird.f32 %v8967
      %vm8974 = vmor %vm8972, %vm8973
      %v8975 = vsel %vm8974, %v8967, %v8971
      %v8976 = vand.u32 2147483647, %v8879
      %vm8977 = vcmp.eq.f32.partialorder %v8976, 8.507059e+37
      %v8978 = vand.u32 %v8879, 2147483648
      %v8979 = vor.u32 1.1754944e-38, %v8978
      %v8980 = vsel %vm8977, %v8979, %v8975
      %v8981 = vmul.f32 1.0, %v8980
      %v8982 = vrcp.pop %v8880
      %v8983 = vmul.f32 %v8880, %v8982
      %v8984 = vsub.f32 1.0, %v8983
      %v8985 = vmul.f32 %v8982, %v8984
      %v8986 = vadd.f32 %v8982, %v8985
      %vm8987 = vweird.f32 %v8880
      %vm8988 = vweird.f32 %v8982
      %vm8989 = vmor %vm8987, %vm8988
      %v8990 = vsel %vm8989, %v8982, %v8986
      %v8991 = vand.u32 2147483647, %v8880
      %vm8992 = vcmp.eq.f32.partialorder %v8991, 8.507059e+37
      %v8993 = vand.u32 %v8880, 2147483648
      %v8994 = vor.u32 1.1754944e-38, %v8993
      %v8995 = vsel %vm8992, %v8994, %v8990
      %v8996 = vmul.f32 1.0, %v8995
      %v8997 = vrcp.pop %v8881
      %v8998 = vmul.f32 %v8881, %v8997
      %v8999 = vsub.f32 1.0, %v8998
      %v9000 = vmul.f32 %v8997, %v8999
      %v9001 = vadd.f32 %v8997, %v9000
      %vm9002 = vweird.f32 %v8881
      %vm9003 = vweird.f32 %v8997
      %vm9004 = vmor %vm9002, %vm9003
      %v9005 = vsel %vm9004, %v8997, %v9001
      %v9006 = vand.u32 2147483647, %v8881
      %vm9007 = vcmp.eq.f32.partialorder %v9006, 8.507059e+37
      %v9008 = vand.u32 %v8881, 2147483648
      %v9009 = vor.u32 1.1754944e-38, %v9008
      %v9010 = vsel %vm9007, %v9009, %v9005
      %v9011 = vmul.f32 1.0, %v9010
      %v9012 = vrcp.pop %v8882
      %v9013 = vmul.f32 %v8882, %v9012
      %v9014 = vsub.f32 1.0, %v9013
      %v9015 = vmul.f32 %v9012, %v9014
      %v9016 = vadd.f32 %v9012, %v9015
      %vm9017 = vweird.f32 %v8882
      %vm9018 = vweird.f32 %v9012
      %vm9019 = vmor %vm9017, %vm9018
      %v9020 = vsel %vm9019, %v9012, %v9016
      %v9021 = vand.u32 2147483647, %v8882
      %vm9022 = vcmp.eq.f32.partialorder %v9021, 8.507059e+37
      %v9023 = vand.u32 %v8882, 2147483648
      %v9024 = vor.u32 1.1754944e-38, %v9023
      %v9025 = vsel %vm9022, %v9024, %v9020
      %v9026 = vmul.f32 1.0, %v9025
      %v9027 = vrcp.pop %v8883
      %v9028 = vmul.f32 %v8883, %v9027
      %v9029 = vsub.f32 1.0, %v9028
      %v9030 = vmul.f32 %v9027, %v9029
      %v9031 = vadd.f32 %v9027, %v9030
      %vm9032 = vweird.f32 %v8883
      %vm9033 = vweird.f32 %v9027
      %vm9034 = vmor %vm9032, %vm9033
      %v9035 = vsel %vm9034, %v9027, %v9031
      %v9036 = vand.u32 2147483647, %v8883
      %vm9037 = vcmp.eq.f32.partialorder %v9036, 8.507059e+37
      %v9038 = vand.u32 %v8883, 2147483648
      %v9039 = vor.u32 1.1754944e-38, %v9038
      %v9040 = vsel %vm9037, %v9039, %v9035
      %v9041 = vmul.f32 1.0, %v9040
      %v9042 = vrcp.pop %v8884
      %v9043 = vmul.f32 %v8884, %v9042
      %v9044 = vsub.f32 1.0, %v9043
      %v9045 = vmul.f32 %v9042, %v9044
      %v9046 = vadd.f32 %v9042, %v9045
      %vm9047 = vweird.f32 %v8884
      %vm9048 = vweird.f32 %v9042
      %vm9049 = vmor %vm9047, %vm9048
      %v9050 = vsel %vm9049, %v9042, %v9046
      %v9051 = vand.u32 2147483647, %v8884
      %vm9052 = vcmp.eq.f32.partialorder %v9051, 8.507059e+37
      %v9053 = vand.u32 %v8884, 2147483648
      %v9054 = vor.u32 1.1754944e-38, %v9053
      %v9055 = vsel %vm9052, %v9054, %v9050
      %v9056 = vmul.f32 1.0, %v9055
      %v9057 = vrcp.pop %v8885
      %v9058 = vmul.f32 %v8885, %v9057
      %v9059 = vsub.f32 1.0, %v9058
      %v9060 = vmul.f32 %v9057, %v9059
      %v9061 = vadd.f32 %v9057, %v9060
      %vm9062 = vweird.f32 %v8885
      %vm9063 = vweird.f32 %v9057
      %vm9064 = vmor %vm9062, %vm9063
      %v9065 = vsel %vm9064, %v9057, %v9061
      %v9066 = vand.u32 2147483647, %v8885
      %vm9067 = vcmp.eq.f32.partialorder %v9066, 8.507059e+37
      %v9068 = vand.u32 %v8885, 2147483648
      %v9069 = vor.u32 1.1754944e-38, %v9068
      %v9070 = vsel %vm9067, %v9069, %v9065
      %v9071 = vmul.f32 1.0, %v9070
      %v9072 = vrcp.pop %v8886
      %v9073 = vmul.f32 %v8886, %v9072
      %v9074 = vsub.f32 1.0, %v9073
      %v9075 = vmul.f32 %v9072, %v9074
      %v9076 = vadd.f32 %v9072, %v9075
      %vm9077 = vweird.f32 %v8886
      %vm9078 = vweird.f32 %v9072
      %vm9079 = vmor %vm9077, %vm9078
      %v9080 = vsel %vm9079, %v9072, %v9076
      %v9081 = vand.u32 2147483647, %v8886
      %vm9082 = vcmp.eq.f32.partialorder %v9081, 8.507059e+37
      %v9083 = vand.u32 %v8886, 2147483648
      %v9084 = vor.u32 1.1754944e-38, %v9083
      %v9085 = vsel %vm9082, %v9084, %v9080
      %v9086 = vmul.f32 1.0, %v9085
      %v9087 = vrcp.pop %v8887
      %v9088 = vmul.f32 %v8887, %v9087
      %v9089 = vsub.f32 1.0, %v9088
      %v9090 = vmul.f32 %v9087, %v9089
      %v9091 = vadd.f32 %v9087, %v9090
      %vm9092 = vweird.f32 %v8887
      %vm9093 = vweird.f32 %v9087
      %vm9094 = vmor %vm9092, %vm9093
      %v9095 = vsel %vm9094, %v9087, %v9091
      %v9096 = vand.u32 2147483647, %v8887
      %vm9097 = vcmp.eq.f32.partialorder %v9096, 8.507059e+37
      %v9098 = vand.u32 %v8887, 2147483648
      %v9099 = vor.u32 1.1754944e-38, %v9098
      %v9100 = vsel %vm9097, %v9099, %v9095
      %v9101 = vmul.f32 1.0, %v9100
      %v9102 = vrcp.pop %v8888
      %v9103 = vmul.f32 %v8888, %v9102
      %v9104 = vsub.f32 1.0, %v9103
      %v9105 = vmul.f32 %v9102, %v9104
      %v9106 = vadd.f32 %v9102, %v9105
      %vm9107 = vweird.f32 %v8888
      %vm9108 = vweird.f32 %v9102
      %vm9109 = vmor %vm9107, %vm9108
      %v9110 = vsel %vm9109, %v9102, %v9106
      %v9111 = vand.u32 2147483647, %v8888
      %vm9112 = vcmp.eq.f32.partialorder %v9111, 8.507059e+37
      %v9113 = vand.u32 %v8888, 2147483648
      %v9114 = vor.u32 1.1754944e-38, %v9113
      %v9115 = vsel %vm9112, %v9114, %v9110
      %v9116 = vmul.f32 1.0, %v9115
      %v9117 = vrcp.pop %v8889
      %v9118 = vmul.f32 %v8889, %v9117
      %v9119 = vsub.f32 1.0, %v9118
      %v9120 = vmul.f32 %v9117, %v9119
      %v9121 = vadd.f32 %v9117, %v9120
      %vm9122 = vweird.f32 %v8889
      %vm9123 = vweird.f32 %v9117
      %vm9124 = vmor %vm9122, %vm9123
      %v9125 = vsel %vm9124, %v9117, %v9121
      %v9126 = vand.u32 2147483647, %v8889
      %vm9127 = vcmp.eq.f32.partialorder %v9126, 8.507059e+37
      %v9128 = vand.u32 %v8889, 2147483648
      %v9129 = vor.u32 1.1754944e-38, %v9128
      %v9130 = vsel %vm9127, %v9129, %v9125
      %v9131 = vmul.f32 1.0, %v9130
      %v9132 = vrcp.pop %v8890
      %v9133 = vmul.f32 %v8890, %v9132
      %v9134 = vsub.f32 1.0, %v9133
      %v9135 = vmul.f32 %v9132, %v9134
      %v9136 = vadd.f32 %v9132, %v9135
      %vm9137 = vweird.f32 %v8890
      %vm9138 = vweird.f32 %v9132
      %vm9139 = vmor %vm9137, %vm9138
      %v9140 = vsel %vm9139, %v9132, %v9136
      %v9141 = vand.u32 2147483647, %v8890
      %vm9142 = vcmp.eq.f32.partialorder %v9141, 8.507059e+37
      %v9143 = vand.u32 %v8890, 2147483648
      %v9144 = vor.u32 1.1754944e-38, %v9143
      %v9145 = vsel %vm9142, %v9144, %v9140
      %v9146 = vmul.f32 1.0, %v9145
      %v9147 = vrcp.pop %v8891
      %v9148 = vmul.f32 %v8891, %v9147
      %v9149 = vsub.f32 1.0, %v9148
      %v9150 = vmul.f32 %v9147, %v9149
      %v9151 = vadd.f32 %v9147, %v9150
      %vm9152 = vweird.f32 %v8891
      %vm9153 = vweird.f32 %v9147
      %vm9154 = vmor %vm9152, %vm9153
      %v9155 = vsel %vm9154, %v9147, %v9151
      %v9156 = vand.u32 2147483647, %v8891
      %vm9157 = vcmp.eq.f32.partialorder %v9156, 8.507059e+37
      %v9158 = vand.u32 %v8891, 2147483648
      %v9159 = vor.u32 1.1754944e-38, %v9158
      %v9160 = vsel %vm9157, %v9159, %v9155
      %v9161 = vmul.f32 1.0, %v9160
      %v9162 = vrcp.pop %v8892
      %v9163 = vmul.f32 %v8892, %v9162
      %v9164 = vsub.f32 1.0, %v9163
      %v9165 = vmul.f32 %v9162, %v9164
      %v9166 = vadd.f32 %v9162, %v9165
      %vm9167 = vweird.f32 %v8892
      %vm9168 = vweird.f32 %v9162
      %vm9169 = vmor %vm9167, %vm9168
      %v9170 = vsel %vm9169, %v9162, %v9166
      %v9171 = vand.u32 2147483647, %v8892
      %vm9172 = vcmp.eq.f32.partialorder %v9171, 8.507059e+37
      %v9173 = vand.u32 %v8892, 2147483648
      %v9174 = vor.u32 1.1754944e-38, %v9173
      %v9175 = vsel %vm9172, %v9174, %v9170
      %v9176 = vmul.f32 1.0, %v9175
      %v9177 = vrcp.pop %v8893
      %v9178 = vmul.f32 %v8893, %v9177
      %v9179 = vsub.f32 1.0, %v9178
      %v9180 = vmul.f32 %v9177, %v9179
      %v9181 = vadd.f32 %v9177, %v9180
      %vm9182 = vweird.f32 %v8893
      %vm9183 = vweird.f32 %v9177
      %vm9184 = vmor %vm9182, %vm9183
      %v9185 = vsel %vm9184, %v9177, %v9181
      %v9186 = vand.u32 2147483647, %v8893
      %vm9187 = vcmp.eq.f32.partialorder %v9186, 8.507059e+37
      %v9188 = vand.u32 %v8893, 2147483648
      %v9189 = vor.u32 1.1754944e-38, %v9188
      %v9190 = vsel %vm9187, %v9189, %v9185
      %v9191 = vmul.f32 1.0, %v9190
      %v9192 = vrcp.pop %v8894
      %v9193 = vmul.f32 %v8894, %v9192
      %v9194 = vsub.f32 1.0, %v9193
      %v9195 = vmul.f32 %v9192, %v9194
      %v9196 = vadd.f32 %v9192, %v9195
      %vm9197 = vweird.f32 %v8894
      %vm9198 = vweird.f32 %v9192
      %vm9199 = vmor %vm9197, %vm9198
      %v9200 = vsel %vm9199, %v9192, %v9196
      %v9201 = vand.u32 2147483647, %v8894
      %vm9202 = vcmp.eq.f32.partialorder %v9201, 8.507059e+37
      %v9203 = vand.u32 %v8894, 2147483648
      %v9204 = vor.u32 1.1754944e-38, %v9203
      %v9205 = vsel %vm9202, %v9204, %v9200
      %v9206 = vmul.f32 1.0, %v9205
      %v9207 = vrcp.pop %v8895
      %v9208 = vmul.f32 %v8895, %v9207
      %v9209 = vsub.f32 1.0, %v9208
      %v9210 = vmul.f32 %v9207, %v9209
      %v9211 = vadd.f32 %v9207, %v9210
      %vm9212 = vweird.f32 %v8895
      %vm9213 = vweird.f32 %v9207
      %vm9214 = vmor %vm9212, %vm9213
      %v9215 = vsel %vm9214, %v9207, %v9211
      %v9216 = vand.u32 2147483647, %v8895
      %vm9217 = vcmp.eq.f32.partialorder %v9216, 8.507059e+37
      %v9218 = vand.u32 %v8895, 2147483648
      %v9219 = vor.u32 1.1754944e-38, %v9218
      %v9220 = vsel %vm9217, %v9219, %v9215
      %v9221 = vmul.f32 1.0, %v9220
      %v9222 = vrcp.pop %v8896
      %v9223 = vmul.f32 %v8896, %v9222
      %v9224 = vsub.f32 1.0, %v9223
      %v9225 = vmul.f32 %v9222, %v9224
      %v9226 = vadd.f32 %v9222, %v9225
      %vm9227 = vweird.f32 %v8896
      %vm9228 = vweird.f32 %v9222
      %vm9229 = vmor %vm9227, %vm9228
      %v9230 = vsel %vm9229, %v9222, %v9226
      %v9231 = vand.u32 2147483647, %v8896
      %vm9232 = vcmp.eq.f32.partialorder %v9231, 8.507059e+37
      %v9233 = vand.u32 %v8896, 2147483648
      %v9234 = vor.u32 1.1754944e-38, %v9233
      %v9235 = vsel %vm9232, %v9234, %v9230
      %v9236 = vmul.f32 1.0, %v9235
      %v9237 = vrcp.pop %v8897
      %v9238 = vmul.f32 %v8897, %v9237
      %v9239 = vsub.f32 1.0, %v9238
      %v9240 = vmul.f32 %v9237, %v9239
      %v9241 = vadd.f32 %v9237, %v9240
      %vm9242 = vweird.f32 %v8897
      %vm9243 = vweird.f32 %v9237
      %vm9244 = vmor %vm9242, %vm9243
      %v9245 = vsel %vm9244, %v9237, %v9241
      %v9246 = vand.u32 2147483647, %v8897
      %vm9247 = vcmp.eq.f32.partialorder %v9246, 8.507059e+37
      %v9248 = vand.u32 %v8897, 2147483648
      %v9249 = vor.u32 1.1754944e-38, %v9248
      %v9250 = vsel %vm9247, %v9249, %v9245
      %v9251 = vmul.f32 1.0, %v9250
      %v9252 = vrcp.pop %v8898
      %v9253 = vmul.f32 %v8898, %v9252
      %v9254 = vsub.f32 1.0, %v9253
      %v9255 = vmul.f32 %v9252, %v9254
      %v9256 = vadd.f32 %v9252, %v9255
      %vm9257 = vweird.f32 %v8898
      %vm9258 = vweird.f32 %v9252
      %vm9259 = vmor %vm9257, %vm9258
      %v9260 = vsel %vm9259, %v9252, %v9256
      %v9261 = vand.u32 2147483647, %v8898
      %vm9262 = vcmp.eq.f32.partialorder %v9261, 8.507059e+37
      %v9263 = vand.u32 %v8898, 2147483648
      %v9264 = vor.u32 1.1754944e-38, %v9263
      %v9265 = vsel %vm9262, %v9264, %v9260
      %v9266 = vmul.f32 1.0, %v9265
      %v9267 = vrcp.pop %v8899
      %v9268 = vmul.f32 %v8899, %v9267
      %v9269 = vsub.f32 1.0, %v9268
      %v9270 = vmul.f32 %v9267, %v9269
      %v9271 = vadd.f32 %v9267, %v9270
      %vm9272 = vweird.f32 %v8899
      %vm9273 = vweird.f32 %v9267
      %vm9274 = vmor %vm9272, %vm9273
      %v9275 = vsel %vm9274, %v9267, %v9271
      %v9276 = vand.u32 2147483647, %v8899
      %vm9277 = vcmp.eq.f32.partialorder %v9276, 8.507059e+37
      %v9278 = vand.u32 %v8899, 2147483648
      %v9279 = vor.u32 1.1754944e-38, %v9278
      %v9280 = vsel %vm9277, %v9279, %v9275
      %v9281 = vmul.f32 1.0, %v9280
      %v9282 = vrcp.pop %v8900
      %v9283 = vmul.f32 %v8900, %v9282
      %v9284 = vsub.f32 1.0, %v9283
      %v9285 = vmul.f32 %v9282, %v9284
      %v9286 = vadd.f32 %v9282, %v9285
      %vm9287 = vweird.f32 %v8900
      %vm9288 = vweird.f32 %v9282
      %vm9289 = vmor %vm9287, %vm9288
      %v9290 = vsel %vm9289, %v9282, %v9286
      %v9291 = vand.u32 2147483647, %v8900
      %vm9292 = vcmp.eq.f32.partialorder %v9291, 8.507059e+37
      %v9293 = vand.u32 %v8900, 2147483648
      %v9294 = vor.u32 1.1754944e-38, %v9293
      %v9295 = vsel %vm9292, %v9294, %v9290
      %v9296 = vmul.f32 1.0, %v9295
      %v9297 = vrcp.pop %v8901
      %v9298 = vmul.f32 %v8901, %v9297
      %v9299 = vsub.f32 1.0, %v9298
      %v9300 = vmul.f32 %v9297, %v9299
      %v9301 = vadd.f32 %v9297, %v9300
      %vm9302 = vweird.f32 %v8901
      %vm9303 = vweird.f32 %v9297
      %vm9304 = vmor %vm9302, %vm9303
      %v9305 = vsel %vm9304, %v9297, %v9301
      %v9306 = vand.u32 2147483647, %v8901
      %vm9307 = vcmp.eq.f32.partialorder %v9306, 8.507059e+37
      %v9308 = vand.u32 %v8901, 2147483648
      %v9309 = vor.u32 1.1754944e-38, %v9308
      %v9310 = vsel %vm9307, %v9309, %v9305
      %v9311 = vmul.f32 1.0, %v9310
      %v9312 = vrcp.pop %v8902
      %v9313 = vmul.f32 %v8902, %v9312
      %v9314 = vsub.f32 1.0, %v9313
      %v9315 = vmul.f32 %v9312, %v9314
      %v9316 = vadd.f32 %v9312, %v9315
      %vm9317 = vweird.f32 %v8902
      %vm9318 = vweird.f32 %v9312
      %vm9319 = vmor %vm9317, %vm9318
      %v9320 = vsel %vm9319, %v9312, %v9316
      %v9321 = vand.u32 2147483647, %v8902
      %vm9322 = vcmp.eq.f32.partialorder %v9321, 8.507059e+37
      %v9323 = vand.u32 %v8902, 2147483648
      %v9324 = vor.u32 1.1754944e-38, %v9323
      %v9325 = vsel %vm9322, %v9324, %v9320
      %v9326 = vmul.f32 1.0, %v9325
      %v9327 = vrcp.pop %v8903
      %v9328 = vmul.f32 %v8903, %v9327
      %v9329 = vsub.f32 1.0, %v9328
      %v9330 = vmul.f32 %v9327, %v9329
      %v9331 = vadd.f32 %v9327, %v9330
      %vm9332 = vweird.f32 %v8903
      %vm9333 = vweird.f32 %v9327
      %vm9334 = vmor %vm9332, %vm9333
      %v9335 = vsel %vm9334, %v9327, %v9331
      %v9336 = vand.u32 2147483647, %v8903
      %vm9337 = vcmp.eq.f32.partialorder %v9336, 8.507059e+37
      %v9338 = vand.u32 %v8903, 2147483648
      %v9339 = vor.u32 1.1754944e-38, %v9338
      %v9340 = vsel %vm9337, %v9339, %v9335
      %v9341 = vmul.f32 1.0, %v9340
      %v9342 = vrcp.pop %v8904
      %v9343 = vmul.f32 %v8904, %v9342
      %v9344 = vsub.f32 1.0, %v9343
      %v9345 = vmul.f32 %v9342, %v9344
      %v9346 = vadd.f32 %v9342, %v9345
      %vm9347 = vweird.f32 %v8904
      %vm9348 = vweird.f32 %v9342
      %vm9349 = vmor %vm9347, %vm9348
      %v9350 = vsel %vm9349, %v9342, %v9346
      %v9351 = vand.u32 2147483647, %v8904
      %vm9352 = vcmp.eq.f32.partialorder %v9351, 8.507059e+37
      %v9353 = vand.u32 %v8904, 2147483648
      %v9354 = vor.u32 1.1754944e-38, %v9353
      %v9355 = vsel %vm9352, %v9354, %v9350
      %v9356 = vmul.f32 1.0, %v9355
      %v9357 = vrcp.pop %v8905
      %v9358 = vmul.f32 %v8905, %v9357
      %v9359 = vsub.f32 1.0, %v9358
      %v9360 = vmul.f32 %v9357, %v9359
      %v9361 = vadd.f32 %v9357, %v9360
      %vm9362 = vweird.f32 %v8905
      %vm9363 = vweird.f32 %v9357
      %vm9364 = vmor %vm9362, %vm9363
      %v9365 = vsel %vm9364, %v9357, %v9361
      %v9366 = vand.u32 2147483647, %v8905
      %vm9367 = vcmp.eq.f32.partialorder %v9366, 8.507059e+37
      %v9368 = vand.u32 %v8905, 2147483648
      %v9369 = vor.u32 1.1754944e-38, %v9368
      %v9370 = vsel %vm9367, %v9369, %v9365
      %v9371 = vmul.f32 1.0, %v9370
      %v9372 = vrcp.pop %v8906
      %v9373 = vmul.f32 %v8906, %v9372
      %v9374 = vsub.f32 1.0, %v9373
      %v9375 = vmul.f32 %v9372, %v9374
      %v9376 = vadd.f32 %v9372, %v9375
      %vm9377 = vweird.f32 %v8906
      %vm9378 = vweird.f32 %v9372
      %vm9379 = vmor %vm9377, %vm9378
      %v9380 = vsel %vm9379, %v9372, %v9376
      %v9381 = vand.u32 2147483647, %v8906
      %vm9382 = vcmp.eq.f32.partialorder %v9381, 8.507059e+37
      %v9383 = vand.u32 %v8906, 2147483648
      %v9384 = vor.u32 1.1754944e-38, %v9383
      %v9385 = vsel %vm9382, %v9384, %v9380
      %v9386 = vmul.f32 1.0, %v9385
      %9387 = vst.msk [vmem:[%s440] sm:$0xff] %vm577, %v8921
      %9388 = vst.msk [vmem:[%s440 + $0x8] sm:$0xff] %vm577, %v8936
      %9389 = vst.msk [vmem:[%s440 + $0x10] sm:$0xff] %vm577, %v8951
      %9390 = vst.msk [vmem:[%s440 + $0x18] sm:$0xff] %vm577, %v8966
      %9391 = vst.msk [vmem:[%s440 + $0x20] sm:$0xff] %vm577, %v8981
      %9392 = vst.msk [vmem:[%s440 + $0x28] sm:$0xff] %vm577, %v8996
      %9393 = vst.msk [vmem:[%s440 + $0x30] sm:$0xff] %vm577, %v9011
      %9394 = vst.msk [vmem:[%s440 + $0x38] sm:$0xff] %vm577, %v9026
      %9395 = vst.msk [vmem:[%s440 + $0x40] sm:$0xff] %vm577, %v9041
      %9396 = vst.msk [vmem:[%s440 + $0x48] sm:$0xff] %vm577, %v9056
      %9397 = vst.msk [vmem:[%s440 + $0x50] sm:$0xff] %vm577, %v9071
      %9398 = vst.msk [vmem:[%s440 + $0x58] sm:$0xff] %vm577, %v9086
      %9399 = vst.msk [vmem:[%s440 + $0x60] sm:$0xff] %vm577, %v9101
      %9400 = vst.msk [vmem:[%s440 + $0x68] sm:$0xff] %vm577, %v9116
      %9401 = vst.msk [vmem:[%s440 + $0x70] sm:$0xff] %vm577, %v9131
      %9402 = vst.msk [vmem:[%s440 + $0x78] sm:$0xff] %vm577, %v9146
      %9403 = vst.msk [vmem:[%s440 + $0x80] sm:$0xff] %vm577, %v9161
      %9404 = vst.msk [vmem:[%s440 + $0x88] sm:$0xff] %vm577, %v9176
      %9405 = vst.msk [vmem:[%s440 + $0x90] sm:$0xff] %vm577, %v9191
      %9406 = vst.msk [vmem:[%s440 + $0x98] sm:$0xff] %vm577, %v9206
      %9407 = vst.msk [vmem:[%s440 + $0xa0] sm:$0xff] %vm577, %v9221
      %9408 = vst.msk [vmem:[%s440 + $0xa8] sm:$0xff] %vm577, %v9236
      %9409 = vst.msk [vmem:[%s440 + $0xb0] sm:$0xff] %vm577, %v9251
      %9410 = vst.msk [vmem:[%s440 + $0xb8] sm:$0xff] %vm577, %v9266
      %9411 = vst.msk [vmem:[%s440 + $0xc0] sm:$0xff] %vm577, %v9281
      %9412 = vst.msk [vmem:[%s440 + $0xc8] sm:$0xff] %vm577, %v9296
      %9413 = vst.msk [vmem:[%s440 + $0xd0] sm:$0xff] %vm577, %v9311
      %9414 = vst.msk [vmem:[%s440 + $0xd8] sm:$0xff] %vm577, %v9326
      %9415 = vst.msk [vmem:[%s440 + $0xe0] sm:$0xff] %vm577, %v9341
      %9416 = vst.msk [vmem:[%s440 + $0xe8] sm:$0xff] %vm577, %v9356
      %9417 = vst.msk [vmem:[%s440 + $0xf0] sm:$0xff] %vm577, %v9371
      %9418 = vst.msk [vmem:[%s440 + $0xf8] sm:$0xff] %vm577, %v9386
      %p9419 = scmp.lt.s32.totalorder %s24, 1
      %s9420 = scalar_select %p9419, %s24, 1
      %s9421 = smul.addr %s9420, 32
      %s9422 = smul.addr %s9421, 8
      %s9423 = scalar_lea.vmem %s13, %s9422
      // Predicated region
      $region73: #{efficientnet_autoencoder.1} parent=71 // pred_check
        %p9424 = pneg %p320
      $region74: #{efficientnet_autoencoder.1} parent=71 // pred_check_branch
        %9426 = sbr.rel (%p9424) target = $region76
      $region75: #{efficientnet_autoencoder.1} parent=71 // pred_region
        _
      $region76: #{efficientnet_autoencoder.1} parent=71 // pred_fallthru
        _
    $region72: #{efficientnet_autoencoder.1} parent=5 // pred_fallthru
      _
    %p9427 = scmp.le.s32.totalorder 2, %s19
    // Predicated region
    $region77: #{efficientnet_autoencoder.1} parent=5 // pred_check
      %p9428 = pneg %p9427
    $region78: #{efficientnet_autoencoder.1} parent=5 // pred_check_branch
      %9430 = sbr.rel (%p9428) target = $region80
    $region79: #{efficientnet_autoencoder.1} parent=5 // pred_region
      %s9431 = ssub.s32 %s19, 2
      // Predicated region
      $region81: #{efficientnet_autoencoder.1} parent=79 // pred_check
        %p9432 = pneg %p326
      $region82: #{efficientnet_autoencoder.1} parent=79 // pred_check_branch
        %9434 = sbr.rel (%p9432) target = $region84
      $region83: #{efficientnet_autoencoder.1} parent=79 // pred_region
        %p9435 = scmp.lt.s32.totalorder %s25, 1
        %s9436 = scalar_select %p9435, %s25, 1
        %s9437 = smul.addr %s9436, 32
        %s9438 = smul.addr %s9437, 8
        %s9439 = scalar_lea.vmem %s13, %s9438
      $region84: #{efficientnet_autoencoder.1} parent=79 // pred_fallthru
        _
    $region80: #{efficientnet_autoencoder.1} parent=5 // pred_fallthru
      _
  $region6: #{efficientnet_autoencoder.1} parent=0 // loop_footer
    %s23 = sadd.s32 1, %s19
  $region7: #{efficientnet_autoencoder.1} parent=0 // loop_footer_branch
    %18 = sbr.rel target = $region3
  $region8: #{efficientnet_autoencoder.1} parent=0 // loop_exit
    _

</llo_original>
